<compile_context>
chip_gen: v6e
topology: v6e:2x2x1
jax: 0.10.0
libtpu: 0.0.40
codegen_flags: <defaults>
</compile_context>

<pallas_src>
import numpy as np

import jax
import jax.numpy as jnp
from jax.experimental import pallas as pl
from jax.experimental.pallas import tpu as pltpu

# ---------------- config (small, consistent with the module) ----------------
NZ = 32           # nz
NGF = 8           # ngf
IMG = 16          # img_size
NC = 3            # nc
B = 2             # batch
S = IMG // 4      # init_size = 4
C1 = 2 * NGF      # 16
C2 = NGF          # 8
F = C1 * S * S    # 256 linear features
EPS = 1e-5
SLOPE = 0.2

# Flat zero-padded spatial lattices (conv padding=1 folded into the layout).
HP1 = WP1 = 2 * S + 2          # 10x10 lattice for conv1 (8x8 interior)
MP1 = HP1 * WP1                # 100
HP2 = WP2 = IMG + 2            # 18x18 lattice for conv2 & conv3 (16x16 int.)
MP2 = HP2 * WP2                # 324
MAR1 = WP1 + 1                 # margins so every 3x3 tap is a plain lane slice
MAR2 = WP2 + 1


# --------------------------- in-kernel helpers -------------------------------
def _bn_rows(x, q, g, b, count, mask=None, slope=None):
    """Training-mode BatchNorm on (B*C, Msp) rows.

    q: (R, R) 0/1 selector that sums the rows belonging to the same channel
       across the batch (rows are batch-major: r = b*C + c).
    mask: optional (1, Msp) bool marking valid (interior) lattice columns;
       masked-out columns are excluded from the stats and re-zeroed on output
       (so the result doubles as the next conv's zero padding).
    """
    inv = 1.0 / count
    if mask is not None:
        x = jnp.where(mask, x, 0.0)                    # also kills any garbage
    rs = jnp.sum(x, axis=-1, keepdims=True)            # (R, 1) per-row sums
    mean = jnp.dot(q, rs, preferred_element_type=jnp.float32) * inv
    d = x - mean
    if mask is not None:
        d = jnp.where(mask, d, 0.0)
    vs = jnp.dot(q, jnp.sum(d * d, axis=-1, keepdims=True),
                 preferred_element_type=jnp.float32) * inv
    y = d * jax.lax.rsqrt(vs + EPS) * g + b
    if slope is not None:
        y = jnp.where(y >= 0, y, slope * y)
    if mask is not None:
        y = jnp.where(mask, y, 0.0)                    # keep borders == 0
    return y


def _conv3x3(x, buf, w_ref, wp, mp, rout):
    """3x3 conv on the flat zero-padded lattice.

    x:     (B*Cin, mp) padded input (border columns are zero).
    buf:   (B*Cin, mp + 2*(wp+1)) VMEM scratch; margins may hold garbage —
           interior output columns never read them.
    w_ref: (9, B*Cout, B*Cin) block-diagonal-over-batch tap weights.
    Returns (B*Cout=rout, mp); border columns are garbage (caller masks/crops).
    """
    mar = wp + 1
    buf[:, mar:mar + mp] = x                           # single lane-dense store
    acc = jnp.zeros((rout, mp), jnp.float32)
    for t in range(9):
        off = (t // 3 - 1) * wp + (t % 3 - 1)          # (dy-1)*Wp + (dx-1)
        tap = buf[:, mar + off: mar + off + mp]        # shifted lane slice
        acc = acc + jnp.dot(w_ref[t], tap, preferred_element_type=jnp.float32)
    return acc


# ------------------------------ fused kernel ---------------------------------
def generator_kernel(z_ref, wl_ref, bl_ref, arep_ref, mblk_ref, csel_ref,
                     q32_ref, g1_ref, b1_ref, g01_ref,
                     w1_ref, g2_ref, b2_ref, m1_ref,
                     g12_ref, w2_ref, q16_ref, g3_ref, b3_ref, m2_ref,
                     w3_ref, bc3_ref,
                     o_ref,
                     buf1, buf2, buf3):
    # --- l1: Linear(nz -> C1*S*S), then relayout to (B*C1, S*S) rows via
    #     constant select/compact matmuls (no lane scatter, no reshape). ---
    h = jnp.dot(z_ref[...], wl_ref[...],
                preferred_element_type=jnp.float32) + bl_ref[...]     # (B, F)
    hrep = jnp.dot(arep_ref[...], h,
                   preferred_element_type=jnp.float32)                # (B*C1, F)
    x0 = jnp.dot(hrep * mblk_ref[...], csel_ref[...],
                 preferred_element_type=jnp.float32)                  # (B*C1, 16)

    # --- BatchNorm2d(C1), training-mode batch stats (no activation) ---
    x0 = _bn_rows(x0, q32_ref[...], g1_ref[...], b1_ref[...], count=B * S * S)

    # --- Upsample(2) + zero-pad(1) onto the 10x10 lattice: 0/1 gather matmul -
    x1 = jnp.dot(x0, g01_ref[...],
                 preferred_element_type=jnp.float32)                  # (32, MP1)

    # --- Conv3x3(C1->C1, no bias) + BN + LeakyReLU(0.2) ---
    m1 = m1_ref[...] > 0.5
    y1 = _conv3x3(x1, buf1, w1_ref, WP1, MP1, B * C1)
    y1 = _bn_rows(y1, q32_ref[...], g2_ref[...], b2_ref[...],
                  count=B * 2 * S * 2 * S, mask=m1, slope=SLOPE)

    # --- Upsample(2) + zero-pad(1) onto the 18x18 lattice ---
    x2 = jnp.dot(y1, g12_ref[...],
                 preferred_element_type=jnp.float32)                  # (32, MP2)

    # --- Conv3x3(C1->C2, no bias) + BN + LeakyReLU(0.2) ---
    m2 = m2_ref[...] > 0.5
    y2 = _conv3x3(x2, buf2, w2_ref, WP2, MP2, B * C2)
    y2 = _bn_rows(y2, q16_ref[...], g3_ref[...], b3_ref[...],
                  count=B * IMG * IMG, mask=m2, slope=SLOPE)

    # --- Conv3x3(C2->NC, bias) + Sigmoid.  y2 already has zero borders, so it
    #     IS conv3's padded input on the same 18x18 lattice. ---
    y3 = _conv3x3(y2, buf3, w3_ref, WP2, MP2, B * NC)
    o_ref[...] = jax.nn.sigmoid(jnp.where(m2, y3 + bc3_ref[...], 0.0))


# ------------------------- constant builders (host) --------------------------
def _make_g01():
    """(S*S, MP1) 0/1: 4x4 source -> nearest-2x upsample zero-padded to 10x10."""
    g = np.zeros((S * S, MP1), np.float32)
    for hq in range(HP1):
        for wq in range(WP1):
            if 1 <= hq <= 2 * S and 1 <= wq <= 2 * S:
                src = ((hq - 1) // 2) * S + (wq - 1) // 2
                g[src, hq * WP1 + wq] = 1.0
    return g


def _make_g12():
    """(MP1, MP2) 0/1: 10x10 lattice (8x8 interior) -> 2x upsample, padded 18x18."""
    g = np.zeros((MP1, MP2), np.float32)
    for hq in range(HP2):
        for wq in range(WP2):
            if 1 <= hq <= IMG and 1 <= wq <= IMG:
                src = (1 + (hq - 1) // 2) * WP1 + (1 + (wq - 1) // 2)
                g[src, hq * WP2 + wq] = 1.0
    return g


def _make_mask(hp, wp):
    m = np.zeros((hp, wp), np.float32)
    m[1:hp - 1, 1:wp - 1] = 1.0
    return m.reshape(1, hp * wp)


def _make_q(rows, c):
    r = np.arange(rows)
    return (r[:, None] % c == r[None, :] % c).astype(np.float32)


def pack_params(p):
    """One-time wrapper-side packing of torch-layout params + kernel constants."""
    pn = {k: np.asarray(v, np.float32) for k, v in p.items()}

    def tile_rows(v):                       # per-channel vector -> (B*len, 1)
        return np.tile(np.asarray(v, np.float32), B).reshape(-1, 1)

    def conv_pack(w_hwio):                  # (3,3,Cin,Cout) -> (9, B*Cout, B*Cin)
        kh, kw, cin, cout = w_hwio.shape
        w = np.transpose(w_hwio, (0, 1, 3, 2)).reshape(kh * kw, cout, cin)
        eye = np.eye(B, dtype=np.float32)
        return np.stack([np.kron(eye, w[t]) for t in range(kh * kw)], axis=0)

    rows1 = np.arange(B * C1)
    cols_f = np.arange(F)
    pk = {
        "wl": pn["Wl"],                             # (NZ, F), torch column order
        "bl": pn["bl"].reshape(1, F),
        "arep": np.repeat(np.eye(B, dtype=np.float32), C1, axis=0),   # (32, B)
        "mblk": (cols_f[None, :] // (S * S) == rows1[:, None] % C1
                 ).astype(np.float32),                                 # (32, F)
        "csel": (cols_f[:, None] % (S * S) == np.arange(S * S)[None, :]
                 ).astype(np.float32),                                 # (F, 16)
        "q32": _make_q(B * C1, C1),
        "q16": _make_q(B * C2, C2),
        "g1": tile_rows(pn["g1"]), "b1": tile_rows(pn["b1"]),
        "g01": _make_g01(),
        "w1": conv_pack(pn["W1"]),
        "g2": tile_rows(pn["g2"]), "b2": tile_rows(pn["b2"]),
        "m1": _make_mask(HP1, WP1),
        "g12": _make_g12(),
        "w2": conv_pack(pn["W2"]),
        "g3": tile_rows(pn["g3"]), "b3": tile_rows(pn["b3"]),
        "m2": _make_mask(HP2, WP2),
        "w3": conv_pack(pn["W3"]),
        "bc3": tile_rows(pn["bc3"]),
    }
    return {k: jnp.asarray(v) for k, v in pk.items()}


_ARG_ORDER = ("wl", "bl", "arep", "mblk", "csel", "q32", "g1", "b1", "g01",
              "w1", "g2", "b2", "m1", "g12", "w2", "q16", "g3", "b3", "m2",
              "w3", "bc3")


# ------------------------------- wrapper --------------------------------------
@jax.jit
def generator_forward(z, pk):
    vmem = pl.BlockSpec(memory_space=pltpu.MemorySpace.VMEM)
    args = (z,) + tuple(pk[k] for k in _ARG_ORDER)
    out = pl.pallas_call(
        generator_kernel,
        out_shape=jax.ShapeDtypeStruct((B * NC, MP2), jnp.float32),
        in_specs=[vmem] * len(args),
        out_specs=vmem,
        scratch_shapes=[
            pltpu.VMEM((B * C1, MP1 + 2 * MAR1), jnp.float32),   # conv1 taps
            pltpu.VMEM((B * C1, MP2 + 2 * MAR2), jnp.float32),   # conv2 taps
            pltpu.VMEM((B * C2, MP2 + 2 * MAR2), jnp.float32),   # conv3 taps
        ],
    )(*args)
    # (B*NC, 18*18) lane-dense output; crop the 1-pixel conv-padding border.
    return out.reshape(B, NC, HP2, WP2)[:, :, 1:IMG + 1, 1:IMG + 1]


# --------------------------- pure-JAX reference -------------------------------
def _bn_ref(x, g, b, slope=None):
    mean = jnp.mean(x, axis=(0, 1, 2), keepdims=True)
    var = jnp.mean((x - mean) ** 2, axis=(0, 1, 2), keepdims=True)
    y = (x - mean) * jax.lax.rsqrt(var + EPS) * g + b
    if slope is not None:
        y = jnp.where(y >= 0, y, slope * y)
    return y


def _conv_ref(x, w):
    return jax.lax.conv_general_dilated(
        x, w, window_strides=(1, 1), padding="SAME",
        dimension_numbers=("NHWC", "HWIO", "NHWC"))


def _upsample_ref(x):
    return jnp.repeat(jnp.repeat(x, 2, axis=1), 2, axis=2)


def reference_forward(z, p):
    out = z @ p["Wl"] + p["bl"]
    x = out.reshape(B, C1, S, S).transpose(0, 2, 3, 1)
    x = _bn_ref(x, p["g1"], p["b1"])
    x = _upsample_ref(x)
    x = _conv_ref(x, p["W1"])
    x = _bn_ref(x, p["g2"], p["b2"], slope=SLOPE)
    x = _upsample_ref(x)
    x = _conv_ref(x, p["W2"])
    x = _bn_ref(x, p["g3"], p["b3"], slope=SLOPE)
    x = _conv_ref(x, p["W3"]) + p["bc3"]
    return jax.nn.sigmoid(x).transpose(0, 3, 1, 2)


# ---------------------------------- main --------------------------------------
def init_params(key):
    ks = jax.random.split(key, 12)
    return {
        "Wl": jax.random.normal(ks[0], (NZ, F), jnp.float32) * 0.1,
        "bl": jax.random.normal(ks[1], (F,), jnp.float32) * 0.05,
        "g1": 1.0 + 0.1 * jax.random.normal(ks[2], (C1,), jnp.float32),
        "b1": 0.1 * jax.random.normal(ks[3], (C1,), jnp.float32),
        "W1": jax.random.normal(ks[4], (3, 3, C1, C1), jnp.float32) * 0.1,
        "g2": 1.0 + 0.1 * jax.random.normal(ks[5], (C1,), jnp.float32),
        "b2": 0.1 * jax.random.normal(ks[6], (C1,), jnp.float32),
        "W2": jax.random.normal(ks[7], (3, 3, C1, C2), jnp.float32) * 0.1,
        "g3": 1.0 + 0.1 * jax.random.normal(ks[8], (C2,), jnp.float32),
        "b3": 0.1 * jax.random.normal(ks[9], (C2,), jnp.float32),
        "W3": jax.random.normal(ks[10], (3, 3, C2, NC), jnp.float32) * 0.1,
        "bc3": 0.1 * jax.random.normal(ks[11], (NC,), jnp.float32),
    }


if __name__ == "__main__":
    key = jax.random.PRNGKey(0)
    kz, kp = jax.random.split(key)
    z = jax.random.normal(kz, (B, NZ), jnp.float32)
    params = init_params(kp)
    packed = pack_params(params)

    img = jax.block_until_ready(generator_forward(z, packed))
    assert img.shape == (B, NC, IMG, IMG), img.shape

    ref = reference_forward(z, params)
    np.testing.assert_allclose(np.asarray(img), np.asarray(ref),
                               rtol=2e-3, atol=2e-3)

    print("KERNEL_OK")
</pallas_src>

<mosaic_0001>
module attributes {stable_mosaic.version = 11 : i64} {
  func.func @generator_kernel(%arg0: memref<2x32xf32, #tpu.memory_space<vmem>>, %arg1: memref<32x256xf32, #tpu.memory_space<vmem>>, %arg2: memref<1x256xf32, #tpu.memory_space<vmem>>, %arg3: memref<32x2xf32, #tpu.memory_space<vmem>>, %arg4: memref<32x256xf32, #tpu.memory_space<vmem>>, %arg5: memref<256x16xf32, #tpu.memory_space<vmem>>, %arg6: memref<32x32xf32, #tpu.memory_space<vmem>>, %arg7: memref<32x1xf32, #tpu.memory_space<vmem>>, %arg8: memref<32x1xf32, #tpu.memory_space<vmem>>, %arg9: memref<16x100xf32, #tpu.memory_space<vmem>>, %arg10: memref<9x32x32xf32, #tpu.memory_space<vmem>>, %arg11: memref<32x1xf32, #tpu.memory_space<vmem>>, %arg12: memref<32x1xf32, #tpu.memory_space<vmem>>, %arg13: memref<1x100xf32, #tpu.memory_space<vmem>>, %arg14: memref<100x324xf32, #tpu.memory_space<vmem>>, %arg15: memref<9x16x32xf32, #tpu.memory_space<vmem>>, %arg16: memref<16x16xf32, #tpu.memory_space<vmem>>, %arg17: memref<16x1xf32, #tpu.memory_space<vmem>>, %arg18: memref<16x1xf32, #tpu.memory_space<vmem>>, %arg19: memref<1x324xf32, #tpu.memory_space<vmem>>, %arg20: memref<9x6x16xf32, #tpu.memory_space<vmem>>, %arg21: memref<6x1xf32, #tpu.memory_space<vmem>>, %arg22: memref<6x324xf32, #tpu.memory_space<vmem>>, %arg23: memref<32x122xf32, #tpu.memory_space<vmem>>, %arg24: memref<32x362xf32, #tpu.memory_space<vmem>>, %arg25: memref<16x362xf32, #tpu.memory_space<vmem>>) attributes {dimension_semantics = [], scalar_prefetch = 0 : i64, scratch_operands = 3 : i64, tpu.core_type = #tpu.core_type<tc>} {
    %c0 = arith.constant 0 : index
    %c0_0 = arith.constant 0 : index
    %0 = vector.load %arg0[%c0, %c0_0] : memref<2x32xf32, #tpu.memory_space<vmem>>, vector<2x32xf32>
    %c0_1 = arith.constant 0 : index
    %c0_2 = arith.constant 0 : index
    %1 = vector.load %arg1[%c0_1, %c0_2] : memref<32x256xf32, #tpu.memory_space<vmem>>, vector<32x256xf32>
    %cst = arith.constant dense<0.000000e+00> : vector<2x256xf32>
    %2 = tpu.matmul %0, %1, %cst {dimension_numbers = #tpu.dot_dimension_numbers<[1], [0], [0], [1], [0, 0, 1, 1], [], []>} : vector<2x32xf32>, vector<32x256xf32>, vector<2x256xf32> -> vector<2x256xf32>
    %c0_3 = arith.constant 0 : index
    %c0_4 = arith.constant 0 : index
    %3 = vector.load %arg2[%c0_3, %c0_4] : memref<1x256xf32, #tpu.memory_space<vmem>>, vector<1x256xf32>
    %4 = vector.broadcast %3 : vector<1x256xf32> to vector<2x256xf32>
    %5 = arith.addf %2, %4 : vector<2x256xf32>
    %c0_5 = arith.constant 0 : index
    %c0_6 = arith.constant 0 : index
    %6 = vector.load %arg3[%c0_5, %c0_6] : memref<32x2xf32, #tpu.memory_space<vmem>>, vector<32x2xf32>
    %cst_7 = arith.constant dense<0.000000e+00> : vector<32x256xf32>
    %7 = tpu.matmul %6, %5, %cst_7 {dimension_numbers = #tpu.dot_dimension_numbers<[1], [0], [0], [1], [0, 0, 1, 1], [], []>} : vector<32x2xf32>, vector<2x256xf32>, vector<32x256xf32> -> vector<32x256xf32>
    %c0_8 = arith.constant 0 : index
    %c0_9 = arith.constant 0 : index
    %8 = vector.load %arg4[%c0_8, %c0_9] : memref<32x256xf32, #tpu.memory_space<vmem>>, vector<32x256xf32>
    %9 = arith.mulf %7, %8 : vector<32x256xf32>
    %c0_10 = arith.constant 0 : index
    %c0_11 = arith.constant 0 : index
    %10 = vector.load %arg5[%c0_10, %c0_11] : memref<256x16xf32, #tpu.memory_space<vmem>>, vector<256x16xf32>
    %cst_12 = arith.constant dense<0.000000e+00> : vector<32x16xf32>
    %11 = tpu.matmul %9, %10, %cst_12 {dimension_numbers = #tpu.dot_dimension_numbers<[1], [0], [0], [1], [0, 0, 1, 1], [], []>} : vector<32x256xf32>, vector<256x16xf32>, vector<32x16xf32> -> vector<32x16xf32>
    %c0_13 = arith.constant 0 : index
    %c0_14 = arith.constant 0 : index
    %12 = vector.load %arg6[%c0_13, %c0_14] : memref<32x32xf32, #tpu.memory_space<vmem>>, vector<32x32xf32>
    %c0_15 = arith.constant 0 : index
    %c0_16 = arith.constant 0 : index
    %13 = vector.load %arg7[%c0_15, %c0_16] : memref<32x1xf32, #tpu.memory_space<vmem>>, vector<32x1xf32>
    %c0_17 = arith.constant 0 : index
    %c0_18 = arith.constant 0 : index
    %14 = vector.load %arg8[%c0_17, %c0_18] : memref<32x1xf32, #tpu.memory_space<vmem>>, vector<32x1xf32>
    %cst_19 = arith.constant dense<0.000000e+00> : vector<32xf32>
    %15 = vector.multi_reduction <add>, %11, %cst_19 [1] : vector<32x16xf32> to vector<32xf32>
    %16 = vector.shape_cast %15 : vector<32xf32> to vector<32x1xf32>
    %cst_20 = arith.constant dense<0.000000e+00> : vector<32x1xf32>
    %17 = tpu.matmul %12, %16, %cst_20 {dimension_numbers = #tpu.dot_dimension_numbers<[1], [0], [0], [1], [0, 0, 1, 1], [], []>} : vector<32x32xf32>, vector<32x1xf32>, vector<32x1xf32> -> vector<32x1xf32>
    %cst_21 = arith.constant 3.125000e-02 : f32
    %18 = vector.broadcast %cst_21 : f32 to vector<32x1xf32>
    %19 = arith.mulf %17, %18 : vector<32x1xf32>
    %20 = vector.broadcast %19 : vector<32x1xf32> to vector<32x16xf32>
    %21 = arith.subf %11, %20 : vector<32x16xf32>
    %22 = arith.mulf %21, %21 : vector<32x16xf32>
    %cst_22 = arith.constant dense<0.000000e+00> : vector<32xf32>
    %23 = vector.multi_reduction <add>, %22, %cst_22 [1] : vector<32x16xf32> to vector<32xf32>
    %24 = vector.shape_cast %23 : vector<32xf32> to vector<32x1xf32>
    %cst_23 = arith.constant dense<0.000000e+00> : vector<32x1xf32>
    %25 = tpu.matmul %12, %24, %cst_23 {dimension_numbers = #tpu.dot_dimension_numbers<[1], [0], [0], [1], [0, 0, 1, 1], [], []>} : vector<32x32xf32>, vector<32x1xf32>, vector<32x1xf32> -> vector<32x1xf32>
    %cst_24 = arith.constant 3.125000e-02 : f32
    %26 = vector.broadcast %cst_24 : f32 to vector<32x1xf32>
    %27 = arith.mulf %25, %26 : vector<32x1xf32>
    %cst_25 = arith.constant 9.99999974E-6 : f32
    %28 = vector.broadcast %cst_25 : f32 to vector<32x1xf32>
    %29 = arith.addf %27, %28 : vector<32x1xf32>
    %30 = math.rsqrt %29 : vector<32x1xf32>
    %31 = vector.broadcast %30 : vector<32x1xf32> to vector<32x16xf32>
    %32 = arith.mulf %21, %31 : vector<32x16xf32>
    %33 = vector.broadcast %13 : vector<32x1xf32> to vector<32x16xf32>
    %34 = arith.mulf %32, %33 : vector<32x16xf32>
    %35 = vector.broadcast %14 : vector<32x1xf32> to vector<32x16xf32>
    %36 = arith.addf %34, %35 : vector<32x16xf32>
    %c0_26 = arith.constant 0 : index
    %c0_27 = arith.constant 0 : index
    %37 = vector.load %arg9[%c0_26, %c0_27] : memref<16x100xf32, #tpu.memory_space<vmem>>, vector<16x100xf32>
    %cst_28 = arith.constant dense<0.000000e+00> : vector<32x100xf32>
    %38 = tpu.matmul %36, %37, %cst_28 {dimension_numbers = #tpu.dot_dimension_numbers<[1], [0], [0], [1], [0, 0, 1, 1], [], []>} : vector<32x16xf32>, vector<16x100xf32>, vector<32x100xf32> -> vector<32x100xf32>
    %c0_29 = arith.constant 0 : index
    %c0_30 = arith.constant 0 : index
    %39 = vector.load %arg13[%c0_29, %c0_30] : memref<1x100xf32, #tpu.memory_space<vmem>>, vector<1x100xf32>
    %cst_31 = arith.constant 5.000000e-01 : f32
    %40 = vector.broadcast %cst_31 : f32 to vector<1x100xf32>
    %41 = arith.cmpf ogt, %39, %40 : vector<1x100xf32>
    %c0_32 = arith.constant 0 : index
    %c11 = arith.constant 11 : index
    %42 = vector.load %arg23[%c0_32, %c11] : memref<32x122xf32, #tpu.memory_space<vmem>>, vector<32x100xf32>
    tpu.vector_store %arg23[%c0_32, %c11], %38 {strides = array<i32>} : memref<32x122xf32, #tpu.memory_space<vmem>>, vector<32x100xf32>,
    %cst_33 = arith.constant 0.000000e+00 : f32
    %43 = vector.broadcast %cst_33 : f32 to vector<32x100xf32>
    %c0_34 = arith.constant 0 : index
    %c0_35 = arith.constant 0 : index
    %44 = vector.load %arg23[%c0_34, %c0_35] : memref<32x122xf32, #tpu.memory_space<vmem>>, vector<32x100xf32>
    %c0_36 = arith.constant 0 : index
    %c0_37 = arith.constant 0 : index
    %c0_38 = arith.constant 0 : index
    %45 = vector.load %arg10[%c0_36, %c0_37, %c0_38] : memref<9x32x32xf32, #tpu.memory_space<vmem>>, vector<1x32x32xf32>
    %46 = vector.shape_cast %45 : vector<1x32x32xf32> to vector<32x32xf32>
    %cst_39 = arith.constant dense<0.000000e+00> : vector<32x100xf32>
    %47 = tpu.matmul %46, %44, %cst_39 {dimension_numbers = #tpu.dot_dimension_numbers<[1], [0], [0], [1], [0, 0, 1, 1], [], []>} : vector<32x32xf32>, vector<32x100xf32>, vector<32x100xf32> -> vector<32x100xf32>
    %48 = arith.addf %43, %47 : vector<32x100xf32>
    %c0_40 = arith.constant 0 : index
    %c1 = arith.constant 1 : index
    %49 = vector.load %arg23[%c0_40, %c1] : memref<32x122xf32, #tpu.memory_space<vmem>>, vector<32x100xf32>
    %c1_41 = arith.constant 1 : index
    %c0_42 = arith.constant 0 : index
    %c0_43 = arith.constant 0 : index
    %50 = vector.load %arg10[%c1_41, %c0_42, %c0_43] : memref<9x32x32xf32, #tpu.memory_space<vmem>>, vector<1x32x32xf32>
    %51 = vector.shape_cast %50 : vector<1x32x32xf32> to vector<32x32xf32>
    %cst_44 = arith.constant dense<0.000000e+00> : vector<32x100xf32>
    %52 = tpu.matmul %51, %49, %cst_44 {dimension_numbers = #tpu.dot_dimension_numbers<[1], [0], [0], [1], [0, 0, 1, 1], [], []>} : vector<32x32xf32>, vector<32x100xf32>, vector<32x100xf32> -> vector<32x100xf32>
    %53 = arith.addf %48, %52 : vector<32x100xf32>
    %c0_45 = arith.constant 0 : index
    %c2 = arith.constant 2 : index
    %54 = vector.load %arg23[%c0_45, %c2] : memref<32x122xf32, #tpu.memory_space<vmem>>, vector<32x100xf32>
    %c2_46 = arith.constant 2 : index
    %c0_47 = arith.constant 0 : index
    %c0_48 = arith.constant 0 : index
    %55 = vector.load %arg10[%c2_46, %c0_47, %c0_48] : memref<9x32x32xf32, #tpu.memory_space<vmem>>, vector<1x32x32xf32>
    %56 = vector.shape_cast %55 : vector<1x32x32xf32> to vector<32x32xf32>
    %cst_49 = arith.constant dense<0.000000e+00> : vector<32x100xf32>
    %57 = tpu.matmul %56, %54, %cst_49 {dimension_numbers = #tpu.dot_dimension_numbers<[1], [0], [0], [1], [0, 0, 1, 1], [], []>} : vector<32x32xf32>, vector<32x100xf32>, vector<32x100xf32> -> vector<32x100xf32>
    %58 = arith.addf %53, %57 : vector<32x100xf32>
    %c0_50 = arith.constant 0 : index
    %c10 = arith.constant 10 : index
    %59 = vector.load %arg23[%c0_50, %c10] : memref<32x122xf32, #tpu.memory_space<vmem>>, vector<32x100xf32>
    %c3 = arith.constant 3 : index
    %c0_51 = arith.constant 0 : index
    %c0_52 = arith.constant 0 : index
    %60 = vector.load %arg10[%c3, %c0_51, %c0_52] : memref<9x32x32xf32, #tpu.memory_space<vmem>>, vector<1x32x32xf32>
    %61 = vector.shape_cast %60 : vector<1x32x32xf32> to vector<32x32xf32>
    %cst_53 = arith.constant dense<0.000000e+00> : vector<32x100xf32>
    %62 = tpu.matmul %61, %59, %cst_53 {dimension_numbers = #tpu.dot_dimension_numbers<[1], [0], [0], [1], [0, 0, 1, 1], [], []>} : vector<32x32xf32>, vector<32x100xf32>, vector<32x100xf32> -> vector<32x100xf32>
    %63 = arith.addf %58, %62 : vector<32x100xf32>
    %c0_54 = arith.constant 0 : index
    %c11_55 = arith.constant 11 : index
    %64 = vector.load %arg23[%c0_54, %c11_55] : memref<32x122xf32, #tpu.memory_space<vmem>>, vector<32x100xf32>
    %c4 = arith.constant 4 : index
    %c0_56 = arith.constant 0 : index
    %c0_57 = arith.constant 0 : index
    %65 = vector.load %arg10[%c4, %c0_56, %c0_57] : memref<9x32x32xf32, #tpu.memory_space<vmem>>, vector<1x32x32xf32>
    %66 = vector.shape_cast %65 : vector<1x32x32xf32> to vector<32x32xf32>
    %cst_58 = arith.constant dense<0.000000e+00> : vector<32x100xf32>
    %67 = tpu.matmul %66, %64, %cst_58 {dimension_numbers = #tpu.dot_dimension_numbers<[1], [0], [0], [1], [0, 0, 1, 1], [], []>} : vector<32x32xf32>, vector<32x100xf32>, vector<32x100xf32> -> vector<32x100xf32>
    %68 = arith.addf %63, %67 : vector<32x100xf32>
    %c0_59 = arith.constant 0 : index
    %c12 = arith.constant 12 : index
    %69 = vector.load %arg23[%c0_59, %c12] : memref<32x122xf32, #tpu.memory_space<vmem>>, vector<32x100xf32>
    %c5 = arith.constant 5 : index
    %c0_60 = arith.constant 0 : index
    %c0_61 = arith.constant 0 : index
    %70 = vector.load %arg10[%c5, %c0_60, %c0_61] : memref<9x32x32xf32, #tpu.memory_space<vmem>>, vector<1x32x32xf32>
    %71 = vector.shape_cast %70 : vector<1x32x32xf32> to vector<32x32xf32>
    %cst_62 = arith.constant dense<0.000000e+00> : vector<32x100xf32>
    %72 = tpu.matmul %71, %69, %cst_62 {dimension_numbers = #tpu.dot_dimension_numbers<[1], [0], [0], [1], [0, 0, 1, 1], [], []>} : vector<32x32xf32>, vector<32x100xf32>, vector<32x100xf32> -> vector<32x100xf32>
    %73 = arith.addf %68, %72 : vector<32x100xf32>
    %c0_63 = arith.constant 0 : index
    %c20 = arith.constant 20 : index
    %74 = vector.load %arg23[%c0_63, %c20] : memref<32x122xf32, #tpu.memory_space<vmem>>, vector<32x100xf32>
    %c6 = arith.constant 6 : index
    %c0_64 = arith.constant 0 : index
    %c0_65 = arith.constant 0 : index
    %75 = vector.load %arg10[%c6, %c0_64, %c0_65] : memref<9x32x32xf32, #tpu.memory_space<vmem>>, vector<1x32x32xf32>
    %76 = vector.shape_cast %75 : vector<1x32x32xf32> to vector<32x32xf32>
    %cst_66 = arith.constant dense<0.000000e+00> : vector<32x100xf32>
    %77 = tpu.matmul %76, %74, %cst_66 {dimension_numbers = #tpu.dot_dimension_numbers<[1], [0], [0], [1], [0, 0, 1, 1], [], []>} : vector<32x32xf32>, vector<32x100xf32>, vector<32x100xf32> -> vector<32x100xf32>
    %78 = arith.addf %73, %77 : vector<32x100xf32>
    %c0_67 = arith.constant 0 : index
    %c21 = arith.constant 21 : index
    %79 = vector.load %arg23[%c0_67, %c21] : memref<32x122xf32, #tpu.memory_space<vmem>>, vector<32x100xf32>
    %c7 = arith.constant 7 : index
    %c0_68 = arith.constant 0 : index
    %c0_69 = arith.constant 0 : index
    %80 = vector.load %arg10[%c7, %c0_68, %c0_69] : memref<9x32x32xf32, #tpu.memory_space<vmem>>, vector<1x32x32xf32>
    %81 = vector.shape_cast %80 : vector<1x32x32xf32> to vector<32x32xf32>
    %cst_70 = arith.constant dense<0.000000e+00> : vector<32x100xf32>
    %82 = tpu.matmul %81, %79, %cst_70 {dimension_numbers = #tpu.dot_dimension_numbers<[1], [0], [0], [1], [0, 0, 1, 1], [], []>} : vector<32x32xf32>, vector<32x100xf32>, vector<32x100xf32> -> vector<32x100xf32>
    %83 = arith.addf %78, %82 : vector<32x100xf32>
    %c0_71 = arith.constant 0 : index
    %c22 = arith.constant 22 : index
    %84 = vector.load %arg23[%c0_71, %c22] : memref<32x122xf32, #tpu.memory_space<vmem>>, vector<32x100xf32>
    %c8 = arith.constant 8 : index
    %c0_72 = arith.constant 0 : index
    %c0_73 = arith.constant 0 : index
    %85 = vector.load %arg10[%c8, %c0_72, %c0_73] : memref<9x32x32xf32, #tpu.memory_space<vmem>>, vector<1x32x32xf32>
    %86 = vector.shape_cast %85 : vector<1x32x32xf32> to vector<32x32xf32>
    %cst_74 = arith.constant dense<0.000000e+00> : vector<32x100xf32>
    %87 = tpu.matmul %86, %84, %cst_74 {dimension_numbers = #tpu.dot_dimension_numbers<[1], [0], [0], [1], [0, 0, 1, 1], [], []>} : vector<32x32xf32>, vector<32x100xf32>, vector<32x100xf32> -> vector<32x100xf32>
    %88 = arith.addf %83, %87 : vector<32x100xf32>
    %c0_75 = arith.constant 0 : index
    %c0_76 = arith.constant 0 : index
    %89 = vector.load %arg6[%c0_75, %c0_76] : memref<32x32xf32, #tpu.memory_space<vmem>>, vector<32x32xf32>
    %c0_77 = arith.constant 0 : index
    %c0_78 = arith.constant 0 : index
    %90 = vector.load %arg11[%c0_77, %c0_78] : memref<32x1xf32, #tpu.memory_space<vmem>>, vector<32x1xf32>
    %c0_79 = arith.constant 0 : index
    %c0_80 = arith.constant 0 : index
    %91 = vector.load %arg12[%c0_79, %c0_80] : memref<32x1xf32, #tpu.memory_space<vmem>>, vector<32x1xf32>
    %cst_81 = arith.constant 0.000000e+00 : f32
    %92 = vector.shape_cast %41 : vector<1x100xi1> to vector<1x100xi1>
    %93 = vector.broadcast %92 : vector<1x100xi1> to vector<32x100xi1>
    %94 = vector.broadcast %cst_81 : f32 to vector<32x100xf32>
    %95 = arith.select %93, %88, %94 : vector<32x100xi1>, vector<32x100xf32>
    %cst_82 = arith.constant dense<0.000000e+00> : vector<32xf32>
    %96 = vector.multi_reduction <add>, %95, %cst_82 [1] : vector<32x100xf32> to vector<32xf32>
    %97 = vector.shape_cast %96 : vector<32xf32> to vector<32x1xf32>
    %cst_83 = arith.constant dense<0.000000e+00> : vector<32x1xf32>
    %98 = tpu.matmul %89, %97, %cst_83 {dimension_numbers = #tpu.dot_dimension_numbers<[1], [0], [0], [1], [0, 0, 1, 1], [], []>} : vector<32x32xf32>, vector<32x1xf32>, vector<32x1xf32> -> vector<32x1xf32>
    %cst_84 = arith.constant 7.812500e-03 : f32
    %99 = vector.broadcast %cst_84 : f32 to vector<32x1xf32>
    %100 = arith.mulf %98, %99 : vector<32x1xf32>
    %101 = vector.broadcast %100 : vector<32x1xf32> to vector<32x100xf32>
    %102 = arith.subf %95, %101 : vector<32x100xf32>
    %cst_85 = arith.constant 0.000000e+00 : f32
    %103 = vector.shape_cast %41 : vector<1x100xi1> to vector<1x100xi1>
    %104 = vector.broadcast %103 : vector<1x100xi1> to vector<32x100xi1>
    %105 = vector.broadcast %cst_85 : f32 to vector<32x100xf32>
    %106 = arith.select %104, %102, %105 : vector<32x100xi1>, vector<32x100xf32>
    %107 = arith.mulf %106, %106 : vector<32x100xf32>
    %cst_86 = arith.constant dense<0.000000e+00> : vector<32xf32>
    %108 = vector.multi_reduction <add>, %107, %cst_86 [1] : vector<32x100xf32> to vector<32xf32>
    %109 = vector.shape_cast %108 : vector<32xf32> to vector<32x1xf32>
    %cst_87 = arith.constant dense<0.000000e+00> : vector<32x1xf32>
    %110 = tpu.matmul %89, %109, %cst_87 {dimension_numbers = #tpu.dot_dimension_numbers<[1], [0], [0], [1], [0, 0, 1, 1], [], []>} : vector<32x32xf32>, vector<32x1xf32>, vector<32x1xf32> -> vector<32x1xf32>
    %cst_88 = arith.constant 7.812500e-03 : f32
    %111 = vector.broadcast %cst_88 : f32 to vector<32x1xf32>
    %112 = arith.mulf %110, %111 : vector<32x1xf32>
    %cst_89 = arith.constant 9.99999974E-6 : f32
    %113 = vector.broadcast %cst_89 : f32 to vector<32x1xf32>
    %114 = arith.addf %112, %113 : vector<32x1xf32>
    %115 = math.rsqrt %114 : vector<32x1xf32>
    %116 = vector.broadcast %115 : vector<32x1xf32> to vector<32x100xf32>
    %117 = arith.mulf %106, %116 : vector<32x100xf32>
    %118 = vector.broadcast %90 : vector<32x1xf32> to vector<32x100xf32>
    %119 = arith.mulf %117, %118 : vector<32x100xf32>
    %120 = vector.broadcast %91 : vector<32x1xf32> to vector<32x100xf32>
    %121 = arith.addf %119, %120 : vector<32x100xf32>
    %cst_90 = arith.constant 0.000000e+00 : f32
    %122 = vector.broadcast %cst_90 : f32 to vector<32x100xf32>
    %123 = arith.cmpf oge, %121, %122 : vector<32x100xf32>
    %cst_91 = arith.constant 2.000000e-01 : f32
    %124 = vector.broadcast %cst_91 : f32 to vector<32x100xf32>
    %125 = arith.mulf %124, %121 : vector<32x100xf32>
    %126 = arith.select %123, %121, %125 : vector<32x100xi1>, vector<32x100xf32>
    %cst_92 = arith.constant 0.000000e+00 : f32
    %127 = vector.shape_cast %41 : vector<1x100xi1> to vector<1x100xi1>
    %128 = vector.broadcast %127 : vector<1x100xi1> to vector<32x100xi1>
    %129 = vector.broadcast %cst_92 : f32 to vector<32x100xf32>
    %130 = arith.select %128, %126, %129 : vector<32x100xi1>, vector<32x100xf32>
    %c0_93 = arith.constant 0 : index
    %c0_94 = arith.constant 0 : index
    %131 = vector.load %arg14[%c0_93, %c0_94] : memref<100x324xf32, #tpu.memory_space<vmem>>, vector<100x324xf32>
    %cst_95 = arith.constant dense<0.000000e+00> : vector<32x324xf32>
    %132 = tpu.matmul %130, %131, %cst_95 {dimension_numbers = #tpu.dot_dimension_numbers<[1], [0], [0], [1], [0, 0, 1, 1], [], []>} : vector<32x100xf32>, vector<100x324xf32>, vector<32x324xf32> -> vector<32x324xf32>
    %c0_96 = arith.constant 0 : index
    %c0_97 = arith.constant 0 : index
    %133 = vector.load %arg19[%c0_96, %c0_97] : memref<1x324xf32, #tpu.memory_space<vmem>>, vector<1x324xf32>
    %cst_98 = arith.constant 5.000000e-01 : f32
    %134 = vector.broadcast %cst_98 : f32 to vector<1x324xf32>
    %135 = arith.cmpf ogt, %133, %134 : vector<1x324xf32>
    %c0_99 = arith.constant 0 : index
    %c19 = arith.constant 19 : index
    %136 = vector.load %arg24[%c0_99, %c19] : memref<32x362xf32, #tpu.memory_space<vmem>>, vector<32x324xf32>
    tpu.vector_store %arg24[%c0_99, %c19], %132 {strides = array<i32>} : memref<32x362xf32, #tpu.memory_space<vmem>>, vector<32x324xf32>,
    %cst_100 = arith.constant 0.000000e+00 : f32
    %137 = vector.broadcast %cst_100 : f32 to vector<16x324xf32>
    %c0_101 = arith.constant 0 : index
    %c0_102 = arith.constant 0 : index
    %138 = vector.load %arg24[%c0_101, %c0_102] : memref<32x362xf32, #tpu.memory_space<vmem>>, vector<32x324xf32>
    %c0_103 = arith.constant 0 : index
    %c0_104 = arith.constant 0 : index
    %c0_105 = arith.constant 0 : index
    %139 = vector.load %arg15[%c0_103, %c0_104, %c0_105] : memref<9x16x32xf32, #tpu.memory_space<vmem>>, vector<1x16x32xf32>
    %140 = vector.shape_cast %139 : vector<1x16x32xf32> to vector<16x32xf32>
    %cst_106 = arith.constant dense<0.000000e+00> : vector<16x324xf32>
    %141 = tpu.matmul %140, %138, %cst_106 {dimension_numbers = #tpu.dot_dimension_numbers<[1], [0], [0], [1], [0, 0, 1, 1], [], []>} : vector<16x32xf32>, vector<32x324xf32>, vector<16x324xf32> -> vector<16x324xf32>
    %142 = arith.addf %137, %141 : vector<16x324xf32>
    %c0_107 = arith.constant 0 : index
    %c1_108 = arith.constant 1 : index
    %143 = vector.load %arg24[%c0_107, %c1_108] : memref<32x362xf32, #tpu.memory_space<vmem>>, vector<32x324xf32>
    %c1_109 = arith.constant 1 : index
    %c0_110 = arith.constant 0 : index
    %c0_111 = arith.constant 0 : index
    %144 = vector.load %arg15[%c1_109, %c0_110, %c0_111] : memref<9x16x32xf32, #tpu.memory_space<vmem>>, vector<1x16x32xf32>
    %145 = vector.shape_cast %144 : vector<1x16x32xf32> to vector<16x32xf32>
    %cst_112 = arith.constant dense<0.000000e+00> : vector<16x324xf32>
    %146 = tpu.matmul %145, %143, %cst_112 {dimension_numbers = #tpu.dot_dimension_numbers<[1], [0], [0], [1], [0, 0, 1, 1], [], []>} : vector<16x32xf32>, vector<32x324xf32>, vector<16x324xf32> -> vector<16x324xf32>
    %147 = arith.addf %142, %146 : vector<16x324xf32>
    %c0_113 = arith.constant 0 : index
    %c2_114 = arith.constant 2 : index
    %148 = vector.load %arg24[%c0_113, %c2_114] : memref<32x362xf32, #tpu.memory_space<vmem>>, vector<32x324xf32>
    %c2_115 = arith.constant 2 : index
    %c0_116 = arith.constant 0 : index
    %c0_117 = arith.constant 0 : index
    %149 = vector.load %arg15[%c2_115, %c0_116, %c0_117] : memref<9x16x32xf32, #tpu.memory_space<vmem>>, vector<1x16x32xf32>
    %150 = vector.shape_cast %149 : vector<1x16x32xf32> to vector<16x32xf32>
    %cst_118 = arith.constant dense<0.000000e+00> : vector<16x324xf32>
    %151 = tpu.matmul %150, %148, %cst_118 {dimension_numbers = #tpu.dot_dimension_numbers<[1], [0], [0], [1], [0, 0, 1, 1], [], []>} : vector<16x32xf32>, vector<32x324xf32>, vector<16x324xf32> -> vector<16x324xf32>
    %152 = arith.addf %147, %151 : vector<16x324xf32>
    %c0_119 = arith.constant 0 : index
    %c18 = arith.constant 18 : index
    %153 = vector.load %arg24[%c0_119, %c18] : memref<32x362xf32, #tpu.memory_space<vmem>>, vector<32x324xf32>
    %c3_120 = arith.constant 3 : index
    %c0_121 = arith.constant 0 : index
    %c0_122 = arith.constant 0 : index
    %154 = vector.load %arg15[%c3_120, %c0_121, %c0_122] : memref<9x16x32xf32, #tpu.memory_space<vmem>>, vector<1x16x32xf32>
    %155 = vector.shape_cast %154 : vector<1x16x32xf32> to vector<16x32xf32>
    %cst_123 = arith.constant dense<0.000000e+00> : vector<16x324xf32>
    %156 = tpu.matmul %155, %153, %cst_123 {dimension_numbers = #tpu.dot_dimension_numbers<[1], [0], [0], [1], [0, 0, 1, 1], [], []>} : vector<16x32xf32>, vector<32x324xf32>, vector<16x324xf32> -> vector<16x324xf32>
    %157 = arith.addf %152, %156 : vector<16x324xf32>
    %c0_124 = arith.constant 0 : index
    %c19_125 = arith.constant 19 : index
    %158 = vector.load %arg24[%c0_124, %c19_125] : memref<32x362xf32, #tpu.memory_space<vmem>>, vector<32x324xf32>
    %c4_126 = arith.constant 4 : index
    %c0_127 = arith.constant 0 : index
    %c0_128 = arith.constant 0 : index
    %159 = vector.load %arg15[%c4_126, %c0_127, %c0_128] : memref<9x16x32xf32, #tpu.memory_space<vmem>>, vector<1x16x32xf32>
    %160 = vector.shape_cast %159 : vector<1x16x32xf32> to vector<16x32xf32>
    %cst_129 = arith.constant dense<0.000000e+00> : vector<16x324xf32>
    %161 = tpu.matmul %160, %158, %cst_129 {dimension_numbers = #tpu.dot_dimension_numbers<[1], [0], [0], [1], [0, 0, 1, 1], [], []>} : vector<16x32xf32>, vector<32x324xf32>, vector<16x324xf32> -> vector<16x324xf32>
    %162 = arith.addf %157, %161 : vector<16x324xf32>
    %c0_130 = arith.constant 0 : index
    %c20_131 = arith.constant 20 : index
    %163 = vector.load %arg24[%c0_130, %c20_131] : memref<32x362xf32, #tpu.memory_space<vmem>>, vector<32x324xf32>
    %c5_132 = arith.constant 5 : index
    %c0_133 = arith.constant 0 : index
    %c0_134 = arith.constant 0 : index
    %164 = vector.load %arg15[%c5_132, %c0_133, %c0_134] : memref<9x16x32xf32, #tpu.memory_space<vmem>>, vector<1x16x32xf32>
    %165 = vector.shape_cast %164 : vector<1x16x32xf32> to vector<16x32xf32>
    %cst_135 = arith.constant dense<0.000000e+00> : vector<16x324xf32>
    %166 = tpu.matmul %165, %163, %cst_135 {dimension_numbers = #tpu.dot_dimension_numbers<[1], [0], [0], [1], [0, 0, 1, 1], [], []>} : vector<16x32xf32>, vector<32x324xf32>, vector<16x324xf32> -> vector<16x324xf32>
    %167 = arith.addf %162, %166 : vector<16x324xf32>
    %c0_136 = arith.constant 0 : index
    %c36 = arith.constant 36 : index
    %168 = vector.load %arg24[%c0_136, %c36] : memref<32x362xf32, #tpu.memory_space<vmem>>, vector<32x324xf32>
    %c6_137 = arith.constant 6 : index
    %c0_138 = arith.constant 0 : index
    %c0_139 = arith.constant 0 : index
    %169 = vector.load %arg15[%c6_137, %c0_138, %c0_139] : memref<9x16x32xf32, #tpu.memory_space<vmem>>, vector<1x16x32xf32>
    %170 = vector.shape_cast %169 : vector<1x16x32xf32> to vector<16x32xf32>
    %cst_140 = arith.constant dense<0.000000e+00> : vector<16x324xf32>
    %171 = tpu.matmul %170, %168, %cst_140 {dimension_numbers = #tpu.dot_dimension_numbers<[1], [0], [0], [1], [0, 0, 1, 1], [], []>} : vector<16x32xf32>, vector<32x324xf32>, vector<16x324xf32> -> vector<16x324xf32>
    %172 = arith.addf %167, %171 : vector<16x324xf32>
    %c0_141 = arith.constant 0 : index
    %c37 = arith.constant 37 : index
    %173 = vector.load %arg24[%c0_141, %c37] : memref<32x362xf32, #tpu.memory_space<vmem>>, vector<32x324xf32>
    %c7_142 = arith.constant 7 : index
    %c0_143 = arith.constant 0 : index
    %c0_144 = arith.constant 0 : index
    %174 = vector.load %arg15[%c7_142, %c0_143, %c0_144] : memref<9x16x32xf32, #tpu.memory_space<vmem>>, vector<1x16x32xf32>
    %175 = vector.shape_cast %174 : vector<1x16x32xf32> to vector<16x32xf32>
    %cst_145 = arith.constant dense<0.000000e+00> : vector<16x324xf32>
    %176 = tpu.matmul %175, %173, %cst_145 {dimension_numbers = #tpu.dot_dimension_numbers<[1], [0], [0], [1], [0, 0, 1, 1], [], []>} : vector<16x32xf32>, vector<32x324xf32>, vector<16x324xf32> -> vector<16x324xf32>
    %177 = arith.addf %172, %176 : vector<16x324xf32>
    %c0_146 = arith.constant 0 : index
    %c38 = arith.constant 38 : index
    %178 = vector.load %arg24[%c0_146, %c38] : memref<32x362xf32, #tpu.memory_space<vmem>>, vector<32x324xf32>
    %c8_147 = arith.constant 8 : index
    %c0_148 = arith.constant 0 : index
    %c0_149 = arith.constant 0 : index
    %179 = vector.load %arg15[%c8_147, %c0_148, %c0_149] : memref<9x16x32xf32, #tpu.memory_space<vmem>>, vector<1x16x32xf32>
    %180 = vector.shape_cast %179 : vector<1x16x32xf32> to vector<16x32xf32>
    %cst_150 = arith.constant dense<0.000000e+00> : vector<16x324xf32>
    %181 = tpu.matmul %180, %178, %cst_150 {dimension_numbers = #tpu.dot_dimension_numbers<[1], [0], [0], [1], [0, 0, 1, 1], [], []>} : vector<16x32xf32>, vector<32x324xf32>, vector<16x324xf32> -> vector<16x324xf32>
    %182 = arith.addf %177, %181 : vector<16x324xf32>
    %c0_151 = arith.constant 0 : index
    %c0_152 = arith.constant 0 : index
    %183 = vector.load %arg16[%c0_151, %c0_152] : memref<16x16xf32, #tpu.memory_space<vmem>>, vector<16x16xf32>
    %c0_153 = arith.constant 0 : index
    %c0_154 = arith.constant 0 : index
    %184 = vector.load %arg17[%c0_153, %c0_154] : memref<16x1xf32, #tpu.memory_space<vmem>>, vector<16x1xf32>
    %c0_155 = arith.constant 0 : index
    %c0_156 = arith.constant 0 : index
    %185 = vector.load %arg18[%c0_155, %c0_156] : memref<16x1xf32, #tpu.memory_space<vmem>>, vector<16x1xf32>
    %cst_157 = arith.constant 0.000000e+00 : f32
    %186 = vector.shape_cast %135 : vector<1x324xi1> to vector<1x324xi1>
    %187 = vector.broadcast %186 : vector<1x324xi1> to vector<16x324xi1>
    %188 = vector.broadcast %cst_157 : f32 to vector<16x324xf32>
    %189 = arith.select %187, %182, %188 : vector<16x324xi1>, vector<16x324xf32>
    %cst_158 = arith.constant dense<0.000000e+00> : vector<16xf32>
    %190 = vector.multi_reduction <add>, %189, %cst_158 [1] : vector<16x324xf32> to vector<16xf32>
    %191 = vector.shape_cast %190 : vector<16xf32> to vector<16x1xf32>
    %cst_159 = arith.constant dense<0.000000e+00> : vector<16x1xf32>
    %192 = tpu.matmul %183, %191, %cst_159 {dimension_numbers = #tpu.dot_dimension_numbers<[1], [0], [0], [1], [0, 0, 1, 1], [], []>} : vector<16x16xf32>, vector<16x1xf32>, vector<16x1xf32> -> vector<16x1xf32>
    %cst_160 = arith.constant 0.001953125 : f32
    %193 = vector.broadcast %cst_160 : f32 to vector<16x1xf32>
    %194 = arith.mulf %192, %193 : vector<16x1xf32>
    %195 = vector.broadcast %194 : vector<16x1xf32> to vector<16x324xf32>
    %196 = arith.subf %189, %195 : vector<16x324xf32>
    %cst_161 = arith.constant 0.000000e+00 : f32
    %197 = vector.shape_cast %135 : vector<1x324xi1> to vector<1x324xi1>
    %198 = vector.broadcast %197 : vector<1x324xi1> to vector<16x324xi1>
    %199 = vector.broadcast %cst_161 : f32 to vector<16x324xf32>
    %200 = arith.select %198, %196, %199 : vector<16x324xi1>, vector<16x324xf32>
    %201 = arith.mulf %200, %200 : vector<16x324xf32>
    %cst_162 = arith.constant dense<0.000000e+00> : vector<16xf32>
    %202 = vector.multi_reduction <add>, %201, %cst_162 [1] : vector<16x324xf32> to vector<16xf32>
    %203 = vector.shape_cast %202 : vector<16xf32> to vector<16x1xf32>
    %cst_163 = arith.constant dense<0.000000e+00> : vector<16x1xf32>
    %204 = tpu.matmul %183, %203, %cst_163 {dimension_numbers = #tpu.dot_dimension_numbers<[1], [0], [0], [1], [0, 0, 1, 1], [], []>} : vector<16x16xf32>, vector<16x1xf32>, vector<16x1xf32> -> vector<16x1xf32>
    %cst_164 = arith.constant 0.001953125 : f32
    %205 = vector.broadcast %cst_164 : f32 to vector<16x1xf32>
    %206 = arith.mulf %204, %205 : vector<16x1xf32>
    %cst_165 = arith.constant 9.99999974E-6 : f32
    %207 = vector.broadcast %cst_165 : f32 to vector<16x1xf32>
    %208 = arith.addf %206, %207 : vector<16x1xf32>
    %209 = math.rsqrt %208 : vector<16x1xf32>
    %210 = vector.broadcast %209 : vector<16x1xf32> to vector<16x324xf32>
    %211 = arith.mulf %200, %210 : vector<16x324xf32>
    %212 = vector.broadcast %184 : vector<16x1xf32> to vector<16x324xf32>
    %213 = arith.mulf %211, %212 : vector<16x324xf32>
    %214 = vector.broadcast %185 : vector<16x1xf32> to vector<16x324xf32>
    %215 = arith.addf %213, %214 : vector<16x324xf32>
    %cst_166 = arith.constant 0.000000e+00 : f32
    %216 = vector.broadcast %cst_166 : f32 to vector<16x324xf32>
    %217 = arith.cmpf oge, %215, %216 : vector<16x324xf32>
    %cst_167 = arith.constant 2.000000e-01 : f32
    %218 = vector.broadcast %cst_167 : f32 to vector<16x324xf32>
    %219 = arith.mulf %218, %215 : vector<16x324xf32>
    %220 = arith.select %217, %215, %219 : vector<16x324xi1>, vector<16x324xf32>
    %cst_168 = arith.constant 0.000000e+00 : f32
    %221 = vector.shape_cast %135 : vector<1x324xi1> to vector<1x324xi1>
    %222 = vector.broadcast %221 : vector<1x324xi1> to vector<16x324xi1>
    %223 = vector.broadcast %cst_168 : f32 to vector<16x324xf32>
    %224 = arith.select %222, %220, %223 : vector<16x324xi1>, vector<16x324xf32>
    %c0_169 = arith.constant 0 : index
    %c19_170 = arith.constant 19 : index
    %225 = vector.load %arg25[%c0_169, %c19_170] : memref<16x362xf32, #tpu.memory_space<vmem>>, vector<16x324xf32>
    tpu.vector_store %arg25[%c0_169, %c19_170], %224 {strides = array<i32>} : memref<16x362xf32, #tpu.memory_space<vmem>>, vector<16x324xf32>,
    %cst_171 = arith.constant 0.000000e+00 : f32
    %226 = vector.broadcast %cst_171 : f32 to vector<6x324xf32>
    %c0_172 = arith.constant 0 : index
    %c0_173 = arith.constant 0 : index
    %227 = vector.load %arg25[%c0_172, %c0_173] : memref<16x362xf32, #tpu.memory_space<vmem>>, vector<16x324xf32>
    %c0_174 = arith.constant 0 : index
    %c0_175 = arith.constant 0 : index
    %c0_176 = arith.constant 0 : index
    %228 = vector.load %arg20[%c0_174, %c0_175, %c0_176] : memref<9x6x16xf32, #tpu.memory_space<vmem>>, vector<1x6x16xf32>
    %229 = vector.shape_cast %228 : vector<1x6x16xf32> to vector<6x16xf32>
    %cst_177 = arith.constant dense<0.000000e+00> : vector<6x324xf32>
    %230 = tpu.matmul %229, %227, %cst_177 {dimension_numbers = #tpu.dot_dimension_numbers<[1], [0], [0], [1], [0, 0, 1, 1], [], []>} : vector<6x16xf32>, vector<16x324xf32>, vector<6x324xf32> -> vector<6x324xf32>
    %231 = arith.addf %226, %230 : vector<6x324xf32>
    %c0_178 = arith.constant 0 : index
    %c1_179 = arith.constant 1 : index
    %232 = vector.load %arg25[%c0_178, %c1_179] : memref<16x362xf32, #tpu.memory_space<vmem>>, vector<16x324xf32>
    %c1_180 = arith.constant 1 : index
    %c0_181 = arith.constant 0 : index
    %c0_182 = arith.constant 0 : index
    %233 = vector.load %arg20[%c1_180, %c0_181, %c0_182] : memref<9x6x16xf32, #tpu.memory_space<vmem>>, vector<1x6x16xf32>
    %234 = vector.shape_cast %233 : vector<1x6x16xf32> to vector<6x16xf32>
    %cst_183 = arith.constant dense<0.000000e+00> : vector<6x324xf32>
    %235 = tpu.matmul %234, %232, %cst_183 {dimension_numbers = #tpu.dot_dimension_numbers<[1], [0], [0], [1], [0, 0, 1, 1], [], []>} : vector<6x16xf32>, vector<16x324xf32>, vector<6x324xf32> -> vector<6x324xf32>
    %236 = arith.addf %231, %235 : vector<6x324xf32>
    %c0_184 = arith.constant 0 : index
    %c2_185 = arith.constant 2 : index
    %237 = vector.load %arg25[%c0_184, %c2_185] : memref<16x362xf32, #tpu.memory_space<vmem>>, vector<16x324xf32>
    %c2_186 = arith.constant 2 : index
    %c0_187 = arith.constant 0 : index
    %c0_188 = arith.constant 0 : index
    %238 = vector.load %arg20[%c2_186, %c0_187, %c0_188] : memref<9x6x16xf32, #tpu.memory_space<vmem>>, vector<1x6x16xf32>
    %239 = vector.shape_cast %238 : vector<1x6x16xf32> to vector<6x16xf32>
    %cst_189 = arith.constant dense<0.000000e+00> : vector<6x324xf32>
    %240 = tpu.matmul %239, %237, %cst_189 {dimension_numbers = #tpu.dot_dimension_numbers<[1], [0], [0], [1], [0, 0, 1, 1], [], []>} : vector<6x16xf32>, vector<16x324xf32>, vector<6x324xf32> -> vector<6x324xf32>
    %241 = arith.addf %236, %240 : vector<6x324xf32>
    %c0_190 = arith.constant 0 : index
    %c18_191 = arith.constant 18 : index
    %242 = vector.load %arg25[%c0_190, %c18_191] : memref<16x362xf32, #tpu.memory_space<vmem>>, vector<16x324xf32>
    %c3_192 = arith.constant 3 : index
    %c0_193 = arith.constant 0 : index
    %c0_194 = arith.constant 0 : index
    %243 = vector.load %arg20[%c3_192, %c0_193, %c0_194] : memref<9x6x16xf32, #tpu.memory_space<vmem>>, vector<1x6x16xf32>
    %244 = vector.shape_cast %243 : vector<1x6x16xf32> to vector<6x16xf32>
    %cst_195 = arith.constant dense<0.000000e+00> : vector<6x324xf32>
    %245 = tpu.matmul %244, %242, %cst_195 {dimension_numbers = #tpu.dot_dimension_numbers<[1], [0], [0], [1], [0, 0, 1, 1], [], []>} : vector<6x16xf32>, vector<16x324xf32>, vector<6x324xf32> -> vector<6x324xf32>
    %246 = arith.addf %241, %245 : vector<6x324xf32>
    %c0_196 = arith.constant 0 : index
    %c19_197 = arith.constant 19 : index
    %247 = vector.load %arg25[%c0_196, %c19_197] : memref<16x362xf32, #tpu.memory_space<vmem>>, vector<16x324xf32>
    %c4_198 = arith.constant 4 : index
    %c0_199 = arith.constant 0 : index
    %c0_200 = arith.constant 0 : index
    %248 = vector.load %arg20[%c4_198, %c0_199, %c0_200] : memref<9x6x16xf32, #tpu.memory_space<vmem>>, vector<1x6x16xf32>
    %249 = vector.shape_cast %248 : vector<1x6x16xf32> to vector<6x16xf32>
    %cst_201 = arith.constant dense<0.000000e+00> : vector<6x324xf32>
    %250 = tpu.matmul %249, %247, %cst_201 {dimension_numbers = #tpu.dot_dimension_numbers<[1], [0], [0], [1], [0, 0, 1, 1], [], []>} : vector<6x16xf32>, vector<16x324xf32>, vector<6x324xf32> -> vector<6x324xf32>
    %251 = arith.addf %246, %250 : vector<6x324xf32>
    %c0_202 = arith.constant 0 : index
    %c20_203 = arith.constant 20 : index
    %252 = vector.load %arg25[%c0_202, %c20_203] : memref<16x362xf32, #tpu.memory_space<vmem>>, vector<16x324xf32>
    %c5_204 = arith.constant 5 : index
    %c0_205 = arith.constant 0 : index
    %c0_206 = arith.constant 0 : index
    %253 = vector.load %arg20[%c5_204, %c0_205, %c0_206] : memref<9x6x16xf32, #tpu.memory_space<vmem>>, vector<1x6x16xf32>
    %254 = vector.shape_cast %253 : vector<1x6x16xf32> to vector<6x16xf32>
    %cst_207 = arith.constant dense<0.000000e+00> : vector<6x324xf32>
    %255 = tpu.matmul %254, %252, %cst_207 {dimension_numbers = #tpu.dot_dimension_numbers<[1], [0], [0], [1], [0, 0, 1, 1], [], []>} : vector<6x16xf32>, vector<16x324xf32>, vector<6x324xf32> -> vector<6x324xf32>
    %256 = arith.addf %251, %255 : vector<6x324xf32>
    %c0_208 = arith.constant 0 : index
    %c36_209 = arith.constant 36 : index
    %257 = vector.load %arg25[%c0_208, %c36_209] : memref<16x362xf32, #tpu.memory_space<vmem>>, vector<16x324xf32>
    %c6_210 = arith.constant 6 : index
    %c0_211 = arith.constant 0 : index
    %c0_212 = arith.constant 0 : index
    %258 = vector.load %arg20[%c6_210, %c0_211, %c0_212] : memref<9x6x16xf32, #tpu.memory_space<vmem>>, vector<1x6x16xf32>
    %259 = vector.shape_cast %258 : vector<1x6x16xf32> to vector<6x16xf32>
    %cst_213 = arith.constant dense<0.000000e+00> : vector<6x324xf32>
    %260 = tpu.matmul %259, %257, %cst_213 {dimension_numbers = #tpu.dot_dimension_numbers<[1], [0], [0], [1], [0, 0, 1, 1], [], []>} : vector<6x16xf32>, vector<16x324xf32>, vector<6x324xf32> -> vector<6x324xf32>
    %261 = arith.addf %256, %260 : vector<6x324xf32>
    %c0_214 = arith.constant 0 : index
    %c37_215 = arith.constant 37 : index
    %262 = vector.load %arg25[%c0_214, %c37_215] : memref<16x362xf32, #tpu.memory_space<vmem>>, vector<16x324xf32>
    %c7_216 = arith.constant 7 : index
    %c0_217 = arith.constant 0 : index
    %c0_218 = arith.constant 0 : index
    %263 = vector.load %arg20[%c7_216, %c0_217, %c0_218] : memref<9x6x16xf32, #tpu.memory_space<vmem>>, vector<1x6x16xf32>
    %264 = vector.shape_cast %263 : vector<1x6x16xf32> to vector<6x16xf32>
    %cst_219 = arith.constant dense<0.000000e+00> : vector<6x324xf32>
    %265 = tpu.matmul %264, %262, %cst_219 {dimension_numbers = #tpu.dot_dimension_numbers<[1], [0], [0], [1], [0, 0, 1, 1], [], []>} : vector<6x16xf32>, vector<16x324xf32>, vector<6x324xf32> -> vector<6x324xf32>
    %266 = arith.addf %261, %265 : vector<6x324xf32>
    %c0_220 = arith.constant 0 : index
    %c38_221 = arith.constant 38 : index
    %267 = vector.load %arg25[%c0_220, %c38_221] : memref<16x362xf32, #tpu.memory_space<vmem>>, vector<16x324xf32>
    %c8_222 = arith.constant 8 : index
    %c0_223 = arith.constant 0 : index
    %c0_224 = arith.constant 0 : index
    %268 = vector.load %arg20[%c8_222, %c0_223, %c0_224] : memref<9x6x16xf32, #tpu.memory_space<vmem>>, vector<1x6x16xf32>
    %269 = vector.shape_cast %268 : vector<1x6x16xf32> to vector<6x16xf32>
    %cst_225 = arith.constant dense<0.000000e+00> : vector<6x324xf32>
    %270 = tpu.matmul %269, %267, %cst_225 {dimension_numbers = #tpu.dot_dimension_numbers<[1], [0], [0], [1], [0, 0, 1, 1], [], []>} : vector<6x16xf32>, vector<16x324xf32>, vector<6x324xf32> -> vector<6x324xf32>
    %271 = arith.addf %266, %270 : vector<6x324xf32>
    %c0_226 = arith.constant 0 : index
    %c0_227 = arith.constant 0 : index
    %272 = vector.load %arg21[%c0_226, %c0_227] : memref<6x1xf32, #tpu.memory_space<vmem>>, vector<6x1xf32>
    %273 = vector.broadcast %272 : vector<6x1xf32> to vector<6x324xf32>
    %274 = arith.addf %271, %273 : vector<6x324xf32>
    %cst_228 = arith.constant 0.000000e+00 : f32
    %275 = vector.shape_cast %135 : vector<1x324xi1> to vector<1x324xi1>
    %276 = vector.broadcast %275 : vector<1x324xi1> to vector<6x324xi1>
    %277 = vector.broadcast %cst_228 : f32 to vector<6x324xf32>
    %278 = arith.select %276, %274, %277 : vector<6x324xi1>, vector<6x324xf32>
    %279 = arith.negf %278 : vector<6x324xf32>
    %280 = math.exp %279 : vector<6x324xf32>
    %cst_229 = arith.constant 1.000000e+00 : f32
    %281 = vector.broadcast %cst_229 : f32 to vector<6x324xf32>
    %282 = arith.addf %281, %280 : vector<6x324xf32>
    %283 = arith.divf %281, %282 : vector<6x324xf32>
    %c0_230 = arith.constant 0 : index
    %c0_231 = arith.constant 0 : index
    %284 = vector.load %arg22[%c0_230, %c0_231] : memref<6x324xf32, #tpu.memory_space<vmem>>, vector<6x324xf32>
    tpu.vector_store %arg22[%c0_230, %c0_231], %283 {strides = array<i32>} : memref<6x324xf32, #tpu.memory_space<vmem>>, vector<6x324xf32>,
    return
  }
}

</mosaic_0001>

<llo_original>
// kernel: generator_forward.1
$region0: #{generator_forward.1}
  #allocation0 [shape = 'u32[]', space=smem, size = 0x4, offset = 0x4, fixed_abs, tag = 'smem constant byte address 0x4 - core index']
  #allocation1 [shape = 'u32[144,128]{1,0:T(1,128)}', space=vmem, size = 0x12000, scoped, tag = 'internal scratch']
  #allocation2 [shape = 'f32[32,122]{1,0:T(8,128)}', space=vmem, size = 0x4000, scoped, tag = 'scratch operand']
  #allocation3 [shape = 'f32[32,362]{1,0:T(8,128)}', space=vmem, size = 0xc000, scoped, tag = 'scratch operand']
  #allocation4 [shape = 'f32[16,362]{1,0:T(8,128)}', space=vmem, size = 0x6000, scoped, tag = 'scratch operand']
  %s0 = inlined_call_operand.hbm [shape: f32[2,32], index: 0, kind: input, shape index: {}]
  %s1 = inlined_call_operand.hbm [shape: f32[32,256], index: 1, kind: input, shape index: {}]
  %s2 = inlined_call_operand.hbm [shape: f32[1,256], index: 2, kind: input, shape index: {}]
  %s3 = inlined_call_operand.vmem [shape: f32[32,2], index: 3, kind: input, shape index: {}]
  %s4 = inlined_call_operand.hbm [shape: f32[32,256], index: 4, kind: input, shape index: {}]
  %s5 = inlined_call_operand.vmem [shape: f32[256,16], index: 5, kind: input, shape index: {}]
  %s6 = inlined_call_operand.hbm [shape: f32[32,32], index: 6, kind: input, shape index: {}]
  %s7 = inlined_call_operand.vmem [shape: f32[32,1], index: 7, kind: input, shape index: {}]
  %s8 = inlined_call_operand.vmem [shape: f32[32,1], index: 8, kind: input, shape index: {}]
  %s9 = inlined_call_operand.hbm [shape: f32[16,100], index: 9, kind: input, shape index: {}]
  %s10 = inlined_call_operand.hbm [shape: f32[9,32,32], index: 10, kind: input, shape index: {}]
  %s11 = inlined_call_operand.vmem [shape: f32[32,1], index: 11, kind: input, shape index: {}]
  %s12 = inlined_call_operand.vmem [shape: f32[32,1], index: 12, kind: input, shape index: {}]
  %s13 = inlined_call_operand.vmem [shape: f32[1,100], index: 13, kind: input, shape index: {}]
  %s14 = inlined_call_operand.vmem [shape: f32[100,324], index: 14, kind: input, shape index: {}]
  %s15 = inlined_call_operand.vmem [shape: f32[9,16,32], index: 15, kind: input, shape index: {}]
  %s16 = inlined_call_operand.hbm [shape: f32[16,16], index: 16, kind: input, shape index: {}]
  %s17 = inlined_call_operand.vmem [shape: f32[16,1], index: 17, kind: input, shape index: {}]
  %s18 = inlined_call_operand.vmem [shape: f32[16,1], index: 18, kind: input, shape index: {}]
  %s19 = inlined_call_operand.hbm [shape: f32[1,324], index: 19, kind: input, shape index: {}]
  %s20 = inlined_call_operand.vmem [shape: f32[9,6,16], index: 20, kind: input, shape index: {}]
  %s21 = inlined_call_operand.vmem [shape: f32[6,1], index: 21, kind: input, shape index: {}]
  %s22 = inlined_call_operand.vmem [shape: f32[6,324], index: 22, kind: output, shape index: {}]
  %s23 = sld [smem:[#allocation0]]
  $region134: #{generator_forward.1} parent=0
    _
  %s25 = ssub.s32 1, %s23
  %s26 = scalar_select 0, %s25, %s23
  $region1: #{generator_forward.1} parent=0
    #allocation5 [shape = 'u8[1024]{0}', space=vmem, size = 0x400, scoped, tag = 'input window, operand 0, single buffered']
    #allocation6 [shape = 's32[1]{0}', space=sflag, size = 0x4, scoped, tag = 'scoped memory for generator_forward.1']
    #allocation7 [shape = 'u8[32768]{0}', space=vmem, size = 0x8000, scoped, tag = 'input window, operand 1, single buffered']
    #allocation8 [shape = 's32[1]{0}', space=sflag, size = 0x4, scoped, tag = 'scoped memory for generator_forward.1']
    #allocation9 [shape = 'u8[1024]{0}', space=vmem, size = 0x400, scoped, tag = 'input window, operand 2, single buffered']
    #allocation10 [shape = 'u8[32768]{0}', space=vmem, size = 0x8000, scoped, tag = 'input window, operand 4, single buffered']
    #allocation11 [shape = 's32[1]{0}', space=sflag, size = 0x4, scoped, tag = 'scoped memory for generator_forward.1']
    #allocation12 [shape = 'u8[16384]{0}', space=vmem, size = 0x4000, scoped, tag = 'input window, operand 6, single buffered']
    #allocation13 [shape = 'u8[8192]{0}', space=vmem, size = 0x2000, scoped, tag = 'input window, operand 9, single buffered']
    #allocation14 [shape = 's32[1]{0}', space=sflag, size = 0x4, scoped, tag = 'scoped memory for generator_forward.1']
    #allocation15 [shape = 'u8[147456]{0}', space=vmem, size = 0x24000, scoped, tag = 'input window, operand 10, single buffered']
    #allocation16 [shape = 'u8[8192]{0}', space=vmem, size = 0x2000, scoped, tag = 'input window, operand 16, single buffered']
    #allocation17 [shape = 's32[1]{0}', space=sflag, size = 0x4, scoped, tag = 'scoped memory for generator_forward.1']
    #allocation18 [shape = 'u8[1536]{0}', space=vmem, size = 0x800, scoped, tag = 'input window, operand 19, single buffered']
    %27 = vsyncpa [#allocation6], 0
    %28 = vsyncpa [#allocation8], 0
    %29 = vsyncpa [#allocation11], 0
    %30 = vsyncpa [#allocation14], 0
    %31 = vsyncpa [#allocation17], 0
    // Predicated region
    $region2: #{generator_forward.1} parent=1 // pred_check
      _
    $region3: #{generator_forward.1} parent=1 // pred_check_branch
      %33 = sbr.rel (0) target = $region5
    $region4: #{generator_forward.1} parent=1 // pred_region
      %s35 = ssub.s32 32, 32
      %36 = vsyncadd [#allocation6], %s35
      %s38 = sshll.u32 [#allocation5], 4
      %s39 = int_to_ptr.vmem [resolvable:$true] %s38
      %41 = dma.hbm_to_vmem [thread:$0]  %s0, 32, %s39, [#allocation6]
    $region5: #{generator_forward.1} parent=1 // pred_fallthru
      _
    // Predicated region
    $region6: #{generator_forward.1} parent=1 // pred_check
      _
    $region7: #{generator_forward.1} parent=1 // pred_check_branch
      %43 = sbr.rel (0) target = $region9
    $region8: #{generator_forward.1} parent=1 // pred_region
      %s45 = ssub.s32 1024, 1024
      %46 = vsyncadd [#allocation8], %s45
      %s47 = sshll.u32 [#allocation7], 4
      %s48 = int_to_ptr.vmem [resolvable:$true] %s47
      %53 = dma.hbm_to_vmem [thread:$0]  %s1, 1024, %s48, [#allocation8], 256, 256, 16
    $region9: #{generator_forward.1} parent=1 // pred_fallthru
      _
    // Predicated region
    $region10: #{generator_forward.1} parent=1 // pred_check
      _
    $region11: #{generator_forward.1} parent=1 // pred_check_branch
      %55 = sbr.rel (0) target = $region13
    $region12: #{generator_forward.1} parent=1 // pred_region
      %s57 = ssub.s32 32, 32
      %58 = vsyncadd [#allocation8], %s57
      %s60 = sshll.u32 [#allocation9], 4
      %s61 = int_to_ptr.vmem [resolvable:$true] %s60
      %63 = dma.hbm_to_vmem [thread:$0]  %s2, 32, %s61, [#allocation8]
    $region13: #{generator_forward.1} parent=1 // pred_fallthru
      _
    // Predicated region
    $region14: #{generator_forward.1} parent=1 // pred_check
      _
    $region15: #{generator_forward.1} parent=1 // pred_check_branch
      %65 = sbr.rel (0) target = $region17
    $region16: #{generator_forward.1} parent=1 // pred_region
      _
    $region17: #{generator_forward.1} parent=1 // pred_fallthru
      _
    // Predicated region
    $region18: #{generator_forward.1} parent=1 // pred_check
      _
    $region19: #{generator_forward.1} parent=1 // pred_check_branch
      %67 = sbr.rel (0) target = $region21
    $region20: #{generator_forward.1} parent=1 // pred_region
      %s69 = ssub.s32 1024, 1024
      %70 = vsyncadd [#allocation11], %s69
      %s71 = sshll.u32 [#allocation10], 4
      %s72 = int_to_ptr.vmem [resolvable:$true] %s71
      %77 = dma.hbm_to_vmem [thread:$0]  %s4, 1024, %s72, [#allocation11], 256, 256, 16
    $region21: #{generator_forward.1} parent=1 // pred_fallthru
      _
    // Predicated region
    $region22: #{generator_forward.1} parent=1 // pred_check
      _
    $region23: #{generator_forward.1} parent=1 // pred_check_branch
      %79 = sbr.rel (0) target = $region25
    $region24: #{generator_forward.1} parent=1 // pred_region
      _
    $region25: #{generator_forward.1} parent=1 // pred_fallthru
      _
    // Predicated region
    $region26: #{generator_forward.1} parent=1 // pred_check
      _
    $region27: #{generator_forward.1} parent=1 // pred_check_branch
      %81 = sbr.rel (0) target = $region29
    $region28: #{generator_forward.1} parent=1 // pred_region
      %s83 = ssub.s32 512, 512
      %84 = vsyncadd [#allocation11], %s83
      %s85 = sshll.u32 [#allocation12], 4
      %s86 = int_to_ptr.vmem [resolvable:$true] %s85
      %91 = dma.hbm_to_vmem [thread:$0]  %s6, 512, %s86, [#allocation11], 128, 128, 8
    $region29: #{generator_forward.1} parent=1 // pred_fallthru
      _
    // Predicated region
    $region30: #{generator_forward.1} parent=1 // pred_check
      _
    $region31: #{generator_forward.1} parent=1 // pred_check_branch
      %93 = sbr.rel (0) target = $region33
    $region32: #{generator_forward.1} parent=1 // pred_region
      _
    $region33: #{generator_forward.1} parent=1 // pred_fallthru
      _
    // Predicated region
    $region34: #{generator_forward.1} parent=1 // pred_check
      _
    $region35: #{generator_forward.1} parent=1 // pred_check_branch
      %95 = sbr.rel (0) target = $region37
    $region36: #{generator_forward.1} parent=1 // pred_region
      _
    $region37: #{generator_forward.1} parent=1 // pred_fallthru
      _
    // Predicated region
    $region38: #{generator_forward.1} parent=1 // pred_check
      _
    $region39: #{generator_forward.1} parent=1 // pred_check_branch
      %97 = sbr.rel (0) target = $region41
    $region40: #{generator_forward.1} parent=1 // pred_region
      %s99 = ssub.s32 256, 256
      %100 = vsyncadd [#allocation14], %s99
      %s101 = sshll.u32 [#allocation13], 4
      %s102 = int_to_ptr.vmem [resolvable:$true] %s101
      %107 = dma.hbm_to_vmem [thread:$0]  %s9, 256, %s102, [#allocation14], 128, 128, 8
    $region41: #{generator_forward.1} parent=1 // pred_fallthru
      _
    // Predicated region
    $region42: #{generator_forward.1} parent=1 // pred_check
      _
    $region43: #{generator_forward.1} parent=1 // pred_check_branch
      %109 = sbr.rel (0) target = $region45
    $region44: #{generator_forward.1} parent=1 // pred_region
      %s111 = ssub.s32 4608, 4608
      %112 = vsyncadd [#allocation14], %s111
      %s113 = sshll.u32 [#allocation15], 4
      %s114 = int_to_ptr.vmem [resolvable:$true] %s113
      %119 = dma.hbm_to_vmem [thread:$0]  %s10, 4608, %s114, [#allocation14], 128, 128, 8
    $region45: #{generator_forward.1} parent=1 // pred_fallthru
      _
    // Predicated region
    $region46: #{generator_forward.1} parent=1 // pred_check
      _
    $region47: #{generator_forward.1} parent=1 // pred_check_branch
      %121 = sbr.rel (0) target = $region49
    $region48: #{generator_forward.1} parent=1 // pred_region
      _
    $region49: #{generator_forward.1} parent=1 // pred_fallthru
      _
    // Predicated region
    $region50: #{generator_forward.1} parent=1 // pred_check
      _
    $region51: #{generator_forward.1} parent=1 // pred_check_branch
      %123 = sbr.rel (0) target = $region53
    $region52: #{generator_forward.1} parent=1 // pred_region
      _
    $region53: #{generator_forward.1} parent=1 // pred_fallthru
      _
    // Predicated region
    $region54: #{generator_forward.1} parent=1 // pred_check
      _
    $region55: #{generator_forward.1} parent=1 // pred_check_branch
      %125 = sbr.rel (0) target = $region57
    $region56: #{generator_forward.1} parent=1 // pred_region
      _
    $region57: #{generator_forward.1} parent=1 // pred_fallthru
      _
    // Predicated region
    $region58: #{generator_forward.1} parent=1 // pred_check
      _
    $region59: #{generator_forward.1} parent=1 // pred_check_branch
      %127 = sbr.rel (0) target = $region61
    $region60: #{generator_forward.1} parent=1 // pred_region
      _
    $region61: #{generator_forward.1} parent=1 // pred_fallthru
      _
    // Predicated region
    $region62: #{generator_forward.1} parent=1 // pred_check
      _
    $region63: #{generator_forward.1} parent=1 // pred_check_branch
      %129 = sbr.rel (0) target = $region65
    $region64: #{generator_forward.1} parent=1 // pred_region
      _
    $region65: #{generator_forward.1} parent=1 // pred_fallthru
      _
    // Predicated region
    $region66: #{generator_forward.1} parent=1 // pred_check
      _
    $region67: #{generator_forward.1} parent=1 // pred_check_branch
      %131 = sbr.rel (0) target = $region69
    $region68: #{generator_forward.1} parent=1 // pred_region
      %s133 = ssub.s32 256, 256
      %134 = vsyncadd [#allocation17], %s133
      %s135 = sshll.u32 [#allocation16], 4
      %s136 = int_to_ptr.vmem [resolvable:$true] %s135
      %141 = dma.hbm_to_vmem [thread:$0]  %s16, 256, %s136, [#allocation17], 128, 128, 8
    $region69: #{generator_forward.1} parent=1 // pred_fallthru
      _
    // Predicated region
    $region70: #{generator_forward.1} parent=1 // pred_check
      _
    $region71: #{generator_forward.1} parent=1 // pred_check_branch
      %143 = sbr.rel (0) target = $region73
    $region72: #{generator_forward.1} parent=1 // pred_region
      _
    $region73: #{generator_forward.1} parent=1 // pred_fallthru
      _
    // Predicated region
    $region74: #{generator_forward.1} parent=1 // pred_check
      _
    $region75: #{generator_forward.1} parent=1 // pred_check_branch
      %145 = sbr.rel (0) target = $region77
    $region76: #{generator_forward.1} parent=1 // pred_region
      _
    $region77: #{generator_forward.1} parent=1 // pred_fallthru
      _
    // Predicated region
    $region78: #{generator_forward.1} parent=1 // pred_check
      _
    $region79: #{generator_forward.1} parent=1 // pred_check_branch
      %147 = sbr.rel (0) target = $region81
    $region80: #{generator_forward.1} parent=1 // pred_region
      %s149 = ssub.s32 48, 48
      %150 = vsyncadd [#allocation17], %s149
      %s152 = sshll.u32 [#allocation18], 4
      %s153 = int_to_ptr.vmem [resolvable:$true] %s152
      %155 = dma.hbm_to_vmem [thread:$0]  %s19, 48, %s153, [#allocation17]
    $region81: #{generator_forward.1} parent=1 // pred_fallthru
      _
    // Predicated region
    $region82: #{generator_forward.1} parent=1 // pred_check
      _
    $region83: #{generator_forward.1} parent=1 // pred_check_branch
      %157 = sbr.rel (0) target = $region85
    $region84: #{generator_forward.1} parent=1 // pred_region
      _
    $region85: #{generator_forward.1} parent=1 // pred_fallthru
      _
    // Predicated region
    $region86: #{generator_forward.1} parent=1 // pred_check
      _
    $region87: #{generator_forward.1} parent=1 // pred_check_branch
      %159 = sbr.rel (0) target = $region89
    $region88: #{generator_forward.1} parent=1 // pred_region
      _
    $region89: #{generator_forward.1} parent=1 // pred_fallthru
      _
    // Predicated region
    $region90: #{generator_forward.1} parent=1 // pred_check
      _
    $region91: #{generator_forward.1} parent=1 // pred_check_branch
      %161 = sbr.rel (0) target = $region93
    $region92: #{generator_forward.1} parent=1 // pred_region
      %162 = dma.done [#allocation6], 32
    $region93: #{generator_forward.1} parent=1 // pred_fallthru
      _
    // Predicated region
    $region94: #{generator_forward.1} parent=1 // pred_check
      _
    $region95: #{generator_forward.1} parent=1 // pred_check_branch
      %164 = sbr.rel (0) target = $region97
    $region96: #{generator_forward.1} parent=1 // pred_region
      %165 = dma.done [#allocation8], 1024
    $region97: #{generator_forward.1} parent=1 // pred_fallthru
      _
    // Predicated region
    $region98: #{generator_forward.1} parent=1 // pred_check
      _
    $region99: #{generator_forward.1} parent=1 // pred_check_branch
      %167 = sbr.rel (0) target = $region101
    $region100: #{generator_forward.1} parent=1 // pred_region
      %168 = dma.done [#allocation8], 32
    $region101: #{generator_forward.1} parent=1 // pred_fallthru
      _
    // Predicated region
    $region102: #{generator_forward.1} parent=1 // pred_check
      _
    $region103: #{generator_forward.1} parent=1 // pred_check_branch
      %170 = sbr.rel (0) target = $region105
    $region104: #{generator_forward.1} parent=1 // pred_region
      %171 = dma.done [#allocation11], 1024
    $region105: #{generator_forward.1} parent=1 // pred_fallthru
      _
    // Predicated region
    $region106: #{generator_forward.1} parent=1 // pred_check
      _
    $region107: #{generator_forward.1} parent=1 // pred_check_branch
      %173 = sbr.rel (0) target = $region109
    $region108: #{generator_forward.1} parent=1 // pred_region
      %174 = dma.done [#allocation11], 512
    $region109: #{generator_forward.1} parent=1 // pred_fallthru
      _
    // Predicated region
    $region110: #{generator_forward.1} parent=1 // pred_check
      _
    $region111: #{generator_forward.1} parent=1 // pred_check_branch
      %176 = sbr.rel (0) target = $region113
    $region112: #{generator_forward.1} parent=1 // pred_region
      %177 = dma.done [#allocation14], 256
    $region113: #{generator_forward.1} parent=1 // pred_fallthru
      _
    // Predicated region
    $region114: #{generator_forward.1} parent=1 // pred_check
      _
    $region115: #{generator_forward.1} parent=1 // pred_check_branch
      %179 = sbr.rel (0) target = $region117
    $region116: #{generator_forward.1} parent=1 // pred_region
      %180 = dma.done [#allocation14], 4608
    $region117: #{generator_forward.1} parent=1 // pred_fallthru
      _
    // Predicated region
    $region118: #{generator_forward.1} parent=1 // pred_check
      _
    $region119: #{generator_forward.1} parent=1 // pred_check_branch
      %182 = sbr.rel (0) target = $region121
    $region120: #{generator_forward.1} parent=1 // pred_region
      %183 = dma.done [#allocation17], 256
    $region121: #{generator_forward.1} parent=1 // pred_fallthru
      _
    // Predicated region
    $region122: #{generator_forward.1} parent=1 // pred_check
      _
    $region123: #{generator_forward.1} parent=1 // pred_check_branch
      %185 = sbr.rel (0) target = $region125
    $region124: #{generator_forward.1} parent=1 // pred_region
      %186 = dma.done [#allocation17], 48
    $region125: #{generator_forward.1} parent=1 // pred_fallthru
      _
    %v187 = vld [vmem:[#allocation5] sm:$0x3]
    %v188 = vld [vmem:[#allocation7] sm:$0xff]
    %v189 = vld [vmem:[#allocation7 + $0x8] sm:$0xff]
    %v190 = vld [vmem:[#allocation7 + $0x10] sm:$0xff]
    %v191 = vld [vmem:[#allocation7 + $0x18] sm:$0xff]
    %v192 = vld [vmem:[#allocation7 + $0x20] sm:$0xff]
    %v193 = vld [vmem:[#allocation7 + $0x28] sm:$0xff]
    %v194 = vld [vmem:[#allocation7 + $0x30] sm:$0xff]
    %v195 = vld [vmem:[#allocation7 + $0x38] sm:$0xff]
    %v196 = vld [vmem:[#allocation9] sm:$0x3]
    %v198 = vlaneseq
    %v199 = vshrl.u32 %v198, 7
    %v200 = vsub.s32 0, %v199
    %v201 = vrot.slane %v196, %v200
    %v202 = vlaneseq
    %v203 = vshrl.u32 %v202, 7
    %v204 = vsub.s32 1, %v203
    %v205 = vrot.slane %v196, %v204
    %vm208 = vcmask 261120
    %v210 = vsel %vm208, %v187, 0
    %212 = vmatprep.subr.mxu0 0.0
    %213 = vmatpush1.msra.mxu0 0.0
    %214 = vmatprep.subr.mxu0 0.0
    %215 = vmatpush1.msra.mxu0 0.0
    %216 = vmatprep.subr.mxu0 0.0
    %217 = vmatpush1.msra.mxu0 0.0
    %218 = vmatprep.subr.mxu0 0.0
    %219 = vmatpush1.msra.mxu0 0.0
    %220 = vmatprep.subr.mxu0 0.0
    %221 = vmatpush1.msra.mxu0 0.0
    %222 = vmatprep.subr.mxu0 0.0
    %223 = vmatpush1.msra.mxu0 0.0
    %224 = vmatprep.subr.mxu0 0.0
    %225 = vmatpush1.msra.mxu0 0.0
    %226 = vmatprep.subr.mxu0 0.0
    %227 = vmatpush1.msra.mxu0 0.0
    %228 = vmatprep.subr.mxu0 0.0
    %229 = vmatpush1.msra.mxu0 0.0
    %230 = vmatprep.subr.mxu0 0.0
    %231 = vmatpush1.msra.mxu0 0.0
    %232 = vmatprep.subr.mxu0 0.0
    %233 = vmatpush1.msra.mxu0 0.0
    %234 = vmatprep.subr.mxu0 0.0
    %235 = vmatpush1.msra.mxu0 0.0
    %236 = vmatprep.subr.mxu0 %v195
    %237 = vmatpush1.msra.mxu0 %v194
    %238 = vmatprep.subr.mxu0 %v193
    %239 = vmatpush1.msra.mxu0 %v192
    %240 = vmatprep.subr.mxu0 %v191
    %241 = vmatpush1.msra.mxu0 %v190
    %242 = vmatprep.subr.mxu0 %v189
    %243 = vmatpush1.msra.mxu0 %v188
    %244 = vmatprep.subr.mxu0 0.0
    %245 = vmatpush2.msra.mxu0 0.0
    %246 = vmatprep.subr.mxu0 0.0
    %247 = vmatpush2.msra.mxu0 0.0
    %248 = vmatprep.subr.mxu0 0.0
    %249 = vmatpush2.msra.mxu0 0.0
    %250 = vmatprep.subr.mxu0 0.0
    %251 = vmatpush2.msra.mxu0 0.0
    %252 = vmatprep.subr.mxu0 0.0
    %253 = vmatpush2.msra.mxu0 0.0
    %254 = vmatprep.subr.mxu0 0.0
    %255 = vmatpush2.msra.mxu0 0.0
    %256 = vmatprep.subr.mxu0 0.0
    %257 = vmatpush2.msra.mxu0 0.0
    %258 = vmatprep.subr.mxu0 0.0
    %259 = vmatpush2.msra.mxu0 0.0
    %260 = vmatprep.subr.mxu0 0.0
    %261 = vmatpush2.msra.mxu0 0.0
    %262 = vmatprep.subr.mxu0 0.0
    %263 = vmatpush2.msra.mxu0 0.0
    %264 = vmatprep.subr.mxu0 0.0
    %265 = vmatpush2.msra.mxu0 0.0
    %266 = vmatprep.subr.mxu0 0.0
    %267 = vmatpush2.msra.mxu0 0.0
    %268 = vmatprep.subr.mxu0 0.0
    %269 = vmatpush2.msra.mxu0 0.0
    %270 = vmatprep.subr.mxu0 0.0
    %271 = vmatpush2.msra.mxu0 0.0
    %272 = vmatprep.subr.mxu0 0.0
    %273 = vmatpush2.msra.mxu0 0.0
    %274 = vmatprep.subr.mxu0 0.0
    %275 = vmatpush2.msra.mxu0 0.0
    %276 = vmatprep.mubr.f32.mxu0 0.0
    %277 = vmatmul.mubr.f32.gmra.mxu0 %v210
    %v278 = vpop.f32.mrf.mxu0
    %v279 = vadd.f32 %v201, %v278
    %v280 = vpop.f32.mrf.mxu0
    %v281 = vadd.f32 %v205, %v280
    %282 = vdwg.mxu0
    %v283 = vld [vmem:[%s3] sm:$0xff]
    %v284 = vld [vmem:[%s3 + $0x8] sm:$0xff]
    %v285 = vld [vmem:[%s3 + $0x10] sm:$0xff]
    %v286 = vld [vmem:[%s3 + $0x18] sm:$0xff]
    %vm287 = vcmask 15360
    %v289 = vsel %vm287, %v283, 0
    %v292 = vsel %vm287, %v284, 0
    %v295 = vsel %vm287, %v285, 0
    %v298 = vsel %vm287, %v286, 0
    %vm300 = vcmask 1041408
    %v302 = vsel %vm300, %v279, 0
    %v305 = vsel %vm300, %v281, 0
    %307 = vmatprep.subr.mxu0 0.0
    %308 = vmatpush1.msra.mxu0 0.0
    %309 = vmatprep.subr.mxu0 0.0
    %310 = vmatpush1.msra.mxu0 0.0
    %311 = vmatprep.subr.mxu0 0.0
    %312 = vmatpush1.msra.mxu0 0.0
    %313 = vmatprep.subr.mxu0 0.0
    %314 = vmatpush1.msra.mxu0 0.0
    %315 = vmatprep.subr.mxu0 0.0
    %316 = vmatpush1.msra.mxu0 0.0
    %317 = vmatprep.subr.mxu0 0.0
    %318 = vmatpush1.msra.mxu0 0.0
    %319 = vmatprep.subr.mxu0 0.0
    %320 = vmatpush1.msra.mxu0 0.0
    %321 = vmatprep.subr.mxu0 0.0
    %322 = vmatpush1.msra.mxu0 0.0
    %323 = vmatprep.subr.mxu0 0.0
    %324 = vmatpush1.msra.mxu0 0.0
    %325 = vmatprep.subr.mxu0 0.0
    %326 = vmatpush1.msra.mxu0 0.0
    %327 = vmatprep.subr.mxu0 0.0
    %328 = vmatpush1.msra.mxu0 0.0
    %329 = vmatprep.subr.mxu0 0.0
    %330 = vmatpush1.msra.mxu0 0.0
    %331 = vmatprep.subr.mxu0 0.0
    %332 = vmatpush1.msra.mxu0 0.0
    %333 = vmatprep.subr.mxu0 0.0
    %334 = vmatpush1.msra.mxu0 0.0
    %335 = vmatprep.subr.mxu0 0.0
    %336 = vmatpush1.msra.mxu0 0.0
    %337 = vmatprep.subr.mxu0 %v305
    %338 = vmatpush1.msra.mxu0 %v302
    %339 = vmatprep.subr.mxu0 0.0
    %340 = vmatpush2.msra.mxu0 0.0
    %341 = vmatprep.subr.mxu0 0.0
    %342 = vmatpush2.msra.mxu0 0.0
    %343 = vmatprep.subr.mxu0 0.0
    %344 = vmatpush2.msra.mxu0 0.0
    %345 = vmatprep.subr.mxu0 0.0
    %346 = vmatpush2.msra.mxu0 0.0
    %347 = vmatprep.subr.mxu0 0.0
    %348 = vmatpush2.msra.mxu0 0.0
    %349 = vmatprep.subr.mxu0 0.0
    %350 = vmatpush2.msra.mxu0 0.0
    %351 = vmatprep.subr.mxu0 0.0
    %352 = vmatpush2.msra.mxu0 0.0
    %353 = vmatprep.subr.mxu0 0.0
    %354 = vmatpush2.msra.mxu0 0.0
    %355 = vmatprep.subr.mxu0 0.0
    %356 = vmatpush2.msra.mxu0 0.0
    %357 = vmatprep.subr.mxu0 0.0
    %358 = vmatpush2.msra.mxu0 0.0
    %359 = vmatprep.subr.mxu0 0.0
    %360 = vmatpush2.msra.mxu0 0.0
    %361 = vmatprep.subr.mxu0 0.0
    %362 = vmatpush2.msra.mxu0 0.0
    %363 = vmatprep.subr.mxu0 0.0
    %364 = vmatpush2.msra.mxu0 0.0
    %365 = vmatprep.subr.mxu0 0.0
    %366 = vmatpush2.msra.mxu0 0.0
    %367 = vmatprep.subr.mxu0 0.0
    %368 = vmatpush2.msra.mxu0 0.0
    %369 = vmatprep.subr.mxu0 0.0
    %370 = vmatpush2.msra.mxu0 0.0
    %371 = vmatprep.mubr.f32.mxu0 0.0
    %372 = vmatmul.mubr.f32.gmra.mxu0 %v289
    %v373 = vpop.f32.mrf.mxu0
    %v374 = vadd.f32 0.0, %v373
    %v375 = vpop.f32.mrf.mxu0
    %v376 = vadd.f32 0.0, %v375
    %377 = vmatprep.mubr.f32.mxu0 0.0
    %378 = vmatmul.mubr.f32.gmra.mxu0 %v292
    %v379 = vpop.f32.mrf.mxu0
    %v380 = vadd.f32 0.0, %v379
    %v381 = vpop.f32.mrf.mxu0
    %v382 = vadd.f32 0.0, %v381
    %383 = vmatprep.mubr.f32.mxu0 0.0
    %384 = vmatmul.mubr.f32.gmra.mxu0 %v295
    %v385 = vpop.f32.mrf.mxu0
    %v386 = vadd.f32 0.0, %v385
    %v387 = vpop.f32.mrf.mxu0
    %v388 = vadd.f32 0.0, %v387
    %389 = vmatprep.mubr.f32.mxu0 0.0
    %390 = vmatmul.mubr.f32.gmra.mxu0 %v298
    %v391 = vpop.f32.mrf.mxu0
    %v392 = vadd.f32 0.0, %v391
    %v393 = vpop.f32.mrf.mxu0
    %v394 = vadd.f32 0.0, %v393
    %395 = vdwg.mxu0
    %v396 = vld [vmem:[#allocation10] sm:$0xff]
    %v397 = vld [vmem:[#allocation10 + $0x8] sm:$0xff]
    %v398 = vld [vmem:[#allocation10 + $0x10] sm:$0xff]
    %v399 = vld [vmem:[#allocation10 + $0x18] sm:$0xff]
    %v400 = vld [vmem:[#allocation10 + $0x20] sm:$0xff]
    %v401 = vld [vmem:[#allocation10 + $0x28] sm:$0xff]
    %v402 = vld [vmem:[#allocation10 + $0x30] sm:$0xff]
    %v403 = vld [vmem:[#allocation10 + $0x38] sm:$0xff]
    %v404 = vmul.f32 %v374, %v396
    %v405 = vmul.f32 %v376, %v397
    %v406 = vmul.f32 %v380, %v398
    %v407 = vmul.f32 %v382, %v399
    %v408 = vmul.f32 %v386, %v400
    %v409 = vmul.f32 %v388, %v401
    %v410 = vmul.f32 %v392, %v402
    %v411 = vmul.f32 %v394, %v403
    %v412 = vld [vmem:[%s5] sm:$0xff]
    %v413 = vld [vmem:[%s5 + $0x8] sm:$0xff]
    %v414 = vld [vmem:[%s5 + $0x10] sm:$0xff]
    %v415 = vld [vmem:[%s5 + $0x18] sm:$0xff]
    %v416 = vld [vmem:[%s5 + $0x20] sm:$0xff]
    %v417 = vld [vmem:[%s5 + $0x28] sm:$0xff]
    %v418 = vld [vmem:[%s5 + $0x30] sm:$0xff]
    %v419 = vld [vmem:[%s5 + $0x38] sm:$0xff]
    %v420 = vld [vmem:[%s5 + $0x40] sm:$0xff]
    %v421 = vld [vmem:[%s5 + $0x48] sm:$0xff]
    %v422 = vld [vmem:[%s5 + $0x50] sm:$0xff]
    %v423 = vld [vmem:[%s5 + $0x58] sm:$0xff]
    %v424 = vld [vmem:[%s5 + $0x60] sm:$0xff]
    %v425 = vld [vmem:[%s5 + $0x68] sm:$0xff]
    %v426 = vld [vmem:[%s5 + $0x70] sm:$0xff]
    %v427 = vld [vmem:[%s5 + $0x78] sm:$0xff]
    %v428 = vld [vmem:[%s5 + $0x80] sm:$0xff]
    %v429 = vld [vmem:[%s5 + $0x88] sm:$0xff]
    %v430 = vld [vmem:[%s5 + $0x90] sm:$0xff]
    %v431 = vld [vmem:[%s5 + $0x98] sm:$0xff]
    %v432 = vld [vmem:[%s5 + $0xa0] sm:$0xff]
    %v433 = vld [vmem:[%s5 + $0xa8] sm:$0xff]
    %v434 = vld [vmem:[%s5 + $0xb0] sm:$0xff]
    %v435 = vld [vmem:[%s5 + $0xb8] sm:$0xff]
    %v436 = vld [vmem:[%s5 + $0xc0] sm:$0xff]
    %v437 = vld [vmem:[%s5 + $0xc8] sm:$0xff]
    %v438 = vld [vmem:[%s5 + $0xd0] sm:$0xff]
    %v439 = vld [vmem:[%s5 + $0xd8] sm:$0xff]
    %v440 = vld [vmem:[%s5 + $0xe0] sm:$0xff]
    %v441 = vld [vmem:[%s5 + $0xe8] sm:$0xff]
    %v442 = vld [vmem:[%s5 + $0xf0] sm:$0xff]
    %v443 = vld [vmem:[%s5 + $0xf8] sm:$0xff]
    %444 = vmatprep.subr.mxu0 0.0
    %445 = vmatpush1.msra.mxu0 %v427
    %446 = vmatprep.subr.mxu0 0.0
    %447 = vmatpush1.msra.mxu0 %v426
    %448 = vmatprep.subr.mxu0 0.0
    %449 = vmatpush1.msra.mxu0 %v425
    %450 = vmatprep.subr.mxu0 0.0
    %451 = vmatpush1.msra.mxu0 %v424
    %452 = vmatprep.subr.mxu0 0.0
    %453 = vmatpush1.msra.mxu0 %v423
    %454 = vmatprep.subr.mxu0 0.0
    %455 = vmatpush1.msra.mxu0 %v422
    %456 = vmatprep.subr.mxu0 0.0
    %457 = vmatpush1.msra.mxu0 %v421
    %458 = vmatprep.subr.mxu0 0.0
    %459 = vmatpush1.msra.mxu0 %v420
    %460 = vmatprep.subr.mxu0 0.0
    %461 = vmatpush1.msra.mxu0 %v419
    %462 = vmatprep.subr.mxu0 0.0
    %463 = vmatpush1.msra.mxu0 %v418
    %464 = vmatprep.subr.mxu0 0.0
    %465 = vmatpush1.msra.mxu0 %v417
    %466 = vmatprep.subr.mxu0 0.0
    %467 = vmatpush1.msra.mxu0 %v416
    %468 = vmatprep.subr.mxu0 0.0
    %469 = vmatpush1.msra.mxu0 %v415
    %470 = vmatprep.subr.mxu0 0.0
    %471 = vmatpush1.msra.mxu0 %v414
    %472 = vmatprep.subr.mxu0 0.0
    %473 = vmatpush1.msra.mxu0 %v413
    %474 = vmatprep.subr.mxu0 0.0
    %475 = vmatpush1.msra.mxu0 %v412
    %476 = vmatprep.subr.mxu0 0.0
    %477 = vmatpush2.msra.mxu0 %v443
    %478 = vmatprep.subr.mxu0 0.0
    %479 = vmatpush2.msra.mxu0 %v442
    %480 = vmatprep.subr.mxu0 0.0
    %481 = vmatpush2.msra.mxu0 %v441
    %482 = vmatprep.subr.mxu0 0.0
    %483 = vmatpush2.msra.mxu0 %v440
    %484 = vmatprep.subr.mxu0 0.0
    %485 = vmatpush2.msra.mxu0 %v439
    %486 = vmatprep.subr.mxu0 0.0
    %487 = vmatpush2.msra.mxu0 %v438
    %488 = vmatprep.subr.mxu0 0.0
    %489 = vmatpush2.msra.mxu0 %v437
    %490 = vmatprep.subr.mxu0 0.0
    %491 = vmatpush2.msra.mxu0 %v436
    %492 = vmatprep.subr.mxu0 0.0
    %493 = vmatpush2.msra.mxu0 %v435
    %494 = vmatprep.subr.mxu0 0.0
    %495 = vmatpush2.msra.mxu0 %v434
    %496 = vmatprep.subr.mxu0 0.0
    %497 = vmatpush2.msra.mxu0 %v433
    %498 = vmatprep.subr.mxu0 0.0
    %499 = vmatpush2.msra.mxu0 %v432
    %500 = vmatprep.subr.mxu0 0.0
    %501 = vmatpush2.msra.mxu0 %v431
    %502 = vmatprep.subr.mxu0 0.0
    %503 = vmatpush2.msra.mxu0 %v430
    %504 = vmatprep.subr.mxu0 0.0
    %505 = vmatpush2.msra.mxu0 %v429
    %506 = vmatprep.subr.mxu0 0.0
    %507 = vmatpush2.msra.mxu0 %v428
    %508 = vmatprep.mubr.f32.mxu0 %v405
    %509 = vmatmul.mubr.f32.gmra.mxu0 %v404
    %v510 = vpop.f32.mrf.mxu0
    %v511 = vadd.f32 0.0, %v510
    %v512 = vpop.f32.mrf.mxu0
    %513 = vmatprep.mubr.f32.mxu0 %v407
    %514 = vmatmul.mubr.f32.gmra.mxu0 %v406
    %v515 = vpop.f32.mrf.mxu0
    %v516 = vadd.f32 0.0, %v515
    %v517 = vpop.f32.mrf.mxu0
    %518 = vmatprep.mubr.f32.mxu0 %v409
    %519 = vmatmul.mubr.f32.gmra.mxu0 %v408
    %v520 = vpop.f32.mrf.mxu0
    %v521 = vadd.f32 0.0, %v520
    %v522 = vpop.f32.mrf.mxu0
    %523 = vmatprep.mubr.f32.mxu0 %v411
    %524 = vmatmul.mubr.f32.gmra.mxu0 %v410
    %v525 = vpop.f32.mrf.mxu0
    %v526 = vadd.f32 0.0, %v525
    %v527 = vpop.f32.mrf.mxu0
    %528 = vdwg.mxu0
    %v529 = vld [vmem:[#allocation12] sm:$0xff]
    %v530 = vld [vmem:[#allocation12 + $0x8] sm:$0xff]
    %v531 = vld [vmem:[#allocation12 + $0x10] sm:$0xff]
    %v532 = vld [vmem:[#allocation12 + $0x18] sm:$0xff]
    %v533 = vld [vmem:[%s7] sm:$0xff]
    %v534 = vld [vmem:[%s7 + $0x8] sm:$0xff]
    %v535 = vld [vmem:[%s7 + $0x10] sm:$0xff]
    %v536 = vld [vmem:[%s7 + $0x18] sm:$0xff]
    %v537 = vld [vmem:[%s8] sm:$0xff]
    %v538 = vld [vmem:[%s8 + $0x8] sm:$0xff]
    %v539 = vld [vmem:[%s8 + $0x10] sm:$0xff]
    %v540 = vld [vmem:[%s8 + $0x18] sm:$0xff]
    %vm541 = vcmask 130048
    %v542 = vsel %vm541, %v511, 0.0
    %543 = vadd.xlane.f32.xlu0 %v542
    %v544 = vpop.xlane.xlu0 %543
    %v545 = vsel %vm541, %v516, 0.0
    %546 = vadd.xlane.f32.xlu0 %v545
    %v547 = vpop.xlane.xlu0 %546
    %v548 = vsel %vm541, %v521, 0.0
    %549 = vadd.xlane.f32.xlu0 %v548
    %v550 = vpop.xlane.xlu0 %549
    %v551 = vsel %vm541, %v526, 0.0
    %552 = vadd.xlane.f32.xlu0 %v551
    %v553 = vpop.xlane.xlu0 %552
    %v555 = vsel %vm208, %v529, 0
    %v558 = vsel %vm208, %v530, 0
    %v561 = vsel %vm208, %v531, 0
    %v564 = vsel %vm208, %v532, 0
    %566 = vmatprep.subr.mxu0 0.0
    %567 = vmatpush1.msra.mxu0 0.0
    %568 = vmatprep.subr.mxu0 0.0
    %569 = vmatpush1.msra.mxu0 0.0
    %570 = vmatprep.subr.mxu0 0.0
    %571 = vmatpush1.msra.mxu0 0.0
    %572 = vmatprep.subr.mxu0 0.0
    %573 = vmatpush1.msra.mxu0 0.0
    %574 = vmatprep.subr.mxu0 0.0
    %575 = vmatpush1.msra.mxu0 0.0
    %576 = vmatprep.subr.mxu0 0.0
    %577 = vmatpush1.msra.mxu0 0.0
    %578 = vmatprep.subr.mxu0 0.0
    %579 = vmatpush1.msra.mxu0 0.0
    %580 = vmatprep.subr.mxu0 0.0
    %581 = vmatpush1.msra.mxu0 0.0
    %582 = vmatprep.subr.mxu0 0.0
    %583 = vmatpush1.msra.mxu0 0.0
    %584 = vmatprep.subr.mxu0 0.0
    %585 = vmatpush1.msra.mxu0 0.0
    %586 = vmatprep.subr.mxu0 0.0
    %587 = vmatpush1.msra.mxu0 0.0
    %588 = vmatprep.subr.mxu0 0.0
    %589 = vmatpush1.msra.mxu0 0.0
    %590 = vmatprep.subr.mxu0 0.0
    %591 = vmatpush1.msra.mxu0 %v553
    %592 = vmatprep.subr.mxu0 0.0
    %593 = vmatpush1.msra.mxu0 %v550
    %594 = vmatprep.subr.mxu0 0.0
    %595 = vmatpush1.msra.mxu0 %v547
    %596 = vmatprep.subr.mxu0 0.0
    %597 = vmatpush1.msra.mxu0 %v544
    %598 = vmatprep.subr.mxu0 0.0
    %599 = vmatpush2.msra.mxu0 0.0
    %600 = vmatprep.subr.mxu0 0.0
    %601 = vmatpush2.msra.mxu0 0.0
    %602 = vmatprep.subr.mxu0 0.0
    %603 = vmatpush2.msra.mxu0 0.0
    %604 = vmatprep.subr.mxu0 0.0
    %605 = vmatpush2.msra.mxu0 0.0
    %606 = vmatprep.subr.mxu0 0.0
    %607 = vmatpush2.msra.mxu0 0.0
    %608 = vmatprep.subr.mxu0 0.0
    %609 = vmatpush2.msra.mxu0 0.0
    %610 = vmatprep.subr.mxu0 0.0
    %611 = vmatpush2.msra.mxu0 0.0
    %612 = vmatprep.subr.mxu0 0.0
    %613 = vmatpush2.msra.mxu0 0.0
    %614 = vmatprep.subr.mxu0 0.0
    %615 = vmatpush2.msra.mxu0 0.0
    %616 = vmatprep.subr.mxu0 0.0
    %617 = vmatpush2.msra.mxu0 0.0
    %618 = vmatprep.subr.mxu0 0.0
    %619 = vmatpush2.msra.mxu0 0.0
    %620 = vmatprep.subr.mxu0 0.0
    %621 = vmatpush2.msra.mxu0 0.0
    %622 = vmatprep.subr.mxu0 0.0
    %623 = vmatpush2.msra.mxu0 0.0
    %624 = vmatprep.subr.mxu0 0.0
    %625 = vmatpush2.msra.mxu0 0.0
    %626 = vmatprep.subr.mxu0 0.0
    %627 = vmatpush2.msra.mxu0 0.0
    %628 = vmatprep.subr.mxu0 0.0
    %629 = vmatpush2.msra.mxu0 0.0
    %630 = vmatprep.mubr.f32.mxu0 0.0
    %631 = vmatmul.mubr.f32.gmra.mxu0 %v555
    %v632 = vpop.f32.mrf.mxu0
    %v633 = vadd.f32 0.0, %v632
    %v634 = vpop.f32.mrf.mxu0
    %635 = vmatprep.mubr.f32.mxu0 0.0
    %636 = vmatmul.mubr.f32.gmra.mxu0 %v558
    %v637 = vpop.f32.mrf.mxu0
    %v638 = vadd.f32 0.0, %v637
    %v639 = vpop.f32.mrf.mxu0
    %640 = vmatprep.mubr.f32.mxu0 0.0
    %641 = vmatmul.mubr.f32.gmra.mxu0 %v561
    %v642 = vpop.f32.mrf.mxu0
    %v643 = vadd.f32 0.0, %v642
    %v644 = vpop.f32.mrf.mxu0
    %645 = vmatprep.mubr.f32.mxu0 0.0
    %646 = vmatmul.mubr.f32.gmra.mxu0 %v564
    %v647 = vpop.f32.mrf.mxu0
    %v648 = vadd.f32 0.0, %v647
    %v649 = vpop.f32.mrf.mxu0
    %650 = vdwg.mxu0
    %v651 = vmul.f32 %v633, 0.03125
    %v652 = vmul.f32 %v638, 0.03125
    %v653 = vmul.f32 %v643, 0.03125
    %v654 = vmul.f32 %v648, 0.03125
    %656 = vset.pattern.permute.xlu0 0
    %657 = vperm.xlu0 %656, %v651
    %v658 = vpop.permute.xlu0 %657
    %661 = vset.pattern.permute.xlu0 0
    %662 = vperm.xlu0 %661, %v652
    %v663 = vpop.permute.xlu0 %662
    %666 = vset.pattern.permute.xlu0 0
    %667 = vperm.xlu0 %666, %v653
    %v668 = vpop.permute.xlu0 %667
    %671 = vset.pattern.permute.xlu0 0
    %672 = vperm.xlu0 %671, %v654
    %v673 = vpop.permute.xlu0 %672
    %v675 = vsub.f32 %v511, %v658
    %v676 = vsub.f32 %v516, %v663
    %v677 = vsub.f32 %v521, %v668
    %v678 = vsub.f32 %v526, %v673
    %v679 = vmul.f32 %v675, %v675
    %v680 = vmul.f32 %v676, %v676
    %v681 = vmul.f32 %v677, %v677
    %v682 = vmul.f32 %v678, %v678
    %v683 = vsel %vm541, %v679, 0.0
    %684 = vadd.xlane.f32.xlu0 %v683
    %v685 = vpop.xlane.xlu0 %684
    %v686 = vsel %vm541, %v680, 0.0
    %687 = vadd.xlane.f32.xlu0 %v686
    %v688 = vpop.xlane.xlu0 %687
    %v689 = vsel %vm541, %v681, 0.0
    %690 = vadd.xlane.f32.xlu0 %v689
    %v691 = vpop.xlane.xlu0 %690
    %v692 = vsel %vm541, %v682, 0.0
    %693 = vadd.xlane.f32.xlu0 %v692
    %v694 = vpop.xlane.xlu0 %693
    %695 = vmatprep.subr.mxu0 0.0
    %696 = vmatpush1.msra.mxu0 0.0
    %697 = vmatprep.subr.mxu0 0.0
    %698 = vmatpush1.msra.mxu0 0.0
    %699 = vmatprep.subr.mxu0 0.0
    %700 = vmatpush1.msra.mxu0 0.0
    %701 = vmatprep.subr.mxu0 0.0
    %702 = vmatpush1.msra.mxu0 0.0
    %703 = vmatprep.subr.mxu0 0.0
    %704 = vmatpush1.msra.mxu0 0.0
    %705 = vmatprep.subr.mxu0 0.0
    %706 = vmatpush1.msra.mxu0 0.0
    %707 = vmatprep.subr.mxu0 0.0
    %708 = vmatpush1.msra.mxu0 0.0
    %709 = vmatprep.subr.mxu0 0.0
    %710 = vmatpush1.msra.mxu0 0.0
    %711 = vmatprep.subr.mxu0 0.0
    %712 = vmatpush1.msra.mxu0 0.0
    %713 = vmatprep.subr.mxu0 0.0
    %714 = vmatpush1.msra.mxu0 0.0
    %715 = vmatprep.subr.mxu0 0.0
    %716 = vmatpush1.msra.mxu0 0.0
    %717 = vmatprep.subr.mxu0 0.0
    %718 = vmatpush1.msra.mxu0 0.0
    %719 = vmatprep.subr.mxu0 0.0
    %720 = vmatpush1.msra.mxu0 %v694
    %721 = vmatprep.subr.mxu0 0.0
    %722 = vmatpush1.msra.mxu0 %v691
    %723 = vmatprep.subr.mxu0 0.0
    %724 = vmatpush1.msra.mxu0 %v688
    %725 = vmatprep.subr.mxu0 0.0
    %726 = vmatpush1.msra.mxu0 %v685
    %727 = vmatprep.subr.mxu0 0.0
    %728 = vmatpush2.msra.mxu0 0.0
    %729 = vmatprep.subr.mxu0 0.0
    %730 = vmatpush2.msra.mxu0 0.0
    %731 = vmatprep.subr.mxu0 0.0
    %732 = vmatpush2.msra.mxu0 0.0
    %733 = vmatprep.subr.mxu0 0.0
    %734 = vmatpush2.msra.mxu0 0.0
    %735 = vmatprep.subr.mxu0 0.0
    %736 = vmatpush2.msra.mxu0 0.0
    %737 = vmatprep.subr.mxu0 0.0
    %738 = vmatpush2.msra.mxu0 0.0
    %739 = vmatprep.subr.mxu0 0.0
    %740 = vmatpush2.msra.mxu0 0.0
    %741 = vmatprep.subr.mxu0 0.0
    %742 = vmatpush2.msra.mxu0 0.0
    %743 = vmatprep.subr.mxu0 0.0
    %744 = vmatpush2.msra.mxu0 0.0
    %745 = vmatprep.subr.mxu0 0.0
    %746 = vmatpush2.msra.mxu0 0.0
    %747 = vmatprep.subr.mxu0 0.0
    %748 = vmatpush2.msra.mxu0 0.0
    %749 = vmatprep.subr.mxu0 0.0
    %750 = vmatpush2.msra.mxu0 0.0
    %751 = vmatprep.subr.mxu0 0.0
    %752 = vmatpush2.msra.mxu0 0.0
    %753 = vmatprep.subr.mxu0 0.0
    %754 = vmatpush2.msra.mxu0 0.0
    %755 = vmatprep.subr.mxu0 0.0
    %756 = vmatpush2.msra.mxu0 0.0
    %757 = vmatprep.subr.mxu0 0.0
    %758 = vmatpush2.msra.mxu0 0.0
    %759 = vmatprep.mubr.f32.mxu0 0.0
    %760 = vmatmul.mubr.f32.gmra.mxu0 %v555
    %v761 = vpop.f32.mrf.mxu0
    %v762 = vadd.f32 0.0, %v761
    %v763 = vpop.f32.mrf.mxu0
    %764 = vmatprep.mubr.f32.mxu0 0.0
    %765 = vmatmul.mubr.f32.gmra.mxu0 %v558
    %v766 = vpop.f32.mrf.mxu0
    %v767 = vadd.f32 0.0, %v766
    %v768 = vpop.f32.mrf.mxu0
    %769 = vmatprep.mubr.f32.mxu0 0.0
    %770 = vmatmul.mubr.f32.gmra.mxu0 %v561
    %v771 = vpop.f32.mrf.mxu0
    %v772 = vadd.f32 0.0, %v771
    %v773 = vpop.f32.mrf.mxu0
    %774 = vmatprep.mubr.f32.mxu0 0.0
    %775 = vmatmul.mubr.f32.gmra.mxu0 %v564
    %v776 = vpop.f32.mrf.mxu0
    %v777 = vadd.f32 0.0, %v776
    %v778 = vpop.f32.mrf.mxu0
    %779 = vdwg.mxu0
    %v780 = vmul.f32 %v762, 0.03125
    %v781 = vmul.f32 %v767, 0.03125
    %v782 = vmul.f32 %v772, 0.03125
    %v783 = vmul.f32 %v777, 0.03125
    %v784 = vadd.f32 %v780, 1e-05
    %v785 = vadd.f32 %v781, 1e-05
    %v786 = vadd.f32 %v782, 1e-05
    %v787 = vadd.f32 %v783, 1e-05
    %v788 = vrsqrt.pop %v784
    %v789 = vrsqrt.pop %v785
    %v790 = vrsqrt.pop %v786
    %v791 = vrsqrt.pop %v787
    %793 = vset.pattern.permute.xlu0 0
    %794 = vperm.xlu0 %793, %v788
    %v795 = vpop.permute.xlu0 %794
    %798 = vset.pattern.permute.xlu0 0
    %799 = vperm.xlu0 %798, %v789
    %v800 = vpop.permute.xlu0 %799
    %803 = vset.pattern.permute.xlu0 0
    %804 = vperm.xlu0 %803, %v790
    %v805 = vpop.permute.xlu0 %804
    %808 = vset.pattern.permute.xlu0 0
    %809 = vperm.xlu0 %808, %v791
    %v810 = vpop.permute.xlu0 %809
    %v812 = vmul.f32 %v675, %v795
    %v813 = vmul.f32 %v676, %v800
    %v814 = vmul.f32 %v677, %v805
    %v815 = vmul.f32 %v678, %v810
    %817 = vset.pattern.permute.xlu0 0
    %818 = vperm.xlu0 %817, %v533
    %v819 = vpop.permute.xlu0 %818
    %822 = vset.pattern.permute.xlu0 0
    %823 = vperm.xlu0 %822, %v534
    %v824 = vpop.permute.xlu0 %823
    %827 = vset.pattern.permute.xlu0 0
    %828 = vperm.xlu0 %827, %v535
    %v829 = vpop.permute.xlu0 %828
    %832 = vset.pattern.permute.xlu0 0
    %833 = vperm.xlu0 %832, %v536
    %v834 = vpop.permute.xlu0 %833
    %v836 = vmul.f32 %v812, %v819
    %v837 = vmul.f32 %v813, %v824
    %v838 = vmul.f32 %v814, %v829
    %v839 = vmul.f32 %v815, %v834
    %841 = vset.pattern.permute.xlu0 0
    %842 = vperm.xlu0 %841, %v537
    %v843 = vpop.permute.xlu0 %842
    %846 = vset.pattern.permute.xlu0 0
    %847 = vperm.xlu0 %846, %v538
    %v848 = vpop.permute.xlu0 %847
    %851 = vset.pattern.permute.xlu0 0
    %852 = vperm.xlu0 %851, %v539
    %v853 = vpop.permute.xlu0 %852
    %856 = vset.pattern.permute.xlu0 0
    %857 = vperm.xlu0 %856, %v540
    %v858 = vpop.permute.xlu0 %857
    %v860 = vadd.f32 %v836, %v843
    %v861 = vadd.f32 %v837, %v848
    %v862 = vadd.f32 %v838, %v853
    %v863 = vadd.f32 %v839, %v858
    %v864 = vld [vmem:[#allocation13] sm:$0xff]
    %v865 = vld [vmem:[#allocation13 + $0x8] sm:$0xff]
    %v867 = vsel %vm541, %v860, 0
    %v870 = vsel %vm541, %v861, 0
    %v873 = vsel %vm541, %v862, 0
    %v876 = vsel %vm541, %v863, 0
    %878 = vmatprep.subr.mxu0 0.0
    %879 = vmatpush1.msra.mxu0 0.0
    %880 = vmatprep.subr.mxu0 0.0
    %881 = vmatpush1.msra.mxu0 0.0
    %882 = vmatprep.subr.mxu0 0.0
    %883 = vmatpush1.msra.mxu0 0.0
    %884 = vmatprep.subr.mxu0 0.0
    %885 = vmatpush1.msra.mxu0 0.0
    %886 = vmatprep.subr.mxu0 0.0
    %887 = vmatpush1.msra.mxu0 0.0
    %888 = vmatprep.subr.mxu0 0.0
    %889 = vmatpush1.msra.mxu0 0.0
    %890 = vmatprep.subr.mxu0 0.0
    %891 = vmatpush1.msra.mxu0 0.0
    %892 = vmatprep.subr.mxu0 0.0
    %893 = vmatpush1.msra.mxu0 0.0
    %894 = vmatprep.subr.mxu0 0.0
    %895 = vmatpush1.msra.mxu0 0.0
    %896 = vmatprep.subr.mxu0 0.0
    %897 = vmatpush1.msra.mxu0 0.0
    %898 = vmatprep.subr.mxu0 0.0
    %899 = vmatpush1.msra.mxu0 0.0
    %900 = vmatprep.subr.mxu0 0.0
    %901 = vmatpush1.msra.mxu0 0.0
    %902 = vmatprep.subr.mxu0 0.0
    %903 = vmatpush1.msra.mxu0 0.0
    %904 = vmatprep.subr.mxu0 0.0
    %905 = vmatpush1.msra.mxu0 0.0
    %906 = vmatprep.subr.mxu0 0.0
    %907 = vmatpush1.msra.mxu0 %v865
    %908 = vmatprep.subr.mxu0 0.0
    %909 = vmatpush1.msra.mxu0 %v864
    %910 = vmatprep.subr.mxu0 0.0
    %911 = vmatpush2.msra.mxu0 0.0
    %912 = vmatprep.subr.mxu0 0.0
    %913 = vmatpush2.msra.mxu0 0.0
    %914 = vmatprep.subr.mxu0 0.0
    %915 = vmatpush2.msra.mxu0 0.0
    %916 = vmatprep.subr.mxu0 0.0
    %917 = vmatpush2.msra.mxu0 0.0
    %918 = vmatprep.subr.mxu0 0.0
    %919 = vmatpush2.msra.mxu0 0.0
    %920 = vmatprep.subr.mxu0 0.0
    %921 = vmatpush2.msra.mxu0 0.0
    %922 = vmatprep.subr.mxu0 0.0
    %923 = vmatpush2.msra.mxu0 0.0
    %924 = vmatprep.subr.mxu0 0.0
    %925 = vmatpush2.msra.mxu0 0.0
    %926 = vmatprep.subr.mxu0 0.0
    %927 = vmatpush2.msra.mxu0 0.0
    %928 = vmatprep.subr.mxu0 0.0
    %929 = vmatpush2.msra.mxu0 0.0
    %930 = vmatprep.subr.mxu0 0.0
    %931 = vmatpush2.msra.mxu0 0.0
    %932 = vmatprep.subr.mxu0 0.0
    %933 = vmatpush2.msra.mxu0 0.0
    %934 = vmatprep.subr.mxu0 0.0
    %935 = vmatpush2.msra.mxu0 0.0
    %936 = vmatprep.subr.mxu0 0.0
    %937 = vmatpush2.msra.mxu0 0.0
    %938 = vmatprep.subr.mxu0 0.0
    %939 = vmatpush2.msra.mxu0 0.0
    %940 = vmatprep.subr.mxu0 0.0
    %941 = vmatpush2.msra.mxu0 0.0
    %942 = vmatprep.mubr.f32.mxu0 0.0
    %943 = vmatmul.mubr.f32.gmra.mxu0 %v867
    %v944 = vpop.f32.mrf.mxu0
    %v945 = vadd.f32 0.0, %v944
    %v946 = vpop.f32.mrf.mxu0
    %947 = vmatprep.mubr.f32.mxu0 0.0
    %948 = vmatmul.mubr.f32.gmra.mxu0 %v870
    %v949 = vpop.f32.mrf.mxu0
    %v950 = vadd.f32 0.0, %v949
    %v951 = vpop.f32.mrf.mxu0
    %952 = vmatprep.mubr.f32.mxu0 0.0
    %953 = vmatmul.mubr.f32.gmra.mxu0 %v873
    %v954 = vpop.f32.mrf.mxu0
    %v955 = vadd.f32 0.0, %v954
    %v956 = vpop.f32.mrf.mxu0
    %957 = vmatprep.mubr.f32.mxu0 0.0
    %958 = vmatmul.mubr.f32.gmra.mxu0 %v876
    %v959 = vpop.f32.mrf.mxu0
    %v960 = vadd.f32 0.0, %v959
    %v961 = vpop.f32.mrf.mxu0
    %962 = vdwg.mxu0
    %v963 = vld [vmem:[%s13] sm:$0x1]
    %vm964 = vcmp.gt.f32.partialorder %v963, 0.5
    %969 = vrot.lane.b32.xlu0 %v945, 11
    %v970 = vpop.permute.xlu0 %969
    %971 = vrot.lane.b32.xlu0 %v950, 11
    %v972 = vpop.permute.xlu0 %971
    %973 = vrot.lane.b32.xlu0 %v955, 11
    %v974 = vpop.permute.xlu0 %973
    %975 = vrot.lane.b32.xlu0 %v960, 11
    %v976 = vpop.permute.xlu0 %975
    %vm981 = vcmask 908376
    %982 = vst.msk [vmem:[#allocation2] sm:$0xff] %vm981, %v970
    %983 = vst.msk [vmem:[#allocation2 + $0x8] sm:$0xff] %vm981, %v972
    %984 = vst.msk [vmem:[#allocation2 + $0x10] sm:$0xff] %vm981, %v974
    %985 = vst.msk [vmem:[#allocation2 + $0x18] sm:$0xff] %vm981, %v976
    %v986 = vld [vmem:[#allocation2] sm:$0xff]
    %v987 = vld [vmem:[#allocation2 + $0x8] sm:$0xff]
    %v988 = vld [vmem:[#allocation2 + $0x10] sm:$0xff]
    %v989 = vld [vmem:[#allocation2 + $0x18] sm:$0xff]
    %v990 = vld [vmem:[#allocation15] sm:$0xff]
    %v991 = vld [vmem:[#allocation15 + $0x8] sm:$0xff]
    %v992 = vld [vmem:[#allocation15 + $0x10] sm:$0xff]
    %v993 = vld [vmem:[#allocation15 + $0x18] sm:$0xff]
    %s994 = scalar_lea.vmem [#allocation15], 32
    %v995 = vld [vmem:[%s994] sm:$0xff]
    %v996 = vld [vmem:[%s994 + $0x8] sm:$0xff]
    %v997 = vld [vmem:[%s994 + $0x10] sm:$0xff]
    %v998 = vld [vmem:[%s994 + $0x18] sm:$0xff]
    %1003 = vrot.lane.b32.xlu0 %v986, 127
    %v1004 = vpop.permute.xlu0 %1003
    %1005 = vrot.lane.b32.xlu0 %v987, 127
    %v1006 = vpop.permute.xlu0 %1005
    %1007 = vrot.lane.b32.xlu0 %v988, 127
    %v1008 = vpop.permute.xlu0 %1007
    %1009 = vrot.lane.b32.xlu0 %v989, 127
    %v1010 = vpop.permute.xlu0 %1009
    %v1016 = vsel %vm208, %v995, 0
    %v1019 = vsel %vm208, %v996, 0
    %v1022 = vsel %vm208, %v997, 0
    %v1025 = vsel %vm208, %v998, 0
    %1027 = vmatprep.subr.mxu0 0.0
    %1028 = vmatpush1.msra.mxu0 0.0
    %1029 = vmatprep.subr.mxu0 0.0
    %1030 = vmatpush1.msra.mxu0 0.0
    %1031 = vmatprep.subr.mxu0 0.0
    %1032 = vmatpush1.msra.mxu0 0.0
    %1033 = vmatprep.subr.mxu0 0.0
    %1034 = vmatpush1.msra.mxu0 0.0
    %1035 = vmatprep.subr.mxu0 0.0
    %1036 = vmatpush1.msra.mxu0 0.0
    %1037 = vmatprep.subr.mxu0 0.0
    %1038 = vmatpush1.msra.mxu0 0.0
    %1039 = vmatprep.subr.mxu0 0.0
    %1040 = vmatpush1.msra.mxu0 0.0
    %1041 = vmatprep.subr.mxu0 0.0
    %1042 = vmatpush1.msra.mxu0 0.0
    %1043 = vmatprep.subr.mxu0 0.0
    %1044 = vmatpush1.msra.mxu0 0.0
    %1045 = vmatprep.subr.mxu0 0.0
    %1046 = vmatpush1.msra.mxu0 0.0
    %1047 = vmatprep.subr.mxu0 0.0
    %1048 = vmatpush1.msra.mxu0 0.0
    %1049 = vmatprep.subr.mxu0 0.0
    %1050 = vmatpush1.msra.mxu0 0.0
    %1051 = vmatprep.subr.mxu0 0.0
    %1052 = vmatpush1.msra.mxu0 %v1010
    %1053 = vmatprep.subr.mxu0 0.0
    %1054 = vmatpush1.msra.mxu0 %v1008
    %1055 = vmatprep.subr.mxu0 0.0
    %1056 = vmatpush1.msra.mxu0 %v1006
    %1057 = vmatprep.subr.mxu0 0.0
    %1058 = vmatpush1.msra.mxu0 %v1004
    %1059 = vmatprep.subr.mxu0 0.0
    %1060 = vmatpush2.msra.mxu0 0.0
    %1061 = vmatprep.subr.mxu0 0.0
    %1062 = vmatpush2.msra.mxu0 0.0
    %1063 = vmatprep.subr.mxu0 0.0
    %1064 = vmatpush2.msra.mxu0 0.0
    %1065 = vmatprep.subr.mxu0 0.0
    %1066 = vmatpush2.msra.mxu0 0.0
    %1067 = vmatprep.subr.mxu0 0.0
    %1068 = vmatpush2.msra.mxu0 0.0
    %1069 = vmatprep.subr.mxu0 0.0
    %1070 = vmatpush2.msra.mxu0 0.0
    %1071 = vmatprep.subr.mxu0 0.0
    %1072 = vmatpush2.msra.mxu0 0.0
    %1073 = vmatprep.subr.mxu0 0.0
    %1074 = vmatpush2.msra.mxu0 0.0
    %1075 = vmatprep.subr.mxu0 0.0
    %1076 = vmatpush2.msra.mxu0 0.0
    %1077 = vmatprep.subr.mxu0 0.0
    %1078 = vmatpush2.msra.mxu0 0.0
    %1079 = vmatprep.subr.mxu0 0.0
    %1080 = vmatpush2.msra.mxu0 0.0
    %1081 = vmatprep.subr.mxu0 0.0
    %1082 = vmatpush2.msra.mxu0 0.0
    %1083 = vmatprep.subr.mxu0 0.0
    %1084 = vmatpush2.msra.mxu0 0.0
    %1085 = vmatprep.subr.mxu0 0.0
    %1086 = vmatpush2.msra.mxu0 0.0
    %1087 = vmatprep.subr.mxu0 0.0
    %1088 = vmatpush2.msra.mxu0 0.0
    %1089 = vmatprep.subr.mxu0 0.0
    %1090 = vmatpush2.msra.mxu0 0.0
    %1091 = vmatprep.mubr.f32.mxu0 0.0
    %1092 = vmatmul.mubr.f32.gmra.mxu0 %v1016
    %v1093 = vpop.f32.mrf.mxu0
    %v1094 = vadd.f32 0.0, %v1093
    %v1095 = vpop.f32.mrf.mxu0
    %1096 = vmatprep.mubr.f32.mxu0 0.0
    %1097 = vmatmul.mubr.f32.gmra.mxu0 %v1019
    %v1098 = vpop.f32.mrf.mxu0
    %v1099 = vadd.f32 0.0, %v1098
    %v1100 = vpop.f32.mrf.mxu0
    %1101 = vmatprep.mubr.f32.mxu0 0.0
    %1102 = vmatmul.mubr.f32.gmra.mxu0 %v1022
    %v1103 = vpop.f32.mrf.mxu0
    %v1104 = vadd.f32 0.0, %v1103
    %v1105 = vpop.f32.mrf.mxu0
    %1106 = vmatprep.mubr.f32.mxu0 0.0
    %1107 = vmatmul.mubr.f32.gmra.mxu0 %v1025
    %v1108 = vpop.f32.mrf.mxu0
    %v1109 = vadd.f32 0.0, %v1108
    %v1110 = vpop.f32.mrf.mxu0
    %1111 = vdwg.mxu0
    %v1113 = vsel %vm208, %v990, 0
    %v1116 = vsel %vm208, %v991, 0
    %v1119 = vsel %vm208, %v992, 0
    %v1122 = vsel %vm208, %v993, 0
    %1124 = vmatprep.subr.mxu0 0.0
    %1125 = vmatpush1.msra.mxu0 0.0
    %1126 = vmatprep.subr.mxu0 0.0
    %1127 = vmatpush1.msra.mxu0 0.0
    %1128 = vmatprep.subr.mxu0 0.0
    %1129 = vmatpush1.msra.mxu0 0.0
    %1130 = vmatprep.subr.mxu0 0.0
    %1131 = vmatpush1.msra.mxu0 0.0
    %1132 = vmatprep.subr.mxu0 0.0
    %1133 = vmatpush1.msra.mxu0 0.0
    %1134 = vmatprep.subr.mxu0 0.0
    %1135 = vmatpush1.msra.mxu0 0.0
    %1136 = vmatprep.subr.mxu0 0.0
    %1137 = vmatpush1.msra.mxu0 0.0
    %1138 = vmatprep.subr.mxu0 0.0
    %1139 = vmatpush1.msra.mxu0 0.0
    %1140 = vmatprep.subr.mxu0 0.0
    %1141 = vmatpush1.msra.mxu0 0.0
    %1142 = vmatprep.subr.mxu0 0.0
    %1143 = vmatpush1.msra.mxu0 0.0
    %1144 = vmatprep.subr.mxu0 0.0
    %1145 = vmatpush1.msra.mxu0 0.0
    %1146 = vmatprep.subr.mxu0 0.0
    %1147 = vmatpush1.msra.mxu0 0.0
    %1148 = vmatprep.subr.mxu0 0.0
    %1149 = vmatpush1.msra.mxu0 %v989
    %1150 = vmatprep.subr.mxu0 0.0
    %1151 = vmatpush1.msra.mxu0 %v988
    %1152 = vmatprep.subr.mxu0 0.0
    %1153 = vmatpush1.msra.mxu0 %v987
    %1154 = vmatprep.subr.mxu0 0.0
    %1155 = vmatpush1.msra.mxu0 %v986
    %1156 = vmatprep.subr.mxu0 0.0
    %1157 = vmatpush2.msra.mxu0 0.0
    %1158 = vmatprep.subr.mxu0 0.0
    %1159 = vmatpush2.msra.mxu0 0.0
    %1160 = vmatprep.subr.mxu0 0.0
    %1161 = vmatpush2.msra.mxu0 0.0
    %1162 = vmatprep.subr.mxu0 0.0
    %1163 = vmatpush2.msra.mxu0 0.0
    %1164 = vmatprep.subr.mxu0 0.0
    %1165 = vmatpush2.msra.mxu0 0.0
    %1166 = vmatprep.subr.mxu0 0.0
    %1167 = vmatpush2.msra.mxu0 0.0
    %1168 = vmatprep.subr.mxu0 0.0
    %1169 = vmatpush2.msra.mxu0 0.0
    %1170 = vmatprep.subr.mxu0 0.0
    %1171 = vmatpush2.msra.mxu0 0.0
    %1172 = vmatprep.subr.mxu0 0.0
    %1173 = vmatpush2.msra.mxu0 0.0
    %1174 = vmatprep.subr.mxu0 0.0
    %1175 = vmatpush2.msra.mxu0 0.0
    %1176 = vmatprep.subr.mxu0 0.0
    %1177 = vmatpush2.msra.mxu0 0.0
    %1178 = vmatprep.subr.mxu0 0.0
    %1179 = vmatpush2.msra.mxu0 0.0
    %1180 = vmatprep.subr.mxu0 0.0
    %1181 = vmatpush2.msra.mxu0 0.0
    %1182 = vmatprep.subr.mxu0 0.0
    %1183 = vmatpush2.msra.mxu0 0.0
    %1184 = vmatprep.subr.mxu0 0.0
    %1185 = vmatpush2.msra.mxu0 0.0
    %1186 = vmatprep.subr.mxu0 0.0
    %1187 = vmatpush2.msra.mxu0 0.0
    %1188 = vmatprep.mubr.f32.mxu0 0.0
    %1189 = vmatmul.mubr.f32.gmra.mxu0 %v1113
    %v1190 = vpop.f32.mrf.mxu0
    %v1191 = vadd.f32 %v1094, %v1190
    %v1192 = vpop.f32.mrf.mxu0
    %1193 = vmatprep.mubr.f32.mxu0 0.0
    %1194 = vmatmul.mubr.f32.gmra.mxu0 %v1116
    %v1195 = vpop.f32.mrf.mxu0
    %v1196 = vadd.f32 %v1099, %v1195
    %v1197 = vpop.f32.mrf.mxu0
    %1198 = vmatprep.mubr.f32.mxu0 0.0
    %1199 = vmatmul.mubr.f32.gmra.mxu0 %v1119
    %v1200 = vpop.f32.mrf.mxu0
    %v1201 = vadd.f32 %v1104, %v1200
    %v1202 = vpop.f32.mrf.mxu0
    %1203 = vmatprep.mubr.f32.mxu0 0.0
    %1204 = vmatmul.mubr.f32.gmra.mxu0 %v1122
    %v1205 = vpop.f32.mrf.mxu0
    %v1206 = vadd.f32 %v1109, %v1205
    %v1207 = vpop.f32.mrf.mxu0
    %1208 = vdwg.mxu0
    %s1209 = scalar_lea.vmem [#allocation15], 64
    %v1210 = vld [vmem:[%s1209] sm:$0xff]
    %v1211 = vld [vmem:[%s1209 + $0x8] sm:$0xff]
    %v1212 = vld [vmem:[%s1209 + $0x10] sm:$0xff]
    %v1213 = vld [vmem:[%s1209 + $0x18] sm:$0xff]
    %1214 = vrot.lane.b32.xlu0 %v986, 126
    %v1215 = vpop.permute.xlu0 %1214
    %1216 = vrot.lane.b32.xlu0 %v987, 126
    %v1217 = vpop.permute.xlu0 %1216
    %1218 = vrot.lane.b32.xlu0 %v988, 126
    %v1219 = vpop.permute.xlu0 %1218
    %1220 = vrot.lane.b32.xlu0 %v989, 126
    %v1221 = vpop.permute.xlu0 %1220
    %v1227 = vsel %vm208, %v1210, 0
    %v1230 = vsel %vm208, %v1211, 0
    %v1233 = vsel %vm208, %v1212, 0
    %v1236 = vsel %vm208, %v1213, 0
    %1238 = vmatprep.subr.mxu0 0.0
    %1239 = vmatpush1.msra.mxu0 0.0
    %1240 = vmatprep.subr.mxu0 0.0
    %1241 = vmatpush1.msra.mxu0 0.0
    %1242 = vmatprep.subr.mxu0 0.0
    %1243 = vmatpush1.msra.mxu0 0.0
    %1244 = vmatprep.subr.mxu0 0.0
    %1245 = vmatpush1.msra.mxu0 0.0
    %1246 = vmatprep.subr.mxu0 0.0
    %1247 = vmatpush1.msra.mxu0 0.0
    %1248 = vmatprep.subr.mxu0 0.0
    %1249 = vmatpush1.msra.mxu0 0.0
    %1250 = vmatprep.subr.mxu0 0.0
    %1251 = vmatpush1.msra.mxu0 0.0
    %1252 = vmatprep.subr.mxu0 0.0
    %1253 = vmatpush1.msra.mxu0 0.0
    %1254 = vmatprep.subr.mxu0 0.0
    %1255 = vmatpush1.msra.mxu0 0.0
    %1256 = vmatprep.subr.mxu0 0.0
    %1257 = vmatpush1.msra.mxu0 0.0
    %1258 = vmatprep.subr.mxu0 0.0
    %1259 = vmatpush1.msra.mxu0 0.0
    %1260 = vmatprep.subr.mxu0 0.0
    %1261 = vmatpush1.msra.mxu0 0.0
    %1262 = vmatprep.subr.mxu0 0.0
    %1263 = vmatpush1.msra.mxu0 %v1221
    %1264 = vmatprep.subr.mxu0 0.0
    %1265 = vmatpush1.msra.mxu0 %v1219
    %1266 = vmatprep.subr.mxu0 0.0
    %1267 = vmatpush1.msra.mxu0 %v1217
    %1268 = vmatprep.subr.mxu0 0.0
    %1269 = vmatpush1.msra.mxu0 %v1215
    %1270 = vmatprep.subr.mxu0 0.0
    %1271 = vmatpush2.msra.mxu0 0.0
    %1272 = vmatprep.subr.mxu0 0.0
    %1273 = vmatpush2.msra.mxu0 0.0
    %1274 = vmatprep.subr.mxu0 0.0
    %1275 = vmatpush2.msra.mxu0 0.0
    %1276 = vmatprep.subr.mxu0 0.0
    %1277 = vmatpush2.msra.mxu0 0.0
    %1278 = vmatprep.subr.mxu0 0.0
    %1279 = vmatpush2.msra.mxu0 0.0
    %1280 = vmatprep.subr.mxu0 0.0
    %1281 = vmatpush2.msra.mxu0 0.0
    %1282 = vmatprep.subr.mxu0 0.0
    %1283 = vmatpush2.msra.mxu0 0.0
    %1284 = vmatprep.subr.mxu0 0.0
    %1285 = vmatpush2.msra.mxu0 0.0
    %1286 = vmatprep.subr.mxu0 0.0
    %1287 = vmatpush2.msra.mxu0 0.0
    %1288 = vmatprep.subr.mxu0 0.0
    %1289 = vmatpush2.msra.mxu0 0.0
    %1290 = vmatprep.subr.mxu0 0.0
    %1291 = vmatpush2.msra.mxu0 0.0
    %1292 = vmatprep.subr.mxu0 0.0
    %1293 = vmatpush2.msra.mxu0 0.0
    %1294 = vmatprep.subr.mxu0 0.0
    %1295 = vmatpush2.msra.mxu0 0.0
    %1296 = vmatprep.subr.mxu0 0.0
    %1297 = vmatpush2.msra.mxu0 0.0
    %1298 = vmatprep.subr.mxu0 0.0
    %1299 = vmatpush2.msra.mxu0 0.0
    %1300 = vmatprep.subr.mxu0 0.0
    %1301 = vmatpush2.msra.mxu0 0.0
    %1302 = vmatprep.mubr.f32.mxu0 0.0
    %1303 = vmatmul.mubr.f32.gmra.mxu0 %v1227
    %v1304 = vpop.f32.mrf.mxu0
    %v1305 = vadd.f32 0.0, %v1304
    %v1306 = vpop.f32.mrf.mxu0
    %1307 = vmatprep.mubr.f32.mxu0 0.0
    %1308 = vmatmul.mubr.f32.gmra.mxu0 %v1230
    %v1309 = vpop.f32.mrf.mxu0
    %v1310 = vadd.f32 0.0, %v1309
    %v1311 = vpop.f32.mrf.mxu0
    %1312 = vmatprep.mubr.f32.mxu0 0.0
    %1313 = vmatmul.mubr.f32.gmra.mxu0 %v1233
    %v1314 = vpop.f32.mrf.mxu0
    %v1315 = vadd.f32 0.0, %v1314
    %v1316 = vpop.f32.mrf.mxu0
    %1317 = vmatprep.mubr.f32.mxu0 0.0
    %1318 = vmatmul.mubr.f32.gmra.mxu0 %v1236
    %v1319 = vpop.f32.mrf.mxu0
    %v1320 = vadd.f32 0.0, %v1319
    %v1321 = vpop.f32.mrf.mxu0
    %1322 = vdwg.mxu0
    %v1323 = vadd.f32 %v1191, %v1305
    %v1324 = vadd.f32 %v1196, %v1310
    %v1325 = vadd.f32 %v1201, %v1315
    %v1326 = vadd.f32 %v1206, %v1320
    %s1327 = scalar_lea.vmem [#allocation15], 96
    %v1328 = vld [vmem:[%s1327] sm:$0xff]
    %v1329 = vld [vmem:[%s1327 + $0x8] sm:$0xff]
    %v1330 = vld [vmem:[%s1327 + $0x10] sm:$0xff]
    %v1331 = vld [vmem:[%s1327 + $0x18] sm:$0xff]
    %1332 = vrot.lane.b32.xlu0 %v986, 118
    %v1333 = vpop.permute.xlu0 %1332
    %1334 = vrot.lane.b32.xlu0 %v987, 118
    %v1335 = vpop.permute.xlu0 %1334
    %1336 = vrot.lane.b32.xlu0 %v988, 118
    %v1337 = vpop.permute.xlu0 %1336
    %1338 = vrot.lane.b32.xlu0 %v989, 118
    %v1339 = vpop.permute.xlu0 %1338
    %v1345 = vsel %vm208, %v1328, 0
    %v1348 = vsel %vm208, %v1329, 0
    %v1351 = vsel %vm208, %v1330, 0
    %v1354 = vsel %vm208, %v1331, 0
    %1356 = vmatprep.subr.mxu0 0.0
    %1357 = vmatpush1.msra.mxu0 0.0
    %1358 = vmatprep.subr.mxu0 0.0
    %1359 = vmatpush1.msra.mxu0 0.0
    %1360 = vmatprep.subr.mxu0 0.0
    %1361 = vmatpush1.msra.mxu0 0.0
    %1362 = vmatprep.subr.mxu0 0.0
    %1363 = vmatpush1.msra.mxu0 0.0
    %1364 = vmatprep.subr.mxu0 0.0
    %1365 = vmatpush1.msra.mxu0 0.0
    %1366 = vmatprep.subr.mxu0 0.0
    %1367 = vmatpush1.msra.mxu0 0.0
    %1368 = vmatprep.subr.mxu0 0.0
    %1369 = vmatpush1.msra.mxu0 0.0
    %1370 = vmatprep.subr.mxu0 0.0
    %1371 = vmatpush1.msra.mxu0 0.0
    %1372 = vmatprep.subr.mxu0 0.0
    %1373 = vmatpush1.msra.mxu0 0.0
    %1374 = vmatprep.subr.mxu0 0.0
    %1375 = vmatpush1.msra.mxu0 0.0
    %1376 = vmatprep.subr.mxu0 0.0
    %1377 = vmatpush1.msra.mxu0 0.0
    %1378 = vmatprep.subr.mxu0 0.0
    %1379 = vmatpush1.msra.mxu0 0.0
    %1380 = vmatprep.subr.mxu0 0.0
    %1381 = vmatpush1.msra.mxu0 %v1339
    %1382 = vmatprep.subr.mxu0 0.0
    %1383 = vmatpush1.msra.mxu0 %v1337
    %1384 = vmatprep.subr.mxu0 0.0
    %1385 = vmatpush1.msra.mxu0 %v1335
    %1386 = vmatprep.subr.mxu0 0.0
    %1387 = vmatpush1.msra.mxu0 %v1333
    %1388 = vmatprep.subr.mxu0 0.0
    %1389 = vmatpush2.msra.mxu0 0.0
    %1390 = vmatprep.subr.mxu0 0.0
    %1391 = vmatpush2.msra.mxu0 0.0
    %1392 = vmatprep.subr.mxu0 0.0
    %1393 = vmatpush2.msra.mxu0 0.0
    %1394 = vmatprep.subr.mxu0 0.0
    %1395 = vmatpush2.msra.mxu0 0.0
    %1396 = vmatprep.subr.mxu0 0.0
    %1397 = vmatpush2.msra.mxu0 0.0
    %1398 = vmatprep.subr.mxu0 0.0
    %1399 = vmatpush2.msra.mxu0 0.0
    %1400 = vmatprep.subr.mxu0 0.0
    %1401 = vmatpush2.msra.mxu0 0.0
    %1402 = vmatprep.subr.mxu0 0.0
    %1403 = vmatpush2.msra.mxu0 0.0
    %1404 = vmatprep.subr.mxu0 0.0
    %1405 = vmatpush2.msra.mxu0 0.0
    %1406 = vmatprep.subr.mxu0 0.0
    %1407 = vmatpush2.msra.mxu0 0.0
    %1408 = vmatprep.subr.mxu0 0.0
    %1409 = vmatpush2.msra.mxu0 0.0
    %1410 = vmatprep.subr.mxu0 0.0
    %1411 = vmatpush2.msra.mxu0 0.0
    %1412 = vmatprep.subr.mxu0 0.0
    %1413 = vmatpush2.msra.mxu0 0.0
    %1414 = vmatprep.subr.mxu0 0.0
    %1415 = vmatpush2.msra.mxu0 0.0
    %1416 = vmatprep.subr.mxu0 0.0
    %1417 = vmatpush2.msra.mxu0 0.0
    %1418 = vmatprep.subr.mxu0 0.0
    %1419 = vmatpush2.msra.mxu0 0.0
    %1420 = vmatprep.mubr.f32.mxu0 0.0
    %1421 = vmatmul.mubr.f32.gmra.mxu0 %v1345
    %v1422 = vpop.f32.mrf.mxu0
    %v1423 = vadd.f32 0.0, %v1422
    %v1424 = vpop.f32.mrf.mxu0
    %1425 = vmatprep.mubr.f32.mxu0 0.0
    %1426 = vmatmul.mubr.f32.gmra.mxu0 %v1348
    %v1427 = vpop.f32.mrf.mxu0
    %v1428 = vadd.f32 0.0, %v1427
    %v1429 = vpop.f32.mrf.mxu0
    %1430 = vmatprep.mubr.f32.mxu0 0.0
    %1431 = vmatmul.mubr.f32.gmra.mxu0 %v1351
    %v1432 = vpop.f32.mrf.mxu0
    %v1433 = vadd.f32 0.0, %v1432
    %v1434 = vpop.f32.mrf.mxu0
    %1435 = vmatprep.mubr.f32.mxu0 0.0
    %1436 = vmatmul.mubr.f32.gmra.mxu0 %v1354
    %v1437 = vpop.f32.mrf.mxu0
    %v1438 = vadd.f32 0.0, %v1437
    %v1439 = vpop.f32.mrf.mxu0
    %1440 = vdwg.mxu0
    %v1441 = vadd.f32 %v1323, %v1423
    %v1442 = vadd.f32 %v1324, %v1428
    %v1443 = vadd.f32 %v1325, %v1433
    %v1444 = vadd.f32 %v1326, %v1438
    %s1445 = scalar_lea.vmem [#allocation15], 128
    %v1446 = vld [vmem:[%s1445] sm:$0xff]
    %v1447 = vld [vmem:[%s1445 + $0x8] sm:$0xff]
    %v1448 = vld [vmem:[%s1445 + $0x10] sm:$0xff]
    %v1449 = vld [vmem:[%s1445 + $0x18] sm:$0xff]
    %1450 = vrot.lane.b32.xlu0 %v986, 117
    %v1451 = vpop.permute.xlu0 %1450
    %1452 = vrot.lane.b32.xlu0 %v987, 117
    %v1453 = vpop.permute.xlu0 %1452
    %1454 = vrot.lane.b32.xlu0 %v988, 117
    %v1455 = vpop.permute.xlu0 %1454
    %1456 = vrot.lane.b32.xlu0 %v989, 117
    %v1457 = vpop.permute.xlu0 %1456
    %v1463 = vsel %vm208, %v1446, 0
    %v1466 = vsel %vm208, %v1447, 0
    %v1469 = vsel %vm208, %v1448, 0
    %v1472 = vsel %vm208, %v1449, 0
    %1474 = vmatprep.subr.mxu0 0.0
    %1475 = vmatpush1.msra.mxu0 0.0
    %1476 = vmatprep.subr.mxu0 0.0
    %1477 = vmatpush1.msra.mxu0 0.0
    %1478 = vmatprep.subr.mxu0 0.0
    %1479 = vmatpush1.msra.mxu0 0.0
    %1480 = vmatprep.subr.mxu0 0.0
    %1481 = vmatpush1.msra.mxu0 0.0
    %1482 = vmatprep.subr.mxu0 0.0
    %1483 = vmatpush1.msra.mxu0 0.0
    %1484 = vmatprep.subr.mxu0 0.0
    %1485 = vmatpush1.msra.mxu0 0.0
    %1486 = vmatprep.subr.mxu0 0.0
    %1487 = vmatpush1.msra.mxu0 0.0
    %1488 = vmatprep.subr.mxu0 0.0
    %1489 = vmatpush1.msra.mxu0 0.0
    %1490 = vmatprep.subr.mxu0 0.0
    %1491 = vmatpush1.msra.mxu0 0.0
    %1492 = vmatprep.subr.mxu0 0.0
    %1493 = vmatpush1.msra.mxu0 0.0
    %1494 = vmatprep.subr.mxu0 0.0
    %1495 = vmatpush1.msra.mxu0 0.0
    %1496 = vmatprep.subr.mxu0 0.0
    %1497 = vmatpush1.msra.mxu0 0.0
    %1498 = vmatprep.subr.mxu0 0.0
    %1499 = vmatpush1.msra.mxu0 %v1457
    %1500 = vmatprep.subr.mxu0 0.0
    %1501 = vmatpush1.msra.mxu0 %v1455
    %1502 = vmatprep.subr.mxu0 0.0
    %1503 = vmatpush1.msra.mxu0 %v1453
    %1504 = vmatprep.subr.mxu0 0.0
    %1505 = vmatpush1.msra.mxu0 %v1451
    %1506 = vmatprep.subr.mxu0 0.0
    %1507 = vmatpush2.msra.mxu0 0.0
    %1508 = vmatprep.subr.mxu0 0.0
    %1509 = vmatpush2.msra.mxu0 0.0
    %1510 = vmatprep.subr.mxu0 0.0
    %1511 = vmatpush2.msra.mxu0 0.0
    %1512 = vmatprep.subr.mxu0 0.0
    %1513 = vmatpush2.msra.mxu0 0.0
    %1514 = vmatprep.subr.mxu0 0.0
    %1515 = vmatpush2.msra.mxu0 0.0
    %1516 = vmatprep.subr.mxu0 0.0
    %1517 = vmatpush2.msra.mxu0 0.0
    %1518 = vmatprep.subr.mxu0 0.0
    %1519 = vmatpush2.msra.mxu0 0.0
    %1520 = vmatprep.subr.mxu0 0.0
    %1521 = vmatpush2.msra.mxu0 0.0
    %1522 = vmatprep.subr.mxu0 0.0
    %1523 = vmatpush2.msra.mxu0 0.0
    %1524 = vmatprep.subr.mxu0 0.0
    %1525 = vmatpush2.msra.mxu0 0.0
    %1526 = vmatprep.subr.mxu0 0.0
    %1527 = vmatpush2.msra.mxu0 0.0
    %1528 = vmatprep.subr.mxu0 0.0
    %1529 = vmatpush2.msra.mxu0 0.0
    %1530 = vmatprep.subr.mxu0 0.0
    %1531 = vmatpush2.msra.mxu0 0.0
    %1532 = vmatprep.subr.mxu0 0.0
    %1533 = vmatpush2.msra.mxu0 0.0
    %1534 = vmatprep.subr.mxu0 0.0
    %1535 = vmatpush2.msra.mxu0 0.0
    %1536 = vmatprep.subr.mxu0 0.0
    %1537 = vmatpush2.msra.mxu0 0.0
    %1538 = vmatprep.mubr.f32.mxu0 0.0
    %1539 = vmatmul.mubr.f32.gmra.mxu0 %v1463
    %v1540 = vpop.f32.mrf.mxu0
    %v1541 = vadd.f32 0.0, %v1540
    %v1542 = vpop.f32.mrf.mxu0
    %1543 = vmatprep.mubr.f32.mxu0 0.0
    %1544 = vmatmul.mubr.f32.gmra.mxu0 %v1466
    %v1545 = vpop.f32.mrf.mxu0
    %v1546 = vadd.f32 0.0, %v1545
    %v1547 = vpop.f32.mrf.mxu0
    %1548 = vmatprep.mubr.f32.mxu0 0.0
    %1549 = vmatmul.mubr.f32.gmra.mxu0 %v1469
    %v1550 = vpop.f32.mrf.mxu0
    %v1551 = vadd.f32 0.0, %v1550
    %v1552 = vpop.f32.mrf.mxu0
    %1553 = vmatprep.mubr.f32.mxu0 0.0
    %1554 = vmatmul.mubr.f32.gmra.mxu0 %v1472
    %v1555 = vpop.f32.mrf.mxu0
    %v1556 = vadd.f32 0.0, %v1555
    %v1557 = vpop.f32.mrf.mxu0
    %1558 = vdwg.mxu0
    %v1559 = vadd.f32 %v1441, %v1541
    %v1560 = vadd.f32 %v1442, %v1546
    %v1561 = vadd.f32 %v1443, %v1551
    %v1562 = vadd.f32 %v1444, %v1556
    %s1563 = scalar_lea.vmem [#allocation15], 160
    %v1564 = vld [vmem:[%s1563] sm:$0xff]
    %v1565 = vld [vmem:[%s1563 + $0x8] sm:$0xff]
    %v1566 = vld [vmem:[%s1563 + $0x10] sm:$0xff]
    %v1567 = vld [vmem:[%s1563 + $0x18] sm:$0xff]
    %1568 = vrot.lane.b32.xlu0 %v986, 116
    %v1569 = vpop.permute.xlu0 %1568
    %1570 = vrot.lane.b32.xlu0 %v987, 116
    %v1571 = vpop.permute.xlu0 %1570
    %1572 = vrot.lane.b32.xlu0 %v988, 116
    %v1573 = vpop.permute.xlu0 %1572
    %1574 = vrot.lane.b32.xlu0 %v989, 116
    %v1575 = vpop.permute.xlu0 %1574
    %v1581 = vsel %vm208, %v1564, 0
    %v1584 = vsel %vm208, %v1565, 0
    %v1587 = vsel %vm208, %v1566, 0
    %v1590 = vsel %vm208, %v1567, 0
    %1592 = vmatprep.subr.mxu0 0.0
    %1593 = vmatpush1.msra.mxu0 0.0
    %1594 = vmatprep.subr.mxu0 0.0
    %1595 = vmatpush1.msra.mxu0 0.0
    %1596 = vmatprep.subr.mxu0 0.0
    %1597 = vmatpush1.msra.mxu0 0.0
    %1598 = vmatprep.subr.mxu0 0.0
    %1599 = vmatpush1.msra.mxu0 0.0
    %1600 = vmatprep.subr.mxu0 0.0
    %1601 = vmatpush1.msra.mxu0 0.0
    %1602 = vmatprep.subr.mxu0 0.0
    %1603 = vmatpush1.msra.mxu0 0.0
    %1604 = vmatprep.subr.mxu0 0.0
    %1605 = vmatpush1.msra.mxu0 0.0
    %1606 = vmatprep.subr.mxu0 0.0
    %1607 = vmatpush1.msra.mxu0 0.0
    %1608 = vmatprep.subr.mxu0 0.0
    %1609 = vmatpush1.msra.mxu0 0.0
    %1610 = vmatprep.subr.mxu0 0.0
    %1611 = vmatpush1.msra.mxu0 0.0
    %1612 = vmatprep.subr.mxu0 0.0
    %1613 = vmatpush1.msra.mxu0 0.0
    %1614 = vmatprep.subr.mxu0 0.0
    %1615 = vmatpush1.msra.mxu0 0.0
    %1616 = vmatprep.subr.mxu0 0.0
    %1617 = vmatpush1.msra.mxu0 %v1575
    %1618 = vmatprep.subr.mxu0 0.0
    %1619 = vmatpush1.msra.mxu0 %v1573
    %1620 = vmatprep.subr.mxu0 0.0
    %1621 = vmatpush1.msra.mxu0 %v1571
    %1622 = vmatprep.subr.mxu0 0.0
    %1623 = vmatpush1.msra.mxu0 %v1569
    %1624 = vmatprep.subr.mxu0 0.0
    %1625 = vmatpush2.msra.mxu0 0.0
    %1626 = vmatprep.subr.mxu0 0.0
    %1627 = vmatpush2.msra.mxu0 0.0
    %1628 = vmatprep.subr.mxu0 0.0
    %1629 = vmatpush2.msra.mxu0 0.0
    %1630 = vmatprep.subr.mxu0 0.0
    %1631 = vmatpush2.msra.mxu0 0.0
    %1632 = vmatprep.subr.mxu0 0.0
    %1633 = vmatpush2.msra.mxu0 0.0
    %1634 = vmatprep.subr.mxu0 0.0
    %1635 = vmatpush2.msra.mxu0 0.0
    %1636 = vmatprep.subr.mxu0 0.0
    %1637 = vmatpush2.msra.mxu0 0.0
    %1638 = vmatprep.subr.mxu0 0.0
    %1639 = vmatpush2.msra.mxu0 0.0
    %1640 = vmatprep.subr.mxu0 0.0
    %1641 = vmatpush2.msra.mxu0 0.0
    %1642 = vmatprep.subr.mxu0 0.0
    %1643 = vmatpush2.msra.mxu0 0.0
    %1644 = vmatprep.subr.mxu0 0.0
    %1645 = vmatpush2.msra.mxu0 0.0
    %1646 = vmatprep.subr.mxu0 0.0
    %1647 = vmatpush2.msra.mxu0 0.0
    %1648 = vmatprep.subr.mxu0 0.0
    %1649 = vmatpush2.msra.mxu0 0.0
    %1650 = vmatprep.subr.mxu0 0.0
    %1651 = vmatpush2.msra.mxu0 0.0
    %1652 = vmatprep.subr.mxu0 0.0
    %1653 = vmatpush2.msra.mxu0 0.0
    %1654 = vmatprep.subr.mxu0 0.0
    %1655 = vmatpush2.msra.mxu0 0.0
    %1656 = vmatprep.mubr.f32.mxu0 0.0
    %1657 = vmatmul.mubr.f32.gmra.mxu0 %v1581
    %v1658 = vpop.f32.mrf.mxu0
    %v1659 = vadd.f32 0.0, %v1658
    %v1660 = vpop.f32.mrf.mxu0
    %1661 = vmatprep.mubr.f32.mxu0 0.0
    %1662 = vmatmul.mubr.f32.gmra.mxu0 %v1584
    %v1663 = vpop.f32.mrf.mxu0
    %v1664 = vadd.f32 0.0, %v1663
    %v1665 = vpop.f32.mrf.mxu0
    %1666 = vmatprep.mubr.f32.mxu0 0.0
    %1667 = vmatmul.mubr.f32.gmra.mxu0 %v1587
    %v1668 = vpop.f32.mrf.mxu0
    %v1669 = vadd.f32 0.0, %v1668
    %v1670 = vpop.f32.mrf.mxu0
    %1671 = vmatprep.mubr.f32.mxu0 0.0
    %1672 = vmatmul.mubr.f32.gmra.mxu0 %v1590
    %v1673 = vpop.f32.mrf.mxu0
    %v1674 = vadd.f32 0.0, %v1673
    %v1675 = vpop.f32.mrf.mxu0
    %1676 = vdwg.mxu0
    %v1677 = vadd.f32 %v1559, %v1659
    %v1678 = vadd.f32 %v1560, %v1664
    %v1679 = vadd.f32 %v1561, %v1669
    %v1680 = vadd.f32 %v1562, %v1674
    %s1681 = scalar_lea.vmem [#allocation15], 192
    %v1682 = vld [vmem:[%s1681] sm:$0xff]
    %v1683 = vld [vmem:[%s1681 + $0x8] sm:$0xff]
    %v1684 = vld [vmem:[%s1681 + $0x10] sm:$0xff]
    %v1685 = vld [vmem:[%s1681 + $0x18] sm:$0xff]
    %1686 = vrot.lane.b32.xlu0 %v986, 108
    %v1687 = vpop.permute.xlu0 %1686
    %1688 = vrot.lane.b32.xlu0 %v987, 108
    %v1689 = vpop.permute.xlu0 %1688
    %1690 = vrot.lane.b32.xlu0 %v988, 108
    %v1691 = vpop.permute.xlu0 %1690
    %1692 = vrot.lane.b32.xlu0 %v989, 108
    %v1693 = vpop.permute.xlu0 %1692
    %v1699 = vsel %vm208, %v1682, 0
    %v1702 = vsel %vm208, %v1683, 0
    %v1705 = vsel %vm208, %v1684, 0
    %v1708 = vsel %vm208, %v1685, 0
    %1710 = vmatprep.subr.mxu0 0.0
    %1711 = vmatpush1.msra.mxu0 0.0
    %1712 = vmatprep.subr.mxu0 0.0
    %1713 = vmatpush1.msra.mxu0 0.0
    %1714 = vmatprep.subr.mxu0 0.0
    %1715 = vmatpush1.msra.mxu0 0.0
    %1716 = vmatprep.subr.mxu0 0.0
    %1717 = vmatpush1.msra.mxu0 0.0
    %1718 = vmatprep.subr.mxu0 0.0
    %1719 = vmatpush1.msra.mxu0 0.0
    %1720 = vmatprep.subr.mxu0 0.0
    %1721 = vmatpush1.msra.mxu0 0.0
    %1722 = vmatprep.subr.mxu0 0.0
    %1723 = vmatpush1.msra.mxu0 0.0
    %1724 = vmatprep.subr.mxu0 0.0
    %1725 = vmatpush1.msra.mxu0 0.0
    %1726 = vmatprep.subr.mxu0 0.0
    %1727 = vmatpush1.msra.mxu0 0.0
    %1728 = vmatprep.subr.mxu0 0.0
    %1729 = vmatpush1.msra.mxu0 0.0
    %1730 = vmatprep.subr.mxu0 0.0
    %1731 = vmatpush1.msra.mxu0 0.0
    %1732 = vmatprep.subr.mxu0 0.0
    %1733 = vmatpush1.msra.mxu0 0.0
    %1734 = vmatprep.subr.mxu0 0.0
    %1735 = vmatpush1.msra.mxu0 %v1693
    %1736 = vmatprep.subr.mxu0 0.0
    %1737 = vmatpush1.msra.mxu0 %v1691
    %1738 = vmatprep.subr.mxu0 0.0
    %1739 = vmatpush1.msra.mxu0 %v1689
    %1740 = vmatprep.subr.mxu0 0.0
    %1741 = vmatpush1.msra.mxu0 %v1687
    %1742 = vmatprep.subr.mxu0 0.0
    %1743 = vmatpush2.msra.mxu0 0.0
    %1744 = vmatprep.subr.mxu0 0.0
    %1745 = vmatpush2.msra.mxu0 0.0
    %1746 = vmatprep.subr.mxu0 0.0
    %1747 = vmatpush2.msra.mxu0 0.0
    %1748 = vmatprep.subr.mxu0 0.0
    %1749 = vmatpush2.msra.mxu0 0.0
    %1750 = vmatprep.subr.mxu0 0.0
    %1751 = vmatpush2.msra.mxu0 0.0
    %1752 = vmatprep.subr.mxu0 0.0
    %1753 = vmatpush2.msra.mxu0 0.0
    %1754 = vmatprep.subr.mxu0 0.0
    %1755 = vmatpush2.msra.mxu0 0.0
    %1756 = vmatprep.subr.mxu0 0.0
    %1757 = vmatpush2.msra.mxu0 0.0
    %1758 = vmatprep.subr.mxu0 0.0
    %1759 = vmatpush2.msra.mxu0 0.0
    %1760 = vmatprep.subr.mxu0 0.0
    %1761 = vmatpush2.msra.mxu0 0.0
    %1762 = vmatprep.subr.mxu0 0.0
    %1763 = vmatpush2.msra.mxu0 0.0
    %1764 = vmatprep.subr.mxu0 0.0
    %1765 = vmatpush2.msra.mxu0 0.0
    %1766 = vmatprep.subr.mxu0 0.0
    %1767 = vmatpush2.msra.mxu0 0.0
    %1768 = vmatprep.subr.mxu0 0.0
    %1769 = vmatpush2.msra.mxu0 0.0
    %1770 = vmatprep.subr.mxu0 0.0
    %1771 = vmatpush2.msra.mxu0 0.0
    %1772 = vmatprep.subr.mxu0 0.0
    %1773 = vmatpush2.msra.mxu0 0.0
    %1774 = vmatprep.mubr.f32.mxu0 0.0
    %1775 = vmatmul.mubr.f32.gmra.mxu0 %v1699
    %v1776 = vpop.f32.mrf.mxu0
    %v1777 = vadd.f32 0.0, %v1776
    %v1778 = vpop.f32.mrf.mxu0
    %1779 = vmatprep.mubr.f32.mxu0 0.0
    %1780 = vmatmul.mubr.f32.gmra.mxu0 %v1702
    %v1781 = vpop.f32.mrf.mxu0
    %v1782 = vadd.f32 0.0, %v1781
    %v1783 = vpop.f32.mrf.mxu0
    %1784 = vmatprep.mubr.f32.mxu0 0.0
    %1785 = vmatmul.mubr.f32.gmra.mxu0 %v1705
    %v1786 = vpop.f32.mrf.mxu0
    %v1787 = vadd.f32 0.0, %v1786
    %v1788 = vpop.f32.mrf.mxu0
    %1789 = vmatprep.mubr.f32.mxu0 0.0
    %1790 = vmatmul.mubr.f32.gmra.mxu0 %v1708
    %v1791 = vpop.f32.mrf.mxu0
    %v1792 = vadd.f32 0.0, %v1791
    %v1793 = vpop.f32.mrf.mxu0
    %1794 = vdwg.mxu0
    %v1795 = vadd.f32 %v1677, %v1777
    %v1796 = vadd.f32 %v1678, %v1782
    %v1797 = vadd.f32 %v1679, %v1787
    %v1798 = vadd.f32 %v1680, %v1792
    %s1799 = scalar_lea.vmem [#allocation15], 224
    %v1800 = vld [vmem:[%s1799] sm:$0xff]
    %v1801 = vld [vmem:[%s1799 + $0x8] sm:$0xff]
    %v1802 = vld [vmem:[%s1799 + $0x10] sm:$0xff]
    %v1803 = vld [vmem:[%s1799 + $0x18] sm:$0xff]
    %1804 = vrot.lane.b32.xlu0 %v986, 107
    %v1805 = vpop.permute.xlu0 %1804
    %1806 = vrot.lane.b32.xlu0 %v987, 107
    %v1807 = vpop.permute.xlu0 %1806
    %1808 = vrot.lane.b32.xlu0 %v988, 107
    %v1809 = vpop.permute.xlu0 %1808
    %1810 = vrot.lane.b32.xlu0 %v989, 107
    %v1811 = vpop.permute.xlu0 %1810
    %v1817 = vsel %vm208, %v1800, 0
    %v1820 = vsel %vm208, %v1801, 0
    %v1823 = vsel %vm208, %v1802, 0
    %v1826 = vsel %vm208, %v1803, 0
    %1828 = vmatprep.subr.mxu0 0.0
    %1829 = vmatpush1.msra.mxu0 0.0
    %1830 = vmatprep.subr.mxu0 0.0
    %1831 = vmatpush1.msra.mxu0 0.0
    %1832 = vmatprep.subr.mxu0 0.0
    %1833 = vmatpush1.msra.mxu0 0.0
    %1834 = vmatprep.subr.mxu0 0.0
    %1835 = vmatpush1.msra.mxu0 0.0
    %1836 = vmatprep.subr.mxu0 0.0
    %1837 = vmatpush1.msra.mxu0 0.0
    %1838 = vmatprep.subr.mxu0 0.0
    %1839 = vmatpush1.msra.mxu0 0.0
    %1840 = vmatprep.subr.mxu0 0.0
    %1841 = vmatpush1.msra.mxu0 0.0
    %1842 = vmatprep.subr.mxu0 0.0
    %1843 = vmatpush1.msra.mxu0 0.0
    %1844 = vmatprep.subr.mxu0 0.0
    %1845 = vmatpush1.msra.mxu0 0.0
    %1846 = vmatprep.subr.mxu0 0.0
    %1847 = vmatpush1.msra.mxu0 0.0
    %1848 = vmatprep.subr.mxu0 0.0
    %1849 = vmatpush1.msra.mxu0 0.0
    %1850 = vmatprep.subr.mxu0 0.0
    %1851 = vmatpush1.msra.mxu0 0.0
    %1852 = vmatprep.subr.mxu0 0.0
    %1853 = vmatpush1.msra.mxu0 %v1811
    %1854 = vmatprep.subr.mxu0 0.0
    %1855 = vmatpush1.msra.mxu0 %v1809
    %1856 = vmatprep.subr.mxu0 0.0
    %1857 = vmatpush1.msra.mxu0 %v1807
    %1858 = vmatprep.subr.mxu0 0.0
    %1859 = vmatpush1.msra.mxu0 %v1805
    %1860 = vmatprep.subr.mxu0 0.0
    %1861 = vmatpush2.msra.mxu0 0.0
    %1862 = vmatprep.subr.mxu0 0.0
    %1863 = vmatpush2.msra.mxu0 0.0
    %1864 = vmatprep.subr.mxu0 0.0
    %1865 = vmatpush2.msra.mxu0 0.0
    %1866 = vmatprep.subr.mxu0 0.0
    %1867 = vmatpush2.msra.mxu0 0.0
    %1868 = vmatprep.subr.mxu0 0.0
    %1869 = vmatpush2.msra.mxu0 0.0
    %1870 = vmatprep.subr.mxu0 0.0
    %1871 = vmatpush2.msra.mxu0 0.0
    %1872 = vmatprep.subr.mxu0 0.0
    %1873 = vmatpush2.msra.mxu0 0.0
    %1874 = vmatprep.subr.mxu0 0.0
    %1875 = vmatpush2.msra.mxu0 0.0
    %1876 = vmatprep.subr.mxu0 0.0
    %1877 = vmatpush2.msra.mxu0 0.0
    %1878 = vmatprep.subr.mxu0 0.0
    %1879 = vmatpush2.msra.mxu0 0.0
    %1880 = vmatprep.subr.mxu0 0.0
    %1881 = vmatpush2.msra.mxu0 0.0
    %1882 = vmatprep.subr.mxu0 0.0
    %1883 = vmatpush2.msra.mxu0 0.0
    %1884 = vmatprep.subr.mxu0 0.0
    %1885 = vmatpush2.msra.mxu0 0.0
    %1886 = vmatprep.subr.mxu0 0.0
    %1887 = vmatpush2.msra.mxu0 0.0
    %1888 = vmatprep.subr.mxu0 0.0
    %1889 = vmatpush2.msra.mxu0 0.0
    %1890 = vmatprep.subr.mxu0 0.0
    %1891 = vmatpush2.msra.mxu0 0.0
    %1892 = vmatprep.mubr.f32.mxu0 0.0
    %1893 = vmatmul.mubr.f32.gmra.mxu0 %v1817
    %v1894 = vpop.f32.mrf.mxu0
    %v1895 = vadd.f32 0.0, %v1894
    %v1896 = vpop.f32.mrf.mxu0
    %1897 = vmatprep.mubr.f32.mxu0 0.0
    %1898 = vmatmul.mubr.f32.gmra.mxu0 %v1820
    %v1899 = vpop.f32.mrf.mxu0
    %v1900 = vadd.f32 0.0, %v1899
    %v1901 = vpop.f32.mrf.mxu0
    %1902 = vmatprep.mubr.f32.mxu0 0.0
    %1903 = vmatmul.mubr.f32.gmra.mxu0 %v1823
    %v1904 = vpop.f32.mrf.mxu0
    %v1905 = vadd.f32 0.0, %v1904
    %v1906 = vpop.f32.mrf.mxu0
    %1907 = vmatprep.mubr.f32.mxu0 0.0
    %1908 = vmatmul.mubr.f32.gmra.mxu0 %v1826
    %v1909 = vpop.f32.mrf.mxu0
    %v1910 = vadd.f32 0.0, %v1909
    %v1911 = vpop.f32.mrf.mxu0
    %1912 = vdwg.mxu0
    %v1913 = vadd.f32 %v1795, %v1895
    %v1914 = vadd.f32 %v1796, %v1900
    %v1915 = vadd.f32 %v1797, %v1905
    %v1916 = vadd.f32 %v1798, %v1910
    %s1917 = scalar_lea.vmem [#allocation15], 256
    %v1918 = vld [vmem:[%s1917] sm:$0xff]
    %v1919 = vld [vmem:[%s1917 + $0x8] sm:$0xff]
    %v1920 = vld [vmem:[%s1917 + $0x10] sm:$0xff]
    %v1921 = vld [vmem:[%s1917 + $0x18] sm:$0xff]
    %1922 = vrot.lane.b32.xlu0 %v986, 106
    %v1923 = vpop.permute.xlu0 %1922
    %1924 = vrot.lane.b32.xlu0 %v987, 106
    %v1925 = vpop.permute.xlu0 %1924
    %1926 = vrot.lane.b32.xlu0 %v988, 106
    %v1927 = vpop.permute.xlu0 %1926
    %1928 = vrot.lane.b32.xlu0 %v989, 106
    %v1929 = vpop.permute.xlu0 %1928
    %v1935 = vsel %vm208, %v1918, 0
    %v1938 = vsel %vm208, %v1919, 0
    %v1941 = vsel %vm208, %v1920, 0
    %v1944 = vsel %vm208, %v1921, 0
    %1946 = vmatprep.subr.mxu0 0.0
    %1947 = vmatpush1.msra.mxu0 0.0
    %1948 = vmatprep.subr.mxu0 0.0
    %1949 = vmatpush1.msra.mxu0 0.0
    %1950 = vmatprep.subr.mxu0 0.0
    %1951 = vmatpush1.msra.mxu0 0.0
    %1952 = vmatprep.subr.mxu0 0.0
    %1953 = vmatpush1.msra.mxu0 0.0
    %1954 = vmatprep.subr.mxu0 0.0
    %1955 = vmatpush1.msra.mxu0 0.0
    %1956 = vmatprep.subr.mxu0 0.0
    %1957 = vmatpush1.msra.mxu0 0.0
    %1958 = vmatprep.subr.mxu0 0.0
    %1959 = vmatpush1.msra.mxu0 0.0
    %1960 = vmatprep.subr.mxu0 0.0
    %1961 = vmatpush1.msra.mxu0 0.0
    %1962 = vmatprep.subr.mxu0 0.0
    %1963 = vmatpush1.msra.mxu0 0.0
    %1964 = vmatprep.subr.mxu0 0.0
    %1965 = vmatpush1.msra.mxu0 0.0
    %1966 = vmatprep.subr.mxu0 0.0
    %1967 = vmatpush1.msra.mxu0 0.0
    %1968 = vmatprep.subr.mxu0 0.0
    %1969 = vmatpush1.msra.mxu0 0.0
    %1970 = vmatprep.subr.mxu0 0.0
    %1971 = vmatpush1.msra.mxu0 %v1929
    %1972 = vmatprep.subr.mxu0 0.0
    %1973 = vmatpush1.msra.mxu0 %v1927
    %1974 = vmatprep.subr.mxu0 0.0
    %1975 = vmatpush1.msra.mxu0 %v1925
    %1976 = vmatprep.subr.mxu0 0.0
    %1977 = vmatpush1.msra.mxu0 %v1923
    %1978 = vmatprep.subr.mxu0 0.0
    %1979 = vmatpush2.msra.mxu0 0.0
    %1980 = vmatprep.subr.mxu0 0.0
    %1981 = vmatpush2.msra.mxu0 0.0
    %1982 = vmatprep.subr.mxu0 0.0
    %1983 = vmatpush2.msra.mxu0 0.0
    %1984 = vmatprep.subr.mxu0 0.0
    %1985 = vmatpush2.msra.mxu0 0.0
    %1986 = vmatprep.subr.mxu0 0.0
    %1987 = vmatpush2.msra.mxu0 0.0
    %1988 = vmatprep.subr.mxu0 0.0
    %1989 = vmatpush2.msra.mxu0 0.0
    %1990 = vmatprep.subr.mxu0 0.0
    %1991 = vmatpush2.msra.mxu0 0.0
    %1992 = vmatprep.subr.mxu0 0.0
    %1993 = vmatpush2.msra.mxu0 0.0
    %1994 = vmatprep.subr.mxu0 0.0
    %1995 = vmatpush2.msra.mxu0 0.0
    %1996 = vmatprep.subr.mxu0 0.0
    %1997 = vmatpush2.msra.mxu0 0.0
    %1998 = vmatprep.subr.mxu0 0.0
    %1999 = vmatpush2.msra.mxu0 0.0
    %2000 = vmatprep.subr.mxu0 0.0
    %2001 = vmatpush2.msra.mxu0 0.0
    %2002 = vmatprep.subr.mxu0 0.0
    %2003 = vmatpush2.msra.mxu0 0.0
    %2004 = vmatprep.subr.mxu0 0.0
    %2005 = vmatpush2.msra.mxu0 0.0
    %2006 = vmatprep.subr.mxu0 0.0
    %2007 = vmatpush2.msra.mxu0 0.0
    %2008 = vmatprep.subr.mxu0 0.0
    %2009 = vmatpush2.msra.mxu0 0.0
    %2010 = vmatprep.mubr.f32.mxu0 0.0
    %2011 = vmatmul.mubr.f32.gmra.mxu0 %v1935
    %v2012 = vpop.f32.mrf.mxu0
    %v2013 = vadd.f32 0.0, %v2012
    %v2014 = vpop.f32.mrf.mxu0
    %2015 = vmatprep.mubr.f32.mxu0 0.0
    %2016 = vmatmul.mubr.f32.gmra.mxu0 %v1938
    %v2017 = vpop.f32.mrf.mxu0
    %v2018 = vadd.f32 0.0, %v2017
    %v2019 = vpop.f32.mrf.mxu0
    %2020 = vmatprep.mubr.f32.mxu0 0.0
    %2021 = vmatmul.mubr.f32.gmra.mxu0 %v1941
    %v2022 = vpop.f32.mrf.mxu0
    %v2023 = vadd.f32 0.0, %v2022
    %v2024 = vpop.f32.mrf.mxu0
    %2025 = vmatprep.mubr.f32.mxu0 0.0
    %2026 = vmatmul.mubr.f32.gmra.mxu0 %v1944
    %v2027 = vpop.f32.mrf.mxu0
    %v2028 = vadd.f32 0.0, %v2027
    %v2029 = vpop.f32.mrf.mxu0
    %2030 = vdwg.mxu0
    %v2031 = vadd.f32 %v1913, %v2013
    %v2032 = vadd.f32 %v1914, %v2018
    %v2033 = vadd.f32 %v1915, %v2023
    %v2034 = vadd.f32 %v1916, %v2028
    %v2035 = vld [vmem:[#allocation12] sm:$0xff]
    %v2036 = vld [vmem:[#allocation12 + $0x8] sm:$0xff]
    %v2037 = vld [vmem:[#allocation12 + $0x10] sm:$0xff]
    %v2038 = vld [vmem:[#allocation12 + $0x18] sm:$0xff]
    %v2039 = vld [vmem:[%s11] sm:$0xff]
    %v2040 = vld [vmem:[%s11 + $0x8] sm:$0xff]
    %v2041 = vld [vmem:[%s11 + $0x10] sm:$0xff]
    %v2042 = vld [vmem:[%s11 + $0x18] sm:$0xff]
    %v2043 = vld [vmem:[%s12] sm:$0xff]
    %v2044 = vld [vmem:[%s12 + $0x8] sm:$0xff]
    %v2045 = vld [vmem:[%s12 + $0x10] sm:$0xff]
    %v2046 = vld [vmem:[%s12 + $0x18] sm:$0xff]
    %v2047 = vsel %vm964, 1, 0
    %v2048 = vlaneseq
    %v2049 = vshrl.u32 %v2048, 7
    %v2050 = vsub.s32 0, %v2049
    %v2051 = vrot.slane %v2047, %v2050
    %vm2052 = vcmp.eq.s32.totalorder %v2051, 1
    %v2053 = vsel %vm2052, %v2031, 0.0
    %v2054 = vsel %vm2052, %v2032, 0.0
    %v2055 = vsel %vm2052, %v2033, 0.0
    %v2056 = vsel %vm2052, %v2034, 0.0
    %vm2057 = vcmask 818176
    %v2058 = vsel %vm2057, %v2053, 0.0
    %2059 = vadd.xlane.f32.xlu0 %v2058
    %v2060 = vpop.xlane.xlu0 %2059
    %v2061 = vsel %vm2057, %v2054, 0.0
    %2062 = vadd.xlane.f32.xlu0 %v2061
    %v2063 = vpop.xlane.xlu0 %2062
    %v2064 = vsel %vm2057, %v2055, 0.0
    %2065 = vadd.xlane.f32.xlu0 %v2064
    %v2066 = vpop.xlane.xlu0 %2065
    %v2067 = vsel %vm2057, %v2056, 0.0
    %2068 = vadd.xlane.f32.xlu0 %v2067
    %v2069 = vpop.xlane.xlu0 %2068
    %v2071 = vsel %vm208, %v2035, 0
    %v2074 = vsel %vm208, %v2036, 0
    %v2077 = vsel %vm208, %v2037, 0
    %v2080 = vsel %vm208, %v2038, 0
    %2082 = vmatprep.subr.mxu0 0.0
    %2083 = vmatpush1.msra.mxu0 0.0
    %2084 = vmatprep.subr.mxu0 0.0
    %2085 = vmatpush1.msra.mxu0 0.0
    %2086 = vmatprep.subr.mxu0 0.0
    %2087 = vmatpush1.msra.mxu0 0.0
    %2088 = vmatprep.subr.mxu0 0.0
    %2089 = vmatpush1.msra.mxu0 0.0
    %2090 = vmatprep.subr.mxu0 0.0
    %2091 = vmatpush1.msra.mxu0 0.0
    %2092 = vmatprep.subr.mxu0 0.0
    %2093 = vmatpush1.msra.mxu0 0.0
    %2094 = vmatprep.subr.mxu0 0.0
    %2095 = vmatpush1.msra.mxu0 0.0
    %2096 = vmatprep.subr.mxu0 0.0
    %2097 = vmatpush1.msra.mxu0 0.0
    %2098 = vmatprep.subr.mxu0 0.0
    %2099 = vmatpush1.msra.mxu0 0.0
    %2100 = vmatprep.subr.mxu0 0.0
    %2101 = vmatpush1.msra.mxu0 0.0
    %2102 = vmatprep.subr.mxu0 0.0
    %2103 = vmatpush1.msra.mxu0 0.0
    %2104 = vmatprep.subr.mxu0 0.0
    %2105 = vmatpush1.msra.mxu0 0.0
    %2106 = vmatprep.subr.mxu0 0.0
    %2107 = vmatpush1.msra.mxu0 %v2069
    %2108 = vmatprep.subr.mxu0 0.0
    %2109 = vmatpush1.msra.mxu0 %v2066
    %2110 = vmatprep.subr.mxu0 0.0
    %2111 = vmatpush1.msra.mxu0 %v2063
    %2112 = vmatprep.subr.mxu0 0.0
    %2113 = vmatpush1.msra.mxu0 %v2060
    %2114 = vmatprep.subr.mxu0 0.0
    %2115 = vmatpush2.msra.mxu0 0.0
    %2116 = vmatprep.subr.mxu0 0.0
    %2117 = vmatpush2.msra.mxu0 0.0
    %2118 = vmatprep.subr.mxu0 0.0
    %2119 = vmatpush2.msra.mxu0 0.0
    %2120 = vmatprep.subr.mxu0 0.0
    %2121 = vmatpush2.msra.mxu0 0.0
    %2122 = vmatprep.subr.mxu0 0.0
    %2123 = vmatpush2.msra.mxu0 0.0
    %2124 = vmatprep.subr.mxu0 0.0
    %2125 = vmatpush2.msra.mxu0 0.0
    %2126 = vmatprep.subr.mxu0 0.0
    %2127 = vmatpush2.msra.mxu0 0.0
    %2128 = vmatprep.subr.mxu0 0.0
    %2129 = vmatpush2.msra.mxu0 0.0
    %2130 = vmatprep.subr.mxu0 0.0
    %2131 = vmatpush2.msra.mxu0 0.0
    %2132 = vmatprep.subr.mxu0 0.0
    %2133 = vmatpush2.msra.mxu0 0.0
    %2134 = vmatprep.subr.mxu0 0.0
    %2135 = vmatpush2.msra.mxu0 0.0
    %2136 = vmatprep.subr.mxu0 0.0
    %2137 = vmatpush2.msra.mxu0 0.0
    %2138 = vmatprep.subr.mxu0 0.0
    %2139 = vmatpush2.msra.mxu0 0.0
    %2140 = vmatprep.subr.mxu0 0.0
    %2141 = vmatpush2.msra.mxu0 0.0
    %2142 = vmatprep.subr.mxu0 0.0
    %2143 = vmatpush2.msra.mxu0 0.0
    %2144 = vmatprep.subr.mxu0 0.0
    %2145 = vmatpush2.msra.mxu0 0.0
    %2146 = vmatprep.mubr.f32.mxu0 0.0
    %2147 = vmatmul.mubr.f32.gmra.mxu0 %v2071
    %v2148 = vpop.f32.mrf.mxu0
    %v2149 = vadd.f32 0.0, %v2148
    %v2150 = vpop.f32.mrf.mxu0
    %2151 = vmatprep.mubr.f32.mxu0 0.0
    %2152 = vmatmul.mubr.f32.gmra.mxu0 %v2074
    %v2153 = vpop.f32.mrf.mxu0
    %v2154 = vadd.f32 0.0, %v2153
    %v2155 = vpop.f32.mrf.mxu0
    %2156 = vmatprep.mubr.f32.mxu0 0.0
    %2157 = vmatmul.mubr.f32.gmra.mxu0 %v2077
    %v2158 = vpop.f32.mrf.mxu0
    %v2159 = vadd.f32 0.0, %v2158
    %v2160 = vpop.f32.mrf.mxu0
    %2161 = vmatprep.mubr.f32.mxu0 0.0
    %2162 = vmatmul.mubr.f32.gmra.mxu0 %v2080
    %v2163 = vpop.f32.mrf.mxu0
    %v2164 = vadd.f32 0.0, %v2163
    %v2165 = vpop.f32.mrf.mxu0
    %2166 = vdwg.mxu0
    %v2167 = vmul.f32 %v2149, 0.0078125
    %v2168 = vmul.f32 %v2154, 0.0078125
    %v2169 = vmul.f32 %v2159, 0.0078125
    %v2170 = vmul.f32 %v2164, 0.0078125
    %2172 = vset.pattern.permute.xlu0 0
    %2173 = vperm.xlu0 %2172, %v2167
    %v2174 = vpop.permute.xlu0 %2173
    %2177 = vset.pattern.permute.xlu0 0
    %2178 = vperm.xlu0 %2177, %v2168
    %v2179 = vpop.permute.xlu0 %2178
    %2182 = vset.pattern.permute.xlu0 0
    %2183 = vperm.xlu0 %2182, %v2169
    %v2184 = vpop.permute.xlu0 %2183
    %2187 = vset.pattern.permute.xlu0 0
    %2188 = vperm.xlu0 %2187, %v2170
    %v2189 = vpop.permute.xlu0 %2188
    %v2191 = vsub.f32 %v2053, %v2174
    %v2192 = vsub.f32 %v2054, %v2179
    %v2193 = vsub.f32 %v2055, %v2184
    %v2194 = vsub.f32 %v2056, %v2189
    %v2195 = vsel %vm2052, %v2191, 0.0
    %v2196 = vsel %vm2052, %v2192, 0.0
    %v2197 = vsel %vm2052, %v2193, 0.0
    %v2198 = vsel %vm2052, %v2194, 0.0
    %v2199 = vmul.f32 %v2195, %v2195
    %v2200 = vmul.f32 %v2196, %v2196
    %v2201 = vmul.f32 %v2197, %v2197
    %v2202 = vmul.f32 %v2198, %v2198
    %v2203 = vsel %vm2057, %v2199, 0.0
    %2204 = vadd.xlane.f32.xlu0 %v2203
    %v2205 = vpop.xlane.xlu0 %2204
    %v2206 = vsel %vm2057, %v2200, 0.0
    %2207 = vadd.xlane.f32.xlu0 %v2206
    %v2208 = vpop.xlane.xlu0 %2207
    %v2209 = vsel %vm2057, %v2201, 0.0
    %2210 = vadd.xlane.f32.xlu0 %v2209
    %v2211 = vpop.xlane.xlu0 %2210
    %v2212 = vsel %vm2057, %v2202, 0.0
    %2213 = vadd.xlane.f32.xlu0 %v2212
    %v2214 = vpop.xlane.xlu0 %2213
    %2215 = vmatprep.subr.mxu0 0.0
    %2216 = vmatpush1.msra.mxu0 0.0
    %2217 = vmatprep.subr.mxu0 0.0
    %2218 = vmatpush1.msra.mxu0 0.0
    %2219 = vmatprep.subr.mxu0 0.0
    %2220 = vmatpush1.msra.mxu0 0.0
    %2221 = vmatprep.subr.mxu0 0.0
    %2222 = vmatpush1.msra.mxu0 0.0
    %2223 = vmatprep.subr.mxu0 0.0
    %2224 = vmatpush1.msra.mxu0 0.0
    %2225 = vmatprep.subr.mxu0 0.0
    %2226 = vmatpush1.msra.mxu0 0.0
    %2227 = vmatprep.subr.mxu0 0.0
    %2228 = vmatpush1.msra.mxu0 0.0
    %2229 = vmatprep.subr.mxu0 0.0
    %2230 = vmatpush1.msra.mxu0 0.0
    %2231 = vmatprep.subr.mxu0 0.0
    %2232 = vmatpush1.msra.mxu0 0.0
    %2233 = vmatprep.subr.mxu0 0.0
    %2234 = vmatpush1.msra.mxu0 0.0
    %2235 = vmatprep.subr.mxu0 0.0
    %2236 = vmatpush1.msra.mxu0 0.0
    %2237 = vmatprep.subr.mxu0 0.0
    %2238 = vmatpush1.msra.mxu0 0.0
    %2239 = vmatprep.subr.mxu0 0.0
    %2240 = vmatpush1.msra.mxu0 %v2214
    %2241 = vmatprep.subr.mxu0 0.0
    %2242 = vmatpush1.msra.mxu0 %v2211
    %2243 = vmatprep.subr.mxu0 0.0
    %2244 = vmatpush1.msra.mxu0 %v2208
    %2245 = vmatprep.subr.mxu0 0.0
    %2246 = vmatpush1.msra.mxu0 %v2205
    %2247 = vmatprep.subr.mxu0 0.0
    %2248 = vmatpush2.msra.mxu0 0.0
    %2249 = vmatprep.subr.mxu0 0.0
    %2250 = vmatpush2.msra.mxu0 0.0
    %2251 = vmatprep.subr.mxu0 0.0
    %2252 = vmatpush2.msra.mxu0 0.0
    %2253 = vmatprep.subr.mxu0 0.0
    %2254 = vmatpush2.msra.mxu0 0.0
    %2255 = vmatprep.subr.mxu0 0.0
    %2256 = vmatpush2.msra.mxu0 0.0
    %2257 = vmatprep.subr.mxu0 0.0
    %2258 = vmatpush2.msra.mxu0 0.0
    %2259 = vmatprep.subr.mxu0 0.0
    %2260 = vmatpush2.msra.mxu0 0.0
    %2261 = vmatprep.subr.mxu0 0.0
    %2262 = vmatpush2.msra.mxu0 0.0
    %2263 = vmatprep.subr.mxu0 0.0
    %2264 = vmatpush2.msra.mxu0 0.0
    %2265 = vmatprep.subr.mxu0 0.0
    %2266 = vmatpush2.msra.mxu0 0.0
    %2267 = vmatprep.subr.mxu0 0.0
    %2268 = vmatpush2.msra.mxu0 0.0
    %2269 = vmatprep.subr.mxu0 0.0
    %2270 = vmatpush2.msra.mxu0 0.0
    %2271 = vmatprep.subr.mxu0 0.0
    %2272 = vmatpush2.msra.mxu0 0.0
    %2273 = vmatprep.subr.mxu0 0.0
    %2274 = vmatpush2.msra.mxu0 0.0
    %2275 = vmatprep.subr.mxu0 0.0
    %2276 = vmatpush2.msra.mxu0 0.0
    %2277 = vmatprep.subr.mxu0 0.0
    %2278 = vmatpush2.msra.mxu0 0.0
    %2279 = vmatprep.mubr.f32.mxu0 0.0
    %2280 = vmatmul.mubr.f32.gmra.mxu0 %v2071
    %v2281 = vpop.f32.mrf.mxu0
    %v2282 = vadd.f32 0.0, %v2281
    %v2283 = vpop.f32.mrf.mxu0
    %2284 = vmatprep.mubr.f32.mxu0 0.0
    %2285 = vmatmul.mubr.f32.gmra.mxu0 %v2074
    %v2286 = vpop.f32.mrf.mxu0
    %v2287 = vadd.f32 0.0, %v2286
    %v2288 = vpop.f32.mrf.mxu0
    %2289 = vmatprep.mubr.f32.mxu0 0.0
    %2290 = vmatmul.mubr.f32.gmra.mxu0 %v2077
    %v2291 = vpop.f32.mrf.mxu0
    %v2292 = vadd.f32 0.0, %v2291
    %v2293 = vpop.f32.mrf.mxu0
    %2294 = vmatprep.mubr.f32.mxu0 0.0
    %2295 = vmatmul.mubr.f32.gmra.mxu0 %v2080
    %v2296 = vpop.f32.mrf.mxu0
    %v2297 = vadd.f32 0.0, %v2296
    %v2298 = vpop.f32.mrf.mxu0
    %2299 = vdwg.mxu0
    %v2300 = vmul.f32 %v2282, 0.0078125
    %v2301 = vmul.f32 %v2287, 0.0078125
    %v2302 = vmul.f32 %v2292, 0.0078125
    %v2303 = vmul.f32 %v2297, 0.0078125
    %v2304 = vadd.f32 %v2300, 1e-05
    %v2305 = vadd.f32 %v2301, 1e-05
    %v2306 = vadd.f32 %v2302, 1e-05
    %v2307 = vadd.f32 %v2303, 1e-05
    %v2308 = vrsqrt.pop %v2304
    %v2309 = vrsqrt.pop %v2305
    %v2310 = vrsqrt.pop %v2306
    %v2311 = vrsqrt.pop %v2307
    %2313 = vset.pattern.permute.xlu0 0
    %2314 = vperm.xlu0 %2313, %v2308
    %v2315 = vpop.permute.xlu0 %2314
    %2318 = vset.pattern.permute.xlu0 0
    %2319 = vperm.xlu0 %2318, %v2309
    %v2320 = vpop.permute.xlu0 %2319
    %2323 = vset.pattern.permute.xlu0 0
    %2324 = vperm.xlu0 %2323, %v2310
    %v2325 = vpop.permute.xlu0 %2324
    %2328 = vset.pattern.permute.xlu0 0
    %2329 = vperm.xlu0 %2328, %v2311
    %v2330 = vpop.permute.xlu0 %2329
    %v2332 = vmul.f32 %v2195, %v2315
    %v2333 = vmul.f32 %v2196, %v2320
    %v2334 = vmul.f32 %v2197, %v2325
    %v2335 = vmul.f32 %v2198, %v2330
    %2337 = vset.pattern.permute.xlu0 0
    %2338 = vperm.xlu0 %2337, %v2039
    %v2339 = vpop.permute.xlu0 %2338
    %2342 = vset.pattern.permute.xlu0 0
    %2343 = vperm.xlu0 %2342, %v2040
    %v2344 = vpop.permute.xlu0 %2343
    %2347 = vset.pattern.permute.xlu0 0
    %2348 = vperm.xlu0 %2347, %v2041
    %v2349 = vpop.permute.xlu0 %2348
    %2352 = vset.pattern.permute.xlu0 0
    %2353 = vperm.xlu0 %2352, %v2042
    %v2354 = vpop.permute.xlu0 %2353
    %v2356 = vmul.f32 %v2332, %v2339
    %v2357 = vmul.f32 %v2333, %v2344
    %v2358 = vmul.f32 %v2334, %v2349
    %v2359 = vmul.f32 %v2335, %v2354
    %2361 = vset.pattern.permute.xlu0 0
    %2362 = vperm.xlu0 %2361, %v2043
    %v2363 = vpop.permute.xlu0 %2362
    %2366 = vset.pattern.permute.xlu0 0
    %2367 = vperm.xlu0 %2366, %v2044
    %v2368 = vpop.permute.xlu0 %2367
    %2371 = vset.pattern.permute.xlu0 0
    %2372 = vperm.xlu0 %2371, %v2045
    %v2373 = vpop.permute.xlu0 %2372
    %2376 = vset.pattern.permute.xlu0 0
    %2377 = vperm.xlu0 %2376, %v2046
    %v2378 = vpop.permute.xlu0 %2377
    %v2380 = vadd.f32 %v2356, %v2363
    %v2381 = vadd.f32 %v2357, %v2368
    %v2382 = vadd.f32 %v2358, %v2373
    %v2383 = vadd.f32 %v2359, %v2378
    %vm2384 = vcmp.ge.f32.partialorder %v2380, 0.0
    %vm2385 = vcmp.ge.f32.partialorder %v2381, 0.0
    %vm2386 = vcmp.ge.f32.partialorder %v2382, 0.0
    %vm2387 = vcmp.ge.f32.partialorder %v2383, 0.0
    %v2388 = vmul.f32 %v2380, 0.2
    %v2389 = vmul.f32 %v2381, 0.2
    %v2390 = vmul.f32 %v2382, 0.2
    %v2391 = vmul.f32 %v2383, 0.2
    %v2392 = vsel %vm2384, %v2380, %v2388
    %v2393 = vsel %vm2385, %v2381, %v2389
    %v2394 = vsel %vm2386, %v2382, %v2390
    %v2395 = vsel %vm2387, %v2383, %v2391
    %v2396 = vsel %vm2052, %v2392, 0.0
    %v2397 = vsel %vm2052, %v2393, 0.0
    %v2398 = vsel %vm2052, %v2394, 0.0
    %v2399 = vsel %vm2052, %v2395, 0.0
    %v2400 = vld [vmem:[%s14] sm:$0xff]
    %v2401 = vld [vmem:[%s14 + $0x8] sm:$0xff]
    %v2402 = vld [vmem:[%s14 + $0x10] sm:$0xff]
    %v2403 = vld [vmem:[%s14 + $0x18] sm:$0xff]
    %v2404 = vld [vmem:[%s14 + $0x20] sm:$0xff]
    %v2405 = vld [vmem:[%s14 + $0x28] sm:$0xff]
    %v2406 = vld [vmem:[%s14 + $0x30] sm:$0xff]
    %v2407 = vld [vmem:[%s14 + $0x38] sm:$0xff]
    %v2408 = vld [vmem:[%s14 + $0x40] sm:$0xff]
    %v2409 = vld [vmem:[%s14 + $0x48] sm:$0xff]
    %v2410 = vld [vmem:[%s14 + $0x50] sm:$0xff]
    %v2411 = vld [vmem:[%s14 + $0x58] sm:$0xff]
    %v2412 = vld [vmem:[%s14 + $0x60] sm:$0xff]
    %v2413 = vld [vmem:[%s14 + $0x68] sm:$0xff]
    %v2414 = vld [vmem:[%s14 + $0x70] sm:$0xff]
    %v2415 = vld [vmem:[%s14 + $0x78] sm:$0xff]
    %v2416 = vld [vmem:[%s14 + $0x80] sm:$0xff]
    %v2417 = vld [vmem:[%s14 + $0x88] sm:$0xff]
    %v2418 = vld [vmem:[%s14 + $0x90] sm:$0xff]
    %v2419 = vld [vmem:[%s14 + $0x98] sm:$0xff]
    %v2420 = vld [vmem:[%s14 + $0xa0] sm:$0xff]
    %v2421 = vld [vmem:[%s14 + $0xa8] sm:$0xff]
    %v2422 = vld [vmem:[%s14 + $0xb0] sm:$0xff]
    %v2423 = vld [vmem:[%s14 + $0xb8] sm:$0xff]
    %v2424 = vld [vmem:[%s14 + $0xc0] sm:$0xff]
    %v2425 = vld [vmem:[%s14 + $0xc8] sm:$0xff]
    %v2426 = vld [vmem:[%s14 + $0xd0] sm:$0xff]
    %v2427 = vld [vmem:[%s14 + $0xd8] sm:$0xff]
    %v2428 = vld [vmem:[%s14 + $0xe0] sm:$0xff]
    %v2429 = vld [vmem:[%s14 + $0xe8] sm:$0xff]
    %v2430 = vld [vmem:[%s14 + $0xf0] sm:$0xff]
    %v2431 = vld [vmem:[%s14 + $0xf8] sm:$0xff]
    %v2432 = vld [vmem:[%s14 + $0x100] sm:$0xff]
    %v2433 = vld [vmem:[%s14 + $0x108] sm:$0xff]
    %v2434 = vld [vmem:[%s14 + $0x110] sm:$0xff]
    %v2435 = vld [vmem:[%s14 + $0x118] sm:$0xff]
    %v2436 = vld [vmem:[%s14 + $0x120] sm:$0xf]
    %v2437 = vld [vmem:[%s14 + $0x128] sm:$0xf]
    %v2438 = vld [vmem:[%s14 + $0x130] sm:$0xf]
    %v2440 = vsel %vm2057, %v2396, 0
    %v2443 = vsel %vm2057, %v2397, 0
    %v2446 = vsel %vm2057, %v2398, 0
    %v2449 = vsel %vm2057, %v2399, 0
    %vm2451 = vcmask 1043456
    %v2453 = vsel %vm2451, %v2436, 0
    %v2456 = vsel %vm2451, %v2437, 0
    %v2459 = vsel %vm2451, %v2438, 0
    %2461 = vmatprep.subr.mxu0 0.0
    %2462 = vmatpush1.msra.mxu0 0.0
    %2463 = vmatprep.subr.mxu0 0.0
    %2464 = vmatpush1.msra.mxu0 0.0
    %2465 = vmatprep.subr.mxu0 0.0
    %2466 = vmatpush1.msra.mxu0 0.0
    %2467 = vmatprep.subr.mxu0 %v2456
    %2468 = vmatpush1.msra.mxu0 %v2453
    %2469 = vmatprep.subr.mxu0 %v2434
    %2470 = vmatpush1.msra.mxu0 %v2433
    %2471 = vmatprep.subr.mxu0 %v2431
    %2472 = vmatpush1.msra.mxu0 %v2430
    %2473 = vmatprep.subr.mxu0 %v2428
    %2474 = vmatpush1.msra.mxu0 %v2427
    %2475 = vmatprep.subr.mxu0 %v2425
    %2476 = vmatpush1.msra.mxu0 %v2424
    %2477 = vmatprep.subr.mxu0 %v2422
    %2478 = vmatpush1.msra.mxu0 %v2421
    %2479 = vmatprep.subr.mxu0 %v2419
    %2480 = vmatpush1.msra.mxu0 %v2418
    %2481 = vmatprep.subr.mxu0 %v2416
    %2482 = vmatpush1.msra.mxu0 %v2415
    %2483 = vmatprep.subr.mxu0 %v2413
    %2484 = vmatpush1.msra.mxu0 %v2412
    %2485 = vmatprep.subr.mxu0 %v2410
    %2486 = vmatpush1.msra.mxu0 %v2409
    %2487 = vmatprep.subr.mxu0 %v2407
    %2488 = vmatpush1.msra.mxu0 %v2406
    %2489 = vmatprep.subr.mxu0 %v2404
    %2490 = vmatpush1.msra.mxu0 %v2403
    %2491 = vmatprep.subr.mxu0 %v2401
    %2492 = vmatpush1.msra.mxu0 %v2400
    %2493 = vmatprep.subr.mxu0 0.0
    %2494 = vmatpush2.msra.mxu0 0.0
    %2495 = vmatprep.subr.mxu0 0.0
    %2496 = vmatpush2.msra.mxu0 0.0
    %2497 = vmatprep.subr.mxu0 0.0
    %2498 = vmatpush2.msra.mxu0 0.0
    %2499 = vmatprep.subr.mxu0 0.0
    %2500 = vmatpush2.msra.mxu0 0.0
    %2501 = vmatprep.subr.mxu0 0.0
    %2502 = vmatpush2.msra.mxu0 0.0
    %2503 = vmatprep.subr.mxu0 0.0
    %2504 = vmatpush2.msra.mxu0 0.0
    %2505 = vmatprep.subr.mxu0 0.0
    %2506 = vmatpush2.msra.mxu0 0.0
    %2507 = vmatprep.subr.mxu0 0.0
    %2508 = vmatpush2.msra.mxu0 0.0
    %2509 = vmatprep.subr.mxu0 0.0
    %2510 = vmatpush2.msra.mxu0 0.0
    %2511 = vmatprep.subr.mxu0 0.0
    %2512 = vmatpush2.msra.mxu0 0.0
    %2513 = vmatprep.subr.mxu0 0.0
    %2514 = vmatpush2.msra.mxu0 0.0
    %2515 = vmatprep.subr.mxu0 0.0
    %2516 = vmatpush2.msra.mxu0 0.0
    %2517 = vmatprep.subr.mxu0 0.0
    %2518 = vmatpush2.msra.mxu0 0.0
    %2519 = vmatprep.subr.mxu0 0.0
    %2520 = vmatpush2.msra.mxu0 0.0
    %2521 = vmatprep.subr.mxu0 0.0
    %2522 = vmatpush2.msra.mxu0 0.0
    %2523 = vmatprep.subr.mxu0 0.0
    %2524 = vmatpush2.msra.mxu0 0.0
    %2525 = vmatprep.mubr.f32.mxu0 0.0
    %2526 = vmatmul.mubr.f32.gmra.mxu0 %v2440
    %v2527 = vpop.f32.mrf.mxu0
    %v2528 = vadd.f32 0.0, %v2527
    %v2529 = vpop.f32.mrf.mxu0
    %v2530 = vadd.f32 0.0, %v2529
    %2531 = vmatprep.mubr.f32.mxu0 0.0
    %2532 = vmatmul.mubr.f32.gmra.mxu0 %v2443
    %v2533 = vpop.f32.mrf.mxu0
    %v2534 = vadd.f32 0.0, %v2533
    %v2535 = vpop.f32.mrf.mxu0
    %v2536 = vadd.f32 0.0, %v2535
    %2537 = vmatprep.mubr.f32.mxu0 0.0
    %2538 = vmatmul.mubr.f32.gmra.mxu0 %v2446
    %v2539 = vpop.f32.mrf.mxu0
    %v2540 = vadd.f32 0.0, %v2539
    %v2541 = vpop.f32.mrf.mxu0
    %v2542 = vadd.f32 0.0, %v2541
    %2543 = vmatprep.mubr.f32.mxu0 0.0
    %2544 = vmatmul.mubr.f32.gmra.mxu0 %v2449
    %v2545 = vpop.f32.mrf.mxu0
    %v2546 = vadd.f32 0.0, %v2545
    %v2547 = vpop.f32.mrf.mxu0
    %v2548 = vadd.f32 0.0, %v2547
    %2549 = vdwg.mxu0
    %2550 = vmatprep.subr.mxu0 0.0
    %2551 = vmatpush1.msra.mxu0 0.0
    %2552 = vmatprep.subr.mxu0 0.0
    %2553 = vmatpush1.msra.mxu0 0.0
    %2554 = vmatprep.subr.mxu0 0.0
    %2555 = vmatpush1.msra.mxu0 0.0
    %2556 = vmatprep.subr.mxu0 0.0
    %2557 = vmatpush1.msra.mxu0 %v2459
    %2558 = vmatprep.subr.mxu0 0.0
    %2559 = vmatpush1.msra.mxu0 %v2435
    %2560 = vmatprep.subr.mxu0 0.0
    %2561 = vmatpush1.msra.mxu0 %v2432
    %2562 = vmatprep.subr.mxu0 0.0
    %2563 = vmatpush1.msra.mxu0 %v2429
    %2564 = vmatprep.subr.mxu0 0.0
    %2565 = vmatpush1.msra.mxu0 %v2426
    %2566 = vmatprep.subr.mxu0 0.0
    %2567 = vmatpush1.msra.mxu0 %v2423
    %2568 = vmatprep.subr.mxu0 0.0
    %2569 = vmatpush1.msra.mxu0 %v2420
    %2570 = vmatprep.subr.mxu0 0.0
    %2571 = vmatpush1.msra.mxu0 %v2417
    %2572 = vmatprep.subr.mxu0 0.0
    %2573 = vmatpush1.msra.mxu0 %v2414
    %2574 = vmatprep.subr.mxu0 0.0
    %2575 = vmatpush1.msra.mxu0 %v2411
    %2576 = vmatprep.subr.mxu0 0.0
    %2577 = vmatpush1.msra.mxu0 %v2408
    %2578 = vmatprep.subr.mxu0 0.0
    %2579 = vmatpush1.msra.mxu0 %v2405
    %2580 = vmatprep.subr.mxu0 0.0
    %2581 = vmatpush1.msra.mxu0 %v2402
    %2582 = vmatprep.subr.mxu0 0.0
    %2583 = vmatpush2.msra.mxu0 0.0
    %2584 = vmatprep.subr.mxu0 0.0
    %2585 = vmatpush2.msra.mxu0 0.0
    %2586 = vmatprep.subr.mxu0 0.0
    %2587 = vmatpush2.msra.mxu0 0.0
    %2588 = vmatprep.subr.mxu0 0.0
    %2589 = vmatpush2.msra.mxu0 0.0
    %2590 = vmatprep.subr.mxu0 0.0
    %2591 = vmatpush2.msra.mxu0 0.0
    %2592 = vmatprep.subr.mxu0 0.0
    %2593 = vmatpush2.msra.mxu0 0.0
    %2594 = vmatprep.subr.mxu0 0.0
    %2595 = vmatpush2.msra.mxu0 0.0
    %2596 = vmatprep.subr.mxu0 0.0
    %2597 = vmatpush2.msra.mxu0 0.0
    %2598 = vmatprep.subr.mxu0 0.0
    %2599 = vmatpush2.msra.mxu0 0.0
    %2600 = vmatprep.subr.mxu0 0.0
    %2601 = vmatpush2.msra.mxu0 0.0
    %2602 = vmatprep.subr.mxu0 0.0
    %2603 = vmatpush2.msra.mxu0 0.0
    %2604 = vmatprep.subr.mxu0 0.0
    %2605 = vmatpush2.msra.mxu0 0.0
    %2606 = vmatprep.subr.mxu0 0.0
    %2607 = vmatpush2.msra.mxu0 0.0
    %2608 = vmatprep.subr.mxu0 0.0
    %2609 = vmatpush2.msra.mxu0 0.0
    %2610 = vmatprep.subr.mxu0 0.0
    %2611 = vmatpush2.msra.mxu0 0.0
    %2612 = vmatprep.subr.mxu0 0.0
    %2613 = vmatpush2.msra.mxu0 0.0
    %2614 = vmatprep.mubr.f32.mxu0 0.0
    %2615 = vmatmul.mubr.f32.gmra.mxu0 %v2440
    %v2616 = vpop.f32.mrf.mxu0
    %v2617 = vadd.f32 0.0, %v2616
    %v2618 = vpop.f32.mrf.mxu0
    %2619 = vmatprep.mubr.f32.mxu0 0.0
    %2620 = vmatmul.mubr.f32.gmra.mxu0 %v2443
    %v2621 = vpop.f32.mrf.mxu0
    %v2622 = vadd.f32 0.0, %v2621
    %v2623 = vpop.f32.mrf.mxu0
    %2624 = vmatprep.mubr.f32.mxu0 0.0
    %2625 = vmatmul.mubr.f32.gmra.mxu0 %v2446
    %v2626 = vpop.f32.mrf.mxu0
    %v2627 = vadd.f32 0.0, %v2626
    %v2628 = vpop.f32.mrf.mxu0
    %2629 = vmatprep.mubr.f32.mxu0 0.0
    %2630 = vmatmul.mubr.f32.gmra.mxu0 %v2449
    %v2631 = vpop.f32.mrf.mxu0
    %v2632 = vadd.f32 0.0, %v2631
    %v2633 = vpop.f32.mrf.mxu0
    %2634 = vdwg.mxu0
    %v2635 = vld [vmem:[#allocation18] sm:$0x7]
    %vm2636 = vcmp.gt.f32.partialorder %v2635, 0.5
    %2649 = vrot.lane.b32.xlu0 %v2528, 19
    %v2650 = vpop.permute.xlu0 %2649
    %2651 = vrot.lane.b32.xlu0 %v2530, 19
    %v2652 = vpop.permute.xlu0 %2651
    %2653 = vrot.lane.b32.xlu0 %v2617, 19
    %v2654 = vpop.permute.xlu0 %2653
    %2655 = vrot.lane.b32.xlu0 %v2534, 19
    %v2656 = vpop.permute.xlu0 %2655
    %2657 = vrot.lane.b32.xlu0 %v2536, 19
    %v2658 = vpop.permute.xlu0 %2657
    %2659 = vrot.lane.b32.xlu0 %v2622, 19
    %v2660 = vpop.permute.xlu0 %2659
    %2661 = vrot.lane.b32.xlu0 %v2540, 19
    %v2662 = vpop.permute.xlu0 %2661
    %2663 = vrot.lane.b32.xlu0 %v2542, 19
    %v2664 = vpop.permute.xlu0 %2663
    %2665 = vrot.lane.b32.xlu0 %v2627, 19
    %v2666 = vpop.permute.xlu0 %2665
    %2667 = vrot.lane.b32.xlu0 %v2546, 19
    %v2668 = vpop.permute.xlu0 %2667
    %2669 = vrot.lane.b32.xlu0 %v2548, 19
    %v2670 = vpop.permute.xlu0 %2669
    %2671 = vrot.lane.b32.xlu0 %v2632, 19
    %v2672 = vpop.permute.xlu0 %2671
    %vm2673 = vcmask 154624
    %v2674 = vsel %vm2673, %v2650, %v2652
    %v2675 = vsel %vm2673, %v2652, %v2654
    %v2676 = vsel %vm2673, %v2656, %v2658
    %v2677 = vsel %vm2673, %v2658, %v2660
    %v2678 = vsel %vm2673, %v2662, %v2664
    %v2679 = vsel %vm2673, %v2664, %v2666
    %v2680 = vsel %vm2673, %v2668, %v2670
    %v2681 = vsel %vm2673, %v2670, %v2672
    %vm2694 = vcmask 1047704
    %2695 = vst.msk [vmem:[#allocation3] sm:$0xff] %vm2694, %v2650
    %2696 = vst [vmem:[#allocation3 + $0x8] sm:$0xff] %v2674
    %vm2697 = vcmask 711680
    %2698 = vst.msk [vmem:[#allocation3 + $0x10] sm:$0xff] %vm2697, %v2675
    %2699 = vst.msk [vmem:[#allocation3 + $0x18] sm:$0xff] %vm2694, %v2656
    %2700 = vst [vmem:[#allocation3 + $0x20] sm:$0xff] %v2676
    %2701 = vst.msk [vmem:[#allocation3 + $0x28] sm:$0xff] %vm2697, %v2677
    %2702 = vst.msk [vmem:[#allocation3 + $0x30] sm:$0xff] %vm2694, %v2662
    %2703 = vst [vmem:[#allocation3 + $0x38] sm:$0xff] %v2678
    %2704 = vst.msk [vmem:[#allocation3 + $0x40] sm:$0xff] %vm2697, %v2679
    %2705 = vst.msk [vmem:[#allocation3 + $0x48] sm:$0xff] %vm2694, %v2668
    %2706 = vst [vmem:[#allocation3 + $0x50] sm:$0xff] %v2680
    %2707 = vst.msk [vmem:[#allocation3 + $0x58] sm:$0xff] %vm2697, %v2681
    %v2708 = vld [vmem:[#allocation3] sm:$0xff]
    %v2709 = vld [vmem:[#allocation3 + $0x8] sm:$0xff]
    %v2710 = vld [vmem:[#allocation3 + $0x10] sm:$0xff]
    %v2711 = vld [vmem:[#allocation3 + $0x18] sm:$0xff]
    %v2712 = vld [vmem:[#allocation3 + $0x20] sm:$0xff]
    %v2713 = vld [vmem:[#allocation3 + $0x28] sm:$0xff]
    %v2714 = vld [vmem:[#allocation3 + $0x30] sm:$0xff]
    %v2715 = vld [vmem:[#allocation3 + $0x38] sm:$0xff]
    %v2716 = vld [vmem:[#allocation3 + $0x40] sm:$0xff]
    %v2717 = vld [vmem:[#allocation3 + $0x48] sm:$0xff]
    %v2718 = vld [vmem:[#allocation3 + $0x50] sm:$0xff]
    %v2719 = vld [vmem:[#allocation3 + $0x58] sm:$0xff]
    %v2720 = vld [vmem:[%s15] sm:$0xff]
    %v2721 = vld [vmem:[%s15 + $0x8] sm:$0xff]
    %s2722 = scalar_lea.vmem %s15, 16
    %v2723 = vld [vmem:[%s2722] sm:$0xff]
    %v2724 = vld [vmem:[%s2722 + $0x8] sm:$0xff]
    %2737 = vrot.lane.b32.xlu0 %v2708, 127
    %v2738 = vpop.permute.xlu0 %2737
    %2739 = vrot.lane.b32.xlu0 %v2709, 127
    %v2740 = vpop.permute.xlu0 %2739
    %2741 = vrot.lane.b32.xlu0 %v2710, 127
    %v2742 = vpop.permute.xlu0 %2741
    %2743 = vrot.lane.b32.xlu0 %v2711, 127
    %v2744 = vpop.permute.xlu0 %2743
    %2745 = vrot.lane.b32.xlu0 %v2712, 127
    %v2746 = vpop.permute.xlu0 %2745
    %2747 = vrot.lane.b32.xlu0 %v2713, 127
    %v2748 = vpop.permute.xlu0 %2747
    %2749 = vrot.lane.b32.xlu0 %v2714, 127
    %v2750 = vpop.permute.xlu0 %2749
    %2751 = vrot.lane.b32.xlu0 %v2715, 127
    %v2752 = vpop.permute.xlu0 %2751
    %2753 = vrot.lane.b32.xlu0 %v2716, 127
    %v2754 = vpop.permute.xlu0 %2753
    %2755 = vrot.lane.b32.xlu0 %v2717, 127
    %v2756 = vpop.permute.xlu0 %2755
    %2757 = vrot.lane.b32.xlu0 %v2718, 127
    %v2758 = vpop.permute.xlu0 %2757
    %2759 = vrot.lane.b32.xlu0 %v2719, 127
    %v2760 = vpop.permute.xlu0 %2759
    %vm2761 = vcmask 1039360
    %v2762 = vsel %vm2761, %v2738, %v2740
    %v2763 = vsel %vm2761, %v2740, %v2742
    %v2764 = vsel %vm2761, %v2744, %v2746
    %v2765 = vsel %vm2761, %v2746, %v2748
    %v2766 = vsel %vm2761, %v2750, %v2752
    %v2767 = vsel %vm2761, %v2752, %v2754
    %v2768 = vsel %vm2761, %v2756, %v2758
    %v2769 = vsel %vm2761, %v2758, %v2760
    %v2783 = vsel %vm208, %v2723, 0
    %v2786 = vsel %vm208, %v2724, 0
    %2788 = vmatprep.subr.mxu0 0.0
    %2789 = vmatpush1.msra.mxu0 0.0
    %2790 = vmatprep.subr.mxu0 0.0
    %2791 = vmatpush1.msra.mxu0 0.0
    %2792 = vmatprep.subr.mxu0 0.0
    %2793 = vmatpush1.msra.mxu0 0.0
    %2794 = vmatprep.subr.mxu0 0.0
    %2795 = vmatpush1.msra.mxu0 0.0
    %2796 = vmatprep.subr.mxu0 0.0
    %2797 = vmatpush1.msra.mxu0 0.0
    %2798 = vmatprep.subr.mxu0 0.0
    %2799 = vmatpush1.msra.mxu0 0.0
    %2800 = vmatprep.subr.mxu0 0.0
    %2801 = vmatpush1.msra.mxu0 0.0
    %2802 = vmatprep.subr.mxu0 0.0
    %2803 = vmatpush1.msra.mxu0 0.0
    %2804 = vmatprep.subr.mxu0 0.0
    %2805 = vmatpush1.msra.mxu0 0.0
    %2806 = vmatprep.subr.mxu0 0.0
    %2807 = vmatpush1.msra.mxu0 0.0
    %2808 = vmatprep.subr.mxu0 0.0
    %2809 = vmatpush1.msra.mxu0 0.0
    %2810 = vmatprep.subr.mxu0 0.0
    %2811 = vmatpush1.msra.mxu0 0.0
    %2812 = vmatprep.subr.mxu0 %v2769
    %2813 = vmatpush1.msra.mxu0 %v2768
    %2814 = vmatprep.subr.mxu0 %v2767
    %2815 = vmatpush1.msra.mxu0 %v2766
    %2816 = vmatprep.subr.mxu0 %v2765
    %2817 = vmatpush1.msra.mxu0 %v2764
    %2818 = vmatprep.subr.mxu0 %v2763
    %2819 = vmatpush1.msra.mxu0 %v2762
    %2820 = vmatprep.subr.mxu0 0.0
    %2821 = vmatpush2.msra.mxu0 0.0
    %2822 = vmatprep.subr.mxu0 0.0
    %2823 = vmatpush2.msra.mxu0 0.0
    %2824 = vmatprep.subr.mxu0 0.0
    %2825 = vmatpush2.msra.mxu0 0.0
    %2826 = vmatprep.subr.mxu0 0.0
    %2827 = vmatpush2.msra.mxu0 0.0
    %2828 = vmatprep.subr.mxu0 0.0
    %2829 = vmatpush2.msra.mxu0 0.0
    %2830 = vmatprep.subr.mxu0 0.0
    %2831 = vmatpush2.msra.mxu0 0.0
    %2832 = vmatprep.subr.mxu0 0.0
    %2833 = vmatpush2.msra.mxu0 0.0
    %2834 = vmatprep.subr.mxu0 0.0
    %2835 = vmatpush2.msra.mxu0 0.0
    %2836 = vmatprep.subr.mxu0 0.0
    %2837 = vmatpush2.msra.mxu0 0.0
    %2838 = vmatprep.subr.mxu0 0.0
    %2839 = vmatpush2.msra.mxu0 0.0
    %2840 = vmatprep.subr.mxu0 0.0
    %2841 = vmatpush2.msra.mxu0 0.0
    %2842 = vmatprep.subr.mxu0 0.0
    %2843 = vmatpush2.msra.mxu0 0.0
    %2844 = vmatprep.subr.mxu0 0.0
    %2845 = vmatpush2.msra.mxu0 0.0
    %2846 = vmatprep.subr.mxu0 0.0
    %2847 = vmatpush2.msra.mxu0 0.0
    %2848 = vmatprep.subr.mxu0 0.0
    %2849 = vmatpush2.msra.mxu0 0.0
    %2850 = vmatprep.subr.mxu0 0.0
    %2851 = vmatpush2.msra.mxu0 0.0
    %2852 = vmatprep.mubr.f32.mxu0 0.0
    %2853 = vmatmul.mubr.f32.gmra.mxu0 %v2783
    %v2854 = vpop.f32.mrf.mxu0
    %v2855 = vadd.f32 0.0, %v2854
    %v2856 = vpop.f32.mrf.mxu0
    %v2857 = vadd.f32 0.0, %v2856
    %2858 = vmatprep.mubr.f32.mxu0 0.0
    %2859 = vmatmul.mubr.f32.gmra.mxu0 %v2786
    %v2860 = vpop.f32.mrf.mxu0
    %v2861 = vadd.f32 0.0, %v2860
    %v2862 = vpop.f32.mrf.mxu0
    %v2863 = vadd.f32 0.0, %v2862
    %2864 = vdwg.mxu0
    %2865 = vmatprep.subr.mxu0 0.0
    %2866 = vmatpush1.msra.mxu0 0.0
    %2867 = vmatprep.subr.mxu0 0.0
    %2868 = vmatpush1.msra.mxu0 0.0
    %2869 = vmatprep.subr.mxu0 0.0
    %2870 = vmatpush1.msra.mxu0 0.0
    %2871 = vmatprep.subr.mxu0 0.0
    %2872 = vmatpush1.msra.mxu0 0.0
    %2873 = vmatprep.subr.mxu0 0.0
    %2874 = vmatpush1.msra.mxu0 0.0
    %2875 = vmatprep.subr.mxu0 0.0
    %2876 = vmatpush1.msra.mxu0 0.0
    %2877 = vmatprep.subr.mxu0 0.0
    %2878 = vmatpush1.msra.mxu0 0.0
    %2879 = vmatprep.subr.mxu0 0.0
    %2880 = vmatpush1.msra.mxu0 0.0
    %2881 = vmatprep.subr.mxu0 0.0
    %2882 = vmatpush1.msra.mxu0 0.0
    %2883 = vmatprep.subr.mxu0 0.0
    %2884 = vmatpush1.msra.mxu0 0.0
    %2885 = vmatprep.subr.mxu0 0.0
    %2886 = vmatpush1.msra.mxu0 0.0
    %2887 = vmatprep.subr.mxu0 0.0
    %2888 = vmatpush1.msra.mxu0 0.0
    %2889 = vmatprep.subr.mxu0 0.0
    %2890 = vmatpush1.msra.mxu0 %v2760
    %2891 = vmatprep.subr.mxu0 0.0
    %2892 = vmatpush1.msra.mxu0 %v2754
    %2893 = vmatprep.subr.mxu0 0.0
    %2894 = vmatpush1.msra.mxu0 %v2748
    %2895 = vmatprep.subr.mxu0 0.0
    %2896 = vmatpush1.msra.mxu0 %v2742
    %2897 = vmatprep.subr.mxu0 0.0
    %2898 = vmatpush2.msra.mxu0 0.0
    %2899 = vmatprep.subr.mxu0 0.0
    %2900 = vmatpush2.msra.mxu0 0.0
    %2901 = vmatprep.subr.mxu0 0.0
    %2902 = vmatpush2.msra.mxu0 0.0
    %2903 = vmatprep.subr.mxu0 0.0
    %2904 = vmatpush2.msra.mxu0 0.0
    %2905 = vmatprep.subr.mxu0 0.0
    %2906 = vmatpush2.msra.mxu0 0.0
    %2907 = vmatprep.subr.mxu0 0.0
    %2908 = vmatpush2.msra.mxu0 0.0
    %2909 = vmatprep.subr.mxu0 0.0
    %2910 = vmatpush2.msra.mxu0 0.0
    %2911 = vmatprep.subr.mxu0 0.0
    %2912 = vmatpush2.msra.mxu0 0.0
    %2913 = vmatprep.subr.mxu0 0.0
    %2914 = vmatpush2.msra.mxu0 0.0
    %2915 = vmatprep.subr.mxu0 0.0
    %2916 = vmatpush2.msra.mxu0 0.0
    %2917 = vmatprep.subr.mxu0 0.0
    %2918 = vmatpush2.msra.mxu0 0.0
    %2919 = vmatprep.subr.mxu0 0.0
    %2920 = vmatpush2.msra.mxu0 0.0
    %2921 = vmatprep.subr.mxu0 0.0
    %2922 = vmatpush2.msra.mxu0 0.0
    %2923 = vmatprep.subr.mxu0 0.0
    %2924 = vmatpush2.msra.mxu0 0.0
    %2925 = vmatprep.subr.mxu0 0.0
    %2926 = vmatpush2.msra.mxu0 0.0
    %2927 = vmatprep.subr.mxu0 0.0
    %2928 = vmatpush2.msra.mxu0 0.0
    %2929 = vmatprep.mubr.f32.mxu0 0.0
    %2930 = vmatmul.mubr.f32.gmra.mxu0 %v2783
    %v2931 = vpop.f32.mrf.mxu0
    %v2932 = vadd.f32 0.0, %v2931
    %v2933 = vpop.f32.mrf.mxu0
    %2934 = vmatprep.mubr.f32.mxu0 0.0
    %2935 = vmatmul.mubr.f32.gmra.mxu0 %v2786
    %v2936 = vpop.f32.mrf.mxu0
    %v2937 = vadd.f32 0.0, %v2936
    %v2938 = vpop.f32.mrf.mxu0
    %2939 = vdwg.mxu0
    %v2941 = vsel %vm208, %v2720, 0
    %v2944 = vsel %vm208, %v2721, 0
    %2946 = vmatprep.subr.mxu0 0.0
    %2947 = vmatpush1.msra.mxu0 0.0
    %2948 = vmatprep.subr.mxu0 0.0
    %2949 = vmatpush1.msra.mxu0 0.0
    %2950 = vmatprep.subr.mxu0 0.0
    %2951 = vmatpush1.msra.mxu0 0.0
    %2952 = vmatprep.subr.mxu0 0.0
    %2953 = vmatpush1.msra.mxu0 0.0
    %2954 = vmatprep.subr.mxu0 0.0
    %2955 = vmatpush1.msra.mxu0 0.0
    %2956 = vmatprep.subr.mxu0 0.0
    %2957 = vmatpush1.msra.mxu0 0.0
    %2958 = vmatprep.subr.mxu0 0.0
    %2959 = vmatpush1.msra.mxu0 0.0
    %2960 = vmatprep.subr.mxu0 0.0
    %2961 = vmatpush1.msra.mxu0 0.0
    %2962 = vmatprep.subr.mxu0 0.0
    %2963 = vmatpush1.msra.mxu0 0.0
    %2964 = vmatprep.subr.mxu0 0.0
    %2965 = vmatpush1.msra.mxu0 0.0
    %2966 = vmatprep.subr.mxu0 0.0
    %2967 = vmatpush1.msra.mxu0 0.0
    %2968 = vmatprep.subr.mxu0 0.0
    %2969 = vmatpush1.msra.mxu0 0.0
    %2970 = vmatprep.subr.mxu0 %v2718
    %2971 = vmatpush1.msra.mxu0 %v2717
    %2972 = vmatprep.subr.mxu0 %v2715
    %2973 = vmatpush1.msra.mxu0 %v2714
    %2974 = vmatprep.subr.mxu0 %v2712
    %2975 = vmatpush1.msra.mxu0 %v2711
    %2976 = vmatprep.subr.mxu0 %v2709
    %2977 = vmatpush1.msra.mxu0 %v2708
    %2978 = vmatprep.subr.mxu0 0.0
    %2979 = vmatpush2.msra.mxu0 0.0
    %2980 = vmatprep.subr.mxu0 0.0
    %2981 = vmatpush2.msra.mxu0 0.0
    %2982 = vmatprep.subr.mxu0 0.0
    %2983 = vmatpush2.msra.mxu0 0.0
    %2984 = vmatprep.subr.mxu0 0.0
    %2985 = vmatpush2.msra.mxu0 0.0
    %2986 = vmatprep.subr.mxu0 0.0
    %2987 = vmatpush2.msra.mxu0 0.0
    %2988 = vmatprep.subr.mxu0 0.0
    %2989 = vmatpush2.msra.mxu0 0.0
    %2990 = vmatprep.subr.mxu0 0.0
    %2991 = vmatpush2.msra.mxu0 0.0
    %2992 = vmatprep.subr.mxu0 0.0
    %2993 = vmatpush2.msra.mxu0 0.0
    %2994 = vmatprep.subr.mxu0 0.0
    %2995 = vmatpush2.msra.mxu0 0.0
    %2996 = vmatprep.subr.mxu0 0.0
    %2997 = vmatpush2.msra.mxu0 0.0
    %2998 = vmatprep.subr.mxu0 0.0
    %2999 = vmatpush2.msra.mxu0 0.0
    %3000 = vmatprep.subr.mxu0 0.0
    %3001 = vmatpush2.msra.mxu0 0.0
    %3002 = vmatprep.subr.mxu0 0.0
    %3003 = vmatpush2.msra.mxu0 0.0
    %3004 = vmatprep.subr.mxu0 0.0
    %3005 = vmatpush2.msra.mxu0 0.0
    %3006 = vmatprep.subr.mxu0 0.0
    %3007 = vmatpush2.msra.mxu0 0.0
    %3008 = vmatprep.subr.mxu0 0.0
    %3009 = vmatpush2.msra.mxu0 0.0
    %3010 = vmatprep.mubr.f32.mxu0 0.0
    %3011 = vmatmul.mubr.f32.gmra.mxu0 %v2941
    %v3012 = vpop.f32.mrf.mxu0
    %v3013 = vadd.f32 %v2855, %v3012
    %v3014 = vpop.f32.mrf.mxu0
    %v3015 = vadd.f32 %v2857, %v3014
    %3016 = vmatprep.mubr.f32.mxu0 0.0
    %3017 = vmatmul.mubr.f32.gmra.mxu0 %v2944
    %v3018 = vpop.f32.mrf.mxu0
    %v3019 = vadd.f32 %v2861, %v3018
    %v3020 = vpop.f32.mrf.mxu0
    %v3021 = vadd.f32 %v2863, %v3020
    %3022 = vdwg.mxu0
    %3023 = vmatprep.subr.mxu0 0.0
    %3024 = vmatpush1.msra.mxu0 0.0
    %3025 = vmatprep.subr.mxu0 0.0
    %3026 = vmatpush1.msra.mxu0 0.0
    %3027 = vmatprep.subr.mxu0 0.0
    %3028 = vmatpush1.msra.mxu0 0.0
    %3029 = vmatprep.subr.mxu0 0.0
    %3030 = vmatpush1.msra.mxu0 0.0
    %3031 = vmatprep.subr.mxu0 0.0
    %3032 = vmatpush1.msra.mxu0 0.0
    %3033 = vmatprep.subr.mxu0 0.0
    %3034 = vmatpush1.msra.mxu0 0.0
    %3035 = vmatprep.subr.mxu0 0.0
    %3036 = vmatpush1.msra.mxu0 0.0
    %3037 = vmatprep.subr.mxu0 0.0
    %3038 = vmatpush1.msra.mxu0 0.0
    %3039 = vmatprep.subr.mxu0 0.0
    %3040 = vmatpush1.msra.mxu0 0.0
    %3041 = vmatprep.subr.mxu0 0.0
    %3042 = vmatpush1.msra.mxu0 0.0
    %3043 = vmatprep.subr.mxu0 0.0
    %3044 = vmatpush1.msra.mxu0 0.0
    %3045 = vmatprep.subr.mxu0 0.0
    %3046 = vmatpush1.msra.mxu0 0.0
    %3047 = vmatprep.subr.mxu0 0.0
    %3048 = vmatpush1.msra.mxu0 %v2719
    %3049 = vmatprep.subr.mxu0 0.0
    %3050 = vmatpush1.msra.mxu0 %v2716
    %3051 = vmatprep.subr.mxu0 0.0
    %3052 = vmatpush1.msra.mxu0 %v2713
    %3053 = vmatprep.subr.mxu0 0.0
    %3054 = vmatpush1.msra.mxu0 %v2710
    %3055 = vmatprep.subr.mxu0 0.0
    %3056 = vmatpush2.msra.mxu0 0.0
    %3057 = vmatprep.subr.mxu0 0.0
    %3058 = vmatpush2.msra.mxu0 0.0
    %3059 = vmatprep.subr.mxu0 0.0
    %3060 = vmatpush2.msra.mxu0 0.0
    %3061 = vmatprep.subr.mxu0 0.0
    %3062 = vmatpush2.msra.mxu0 0.0
    %3063 = vmatprep.subr.mxu0 0.0
    %3064 = vmatpush2.msra.mxu0 0.0
    %3065 = vmatprep.subr.mxu0 0.0
    %3066 = vmatpush2.msra.mxu0 0.0
    %3067 = vmatprep.subr.mxu0 0.0
    %3068 = vmatpush2.msra.mxu0 0.0
    %3069 = vmatprep.subr.mxu0 0.0
    %3070 = vmatpush2.msra.mxu0 0.0
    %3071 = vmatprep.subr.mxu0 0.0
    %3072 = vmatpush2.msra.mxu0 0.0
    %3073 = vmatprep.subr.mxu0 0.0
    %3074 = vmatpush2.msra.mxu0 0.0
    %3075 = vmatprep.subr.mxu0 0.0
    %3076 = vmatpush2.msra.mxu0 0.0
    %3077 = vmatprep.subr.mxu0 0.0
    %3078 = vmatpush2.msra.mxu0 0.0
    %3079 = vmatprep.subr.mxu0 0.0
    %3080 = vmatpush2.msra.mxu0 0.0
    %3081 = vmatprep.subr.mxu0 0.0
    %3082 = vmatpush2.msra.mxu0 0.0
    %3083 = vmatprep.subr.mxu0 0.0
    %3084 = vmatpush2.msra.mxu0 0.0
    %3085 = vmatprep.subr.mxu0 0.0
    %3086 = vmatpush2.msra.mxu0 0.0
    %3087 = vmatprep.mubr.f32.mxu0 0.0
    %3088 = vmatmul.mubr.f32.gmra.mxu0 %v2941
    %v3089 = vpop.f32.mrf.mxu0
    %v3090 = vadd.f32 %v2932, %v3089
    %v3091 = vpop.f32.mrf.mxu0
    %3092 = vmatprep.mubr.f32.mxu0 0.0
    %3093 = vmatmul.mubr.f32.gmra.mxu0 %v2944
    %v3094 = vpop.f32.mrf.mxu0
    %v3095 = vadd.f32 %v2937, %v3094
    %v3096 = vpop.f32.mrf.mxu0
    %3097 = vdwg.mxu0
    %s3098 = scalar_lea.vmem %s15, 32
    %v3099 = vld [vmem:[%s3098] sm:$0xff]
    %v3100 = vld [vmem:[%s3098 + $0x8] sm:$0xff]
    %3101 = vrot.lane.b32.xlu0 %v2708, 126
    %v3102 = vpop.permute.xlu0 %3101
    %3103 = vrot.lane.b32.xlu0 %v2709, 126
    %v3104 = vpop.permute.xlu0 %3103
    %3105 = vrot.lane.b32.xlu0 %v2710, 126
    %v3106 = vpop.permute.xlu0 %3105
    %3107 = vrot.lane.b32.xlu0 %v2711, 126
    %v3108 = vpop.permute.xlu0 %3107
    %3109 = vrot.lane.b32.xlu0 %v2712, 126
    %v3110 = vpop.permute.xlu0 %3109
    %3111 = vrot.lane.b32.xlu0 %v2713, 126
    %v3112 = vpop.permute.xlu0 %3111
    %3113 = vrot.lane.b32.xlu0 %v2714, 126
    %v3114 = vpop.permute.xlu0 %3113
    %3115 = vrot.lane.b32.xlu0 %v2715, 126
    %v3116 = vpop.permute.xlu0 %3115
    %3117 = vrot.lane.b32.xlu0 %v2716, 126
    %v3118 = vpop.permute.xlu0 %3117
    %3119 = vrot.lane.b32.xlu0 %v2717, 126
    %v3120 = vpop.permute.xlu0 %3119
    %3121 = vrot.lane.b32.xlu0 %v2718, 126
    %v3122 = vpop.permute.xlu0 %3121
    %3123 = vrot.lane.b32.xlu0 %v2719, 126
    %v3124 = vpop.permute.xlu0 %3123
    %vm3125 = vcmask 1031168
    %v3126 = vsel %vm3125, %v3102, %v3104
    %v3127 = vsel %vm3125, %v3104, %v3106
    %v3128 = vsel %vm3125, %v3108, %v3110
    %v3129 = vsel %vm3125, %v3110, %v3112
    %v3130 = vsel %vm3125, %v3114, %v3116
    %v3131 = vsel %vm3125, %v3116, %v3118
    %v3132 = vsel %vm3125, %v3120, %v3122
    %v3133 = vsel %vm3125, %v3122, %v3124
    %v3147 = vsel %vm208, %v3099, 0
    %v3150 = vsel %vm208, %v3100, 0
    %3152 = vmatprep.subr.mxu0 0.0
    %3153 = vmatpush1.msra.mxu0 0.0
    %3154 = vmatprep.subr.mxu0 0.0
    %3155 = vmatpush1.msra.mxu0 0.0
    %3156 = vmatprep.subr.mxu0 0.0
    %3157 = vmatpush1.msra.mxu0 0.0
    %3158 = vmatprep.subr.mxu0 0.0
    %3159 = vmatpush1.msra.mxu0 0.0
    %3160 = vmatprep.subr.mxu0 0.0
    %3161 = vmatpush1.msra.mxu0 0.0
    %3162 = vmatprep.subr.mxu0 0.0
    %3163 = vmatpush1.msra.mxu0 0.0
    %3164 = vmatprep.subr.mxu0 0.0
    %3165 = vmatpush1.msra.mxu0 0.0
    %3166 = vmatprep.subr.mxu0 0.0
    %3167 = vmatpush1.msra.mxu0 0.0
    %3168 = vmatprep.subr.mxu0 0.0
    %3169 = vmatpush1.msra.mxu0 0.0
    %3170 = vmatprep.subr.mxu0 0.0
    %3171 = vmatpush1.msra.mxu0 0.0
    %3172 = vmatprep.subr.mxu0 0.0
    %3173 = vmatpush1.msra.mxu0 0.0
    %3174 = vmatprep.subr.mxu0 0.0
    %3175 = vmatpush1.msra.mxu0 0.0
    %3176 = vmatprep.subr.mxu0 %v3133
    %3177 = vmatpush1.msra.mxu0 %v3132
    %3178 = vmatprep.subr.mxu0 %v3131
    %3179 = vmatpush1.msra.mxu0 %v3130
    %3180 = vmatprep.subr.mxu0 %v3129
    %3181 = vmatpush1.msra.mxu0 %v3128
    %3182 = vmatprep.subr.mxu0 %v3127
    %3183 = vmatpush1.msra.mxu0 %v3126
    %3184 = vmatprep.subr.mxu0 0.0
    %3185 = vmatpush2.msra.mxu0 0.0
    %3186 = vmatprep.subr.mxu0 0.0
    %3187 = vmatpush2.msra.mxu0 0.0
    %3188 = vmatprep.subr.mxu0 0.0
    %3189 = vmatpush2.msra.mxu0 0.0
    %3190 = vmatprep.subr.mxu0 0.0
    %3191 = vmatpush2.msra.mxu0 0.0
    %3192 = vmatprep.subr.mxu0 0.0
    %3193 = vmatpush2.msra.mxu0 0.0
    %3194 = vmatprep.subr.mxu0 0.0
    %3195 = vmatpush2.msra.mxu0 0.0
    %3196 = vmatprep.subr.mxu0 0.0
    %3197 = vmatpush2.msra.mxu0 0.0
    %3198 = vmatprep.subr.mxu0 0.0
    %3199 = vmatpush2.msra.mxu0 0.0
    %3200 = vmatprep.subr.mxu0 0.0
    %3201 = vmatpush2.msra.mxu0 0.0
    %3202 = vmatprep.subr.mxu0 0.0
    %3203 = vmatpush2.msra.mxu0 0.0
    %3204 = vmatprep.subr.mxu0 0.0
    %3205 = vmatpush2.msra.mxu0 0.0
    %3206 = vmatprep.subr.mxu0 0.0
    %3207 = vmatpush2.msra.mxu0 0.0
    %3208 = vmatprep.subr.mxu0 0.0
    %3209 = vmatpush2.msra.mxu0 0.0
    %3210 = vmatprep.subr.mxu0 0.0
    %3211 = vmatpush2.msra.mxu0 0.0
    %3212 = vmatprep.subr.mxu0 0.0
    %3213 = vmatpush2.msra.mxu0 0.0
    %3214 = vmatprep.subr.mxu0 0.0
    %3215 = vmatpush2.msra.mxu0 0.0
    %3216 = vmatprep.mubr.f32.mxu0 0.0
    %3217 = vmatmul.mubr.f32.gmra.mxu0 %v3147
    %v3218 = vpop.f32.mrf.mxu0
    %v3219 = vadd.f32 0.0, %v3218
    %v3220 = vpop.f32.mrf.mxu0
    %v3221 = vadd.f32 0.0, %v3220
    %3222 = vmatprep.mubr.f32.mxu0 0.0
    %3223 = vmatmul.mubr.f32.gmra.mxu0 %v3150
    %v3224 = vpop.f32.mrf.mxu0
    %v3225 = vadd.f32 0.0, %v3224
    %v3226 = vpop.f32.mrf.mxu0
    %v3227 = vadd.f32 0.0, %v3226
    %3228 = vdwg.mxu0
    %3229 = vmatprep.subr.mxu0 0.0
    %3230 = vmatpush1.msra.mxu0 0.0
    %3231 = vmatprep.subr.mxu0 0.0
    %3232 = vmatpush1.msra.mxu0 0.0
    %3233 = vmatprep.subr.mxu0 0.0
    %3234 = vmatpush1.msra.mxu0 0.0
    %3235 = vmatprep.subr.mxu0 0.0
    %3236 = vmatpush1.msra.mxu0 0.0
    %3237 = vmatprep.subr.mxu0 0.0
    %3238 = vmatpush1.msra.mxu0 0.0
    %3239 = vmatprep.subr.mxu0 0.0
    %3240 = vmatpush1.msra.mxu0 0.0
    %3241 = vmatprep.subr.mxu0 0.0
    %3242 = vmatpush1.msra.mxu0 0.0
    %3243 = vmatprep.subr.mxu0 0.0
    %3244 = vmatpush1.msra.mxu0 0.0
    %3245 = vmatprep.subr.mxu0 0.0
    %3246 = vmatpush1.msra.mxu0 0.0
    %3247 = vmatprep.subr.mxu0 0.0
    %3248 = vmatpush1.msra.mxu0 0.0
    %3249 = vmatprep.subr.mxu0 0.0
    %3250 = vmatpush1.msra.mxu0 0.0
    %3251 = vmatprep.subr.mxu0 0.0
    %3252 = vmatpush1.msra.mxu0 0.0
    %3253 = vmatprep.subr.mxu0 0.0
    %3254 = vmatpush1.msra.mxu0 %v3124
    %3255 = vmatprep.subr.mxu0 0.0
    %3256 = vmatpush1.msra.mxu0 %v3118
    %3257 = vmatprep.subr.mxu0 0.0
    %3258 = vmatpush1.msra.mxu0 %v3112
    %3259 = vmatprep.subr.mxu0 0.0
    %3260 = vmatpush1.msra.mxu0 %v3106
    %3261 = vmatprep.subr.mxu0 0.0
    %3262 = vmatpush2.msra.mxu0 0.0
    %3263 = vmatprep.subr.mxu0 0.0
    %3264 = vmatpush2.msra.mxu0 0.0
    %3265 = vmatprep.subr.mxu0 0.0
    %3266 = vmatpush2.msra.mxu0 0.0
    %3267 = vmatprep.subr.mxu0 0.0
    %3268 = vmatpush2.msra.mxu0 0.0
    %3269 = vmatprep.subr.mxu0 0.0
    %3270 = vmatpush2.msra.mxu0 0.0
    %3271 = vmatprep.subr.mxu0 0.0
    %3272 = vmatpush2.msra.mxu0 0.0
    %3273 = vmatprep.subr.mxu0 0.0
    %3274 = vmatpush2.msra.mxu0 0.0
    %3275 = vmatprep.subr.mxu0 0.0
    %3276 = vmatpush2.msra.mxu0 0.0
    %3277 = vmatprep.subr.mxu0 0.0
    %3278 = vmatpush2.msra.mxu0 0.0
    %3279 = vmatprep.subr.mxu0 0.0
    %3280 = vmatpush2.msra.mxu0 0.0
    %3281 = vmatprep.subr.mxu0 0.0
    %3282 = vmatpush2.msra.mxu0 0.0
    %3283 = vmatprep.subr.mxu0 0.0
    %3284 = vmatpush2.msra.mxu0 0.0
    %3285 = vmatprep.subr.mxu0 0.0
    %3286 = vmatpush2.msra.mxu0 0.0
    %3287 = vmatprep.subr.mxu0 0.0
    %3288 = vmatpush2.msra.mxu0 0.0
    %3289 = vmatprep.subr.mxu0 0.0
    %3290 = vmatpush2.msra.mxu0 0.0
    %3291 = vmatprep.subr.mxu0 0.0
    %3292 = vmatpush2.msra.mxu0 0.0
    %3293 = vmatprep.mubr.f32.mxu0 0.0
    %3294 = vmatmul.mubr.f32.gmra.mxu0 %v3147
    %v3295 = vpop.f32.mrf.mxu0
    %v3296 = vadd.f32 0.0, %v3295
    %v3297 = vpop.f32.mrf.mxu0
    %3298 = vmatprep.mubr.f32.mxu0 0.0
    %3299 = vmatmul.mubr.f32.gmra.mxu0 %v3150
    %v3300 = vpop.f32.mrf.mxu0
    %v3301 = vadd.f32 0.0, %v3300
    %v3302 = vpop.f32.mrf.mxu0
    %3303 = vdwg.mxu0
    %v3304 = vadd.f32 %v3013, %v3219
    %v3305 = vadd.f32 %v3015, %v3221
    %v3306 = vadd.f32 %v3090, %v3296
    %v3307 = vadd.f32 %v3019, %v3225
    %v3308 = vadd.f32 %v3021, %v3227
    %v3309 = vadd.f32 %v3095, %v3301
    %s3310 = scalar_lea.vmem %s15, 48
    %v3311 = vld [vmem:[%s3310] sm:$0xff]
    %v3312 = vld [vmem:[%s3310 + $0x8] sm:$0xff]
    %3313 = vrot.lane.b32.xlu0 %v2708, 110
    %v3314 = vpop.permute.xlu0 %3313
    %3315 = vrot.lane.b32.xlu0 %v2709, 110
    %v3316 = vpop.permute.xlu0 %3315
    %3317 = vrot.lane.b32.xlu0 %v2710, 110
    %v3318 = vpop.permute.xlu0 %3317
    %3319 = vrot.lane.b32.xlu0 %v2711, 110
    %v3320 = vpop.permute.xlu0 %3319
    %3321 = vrot.lane.b32.xlu0 %v2712, 110
    %v3322 = vpop.permute.xlu0 %3321
    %3323 = vrot.lane.b32.xlu0 %v2713, 110
    %v3324 = vpop.permute.xlu0 %3323
    %3325 = vrot.lane.b32.xlu0 %v2714, 110
    %v3326 = vpop.permute.xlu0 %3325
    %3327 = vrot.lane.b32.xlu0 %v2715, 110
    %v3328 = vpop.permute.xlu0 %3327
    %3329 = vrot.lane.b32.xlu0 %v2716, 110
    %v3330 = vpop.permute.xlu0 %3329
    %3331 = vrot.lane.b32.xlu0 %v2717, 110
    %v3332 = vpop.permute.xlu0 %3331
    %3333 = vrot.lane.b32.xlu0 %v2718, 110
    %v3334 = vpop.permute.xlu0 %3333
    %3335 = vrot.lane.b32.xlu0 %v2719, 110
    %v3336 = vpop.permute.xlu0 %3335
    %vm3337 = vcmask 900096
    %v3338 = vsel %vm3337, %v3314, %v3316
    %v3339 = vsel %vm3337, %v3316, %v3318
    %v3340 = vsel %vm3337, %v3320, %v3322
    %v3341 = vsel %vm3337, %v3322, %v3324
    %v3342 = vsel %vm3337, %v3326, %v3328
    %v3343 = vsel %vm3337, %v3328, %v3330
    %v3344 = vsel %vm3337, %v3332, %v3334
    %v3345 = vsel %vm3337, %v3334, %v3336
    %v3359 = vsel %vm208, %v3311, 0
    %v3362 = vsel %vm208, %v3312, 0
    %3364 = vmatprep.subr.mxu0 0.0
    %3365 = vmatpush1.msra.mxu0 0.0
    %3366 = vmatprep.subr.mxu0 0.0
    %3367 = vmatpush1.msra.mxu0 0.0
    %3368 = vmatprep.subr.mxu0 0.0
    %3369 = vmatpush1.msra.mxu0 0.0
    %3370 = vmatprep.subr.mxu0 0.0
    %3371 = vmatpush1.msra.mxu0 0.0
    %3372 = vmatprep.subr.mxu0 0.0
    %3373 = vmatpush1.msra.mxu0 0.0
    %3374 = vmatprep.subr.mxu0 0.0
    %3375 = vmatpush1.msra.mxu0 0.0
    %3376 = vmatprep.subr.mxu0 0.0
    %3377 = vmatpush1.msra.mxu0 0.0
    %3378 = vmatprep.subr.mxu0 0.0
    %3379 = vmatpush1.msra.mxu0 0.0
    %3380 = vmatprep.subr.mxu0 0.0
    %3381 = vmatpush1.msra.mxu0 0.0
    %3382 = vmatprep.subr.mxu0 0.0
    %3383 = vmatpush1.msra.mxu0 0.0
    %3384 = vmatprep.subr.mxu0 0.0
    %3385 = vmatpush1.msra.mxu0 0.0
    %3386 = vmatprep.subr.mxu0 0.0
    %3387 = vmatpush1.msra.mxu0 0.0
    %3388 = vmatprep.subr.mxu0 %v3345
    %3389 = vmatpush1.msra.mxu0 %v3344
    %3390 = vmatprep.subr.mxu0 %v3343
    %3391 = vmatpush1.msra.mxu0 %v3342
    %3392 = vmatprep.subr.mxu0 %v3341
    %3393 = vmatpush1.msra.mxu0 %v3340
    %3394 = vmatprep.subr.mxu0 %v3339
    %3395 = vmatpush1.msra.mxu0 %v3338
    %3396 = vmatprep.subr.mxu0 0.0
    %3397 = vmatpush2.msra.mxu0 0.0
    %3398 = vmatprep.subr.mxu0 0.0
    %3399 = vmatpush2.msra.mxu0 0.0
    %3400 = vmatprep.subr.mxu0 0.0
    %3401 = vmatpush2.msra.mxu0 0.0
    %3402 = vmatprep.subr.mxu0 0.0
    %3403 = vmatpush2.msra.mxu0 0.0
    %3404 = vmatprep.subr.mxu0 0.0
    %3405 = vmatpush2.msra.mxu0 0.0
    %3406 = vmatprep.subr.mxu0 0.0
    %3407 = vmatpush2.msra.mxu0 0.0
    %3408 = vmatprep.subr.mxu0 0.0
    %3409 = vmatpush2.msra.mxu0 0.0
    %3410 = vmatprep.subr.mxu0 0.0
    %3411 = vmatpush2.msra.mxu0 0.0
    %3412 = vmatprep.subr.mxu0 0.0
    %3413 = vmatpush2.msra.mxu0 0.0
    %3414 = vmatprep.subr.mxu0 0.0
    %3415 = vmatpush2.msra.mxu0 0.0
    %3416 = vmatprep.subr.mxu0 0.0
    %3417 = vmatpush2.msra.mxu0 0.0
    %3418 = vmatprep.subr.mxu0 0.0
    %3419 = vmatpush2.msra.mxu0 0.0
    %3420 = vmatprep.subr.mxu0 0.0
    %3421 = vmatpush2.msra.mxu0 0.0
    %3422 = vmatprep.subr.mxu0 0.0
    %3423 = vmatpush2.msra.mxu0 0.0
    %3424 = vmatprep.subr.mxu0 0.0
    %3425 = vmatpush2.msra.mxu0 0.0
    %3426 = vmatprep.subr.mxu0 0.0
    %3427 = vmatpush2.msra.mxu0 0.0
    %3428 = vmatprep.mubr.f32.mxu0 0.0
    %3429 = vmatmul.mubr.f32.gmra.mxu0 %v3359
    %v3430 = vpop.f32.mrf.mxu0
    %v3431 = vadd.f32 0.0, %v3430
    %v3432 = vpop.f32.mrf.mxu0
    %v3433 = vadd.f32 0.0, %v3432
    %3434 = vmatprep.mubr.f32.mxu0 0.0
    %3435 = vmatmul.mubr.f32.gmra.mxu0 %v3362
    %v3436 = vpop.f32.mrf.mxu0
    %v3437 = vadd.f32 0.0, %v3436
    %v3438 = vpop.f32.mrf.mxu0
    %v3439 = vadd.f32 0.0, %v3438
    %3440 = vdwg.mxu0
    %3441 = vmatprep.subr.mxu0 0.0
    %3442 = vmatpush1.msra.mxu0 0.0
    %3443 = vmatprep.subr.mxu0 0.0
    %3444 = vmatpush1.msra.mxu0 0.0
    %3445 = vmatprep.subr.mxu0 0.0
    %3446 = vmatpush1.msra.mxu0 0.0
    %3447 = vmatprep.subr.mxu0 0.0
    %3448 = vmatpush1.msra.mxu0 0.0
    %3449 = vmatprep.subr.mxu0 0.0
    %3450 = vmatpush1.msra.mxu0 0.0
    %3451 = vmatprep.subr.mxu0 0.0
    %3452 = vmatpush1.msra.mxu0 0.0
    %3453 = vmatprep.subr.mxu0 0.0
    %3454 = vmatpush1.msra.mxu0 0.0
    %3455 = vmatprep.subr.mxu0 0.0
    %3456 = vmatpush1.msra.mxu0 0.0
    %3457 = vmatprep.subr.mxu0 0.0
    %3458 = vmatpush1.msra.mxu0 0.0
    %3459 = vmatprep.subr.mxu0 0.0
    %3460 = vmatpush1.msra.mxu0 0.0
    %3461 = vmatprep.subr.mxu0 0.0
    %3462 = vmatpush1.msra.mxu0 0.0
    %3463 = vmatprep.subr.mxu0 0.0
    %3464 = vmatpush1.msra.mxu0 0.0
    %3465 = vmatprep.subr.mxu0 0.0
    %3466 = vmatpush1.msra.mxu0 %v3336
    %3467 = vmatprep.subr.mxu0 0.0
    %3468 = vmatpush1.msra.mxu0 %v3330
    %3469 = vmatprep.subr.mxu0 0.0
    %3470 = vmatpush1.msra.mxu0 %v3324
    %3471 = vmatprep.subr.mxu0 0.0
    %3472 = vmatpush1.msra.mxu0 %v3318
    %3473 = vmatprep.subr.mxu0 0.0
    %3474 = vmatpush2.msra.mxu0 0.0
    %3475 = vmatprep.subr.mxu0 0.0
    %3476 = vmatpush2.msra.mxu0 0.0
    %3477 = vmatprep.subr.mxu0 0.0
    %3478 = vmatpush2.msra.mxu0 0.0
    %3479 = vmatprep.subr.mxu0 0.0
    %3480 = vmatpush2.msra.mxu0 0.0
    %3481 = vmatprep.subr.mxu0 0.0
    %3482 = vmatpush2.msra.mxu0 0.0
    %3483 = vmatprep.subr.mxu0 0.0
    %3484 = vmatpush2.msra.mxu0 0.0
    %3485 = vmatprep.subr.mxu0 0.0
    %3486 = vmatpush2.msra.mxu0 0.0
    %3487 = vmatprep.subr.mxu0 0.0
    %3488 = vmatpush2.msra.mxu0 0.0
    %3489 = vmatprep.subr.mxu0 0.0
    %3490 = vmatpush2.msra.mxu0 0.0
    %3491 = vmatprep.subr.mxu0 0.0
    %3492 = vmatpush2.msra.mxu0 0.0
    %3493 = vmatprep.subr.mxu0 0.0
    %3494 = vmatpush2.msra.mxu0 0.0
    %3495 = vmatprep.subr.mxu0 0.0
    %3496 = vmatpush2.msra.mxu0 0.0
    %3497 = vmatprep.subr.mxu0 0.0
    %3498 = vmatpush2.msra.mxu0 0.0
    %3499 = vmatprep.subr.mxu0 0.0
    %3500 = vmatpush2.msra.mxu0 0.0
    %3501 = vmatprep.subr.mxu0 0.0
    %3502 = vmatpush2.msra.mxu0 0.0
    %3503 = vmatprep.subr.mxu0 0.0
    %3504 = vmatpush2.msra.mxu0 0.0
    %3505 = vmatprep.mubr.f32.mxu0 0.0
    %3506 = vmatmul.mubr.f32.gmra.mxu0 %v3359
    %v3507 = vpop.f32.mrf.mxu0
    %v3508 = vadd.f32 0.0, %v3507
    %v3509 = vpop.f32.mrf.mxu0
    %3510 = vmatprep.mubr.f32.mxu0 0.0
    %3511 = vmatmul.mubr.f32.gmra.mxu0 %v3362
    %v3512 = vpop.f32.mrf.mxu0
    %v3513 = vadd.f32 0.0, %v3512
    %v3514 = vpop.f32.mrf.mxu0
    %3515 = vdwg.mxu0
    %v3516 = vadd.f32 %v3304, %v3431
    %v3517 = vadd.f32 %v3305, %v3433
    %v3518 = vadd.f32 %v3306, %v3508
    %v3519 = vadd.f32 %v3307, %v3437
    %v3520 = vadd.f32 %v3308, %v3439
    %v3521 = vadd.f32 %v3309, %v3513
    %s3522 = scalar_lea.vmem %s15, 64
    %v3523 = vld [vmem:[%s3522] sm:$0xff]
    %v3524 = vld [vmem:[%s3522 + $0x8] sm:$0xff]
    %3525 = vrot.lane.b32.xlu0 %v2708, 109
    %v3526 = vpop.permute.xlu0 %3525
    %3527 = vrot.lane.b32.xlu0 %v2709, 109
    %v3528 = vpop.permute.xlu0 %3527
    %3529 = vrot.lane.b32.xlu0 %v2710, 109
    %v3530 = vpop.permute.xlu0 %3529
    %3531 = vrot.lane.b32.xlu0 %v2711, 109
    %v3532 = vpop.permute.xlu0 %3531
    %3533 = vrot.lane.b32.xlu0 %v2712, 109
    %v3534 = vpop.permute.xlu0 %3533
    %3535 = vrot.lane.b32.xlu0 %v2713, 109
    %v3536 = vpop.permute.xlu0 %3535
    %3537 = vrot.lane.b32.xlu0 %v2714, 109
    %v3538 = vpop.permute.xlu0 %3537
    %3539 = vrot.lane.b32.xlu0 %v2715, 109
    %v3540 = vpop.permute.xlu0 %3539
    %3541 = vrot.lane.b32.xlu0 %v2716, 109
    %v3542 = vpop.permute.xlu0 %3541
    %3543 = vrot.lane.b32.xlu0 %v2717, 109
    %v3544 = vpop.permute.xlu0 %3543
    %3545 = vrot.lane.b32.xlu0 %v2718, 109
    %v3546 = vpop.permute.xlu0 %3545
    %3547 = vrot.lane.b32.xlu0 %v2719, 109
    %v3548 = vpop.permute.xlu0 %3547
    %vm3549 = vcmask 891904
    %v3550 = vsel %vm3549, %v3526, %v3528
    %v3551 = vsel %vm3549, %v3528, %v3530
    %v3552 = vsel %vm3549, %v3532, %v3534
    %v3553 = vsel %vm3549, %v3534, %v3536
    %v3554 = vsel %vm3549, %v3538, %v3540
    %v3555 = vsel %vm3549, %v3540, %v3542
    %v3556 = vsel %vm3549, %v3544, %v3546
    %v3557 = vsel %vm3549, %v3546, %v3548
    %v3571 = vsel %vm208, %v3523, 0
    %v3574 = vsel %vm208, %v3524, 0
    %3576 = vmatprep.subr.mxu0 0.0
    %3577 = vmatpush1.msra.mxu0 0.0
    %3578 = vmatprep.subr.mxu0 0.0
    %3579 = vmatpush1.msra.mxu0 0.0
    %3580 = vmatprep.subr.mxu0 0.0
    %3581 = vmatpush1.msra.mxu0 0.0
    %3582 = vmatprep.subr.mxu0 0.0
    %3583 = vmatpush1.msra.mxu0 0.0
    %3584 = vmatprep.subr.mxu0 0.0
    %3585 = vmatpush1.msra.mxu0 0.0
    %3586 = vmatprep.subr.mxu0 0.0
    %3587 = vmatpush1.msra.mxu0 0.0
    %3588 = vmatprep.subr.mxu0 0.0
    %3589 = vmatpush1.msra.mxu0 0.0
    %3590 = vmatprep.subr.mxu0 0.0
    %3591 = vmatpush1.msra.mxu0 0.0
    %3592 = vmatprep.subr.mxu0 0.0
    %3593 = vmatpush1.msra.mxu0 0.0
    %3594 = vmatprep.subr.mxu0 0.0
    %3595 = vmatpush1.msra.mxu0 0.0
    %3596 = vmatprep.subr.mxu0 0.0
    %3597 = vmatpush1.msra.mxu0 0.0
    %3598 = vmatprep.subr.mxu0 0.0
    %3599 = vmatpush1.msra.mxu0 0.0
    %3600 = vmatprep.subr.mxu0 %v3557
    %3601 = vmatpush1.msra.mxu0 %v3556
    %3602 = vmatprep.subr.mxu0 %v3555
    %3603 = vmatpush1.msra.mxu0 %v3554
    %3604 = vmatprep.subr.mxu0 %v3553
    %3605 = vmatpush1.msra.mxu0 %v3552
    %3606 = vmatprep.subr.mxu0 %v3551
    %3607 = vmatpush1.msra.mxu0 %v3550
    %3608 = vmatprep.subr.mxu0 0.0
    %3609 = vmatpush2.msra.mxu0 0.0
    %3610 = vmatprep.subr.mxu0 0.0
    %3611 = vmatpush2.msra.mxu0 0.0
    %3612 = vmatprep.subr.mxu0 0.0
    %3613 = vmatpush2.msra.mxu0 0.0
    %3614 = vmatprep.subr.mxu0 0.0
    %3615 = vmatpush2.msra.mxu0 0.0
    %3616 = vmatprep.subr.mxu0 0.0
    %3617 = vmatpush2.msra.mxu0 0.0
    %3618 = vmatprep.subr.mxu0 0.0
    %3619 = vmatpush2.msra.mxu0 0.0
    %3620 = vmatprep.subr.mxu0 0.0
    %3621 = vmatpush2.msra.mxu0 0.0
    %3622 = vmatprep.subr.mxu0 0.0
    %3623 = vmatpush2.msra.mxu0 0.0
    %3624 = vmatprep.subr.mxu0 0.0
    %3625 = vmatpush2.msra.mxu0 0.0
    %3626 = vmatprep.subr.mxu0 0.0
    %3627 = vmatpush2.msra.mxu0 0.0
    %3628 = vmatprep.subr.mxu0 0.0
    %3629 = vmatpush2.msra.mxu0 0.0
    %3630 = vmatprep.subr.mxu0 0.0
    %3631 = vmatpush2.msra.mxu0 0.0
    %3632 = vmatprep.subr.mxu0 0.0
    %3633 = vmatpush2.msra.mxu0 0.0
    %3634 = vmatprep.subr.mxu0 0.0
    %3635 = vmatpush2.msra.mxu0 0.0
    %3636 = vmatprep.subr.mxu0 0.0
    %3637 = vmatpush2.msra.mxu0 0.0
    %3638 = vmatprep.subr.mxu0 0.0
    %3639 = vmatpush2.msra.mxu0 0.0
    %3640 = vmatprep.mubr.f32.mxu0 0.0
    %3641 = vmatmul.mubr.f32.gmra.mxu0 %v3571
    %v3642 = vpop.f32.mrf.mxu0
    %v3643 = vadd.f32 0.0, %v3642
    %v3644 = vpop.f32.mrf.mxu0
    %v3645 = vadd.f32 0.0, %v3644
    %3646 = vmatprep.mubr.f32.mxu0 0.0
    %3647 = vmatmul.mubr.f32.gmra.mxu0 %v3574
    %v3648 = vpop.f32.mrf.mxu0
    %v3649 = vadd.f32 0.0, %v3648
    %v3650 = vpop.f32.mrf.mxu0
    %v3651 = vadd.f32 0.0, %v3650
    %3652 = vdwg.mxu0
    %3653 = vmatprep.subr.mxu0 0.0
    %3654 = vmatpush1.msra.mxu0 0.0
    %3655 = vmatprep.subr.mxu0 0.0
    %3656 = vmatpush1.msra.mxu0 0.0
    %3657 = vmatprep.subr.mxu0 0.0
    %3658 = vmatpush1.msra.mxu0 0.0
    %3659 = vmatprep.subr.mxu0 0.0
    %3660 = vmatpush1.msra.mxu0 0.0
    %3661 = vmatprep.subr.mxu0 0.0
    %3662 = vmatpush1.msra.mxu0 0.0
    %3663 = vmatprep.subr.mxu0 0.0
    %3664 = vmatpush1.msra.mxu0 0.0
    %3665 = vmatprep.subr.mxu0 0.0
    %3666 = vmatpush1.msra.mxu0 0.0
    %3667 = vmatprep.subr.mxu0 0.0
    %3668 = vmatpush1.msra.mxu0 0.0
    %3669 = vmatprep.subr.mxu0 0.0
    %3670 = vmatpush1.msra.mxu0 0.0
    %3671 = vmatprep.subr.mxu0 0.0
    %3672 = vmatpush1.msra.mxu0 0.0
    %3673 = vmatprep.subr.mxu0 0.0
    %3674 = vmatpush1.msra.mxu0 0.0
    %3675 = vmatprep.subr.mxu0 0.0
    %3676 = vmatpush1.msra.mxu0 0.0
    %3677 = vmatprep.subr.mxu0 0.0
    %3678 = vmatpush1.msra.mxu0 %v3548
    %3679 = vmatprep.subr.mxu0 0.0
    %3680 = vmatpush1.msra.mxu0 %v3542
    %3681 = vmatprep.subr.mxu0 0.0
    %3682 = vmatpush1.msra.mxu0 %v3536
    %3683 = vmatprep.subr.mxu0 0.0
    %3684 = vmatpush1.msra.mxu0 %v3530
    %3685 = vmatprep.subr.mxu0 0.0
    %3686 = vmatpush2.msra.mxu0 0.0
    %3687 = vmatprep.subr.mxu0 0.0
    %3688 = vmatpush2.msra.mxu0 0.0
    %3689 = vmatprep.subr.mxu0 0.0
    %3690 = vmatpush2.msra.mxu0 0.0
    %3691 = vmatprep.subr.mxu0 0.0
    %3692 = vmatpush2.msra.mxu0 0.0
    %3693 = vmatprep.subr.mxu0 0.0
    %3694 = vmatpush2.msra.mxu0 0.0
    %3695 = vmatprep.subr.mxu0 0.0
    %3696 = vmatpush2.msra.mxu0 0.0
    %3697 = vmatprep.subr.mxu0 0.0
    %3698 = vmatpush2.msra.mxu0 0.0
    %3699 = vmatprep.subr.mxu0 0.0
    %3700 = vmatpush2.msra.mxu0 0.0
    %3701 = vmatprep.subr.mxu0 0.0
    %3702 = vmatpush2.msra.mxu0 0.0
    %3703 = vmatprep.subr.mxu0 0.0
    %3704 = vmatpush2.msra.mxu0 0.0
    %3705 = vmatprep.subr.mxu0 0.0
    %3706 = vmatpush2.msra.mxu0 0.0
    %3707 = vmatprep.subr.mxu0 0.0
    %3708 = vmatpush2.msra.mxu0 0.0
    %3709 = vmatprep.subr.mxu0 0.0
    %3710 = vmatpush2.msra.mxu0 0.0
    %3711 = vmatprep.subr.mxu0 0.0
    %3712 = vmatpush2.msra.mxu0 0.0
    %3713 = vmatprep.subr.mxu0 0.0
    %3714 = vmatpush2.msra.mxu0 0.0
    %3715 = vmatprep.subr.mxu0 0.0
    %3716 = vmatpush2.msra.mxu0 0.0
    %3717 = vmatprep.mubr.f32.mxu0 0.0
    %3718 = vmatmul.mubr.f32.gmra.mxu0 %v3571
    %v3719 = vpop.f32.mrf.mxu0
    %v3720 = vadd.f32 0.0, %v3719
    %v3721 = vpop.f32.mrf.mxu0
    %3722 = vmatprep.mubr.f32.mxu0 0.0
    %3723 = vmatmul.mubr.f32.gmra.mxu0 %v3574
    %v3724 = vpop.f32.mrf.mxu0
    %v3725 = vadd.f32 0.0, %v3724
    %v3726 = vpop.f32.mrf.mxu0
    %3727 = vdwg.mxu0
    %v3728 = vadd.f32 %v3516, %v3643
    %v3729 = vadd.f32 %v3517, %v3645
    %v3730 = vadd.f32 %v3518, %v3720
    %v3731 = vadd.f32 %v3519, %v3649
    %v3732 = vadd.f32 %v3520, %v3651
    %v3733 = vadd.f32 %v3521, %v3725
    %s3734 = scalar_lea.vmem %s15, 80
    %v3735 = vld [vmem:[%s3734] sm:$0xff]
    %v3736 = vld [vmem:[%s3734 + $0x8] sm:$0xff]
    %3737 = vrot.lane.b32.xlu0 %v2708, 108
    %v3738 = vpop.permute.xlu0 %3737
    %3739 = vrot.lane.b32.xlu0 %v2709, 108
    %v3740 = vpop.permute.xlu0 %3739
    %3741 = vrot.lane.b32.xlu0 %v2710, 108
    %v3742 = vpop.permute.xlu0 %3741
    %3743 = vrot.lane.b32.xlu0 %v2711, 108
    %v3744 = vpop.permute.xlu0 %3743
    %3745 = vrot.lane.b32.xlu0 %v2712, 108
    %v3746 = vpop.permute.xlu0 %3745
    %3747 = vrot.lane.b32.xlu0 %v2713, 108
    %v3748 = vpop.permute.xlu0 %3747
    %3749 = vrot.lane.b32.xlu0 %v2714, 108
    %v3750 = vpop.permute.xlu0 %3749
    %3751 = vrot.lane.b32.xlu0 %v2715, 108
    %v3752 = vpop.permute.xlu0 %3751
    %3753 = vrot.lane.b32.xlu0 %v2716, 108
    %v3754 = vpop.permute.xlu0 %3753
    %3755 = vrot.lane.b32.xlu0 %v2717, 108
    %v3756 = vpop.permute.xlu0 %3755
    %3757 = vrot.lane.b32.xlu0 %v2718, 108
    %v3758 = vpop.permute.xlu0 %3757
    %3759 = vrot.lane.b32.xlu0 %v2719, 108
    %v3760 = vpop.permute.xlu0 %3759
    %vm3761 = vcmask 883712
    %v3762 = vsel %vm3761, %v3738, %v3740
    %v3763 = vsel %vm3761, %v3740, %v3742
    %v3764 = vsel %vm3761, %v3744, %v3746
    %v3765 = vsel %vm3761, %v3746, %v3748
    %v3766 = vsel %vm3761, %v3750, %v3752
    %v3767 = vsel %vm3761, %v3752, %v3754
    %v3768 = vsel %vm3761, %v3756, %v3758
    %v3769 = vsel %vm3761, %v3758, %v3760
    %v3783 = vsel %vm208, %v3735, 0
    %v3786 = vsel %vm208, %v3736, 0
    %3788 = vmatprep.subr.mxu0 0.0
    %3789 = vmatpush1.msra.mxu0 0.0
    %3790 = vmatprep.subr.mxu0 0.0
    %3791 = vmatpush1.msra.mxu0 0.0
    %3792 = vmatprep.subr.mxu0 0.0
    %3793 = vmatpush1.msra.mxu0 0.0
    %3794 = vmatprep.subr.mxu0 0.0
    %3795 = vmatpush1.msra.mxu0 0.0
    %3796 = vmatprep.subr.mxu0 0.0
    %3797 = vmatpush1.msra.mxu0 0.0
    %3798 = vmatprep.subr.mxu0 0.0
    %3799 = vmatpush1.msra.mxu0 0.0
    %3800 = vmatprep.subr.mxu0 0.0
    %3801 = vmatpush1.msra.mxu0 0.0
    %3802 = vmatprep.subr.mxu0 0.0
    %3803 = vmatpush1.msra.mxu0 0.0
    %3804 = vmatprep.subr.mxu0 0.0
    %3805 = vmatpush1.msra.mxu0 0.0
    %3806 = vmatprep.subr.mxu0 0.0
    %3807 = vmatpush1.msra.mxu0 0.0
    %3808 = vmatprep.subr.mxu0 0.0
    %3809 = vmatpush1.msra.mxu0 0.0
    %3810 = vmatprep.subr.mxu0 0.0
    %3811 = vmatpush1.msra.mxu0 0.0
    %3812 = vmatprep.subr.mxu0 %v3769
    %3813 = vmatpush1.msra.mxu0 %v3768
    %3814 = vmatprep.subr.mxu0 %v3767
    %3815 = vmatpush1.msra.mxu0 %v3766
    %3816 = vmatprep.subr.mxu0 %v3765
    %3817 = vmatpush1.msra.mxu0 %v3764
    %3818 = vmatprep.subr.mxu0 %v3763
    %3819 = vmatpush1.msra.mxu0 %v3762
    %3820 = vmatprep.subr.mxu0 0.0
    %3821 = vmatpush2.msra.mxu0 0.0
    %3822 = vmatprep.subr.mxu0 0.0
    %3823 = vmatpush2.msra.mxu0 0.0
    %3824 = vmatprep.subr.mxu0 0.0
    %3825 = vmatpush2.msra.mxu0 0.0
    %3826 = vmatprep.subr.mxu0 0.0
    %3827 = vmatpush2.msra.mxu0 0.0
    %3828 = vmatprep.subr.mxu0 0.0
    %3829 = vmatpush2.msra.mxu0 0.0
    %3830 = vmatprep.subr.mxu0 0.0
    %3831 = vmatpush2.msra.mxu0 0.0
    %3832 = vmatprep.subr.mxu0 0.0
    %3833 = vmatpush2.msra.mxu0 0.0
    %3834 = vmatprep.subr.mxu0 0.0
    %3835 = vmatpush2.msra.mxu0 0.0
    %3836 = vmatprep.subr.mxu0 0.0
    %3837 = vmatpush2.msra.mxu0 0.0
    %3838 = vmatprep.subr.mxu0 0.0
    %3839 = vmatpush2.msra.mxu0 0.0
    %3840 = vmatprep.subr.mxu0 0.0
    %3841 = vmatpush2.msra.mxu0 0.0
    %3842 = vmatprep.subr.mxu0 0.0
    %3843 = vmatpush2.msra.mxu0 0.0
    %3844 = vmatprep.subr.mxu0 0.0
    %3845 = vmatpush2.msra.mxu0 0.0
    %3846 = vmatprep.subr.mxu0 0.0
    %3847 = vmatpush2.msra.mxu0 0.0
    %3848 = vmatprep.subr.mxu0 0.0
    %3849 = vmatpush2.msra.mxu0 0.0
    %3850 = vmatprep.subr.mxu0 0.0
    %3851 = vmatpush2.msra.mxu0 0.0
    %3852 = vmatprep.mubr.f32.mxu0 0.0
    %3853 = vmatmul.mubr.f32.gmra.mxu0 %v3783
    %v3854 = vpop.f32.mrf.mxu0
    %v3855 = vadd.f32 0.0, %v3854
    %v3856 = vpop.f32.mrf.mxu0
    %v3857 = vadd.f32 0.0, %v3856
    %3858 = vmatprep.mubr.f32.mxu0 0.0
    %3859 = vmatmul.mubr.f32.gmra.mxu0 %v3786
    %v3860 = vpop.f32.mrf.mxu0
    %v3861 = vadd.f32 0.0, %v3860
    %v3862 = vpop.f32.mrf.mxu0
    %v3863 = vadd.f32 0.0, %v3862
    %3864 = vdwg.mxu0
    %3865 = vmatprep.subr.mxu0 0.0
    %3866 = vmatpush1.msra.mxu0 0.0
    %3867 = vmatprep.subr.mxu0 0.0
    %3868 = vmatpush1.msra.mxu0 0.0
    %3869 = vmatprep.subr.mxu0 0.0
    %3870 = vmatpush1.msra.mxu0 0.0
    %3871 = vmatprep.subr.mxu0 0.0
    %3872 = vmatpush1.msra.mxu0 0.0
    %3873 = vmatprep.subr.mxu0 0.0
    %3874 = vmatpush1.msra.mxu0 0.0
    %3875 = vmatprep.subr.mxu0 0.0
    %3876 = vmatpush1.msra.mxu0 0.0
    %3877 = vmatprep.subr.mxu0 0.0
    %3878 = vmatpush1.msra.mxu0 0.0
    %3879 = vmatprep.subr.mxu0 0.0
    %3880 = vmatpush1.msra.mxu0 0.0
    %3881 = vmatprep.subr.mxu0 0.0
    %3882 = vmatpush1.msra.mxu0 0.0
    %3883 = vmatprep.subr.mxu0 0.0
    %3884 = vmatpush1.msra.mxu0 0.0
    %3885 = vmatprep.subr.mxu0 0.0
    %3886 = vmatpush1.msra.mxu0 0.0
    %3887 = vmatprep.subr.mxu0 0.0
    %3888 = vmatpush1.msra.mxu0 0.0
    %3889 = vmatprep.subr.mxu0 0.0
    %3890 = vmatpush1.msra.mxu0 %v3760
    %3891 = vmatprep.subr.mxu0 0.0
    %3892 = vmatpush1.msra.mxu0 %v3754
    %3893 = vmatprep.subr.mxu0 0.0
    %3894 = vmatpush1.msra.mxu0 %v3748
    %3895 = vmatprep.subr.mxu0 0.0
    %3896 = vmatpush1.msra.mxu0 %v3742
    %3897 = vmatprep.subr.mxu0 0.0
    %3898 = vmatpush2.msra.mxu0 0.0
    %3899 = vmatprep.subr.mxu0 0.0
    %3900 = vmatpush2.msra.mxu0 0.0
    %3901 = vmatprep.subr.mxu0 0.0
    %3902 = vmatpush2.msra.mxu0 0.0
    %3903 = vmatprep.subr.mxu0 0.0
    %3904 = vmatpush2.msra.mxu0 0.0
    %3905 = vmatprep.subr.mxu0 0.0
    %3906 = vmatpush2.msra.mxu0 0.0
    %3907 = vmatprep.subr.mxu0 0.0
    %3908 = vmatpush2.msra.mxu0 0.0
    %3909 = vmatprep.subr.mxu0 0.0
    %3910 = vmatpush2.msra.mxu0 0.0
    %3911 = vmatprep.subr.mxu0 0.0
    %3912 = vmatpush2.msra.mxu0 0.0
    %3913 = vmatprep.subr.mxu0 0.0
    %3914 = vmatpush2.msra.mxu0 0.0
    %3915 = vmatprep.subr.mxu0 0.0
    %3916 = vmatpush2.msra.mxu0 0.0
    %3917 = vmatprep.subr.mxu0 0.0
    %3918 = vmatpush2.msra.mxu0 0.0
    %3919 = vmatprep.subr.mxu0 0.0
    %3920 = vmatpush2.msra.mxu0 0.0
    %3921 = vmatprep.subr.mxu0 0.0
    %3922 = vmatpush2.msra.mxu0 0.0
    %3923 = vmatprep.subr.mxu0 0.0
    %3924 = vmatpush2.msra.mxu0 0.0
    %3925 = vmatprep.subr.mxu0 0.0
    %3926 = vmatpush2.msra.mxu0 0.0
    %3927 = vmatprep.subr.mxu0 0.0
    %3928 = vmatpush2.msra.mxu0 0.0
    %3929 = vmatprep.mubr.f32.mxu0 0.0
    %3930 = vmatmul.mubr.f32.gmra.mxu0 %v3783
    %v3931 = vpop.f32.mrf.mxu0
    %v3932 = vadd.f32 0.0, %v3931
    %v3933 = vpop.f32.mrf.mxu0
    %3934 = vmatprep.mubr.f32.mxu0 0.0
    %3935 = vmatmul.mubr.f32.gmra.mxu0 %v3786
    %v3936 = vpop.f32.mrf.mxu0
    %v3937 = vadd.f32 0.0, %v3936
    %v3938 = vpop.f32.mrf.mxu0
    %3939 = vdwg.mxu0
    %v3940 = vadd.f32 %v3728, %v3855
    %v3941 = vadd.f32 %v3729, %v3857
    %v3942 = vadd.f32 %v3730, %v3932
    %v3943 = vadd.f32 %v3731, %v3861
    %v3944 = vadd.f32 %v3732, %v3863
    %v3945 = vadd.f32 %v3733, %v3937
    %s3946 = scalar_lea.vmem %s15, 96
    %v3947 = vld [vmem:[%s3946] sm:$0xff]
    %v3948 = vld [vmem:[%s3946 + $0x8] sm:$0xff]
    %3949 = vrot.lane.b32.xlu0 %v2708, 92
    %v3950 = vpop.permute.xlu0 %3949
    %3951 = vrot.lane.b32.xlu0 %v2709, 92
    %v3952 = vpop.permute.xlu0 %3951
    %3953 = vrot.lane.b32.xlu0 %v2710, 92
    %v3954 = vpop.permute.xlu0 %3953
    %3955 = vrot.lane.b32.xlu0 %v2711, 92
    %v3956 = vpop.permute.xlu0 %3955
    %3957 = vrot.lane.b32.xlu0 %v2712, 92
    %v3958 = vpop.permute.xlu0 %3957
    %3959 = vrot.lane.b32.xlu0 %v2713, 92
    %v3960 = vpop.permute.xlu0 %3959
    %3961 = vrot.lane.b32.xlu0 %v2714, 92
    %v3962 = vpop.permute.xlu0 %3961
    %3963 = vrot.lane.b32.xlu0 %v2715, 92
    %v3964 = vpop.permute.xlu0 %3963
    %3965 = vrot.lane.b32.xlu0 %v2716, 92
    %v3966 = vpop.permute.xlu0 %3965
    %3967 = vrot.lane.b32.xlu0 %v2717, 92
    %v3968 = vpop.permute.xlu0 %3967
    %3969 = vrot.lane.b32.xlu0 %v2718, 92
    %v3970 = vpop.permute.xlu0 %3969
    %3971 = vrot.lane.b32.xlu0 %v2719, 92
    %v3972 = vpop.permute.xlu0 %3971
    %vm3973 = vcmask 752640
    %v3974 = vsel %vm3973, %v3950, %v3952
    %v3975 = vsel %vm3973, %v3952, %v3954
    %v3976 = vsel %vm3973, %v3956, %v3958
    %v3977 = vsel %vm3973, %v3958, %v3960
    %v3978 = vsel %vm3973, %v3962, %v3964
    %v3979 = vsel %vm3973, %v3964, %v3966
    %v3980 = vsel %vm3973, %v3968, %v3970
    %v3981 = vsel %vm3973, %v3970, %v3972
    %v3995 = vsel %vm208, %v3947, 0
    %v3998 = vsel %vm208, %v3948, 0
    %4000 = vmatprep.subr.mxu0 0.0
    %4001 = vmatpush1.msra.mxu0 0.0
    %4002 = vmatprep.subr.mxu0 0.0
    %4003 = vmatpush1.msra.mxu0 0.0
    %4004 = vmatprep.subr.mxu0 0.0
    %4005 = vmatpush1.msra.mxu0 0.0
    %4006 = vmatprep.subr.mxu0 0.0
    %4007 = vmatpush1.msra.mxu0 0.0
    %4008 = vmatprep.subr.mxu0 0.0
    %4009 = vmatpush1.msra.mxu0 0.0
    %4010 = vmatprep.subr.mxu0 0.0
    %4011 = vmatpush1.msra.mxu0 0.0
    %4012 = vmatprep.subr.mxu0 0.0
    %4013 = vmatpush1.msra.mxu0 0.0
    %4014 = vmatprep.subr.mxu0 0.0
    %4015 = vmatpush1.msra.mxu0 0.0
    %4016 = vmatprep.subr.mxu0 0.0
    %4017 = vmatpush1.msra.mxu0 0.0
    %4018 = vmatprep.subr.mxu0 0.0
    %4019 = vmatpush1.msra.mxu0 0.0
    %4020 = vmatprep.subr.mxu0 0.0
    %4021 = vmatpush1.msra.mxu0 0.0
    %4022 = vmatprep.subr.mxu0 0.0
    %4023 = vmatpush1.msra.mxu0 0.0
    %4024 = vmatprep.subr.mxu0 %v3981
    %4025 = vmatpush1.msra.mxu0 %v3980
    %4026 = vmatprep.subr.mxu0 %v3979
    %4027 = vmatpush1.msra.mxu0 %v3978
    %4028 = vmatprep.subr.mxu0 %v3977
    %4029 = vmatpush1.msra.mxu0 %v3976
    %4030 = vmatprep.subr.mxu0 %v3975
    %4031 = vmatpush1.msra.mxu0 %v3974
    %4032 = vmatprep.subr.mxu0 0.0
    %4033 = vmatpush2.msra.mxu0 0.0
    %4034 = vmatprep.subr.mxu0 0.0
    %4035 = vmatpush2.msra.mxu0 0.0
    %4036 = vmatprep.subr.mxu0 0.0
    %4037 = vmatpush2.msra.mxu0 0.0
    %4038 = vmatprep.subr.mxu0 0.0
    %4039 = vmatpush2.msra.mxu0 0.0
    %4040 = vmatprep.subr.mxu0 0.0
    %4041 = vmatpush2.msra.mxu0 0.0
    %4042 = vmatprep.subr.mxu0 0.0
    %4043 = vmatpush2.msra.mxu0 0.0
    %4044 = vmatprep.subr.mxu0 0.0
    %4045 = vmatpush2.msra.mxu0 0.0
    %4046 = vmatprep.subr.mxu0 0.0
    %4047 = vmatpush2.msra.mxu0 0.0
    %4048 = vmatprep.subr.mxu0 0.0
    %4049 = vmatpush2.msra.mxu0 0.0
    %4050 = vmatprep.subr.mxu0 0.0
    %4051 = vmatpush2.msra.mxu0 0.0
    %4052 = vmatprep.subr.mxu0 0.0
    %4053 = vmatpush2.msra.mxu0 0.0
    %4054 = vmatprep.subr.mxu0 0.0
    %4055 = vmatpush2.msra.mxu0 0.0
    %4056 = vmatprep.subr.mxu0 0.0
    %4057 = vmatpush2.msra.mxu0 0.0
    %4058 = vmatprep.subr.mxu0 0.0
    %4059 = vmatpush2.msra.mxu0 0.0
    %4060 = vmatprep.subr.mxu0 0.0
    %4061 = vmatpush2.msra.mxu0 0.0
    %4062 = vmatprep.subr.mxu0 0.0
    %4063 = vmatpush2.msra.mxu0 0.0
    %4064 = vmatprep.mubr.f32.mxu0 0.0
    %4065 = vmatmul.mubr.f32.gmra.mxu0 %v3995
    %v4066 = vpop.f32.mrf.mxu0
    %v4067 = vadd.f32 0.0, %v4066
    %v4068 = vpop.f32.mrf.mxu0
    %v4069 = vadd.f32 0.0, %v4068
    %4070 = vmatprep.mubr.f32.mxu0 0.0
    %4071 = vmatmul.mubr.f32.gmra.mxu0 %v3998
    %v4072 = vpop.f32.mrf.mxu0
    %v4073 = vadd.f32 0.0, %v4072
    %v4074 = vpop.f32.mrf.mxu0
    %v4075 = vadd.f32 0.0, %v4074
    %4076 = vdwg.mxu0
    %4077 = vmatprep.subr.mxu0 0.0
    %4078 = vmatpush1.msra.mxu0 0.0
    %4079 = vmatprep.subr.mxu0 0.0
    %4080 = vmatpush1.msra.mxu0 0.0
    %4081 = vmatprep.subr.mxu0 0.0
    %4082 = vmatpush1.msra.mxu0 0.0
    %4083 = vmatprep.subr.mxu0 0.0
    %4084 = vmatpush1.msra.mxu0 0.0
    %4085 = vmatprep.subr.mxu0 0.0
    %4086 = vmatpush1.msra.mxu0 0.0
    %4087 = vmatprep.subr.mxu0 0.0
    %4088 = vmatpush1.msra.mxu0 0.0
    %4089 = vmatprep.subr.mxu0 0.0
    %4090 = vmatpush1.msra.mxu0 0.0
    %4091 = vmatprep.subr.mxu0 0.0
    %4092 = vmatpush1.msra.mxu0 0.0
    %4093 = vmatprep.subr.mxu0 0.0
    %4094 = vmatpush1.msra.mxu0 0.0
    %4095 = vmatprep.subr.mxu0 0.0
    %4096 = vmatpush1.msra.mxu0 0.0
    %4097 = vmatprep.subr.mxu0 0.0
    %4098 = vmatpush1.msra.mxu0 0.0
    %4099 = vmatprep.subr.mxu0 0.0
    %4100 = vmatpush1.msra.mxu0 0.0
    %4101 = vmatprep.subr.mxu0 0.0
    %4102 = vmatpush1.msra.mxu0 %v3972
    %4103 = vmatprep.subr.mxu0 0.0
    %4104 = vmatpush1.msra.mxu0 %v3966
    %4105 = vmatprep.subr.mxu0 0.0
    %4106 = vmatpush1.msra.mxu0 %v3960
    %4107 = vmatprep.subr.mxu0 0.0
    %4108 = vmatpush1.msra.mxu0 %v3954
    %4109 = vmatprep.subr.mxu0 0.0
    %4110 = vmatpush2.msra.mxu0 0.0
    %4111 = vmatprep.subr.mxu0 0.0
    %4112 = vmatpush2.msra.mxu0 0.0
    %4113 = vmatprep.subr.mxu0 0.0
    %4114 = vmatpush2.msra.mxu0 0.0
    %4115 = vmatprep.subr.mxu0 0.0
    %4116 = vmatpush2.msra.mxu0 0.0
    %4117 = vmatprep.subr.mxu0 0.0
    %4118 = vmatpush2.msra.mxu0 0.0
    %4119 = vmatprep.subr.mxu0 0.0
    %4120 = vmatpush2.msra.mxu0 0.0
    %4121 = vmatprep.subr.mxu0 0.0
    %4122 = vmatpush2.msra.mxu0 0.0
    %4123 = vmatprep.subr.mxu0 0.0
    %4124 = vmatpush2.msra.mxu0 0.0
    %4125 = vmatprep.subr.mxu0 0.0
    %4126 = vmatpush2.msra.mxu0 0.0
    %4127 = vmatprep.subr.mxu0 0.0
    %4128 = vmatpush2.msra.mxu0 0.0
    %4129 = vmatprep.subr.mxu0 0.0
    %4130 = vmatpush2.msra.mxu0 0.0
    %4131 = vmatprep.subr.mxu0 0.0
    %4132 = vmatpush2.msra.mxu0 0.0
    %4133 = vmatprep.subr.mxu0 0.0
    %4134 = vmatpush2.msra.mxu0 0.0
    %4135 = vmatprep.subr.mxu0 0.0
    %4136 = vmatpush2.msra.mxu0 0.0
    %4137 = vmatprep.subr.mxu0 0.0
    %4138 = vmatpush2.msra.mxu0 0.0
    %4139 = vmatprep.subr.mxu0 0.0
    %4140 = vmatpush2.msra.mxu0 0.0
    %4141 = vmatprep.mubr.f32.mxu0 0.0
    %4142 = vmatmul.mubr.f32.gmra.mxu0 %v3995
    %v4143 = vpop.f32.mrf.mxu0
    %v4144 = vadd.f32 0.0, %v4143
    %v4145 = vpop.f32.mrf.mxu0
    %4146 = vmatprep.mubr.f32.mxu0 0.0
    %4147 = vmatmul.mubr.f32.gmra.mxu0 %v3998
    %v4148 = vpop.f32.mrf.mxu0
    %v4149 = vadd.f32 0.0, %v4148
    %v4150 = vpop.f32.mrf.mxu0
    %4151 = vdwg.mxu0
    %v4152 = vadd.f32 %v3940, %v4067
    %v4153 = vadd.f32 %v3941, %v4069
    %v4154 = vadd.f32 %v3942, %v4144
    %v4155 = vadd.f32 %v3943, %v4073
    %v4156 = vadd.f32 %v3944, %v4075
    %v4157 = vadd.f32 %v3945, %v4149
    %s4158 = scalar_lea.vmem %s15, 112
    %v4159 = vld [vmem:[%s4158] sm:$0xff]
    %v4160 = vld [vmem:[%s4158 + $0x8] sm:$0xff]
    %4161 = vrot.lane.b32.xlu0 %v2708, 91
    %v4162 = vpop.permute.xlu0 %4161
    %4163 = vrot.lane.b32.xlu0 %v2709, 91
    %v4164 = vpop.permute.xlu0 %4163
    %4165 = vrot.lane.b32.xlu0 %v2710, 91
    %v4166 = vpop.permute.xlu0 %4165
    %4167 = vrot.lane.b32.xlu0 %v2711, 91
    %v4168 = vpop.permute.xlu0 %4167
    %4169 = vrot.lane.b32.xlu0 %v2712, 91
    %v4170 = vpop.permute.xlu0 %4169
    %4171 = vrot.lane.b32.xlu0 %v2713, 91
    %v4172 = vpop.permute.xlu0 %4171
    %4173 = vrot.lane.b32.xlu0 %v2714, 91
    %v4174 = vpop.permute.xlu0 %4173
    %4175 = vrot.lane.b32.xlu0 %v2715, 91
    %v4176 = vpop.permute.xlu0 %4175
    %4177 = vrot.lane.b32.xlu0 %v2716, 91
    %v4178 = vpop.permute.xlu0 %4177
    %4179 = vrot.lane.b32.xlu0 %v2717, 91
    %v4180 = vpop.permute.xlu0 %4179
    %4181 = vrot.lane.b32.xlu0 %v2718, 91
    %v4182 = vpop.permute.xlu0 %4181
    %4183 = vrot.lane.b32.xlu0 %v2719, 91
    %v4184 = vpop.permute.xlu0 %4183
    %vm4185 = vcmask 744448
    %v4186 = vsel %vm4185, %v4162, %v4164
    %v4187 = vsel %vm4185, %v4164, %v4166
    %v4188 = vsel %vm4185, %v4168, %v4170
    %v4189 = vsel %vm4185, %v4170, %v4172
    %v4190 = vsel %vm4185, %v4174, %v4176
    %v4191 = vsel %vm4185, %v4176, %v4178
    %v4192 = vsel %vm4185, %v4180, %v4182
    %v4193 = vsel %vm4185, %v4182, %v4184
    %v4207 = vsel %vm208, %v4159, 0
    %v4210 = vsel %vm208, %v4160, 0
    %4212 = vmatprep.subr.mxu0 0.0
    %4213 = vmatpush1.msra.mxu0 0.0
    %4214 = vmatprep.subr.mxu0 0.0
    %4215 = vmatpush1.msra.mxu0 0.0
    %4216 = vmatprep.subr.mxu0 0.0
    %4217 = vmatpush1.msra.mxu0 0.0
    %4218 = vmatprep.subr.mxu0 0.0
    %4219 = vmatpush1.msra.mxu0 0.0
    %4220 = vmatprep.subr.mxu0 0.0
    %4221 = vmatpush1.msra.mxu0 0.0
    %4222 = vmatprep.subr.mxu0 0.0
    %4223 = vmatpush1.msra.mxu0 0.0
    %4224 = vmatprep.subr.mxu0 0.0
    %4225 = vmatpush1.msra.mxu0 0.0
    %4226 = vmatprep.subr.mxu0 0.0
    %4227 = vmatpush1.msra.mxu0 0.0
    %4228 = vmatprep.subr.mxu0 0.0
    %4229 = vmatpush1.msra.mxu0 0.0
    %4230 = vmatprep.subr.mxu0 0.0
    %4231 = vmatpush1.msra.mxu0 0.0
    %4232 = vmatprep.subr.mxu0 0.0
    %4233 = vmatpush1.msra.mxu0 0.0
    %4234 = vmatprep.subr.mxu0 0.0
    %4235 = vmatpush1.msra.mxu0 0.0
    %4236 = vmatprep.subr.mxu0 %v4193
    %4237 = vmatpush1.msra.mxu0 %v4192
    %4238 = vmatprep.subr.mxu0 %v4191
    %4239 = vmatpush1.msra.mxu0 %v4190
    %4240 = vmatprep.subr.mxu0 %v4189
    %4241 = vmatpush1.msra.mxu0 %v4188
    %4242 = vmatprep.subr.mxu0 %v4187
    %4243 = vmatpush1.msra.mxu0 %v4186
    %4244 = vmatprep.subr.mxu0 0.0
    %4245 = vmatpush2.msra.mxu0 0.0
    %4246 = vmatprep.subr.mxu0 0.0
    %4247 = vmatpush2.msra.mxu0 0.0
    %4248 = vmatprep.subr.mxu0 0.0
    %4249 = vmatpush2.msra.mxu0 0.0
    %4250 = vmatprep.subr.mxu0 0.0
    %4251 = vmatpush2.msra.mxu0 0.0
    %4252 = vmatprep.subr.mxu0 0.0
    %4253 = vmatpush2.msra.mxu0 0.0
    %4254 = vmatprep.subr.mxu0 0.0
    %4255 = vmatpush2.msra.mxu0 0.0
    %4256 = vmatprep.subr.mxu0 0.0
    %4257 = vmatpush2.msra.mxu0 0.0
    %4258 = vmatprep.subr.mxu0 0.0
    %4259 = vmatpush2.msra.mxu0 0.0
    %4260 = vmatprep.subr.mxu0 0.0
    %4261 = vmatpush2.msra.mxu0 0.0
    %4262 = vmatprep.subr.mxu0 0.0
    %4263 = vmatpush2.msra.mxu0 0.0
    %4264 = vmatprep.subr.mxu0 0.0
    %4265 = vmatpush2.msra.mxu0 0.0
    %4266 = vmatprep.subr.mxu0 0.0
    %4267 = vmatpush2.msra.mxu0 0.0
    %4268 = vmatprep.subr.mxu0 0.0
    %4269 = vmatpush2.msra.mxu0 0.0
    %4270 = vmatprep.subr.mxu0 0.0
    %4271 = vmatpush2.msra.mxu0 0.0
    %4272 = vmatprep.subr.mxu0 0.0
    %4273 = vmatpush2.msra.mxu0 0.0
    %4274 = vmatprep.subr.mxu0 0.0
    %4275 = vmatpush2.msra.mxu0 0.0
    %4276 = vmatprep.mubr.f32.mxu0 0.0
    %4277 = vmatmul.mubr.f32.gmra.mxu0 %v4207
    %v4278 = vpop.f32.mrf.mxu0
    %v4279 = vadd.f32 0.0, %v4278
    %v4280 = vpop.f32.mrf.mxu0
    %v4281 = vadd.f32 0.0, %v4280
    %4282 = vmatprep.mubr.f32.mxu0 0.0
    %4283 = vmatmul.mubr.f32.gmra.mxu0 %v4210
    %v4284 = vpop.f32.mrf.mxu0
    %v4285 = vadd.f32 0.0, %v4284
    %v4286 = vpop.f32.mrf.mxu0
    %v4287 = vadd.f32 0.0, %v4286
    %4288 = vdwg.mxu0
    %4289 = vmatprep.subr.mxu0 0.0
    %4290 = vmatpush1.msra.mxu0 0.0
    %4291 = vmatprep.subr.mxu0 0.0
    %4292 = vmatpush1.msra.mxu0 0.0
    %4293 = vmatprep.subr.mxu0 0.0
    %4294 = vmatpush1.msra.mxu0 0.0
    %4295 = vmatprep.subr.mxu0 0.0
    %4296 = vmatpush1.msra.mxu0 0.0
    %4297 = vmatprep.subr.mxu0 0.0
    %4298 = vmatpush1.msra.mxu0 0.0
    %4299 = vmatprep.subr.mxu0 0.0
    %4300 = vmatpush1.msra.mxu0 0.0
    %4301 = vmatprep.subr.mxu0 0.0
    %4302 = vmatpush1.msra.mxu0 0.0
    %4303 = vmatprep.subr.mxu0 0.0
    %4304 = vmatpush1.msra.mxu0 0.0
    %4305 = vmatprep.subr.mxu0 0.0
    %4306 = vmatpush1.msra.mxu0 0.0
    %4307 = vmatprep.subr.mxu0 0.0
    %4308 = vmatpush1.msra.mxu0 0.0
    %4309 = vmatprep.subr.mxu0 0.0
    %4310 = vmatpush1.msra.mxu0 0.0
    %4311 = vmatprep.subr.mxu0 0.0
    %4312 = vmatpush1.msra.mxu0 0.0
    %4313 = vmatprep.subr.mxu0 0.0
    %4314 = vmatpush1.msra.mxu0 %v4184
    %4315 = vmatprep.subr.mxu0 0.0
    %4316 = vmatpush1.msra.mxu0 %v4178
    %4317 = vmatprep.subr.mxu0 0.0
    %4318 = vmatpush1.msra.mxu0 %v4172
    %4319 = vmatprep.subr.mxu0 0.0
    %4320 = vmatpush1.msra.mxu0 %v4166
    %4321 = vmatprep.subr.mxu0 0.0
    %4322 = vmatpush2.msra.mxu0 0.0
    %4323 = vmatprep.subr.mxu0 0.0
    %4324 = vmatpush2.msra.mxu0 0.0
    %4325 = vmatprep.subr.mxu0 0.0
    %4326 = vmatpush2.msra.mxu0 0.0
    %4327 = vmatprep.subr.mxu0 0.0
    %4328 = vmatpush2.msra.mxu0 0.0
    %4329 = vmatprep.subr.mxu0 0.0
    %4330 = vmatpush2.msra.mxu0 0.0
    %4331 = vmatprep.subr.mxu0 0.0
    %4332 = vmatpush2.msra.mxu0 0.0
    %4333 = vmatprep.subr.mxu0 0.0
    %4334 = vmatpush2.msra.mxu0 0.0
    %4335 = vmatprep.subr.mxu0 0.0
    %4336 = vmatpush2.msra.mxu0 0.0
    %4337 = vmatprep.subr.mxu0 0.0
    %4338 = vmatpush2.msra.mxu0 0.0
    %4339 = vmatprep.subr.mxu0 0.0
    %4340 = vmatpush2.msra.mxu0 0.0
    %4341 = vmatprep.subr.mxu0 0.0
    %4342 = vmatpush2.msra.mxu0 0.0
    %4343 = vmatprep.subr.mxu0 0.0
    %4344 = vmatpush2.msra.mxu0 0.0
    %4345 = vmatprep.subr.mxu0 0.0
    %4346 = vmatpush2.msra.mxu0 0.0
    %4347 = vmatprep.subr.mxu0 0.0
    %4348 = vmatpush2.msra.mxu0 0.0
    %4349 = vmatprep.subr.mxu0 0.0
    %4350 = vmatpush2.msra.mxu0 0.0
    %4351 = vmatprep.subr.mxu0 0.0
    %4352 = vmatpush2.msra.mxu0 0.0
    %4353 = vmatprep.mubr.f32.mxu0 0.0
    %4354 = vmatmul.mubr.f32.gmra.mxu0 %v4207
    %v4355 = vpop.f32.mrf.mxu0
    %v4356 = vadd.f32 0.0, %v4355
    %v4357 = vpop.f32.mrf.mxu0
    %4358 = vmatprep.mubr.f32.mxu0 0.0
    %4359 = vmatmul.mubr.f32.gmra.mxu0 %v4210
    %v4360 = vpop.f32.mrf.mxu0
    %v4361 = vadd.f32 0.0, %v4360
    %v4362 = vpop.f32.mrf.mxu0
    %4363 = vdwg.mxu0
    %v4364 = vadd.f32 %v4152, %v4279
    %v4365 = vadd.f32 %v4153, %v4281
    %v4366 = vadd.f32 %v4154, %v4356
    %v4367 = vadd.f32 %v4155, %v4285
    %v4368 = vadd.f32 %v4156, %v4287
    %v4369 = vadd.f32 %v4157, %v4361
    %s4370 = scalar_lea.vmem %s15, 128
    %v4371 = vld [vmem:[%s4370] sm:$0xff]
    %v4372 = vld [vmem:[%s4370 + $0x8] sm:$0xff]
    %4373 = vrot.lane.b32.xlu0 %v2708, 90
    %v4374 = vpop.permute.xlu0 %4373
    %4375 = vrot.lane.b32.xlu0 %v2709, 90
    %v4376 = vpop.permute.xlu0 %4375
    %4377 = vrot.lane.b32.xlu0 %v2710, 90
    %v4378 = vpop.permute.xlu0 %4377
    %4379 = vrot.lane.b32.xlu0 %v2711, 90
    %v4380 = vpop.permute.xlu0 %4379
    %4381 = vrot.lane.b32.xlu0 %v2712, 90
    %v4382 = vpop.permute.xlu0 %4381
    %4383 = vrot.lane.b32.xlu0 %v2713, 90
    %v4384 = vpop.permute.xlu0 %4383
    %4385 = vrot.lane.b32.xlu0 %v2714, 90
    %v4386 = vpop.permute.xlu0 %4385
    %4387 = vrot.lane.b32.xlu0 %v2715, 90
    %v4388 = vpop.permute.xlu0 %4387
    %4389 = vrot.lane.b32.xlu0 %v2716, 90
    %v4390 = vpop.permute.xlu0 %4389
    %4391 = vrot.lane.b32.xlu0 %v2717, 90
    %v4392 = vpop.permute.xlu0 %4391
    %4393 = vrot.lane.b32.xlu0 %v2718, 90
    %v4394 = vpop.permute.xlu0 %4393
    %4395 = vrot.lane.b32.xlu0 %v2719, 90
    %v4396 = vpop.permute.xlu0 %4395
    %vm4397 = vcmask 736256
    %v4398 = vsel %vm4397, %v4374, %v4376
    %v4399 = vsel %vm4397, %v4376, %v4378
    %v4400 = vsel %vm4397, %v4380, %v4382
    %v4401 = vsel %vm4397, %v4382, %v4384
    %v4402 = vsel %vm4397, %v4386, %v4388
    %v4403 = vsel %vm4397, %v4388, %v4390
    %v4404 = vsel %vm4397, %v4392, %v4394
    %v4405 = vsel %vm4397, %v4394, %v4396
    %v4419 = vsel %vm208, %v4371, 0
    %v4422 = vsel %vm208, %v4372, 0
    %4424 = vmatprep.subr.mxu0 0.0
    %4425 = vmatpush1.msra.mxu0 0.0
    %4426 = vmatprep.subr.mxu0 0.0
    %4427 = vmatpush1.msra.mxu0 0.0
    %4428 = vmatprep.subr.mxu0 0.0
    %4429 = vmatpush1.msra.mxu0 0.0
    %4430 = vmatprep.subr.mxu0 0.0
    %4431 = vmatpush1.msra.mxu0 0.0
    %4432 = vmatprep.subr.mxu0 0.0
    %4433 = vmatpush1.msra.mxu0 0.0
    %4434 = vmatprep.subr.mxu0 0.0
    %4435 = vmatpush1.msra.mxu0 0.0
    %4436 = vmatprep.subr.mxu0 0.0
    %4437 = vmatpush1.msra.mxu0 0.0
    %4438 = vmatprep.subr.mxu0 0.0
    %4439 = vmatpush1.msra.mxu0 0.0
    %4440 = vmatprep.subr.mxu0 0.0
    %4441 = vmatpush1.msra.mxu0 0.0
    %4442 = vmatprep.subr.mxu0 0.0
    %4443 = vmatpush1.msra.mxu0 0.0
    %4444 = vmatprep.subr.mxu0 0.0
    %4445 = vmatpush1.msra.mxu0 0.0
    %4446 = vmatprep.subr.mxu0 0.0
    %4447 = vmatpush1.msra.mxu0 0.0
    %4448 = vmatprep.subr.mxu0 %v4405
    %4449 = vmatpush1.msra.mxu0 %v4404
    %4450 = vmatprep.subr.mxu0 %v4403
    %4451 = vmatpush1.msra.mxu0 %v4402
    %4452 = vmatprep.subr.mxu0 %v4401
    %4453 = vmatpush1.msra.mxu0 %v4400
    %4454 = vmatprep.subr.mxu0 %v4399
    %4455 = vmatpush1.msra.mxu0 %v4398
    %4456 = vmatprep.subr.mxu0 0.0
    %4457 = vmatpush2.msra.mxu0 0.0
    %4458 = vmatprep.subr.mxu0 0.0
    %4459 = vmatpush2.msra.mxu0 0.0
    %4460 = vmatprep.subr.mxu0 0.0
    %4461 = vmatpush2.msra.mxu0 0.0
    %4462 = vmatprep.subr.mxu0 0.0
    %4463 = vmatpush2.msra.mxu0 0.0
    %4464 = vmatprep.subr.mxu0 0.0
    %4465 = vmatpush2.msra.mxu0 0.0
    %4466 = vmatprep.subr.mxu0 0.0
    %4467 = vmatpush2.msra.mxu0 0.0
    %4468 = vmatprep.subr.mxu0 0.0
    %4469 = vmatpush2.msra.mxu0 0.0
    %4470 = vmatprep.subr.mxu0 0.0
    %4471 = vmatpush2.msra.mxu0 0.0
    %4472 = vmatprep.subr.mxu0 0.0
    %4473 = vmatpush2.msra.mxu0 0.0
    %4474 = vmatprep.subr.mxu0 0.0
    %4475 = vmatpush2.msra.mxu0 0.0
    %4476 = vmatprep.subr.mxu0 0.0
    %4477 = vmatpush2.msra.mxu0 0.0
    %4478 = vmatprep.subr.mxu0 0.0
    %4479 = vmatpush2.msra.mxu0 0.0
    %4480 = vmatprep.subr.mxu0 0.0
    %4481 = vmatpush2.msra.mxu0 0.0
    %4482 = vmatprep.subr.mxu0 0.0
    %4483 = vmatpush2.msra.mxu0 0.0
    %4484 = vmatprep.subr.mxu0 0.0
    %4485 = vmatpush2.msra.mxu0 0.0
    %4486 = vmatprep.subr.mxu0 0.0
    %4487 = vmatpush2.msra.mxu0 0.0
    %4488 = vmatprep.mubr.f32.mxu0 0.0
    %4489 = vmatmul.mubr.f32.gmra.mxu0 %v4419
    %v4490 = vpop.f32.mrf.mxu0
    %v4491 = vadd.f32 0.0, %v4490
    %v4492 = vpop.f32.mrf.mxu0
    %v4493 = vadd.f32 0.0, %v4492
    %4494 = vmatprep.mubr.f32.mxu0 0.0
    %4495 = vmatmul.mubr.f32.gmra.mxu0 %v4422
    %v4496 = vpop.f32.mrf.mxu0
    %v4497 = vadd.f32 0.0, %v4496
    %v4498 = vpop.f32.mrf.mxu0
    %v4499 = vadd.f32 0.0, %v4498
    %4500 = vdwg.mxu0
    %4501 = vmatprep.subr.mxu0 0.0
    %4502 = vmatpush1.msra.mxu0 0.0
    %4503 = vmatprep.subr.mxu0 0.0
    %4504 = vmatpush1.msra.mxu0 0.0
    %4505 = vmatprep.subr.mxu0 0.0
    %4506 = vmatpush1.msra.mxu0 0.0
    %4507 = vmatprep.subr.mxu0 0.0
    %4508 = vmatpush1.msra.mxu0 0.0
    %4509 = vmatprep.subr.mxu0 0.0
    %4510 = vmatpush1.msra.mxu0 0.0
    %4511 = vmatprep.subr.mxu0 0.0
    %4512 = vmatpush1.msra.mxu0 0.0
    %4513 = vmatprep.subr.mxu0 0.0
    %4514 = vmatpush1.msra.mxu0 0.0
    %4515 = vmatprep.subr.mxu0 0.0
    %4516 = vmatpush1.msra.mxu0 0.0
    %4517 = vmatprep.subr.mxu0 0.0
    %4518 = vmatpush1.msra.mxu0 0.0
    %4519 = vmatprep.subr.mxu0 0.0
    %4520 = vmatpush1.msra.mxu0 0.0
    %4521 = vmatprep.subr.mxu0 0.0
    %4522 = vmatpush1.msra.mxu0 0.0
    %4523 = vmatprep.subr.mxu0 0.0
    %4524 = vmatpush1.msra.mxu0 0.0
    %4525 = vmatprep.subr.mxu0 0.0
    %4526 = vmatpush1.msra.mxu0 %v4396
    %4527 = vmatprep.subr.mxu0 0.0
    %4528 = vmatpush1.msra.mxu0 %v4390
    %4529 = vmatprep.subr.mxu0 0.0
    %4530 = vmatpush1.msra.mxu0 %v4384
    %4531 = vmatprep.subr.mxu0 0.0
    %4532 = vmatpush1.msra.mxu0 %v4378
    %4533 = vmatprep.subr.mxu0 0.0
    %4534 = vmatpush2.msra.mxu0 0.0
    %4535 = vmatprep.subr.mxu0 0.0
    %4536 = vmatpush2.msra.mxu0 0.0
    %4537 = vmatprep.subr.mxu0 0.0
    %4538 = vmatpush2.msra.mxu0 0.0
    %4539 = vmatprep.subr.mxu0 0.0
    %4540 = vmatpush2.msra.mxu0 0.0
    %4541 = vmatprep.subr.mxu0 0.0
    %4542 = vmatpush2.msra.mxu0 0.0
    %4543 = vmatprep.subr.mxu0 0.0
    %4544 = vmatpush2.msra.mxu0 0.0
    %4545 = vmatprep.subr.mxu0 0.0
    %4546 = vmatpush2.msra.mxu0 0.0
    %4547 = vmatprep.subr.mxu0 0.0
    %4548 = vmatpush2.msra.mxu0 0.0
    %4549 = vmatprep.subr.mxu0 0.0
    %4550 = vmatpush2.msra.mxu0 0.0
    %4551 = vmatprep.subr.mxu0 0.0
    %4552 = vmatpush2.msra.mxu0 0.0
    %4553 = vmatprep.subr.mxu0 0.0
    %4554 = vmatpush2.msra.mxu0 0.0
    %4555 = vmatprep.subr.mxu0 0.0
    %4556 = vmatpush2.msra.mxu0 0.0
    %4557 = vmatprep.subr.mxu0 0.0
    %4558 = vmatpush2.msra.mxu0 0.0
    %4559 = vmatprep.subr.mxu0 0.0
    %4560 = vmatpush2.msra.mxu0 0.0
    %4561 = vmatprep.subr.mxu0 0.0
    %4562 = vmatpush2.msra.mxu0 0.0
    %4563 = vmatprep.subr.mxu0 0.0
    %4564 = vmatpush2.msra.mxu0 0.0
    %4565 = vmatprep.mubr.f32.mxu0 0.0
    %4566 = vmatmul.mubr.f32.gmra.mxu0 %v4419
    %v4567 = vpop.f32.mrf.mxu0
    %v4568 = vadd.f32 0.0, %v4567
    %v4569 = vpop.f32.mrf.mxu0
    %4570 = vmatprep.mubr.f32.mxu0 0.0
    %4571 = vmatmul.mubr.f32.gmra.mxu0 %v4422
    %v4572 = vpop.f32.mrf.mxu0
    %v4573 = vadd.f32 0.0, %v4572
    %v4574 = vpop.f32.mrf.mxu0
    %4575 = vdwg.mxu0
    %v4576 = vadd.f32 %v4364, %v4491
    %v4577 = vadd.f32 %v4365, %v4493
    %v4578 = vadd.f32 %v4366, %v4568
    %v4579 = vadd.f32 %v4367, %v4497
    %v4580 = vadd.f32 %v4368, %v4499
    %v4581 = vadd.f32 %v4369, %v4573
    %v4582 = vld [vmem:[#allocation16] sm:$0xff]
    %v4583 = vld [vmem:[#allocation16 + $0x8] sm:$0xff]
    %v4584 = vld [vmem:[%s17] sm:$0xff]
    %v4585 = vld [vmem:[%s17 + $0x8] sm:$0xff]
    %v4586 = vld [vmem:[%s18] sm:$0xff]
    %v4587 = vld [vmem:[%s18 + $0x8] sm:$0xff]
    %v4588 = vsel %vm2636, 1, 0
    %v4589 = vlaneseq
    %v4590 = vshrl.u32 %v4589, 7
    %v4591 = vsub.s32 0, %v4590
    %v4592 = vrot.slane %v4588, %v4591
    %v4593 = vlaneseq
    %v4594 = vshrl.u32 %v4593, 7
    %v4595 = vsub.s32 1, %v4594
    %v4596 = vrot.slane %v4588, %v4595
    %v4597 = vlaneseq
    %v4598 = vshrl.u32 %v4597, 7
    %v4599 = vsub.s32 2, %v4598
    %v4600 = vrot.slane %v4588, %v4599
    %vm4601 = vcmp.eq.s32.totalorder %v4592, 1
    %vm4602 = vcmp.eq.s32.totalorder %v4596, 1
    %vm4603 = vcmp.eq.s32.totalorder %v4600, 1
    %v4604 = vsel %vm4601, %v4576, 0.0
    %v4605 = vsel %vm4602, %v4577, 0.0
    %v4606 = vsel %vm4603, %v4578, 0.0
    %v4607 = vsel %vm4601, %v4579, 0.0
    %v4608 = vsel %vm4602, %v4580, 0.0
    %v4609 = vsel %vm4603, %v4581, 0.0
    %v4610 = vadd.f32 %v4604, %v4605
    %vm4611 = vcmask 556032
    %v4612 = vsel %vm4611, %v4606, 0.0
    %v4613 = vadd.f32 %v4610, %v4612
    %4614 = vadd.xlane.f32.xlu0 %v4613
    %v4615 = vpop.xlane.xlu0 %4614
    %v4616 = vadd.f32 %v4607, %v4608
    %v4617 = vsel %vm4611, %v4609, 0.0
    %v4618 = vadd.f32 %v4616, %v4617
    %4619 = vadd.xlane.f32.xlu0 %v4618
    %v4620 = vpop.xlane.xlu0 %4619
    %v4622 = vsel %vm541, %v4582, 0
    %v4625 = vsel %vm541, %v4583, 0
    %4627 = vmatprep.subr.mxu0 0.0
    %4628 = vmatpush1.msra.mxu0 0.0
    %4629 = vmatprep.subr.mxu0 0.0
    %4630 = vmatpush1.msra.mxu0 0.0
    %4631 = vmatprep.subr.mxu0 0.0
    %4632 = vmatpush1.msra.mxu0 0.0
    %4633 = vmatprep.subr.mxu0 0.0
    %4634 = vmatpush1.msra.mxu0 0.0
    %4635 = vmatprep.subr.mxu0 0.0
    %4636 = vmatpush1.msra.mxu0 0.0
    %4637 = vmatprep.subr.mxu0 0.0
    %4638 = vmatpush1.msra.mxu0 0.0
    %4639 = vmatprep.subr.mxu0 0.0
    %4640 = vmatpush1.msra.mxu0 0.0
    %4641 = vmatprep.subr.mxu0 0.0
    %4642 = vmatpush1.msra.mxu0 0.0
    %4643 = vmatprep.subr.mxu0 0.0
    %4644 = vmatpush1.msra.mxu0 0.0
    %4645 = vmatprep.subr.mxu0 0.0
    %4646 = vmatpush1.msra.mxu0 0.0
    %4647 = vmatprep.subr.mxu0 0.0
    %4648 = vmatpush1.msra.mxu0 0.0
    %4649 = vmatprep.subr.mxu0 0.0
    %4650 = vmatpush1.msra.mxu0 0.0
    %4651 = vmatprep.subr.mxu0 0.0
    %4652 = vmatpush1.msra.mxu0 0.0
    %4653 = vmatprep.subr.mxu0 0.0
    %4654 = vmatpush1.msra.mxu0 0.0
    %4655 = vmatprep.subr.mxu0 0.0
    %4656 = vmatpush1.msra.mxu0 %v4620
    %4657 = vmatprep.subr.mxu0 0.0
    %4658 = vmatpush1.msra.mxu0 %v4615
    %4659 = vmatprep.subr.mxu0 0.0
    %4660 = vmatpush2.msra.mxu0 0.0
    %4661 = vmatprep.subr.mxu0 0.0
    %4662 = vmatpush2.msra.mxu0 0.0
    %4663 = vmatprep.subr.mxu0 0.0
    %4664 = vmatpush2.msra.mxu0 0.0
    %4665 = vmatprep.subr.mxu0 0.0
    %4666 = vmatpush2.msra.mxu0 0.0
    %4667 = vmatprep.subr.mxu0 0.0
    %4668 = vmatpush2.msra.mxu0 0.0
    %4669 = vmatprep.subr.mxu0 0.0
    %4670 = vmatpush2.msra.mxu0 0.0
    %4671 = vmatprep.subr.mxu0 0.0
    %4672 = vmatpush2.msra.mxu0 0.0
    %4673 = vmatprep.subr.mxu0 0.0
    %4674 = vmatpush2.msra.mxu0 0.0
    %4675 = vmatprep.subr.mxu0 0.0
    %4676 = vmatpush2.msra.mxu0 0.0
    %4677 = vmatprep.subr.mxu0 0.0
    %4678 = vmatpush2.msra.mxu0 0.0
    %4679 = vmatprep.subr.mxu0 0.0
    %4680 = vmatpush2.msra.mxu0 0.0
    %4681 = vmatprep.subr.mxu0 0.0
    %4682 = vmatpush2.msra.mxu0 0.0
    %4683 = vmatprep.subr.mxu0 0.0
    %4684 = vmatpush2.msra.mxu0 0.0
    %4685 = vmatprep.subr.mxu0 0.0
    %4686 = vmatpush2.msra.mxu0 0.0
    %4687 = vmatprep.subr.mxu0 0.0
    %4688 = vmatpush2.msra.mxu0 0.0
    %4689 = vmatprep.subr.mxu0 0.0
    %4690 = vmatpush2.msra.mxu0 0.0
    %4691 = vmatprep.mubr.f32.mxu0 0.0
    %4692 = vmatmul.mubr.f32.gmra.mxu0 %v4622
    %v4693 = vpop.f32.mrf.mxu0
    %v4694 = vadd.f32 0.0, %v4693
    %v4695 = vpop.f32.mrf.mxu0
    %4696 = vmatprep.mubr.f32.mxu0 0.0
    %4697 = vmatmul.mubr.f32.gmra.mxu0 %v4625
    %v4698 = vpop.f32.mrf.mxu0
    %v4699 = vadd.f32 0.0, %v4698
    %v4700 = vpop.f32.mrf.mxu0
    %4701 = vdwg.mxu0
    %v4702 = vmul.f32 %v4694, 0.001953125
    %v4703 = vmul.f32 %v4699, 0.001953125
    %4705 = vset.pattern.permute.xlu0 0
    %4706 = vperm.xlu0 %4705, %v4702
    %v4707 = vpop.permute.xlu0 %4706
    %4710 = vset.pattern.permute.xlu0 0
    %4711 = vperm.xlu0 %4710, %v4703
    %v4712 = vpop.permute.xlu0 %4711
    %v4714 = vsub.f32 %v4604, %v4707
    %v4715 = vsub.f32 %v4605, %v4707
    %v4716 = vsub.f32 %v4606, %v4707
    %v4717 = vsub.f32 %v4607, %v4712
    %v4718 = vsub.f32 %v4608, %v4712
    %v4719 = vsub.f32 %v4609, %v4712
    %v4720 = vsel %vm4601, %v4714, 0.0
    %v4721 = vsel %vm4602, %v4715, 0.0
    %v4722 = vsel %vm4603, %v4716, 0.0
    %v4723 = vsel %vm4601, %v4717, 0.0
    %v4724 = vsel %vm4602, %v4718, 0.0
    %v4725 = vsel %vm4603, %v4719, 0.0
    %v4726 = vmul.f32 %v4720, %v4720
    %v4727 = vmul.f32 %v4721, %v4721
    %v4728 = vmul.f32 %v4722, %v4722
    %v4729 = vmul.f32 %v4723, %v4723
    %v4730 = vmul.f32 %v4724, %v4724
    %v4731 = vmul.f32 %v4725, %v4725
    %v4732 = vadd.f32 %v4726, %v4727
    %v4733 = vsel %vm4611, %v4728, 0.0
    %v4734 = vadd.f32 %v4732, %v4733
    %4735 = vadd.xlane.f32.xlu0 %v4734
    %v4736 = vpop.xlane.xlu0 %4735
    %v4737 = vadd.f32 %v4729, %v4730
    %v4738 = vsel %vm4611, %v4731, 0.0
    %v4739 = vadd.f32 %v4737, %v4738
    %4740 = vadd.xlane.f32.xlu0 %v4739
    %v4741 = vpop.xlane.xlu0 %4740
    %4742 = vmatprep.subr.mxu0 0.0
    %4743 = vmatpush1.msra.mxu0 0.0
    %4744 = vmatprep.subr.mxu0 0.0
    %4745 = vmatpush1.msra.mxu0 0.0
    %4746 = vmatprep.subr.mxu0 0.0
    %4747 = vmatpush1.msra.mxu0 0.0
    %4748 = vmatprep.subr.mxu0 0.0
    %4749 = vmatpush1.msra.mxu0 0.0
    %4750 = vmatprep.subr.mxu0 0.0
    %4751 = vmatpush1.msra.mxu0 0.0
    %4752 = vmatprep.subr.mxu0 0.0
    %4753 = vmatpush1.msra.mxu0 0.0
    %4754 = vmatprep.subr.mxu0 0.0
    %4755 = vmatpush1.msra.mxu0 0.0
    %4756 = vmatprep.subr.mxu0 0.0
    %4757 = vmatpush1.msra.mxu0 0.0
    %4758 = vmatprep.subr.mxu0 0.0
    %4759 = vmatpush1.msra.mxu0 0.0
    %4760 = vmatprep.subr.mxu0 0.0
    %4761 = vmatpush1.msra.mxu0 0.0
    %4762 = vmatprep.subr.mxu0 0.0
    %4763 = vmatpush1.msra.mxu0 0.0
    %4764 = vmatprep.subr.mxu0 0.0
    %4765 = vmatpush1.msra.mxu0 0.0
    %4766 = vmatprep.subr.mxu0 0.0
    %4767 = vmatpush1.msra.mxu0 0.0
    %4768 = vmatprep.subr.mxu0 0.0
    %4769 = vmatpush1.msra.mxu0 0.0
    %4770 = vmatprep.subr.mxu0 0.0
    %4771 = vmatpush1.msra.mxu0 %v4741
    %4772 = vmatprep.subr.mxu0 0.0
    %4773 = vmatpush1.msra.mxu0 %v4736
    %4774 = vmatprep.subr.mxu0 0.0
    %4775 = vmatpush2.msra.mxu0 0.0
    %4776 = vmatprep.subr.mxu0 0.0
    %4777 = vmatpush2.msra.mxu0 0.0
    %4778 = vmatprep.subr.mxu0 0.0
    %4779 = vmatpush2.msra.mxu0 0.0
    %4780 = vmatprep.subr.mxu0 0.0
    %4781 = vmatpush2.msra.mxu0 0.0
    %4782 = vmatprep.subr.mxu0 0.0
    %4783 = vmatpush2.msra.mxu0 0.0
    %4784 = vmatprep.subr.mxu0 0.0
    %4785 = vmatpush2.msra.mxu0 0.0
    %4786 = vmatprep.subr.mxu0 0.0
    %4787 = vmatpush2.msra.mxu0 0.0
    %4788 = vmatprep.subr.mxu0 0.0
    %4789 = vmatpush2.msra.mxu0 0.0
    %4790 = vmatprep.subr.mxu0 0.0
    %4791 = vmatpush2.msra.mxu0 0.0
    %4792 = vmatprep.subr.mxu0 0.0
    %4793 = vmatpush2.msra.mxu0 0.0
    %4794 = vmatprep.subr.mxu0 0.0
    %4795 = vmatpush2.msra.mxu0 0.0
    %4796 = vmatprep.subr.mxu0 0.0
    %4797 = vmatpush2.msra.mxu0 0.0
    %4798 = vmatprep.subr.mxu0 0.0
    %4799 = vmatpush2.msra.mxu0 0.0
    %4800 = vmatprep.subr.mxu0 0.0
    %4801 = vmatpush2.msra.mxu0 0.0
    %4802 = vmatprep.subr.mxu0 0.0
    %4803 = vmatpush2.msra.mxu0 0.0
    %4804 = vmatprep.subr.mxu0 0.0
    %4805 = vmatpush2.msra.mxu0 0.0
    %4806 = vmatprep.mubr.f32.mxu0 0.0
    %4807 = vmatmul.mubr.f32.gmra.mxu0 %v4622
    %v4808 = vpop.f32.mrf.mxu0
    %v4809 = vadd.f32 0.0, %v4808
    %v4810 = vpop.f32.mrf.mxu0
    %4811 = vmatprep.mubr.f32.mxu0 0.0
    %4812 = vmatmul.mubr.f32.gmra.mxu0 %v4625
    %v4813 = vpop.f32.mrf.mxu0
    %v4814 = vadd.f32 0.0, %v4813
    %v4815 = vpop.f32.mrf.mxu0
    %4816 = vdwg.mxu0
    %v4817 = vmul.f32 %v4809, 0.001953125
    %v4818 = vmul.f32 %v4814, 0.001953125
    %v4819 = vadd.f32 %v4817, 1e-05
    %v4820 = vadd.f32 %v4818, 1e-05
    %v4821 = vrsqrt.pop %v4819
    %v4822 = vrsqrt.pop %v4820
    %4824 = vset.pattern.permute.xlu0 0
    %4825 = vperm.xlu0 %4824, %v4821
    %v4826 = vpop.permute.xlu0 %4825
    %4829 = vset.pattern.permute.xlu0 0
    %4830 = vperm.xlu0 %4829, %v4822
    %v4831 = vpop.permute.xlu0 %4830
    %v4833 = vmul.f32 %v4720, %v4826
    %v4834 = vmul.f32 %v4721, %v4826
    %v4835 = vmul.f32 %v4722, %v4826
    %v4836 = vmul.f32 %v4723, %v4831
    %v4837 = vmul.f32 %v4724, %v4831
    %v4838 = vmul.f32 %v4725, %v4831
    %4840 = vset.pattern.permute.xlu0 0
    %4841 = vperm.xlu0 %4840, %v4584
    %v4842 = vpop.permute.xlu0 %4841
    %4845 = vset.pattern.permute.xlu0 0
    %4846 = vperm.xlu0 %4845, %v4585
    %v4847 = vpop.permute.xlu0 %4846
    %v4849 = vmul.f32 %v4833, %v4842
    %v4850 = vmul.f32 %v4834, %v4842
    %v4851 = vmul.f32 %v4835, %v4842
    %v4852 = vmul.f32 %v4836, %v4847
    %v4853 = vmul.f32 %v4837, %v4847
    %v4854 = vmul.f32 %v4838, %v4847
    %4856 = vset.pattern.permute.xlu0 0
    %4857 = vperm.xlu0 %4856, %v4586
    %v4858 = vpop.permute.xlu0 %4857
    %4861 = vset.pattern.permute.xlu0 0
    %4862 = vperm.xlu0 %4861, %v4587
    %v4863 = vpop.permute.xlu0 %4862
    %v4865 = vadd.f32 %v4849, %v4858
    %v4866 = vadd.f32 %v4850, %v4858
    %v4867 = vadd.f32 %v4851, %v4858
    %v4868 = vadd.f32 %v4852, %v4863
    %v4869 = vadd.f32 %v4853, %v4863
    %v4870 = vadd.f32 %v4854, %v4863
    %vm4871 = vcmp.ge.f32.partialorder %v4865, 0.0
    %vm4872 = vcmp.ge.f32.partialorder %v4866, 0.0
    %vm4873 = vcmp.ge.f32.partialorder %v4867, 0.0
    %vm4874 = vcmp.ge.f32.partialorder %v4868, 0.0
    %vm4875 = vcmp.ge.f32.partialorder %v4869, 0.0
    %vm4876 = vcmp.ge.f32.partialorder %v4870, 0.0
    %v4877 = vmul.f32 %v4865, 0.2
    %v4878 = vmul.f32 %v4866, 0.2
    %v4879 = vmul.f32 %v4867, 0.2
    %v4880 = vmul.f32 %v4868, 0.2
    %v4881 = vmul.f32 %v4869, 0.2
    %v4882 = vmul.f32 %v4870, 0.2
    %v4883 = vsel %vm4871, %v4865, %v4877
    %v4884 = vsel %vm4872, %v4866, %v4878
    %v4885 = vsel %vm4873, %v4867, %v4879
    %v4886 = vsel %vm4874, %v4868, %v4880
    %v4887 = vsel %vm4875, %v4869, %v4881
    %v4888 = vsel %vm4876, %v4870, %v4882
    %v4889 = vsel %vm4601, %v4883, 0.0
    %v4890 = vsel %vm4602, %v4884, 0.0
    %v4891 = vsel %vm4603, %v4885, 0.0
    %v4892 = vsel %vm4601, %v4886, 0.0
    %v4893 = vsel %vm4602, %v4887, 0.0
    %v4894 = vsel %vm4603, %v4888, 0.0
    %4901 = vrot.lane.b32.xlu0 %v4889, 19
    %v4902 = vpop.permute.xlu0 %4901
    %4903 = vrot.lane.b32.xlu0 %v4890, 19
    %v4904 = vpop.permute.xlu0 %4903
    %4905 = vrot.lane.b32.xlu0 %v4891, 19
    %v4906 = vpop.permute.xlu0 %4905
    %4907 = vrot.lane.b32.xlu0 %v4892, 19
    %v4908 = vpop.permute.xlu0 %4907
    %4909 = vrot.lane.b32.xlu0 %v4893, 19
    %v4910 = vpop.permute.xlu0 %4909
    %4911 = vrot.lane.b32.xlu0 %v4894, 19
    %v4912 = vpop.permute.xlu0 %4911
    %v4913 = vsel %vm2673, %v4902, %v4904
    %v4914 = vsel %vm2673, %v4904, %v4906
    %v4915 = vsel %vm2673, %v4908, %v4910
    %v4916 = vsel %vm2673, %v4910, %v4912
    %4923 = vst.msk [vmem:[#allocation4] sm:$0xff] %vm2694, %v4902
    %4924 = vst [vmem:[#allocation4 + $0x8] sm:$0xff] %v4913
    %4925 = vst.msk [vmem:[#allocation4 + $0x10] sm:$0xff] %vm2697, %v4914
    %4926 = vst.msk [vmem:[#allocation4 + $0x18] sm:$0xff] %vm2694, %v4908
    %4927 = vst [vmem:[#allocation4 + $0x20] sm:$0xff] %v4915
    %4928 = vst.msk [vmem:[#allocation4 + $0x28] sm:$0xff] %vm2697, %v4916
    %v4929 = vld [vmem:[#allocation4] sm:$0xff]
    %v4930 = vld [vmem:[#allocation4 + $0x8] sm:$0xff]
    %v4931 = vld [vmem:[#allocation4 + $0x10] sm:$0xff]
    %v4932 = vld [vmem:[#allocation4 + $0x18] sm:$0xff]
    %v4933 = vld [vmem:[#allocation4 + $0x20] sm:$0xff]
    %v4934 = vld [vmem:[#allocation4 + $0x28] sm:$0xff]
    %v4935 = vld [vmem:[%s20] sm:$0x3f]
    %s4936 = scalar_lea.vmem %s20, 8
    %v4937 = vld [vmem:[%s4936] sm:$0x3f]
    %4944 = vrot.lane.b32.xlu0 %v4929, 127
    %v4945 = vpop.permute.xlu0 %4944
    %4946 = vrot.lane.b32.xlu0 %v4930, 127
    %v4947 = vpop.permute.xlu0 %4946
    %4948 = vrot.lane.b32.xlu0 %v4931, 127
    %v4949 = vpop.permute.xlu0 %4948
    %4950 = vrot.lane.b32.xlu0 %v4932, 127
    %v4951 = vpop.permute.xlu0 %4950
    %4952 = vrot.lane.b32.xlu0 %v4933, 127
    %v4953 = vpop.permute.xlu0 %4952
    %4954 = vrot.lane.b32.xlu0 %v4934, 127
    %v4955 = vpop.permute.xlu0 %4954
    %v4956 = vsel %vm2761, %v4945, %v4947
    %v4957 = vsel %vm2761, %v4947, %v4949
    %v4958 = vsel %vm2761, %v4951, %v4953
    %v4959 = vsel %vm2761, %v4953, %v4955
    %v4967 = vsel %vm541, %v4937, 0
    %4969 = vmatprep.subr.mxu0 0.0
    %4970 = vmatpush1.msra.mxu0 0.0
    %4971 = vmatprep.subr.mxu0 0.0
    %4972 = vmatpush1.msra.mxu0 0.0
    %4973 = vmatprep.subr.mxu0 0.0
    %4974 = vmatpush1.msra.mxu0 0.0
    %4975 = vmatprep.subr.mxu0 0.0
    %4976 = vmatpush1.msra.mxu0 0.0
    %4977 = vmatprep.subr.mxu0 0.0
    %4978 = vmatpush1.msra.mxu0 0.0
    %4979 = vmatprep.subr.mxu0 0.0
    %4980 = vmatpush1.msra.mxu0 0.0
    %4981 = vmatprep.subr.mxu0 0.0
    %4982 = vmatpush1.msra.mxu0 0.0
    %4983 = vmatprep.subr.mxu0 0.0
    %4984 = vmatpush1.msra.mxu0 0.0
    %4985 = vmatprep.subr.mxu0 0.0
    %4986 = vmatpush1.msra.mxu0 0.0
    %4987 = vmatprep.subr.mxu0 0.0
    %4988 = vmatpush1.msra.mxu0 0.0
    %4989 = vmatprep.subr.mxu0 0.0
    %4990 = vmatpush1.msra.mxu0 0.0
    %4991 = vmatprep.subr.mxu0 0.0
    %4992 = vmatpush1.msra.mxu0 0.0
    %4993 = vmatprep.subr.mxu0 0.0
    %4994 = vmatpush1.msra.mxu0 0.0
    %4995 = vmatprep.subr.mxu0 0.0
    %4996 = vmatpush1.msra.mxu0 0.0
    %4997 = vmatprep.subr.mxu0 %v4959
    %4998 = vmatpush1.msra.mxu0 %v4958
    %4999 = vmatprep.subr.mxu0 %v4957
    %5000 = vmatpush1.msra.mxu0 %v4956
    %5001 = vmatprep.subr.mxu0 0.0
    %5002 = vmatpush2.msra.mxu0 0.0
    %5003 = vmatprep.subr.mxu0 0.0
    %5004 = vmatpush2.msra.mxu0 0.0
    %5005 = vmatprep.subr.mxu0 0.0
    %5006 = vmatpush2.msra.mxu0 0.0
    %5007 = vmatprep.subr.mxu0 0.0
    %5008 = vmatpush2.msra.mxu0 0.0
    %5009 = vmatprep.subr.mxu0 0.0
    %5010 = vmatpush2.msra.mxu0 0.0
    %5011 = vmatprep.subr.mxu0 0.0
    %5012 = vmatpush2.msra.mxu0 0.0
    %5013 = vmatprep.subr.mxu0 0.0
    %5014 = vmatpush2.msra.mxu0 0.0
    %5015 = vmatprep.subr.mxu0 0.0
    %5016 = vmatpush2.msra.mxu0 0.0
    %5017 = vmatprep.subr.mxu0 0.0
    %5018 = vmatpush2.msra.mxu0 0.0
    %5019 = vmatprep.subr.mxu0 0.0
    %5020 = vmatpush2.msra.mxu0 0.0
    %5021 = vmatprep.subr.mxu0 0.0
    %5022 = vmatpush2.msra.mxu0 0.0
    %5023 = vmatprep.subr.mxu0 0.0
    %5024 = vmatpush2.msra.mxu0 0.0
    %5025 = vmatprep.subr.mxu0 0.0
    %5026 = vmatpush2.msra.mxu0 0.0
    %5027 = vmatprep.subr.mxu0 0.0
    %5028 = vmatpush2.msra.mxu0 0.0
    %5029 = vmatprep.subr.mxu0 0.0
    %5030 = vmatpush2.msra.mxu0 0.0
    %5031 = vmatprep.subr.mxu0 0.0
    %5032 = vmatpush2.msra.mxu0 0.0
    %5033 = vmatprep.mubr.f32.mxu0 0.0
    %5034 = vmatmul.mubr.f32.gmra.mxu0 %v4967
    %v5035 = vpop.f32.mrf.mxu0
    %v5036 = vadd.f32 0.0, %v5035
    %v5037 = vpop.f32.mrf.mxu0
    %v5038 = vadd.f32 0.0, %v5037
    %5039 = vdwg.mxu0
    %5040 = vmatprep.subr.mxu0 0.0
    %5041 = vmatpush1.msra.mxu0 0.0
    %5042 = vmatprep.subr.mxu0 0.0
    %5043 = vmatpush1.msra.mxu0 0.0
    %5044 = vmatprep.subr.mxu0 0.0
    %5045 = vmatpush1.msra.mxu0 0.0
    %5046 = vmatprep.subr.mxu0 0.0
    %5047 = vmatpush1.msra.mxu0 0.0
    %5048 = vmatprep.subr.mxu0 0.0
    %5049 = vmatpush1.msra.mxu0 0.0
    %5050 = vmatprep.subr.mxu0 0.0
    %5051 = vmatpush1.msra.mxu0 0.0
    %5052 = vmatprep.subr.mxu0 0.0
    %5053 = vmatpush1.msra.mxu0 0.0
    %5054 = vmatprep.subr.mxu0 0.0
    %5055 = vmatpush1.msra.mxu0 0.0
    %5056 = vmatprep.subr.mxu0 0.0
    %5057 = vmatpush1.msra.mxu0 0.0
    %5058 = vmatprep.subr.mxu0 0.0
    %5059 = vmatpush1.msra.mxu0 0.0
    %5060 = vmatprep.subr.mxu0 0.0
    %5061 = vmatpush1.msra.mxu0 0.0
    %5062 = vmatprep.subr.mxu0 0.0
    %5063 = vmatpush1.msra.mxu0 0.0
    %5064 = vmatprep.subr.mxu0 0.0
    %5065 = vmatpush1.msra.mxu0 0.0
    %5066 = vmatprep.subr.mxu0 0.0
    %5067 = vmatpush1.msra.mxu0 0.0
    %5068 = vmatprep.subr.mxu0 0.0
    %5069 = vmatpush1.msra.mxu0 %v4955
    %5070 = vmatprep.subr.mxu0 0.0
    %5071 = vmatpush1.msra.mxu0 %v4949
    %5072 = vmatprep.subr.mxu0 0.0
    %5073 = vmatpush2.msra.mxu0 0.0
    %5074 = vmatprep.subr.mxu0 0.0
    %5075 = vmatpush2.msra.mxu0 0.0
    %5076 = vmatprep.subr.mxu0 0.0
    %5077 = vmatpush2.msra.mxu0 0.0
    %5078 = vmatprep.subr.mxu0 0.0
    %5079 = vmatpush2.msra.mxu0 0.0
    %5080 = vmatprep.subr.mxu0 0.0
    %5081 = vmatpush2.msra.mxu0 0.0
    %5082 = vmatprep.subr.mxu0 0.0
    %5083 = vmatpush2.msra.mxu0 0.0
    %5084 = vmatprep.subr.mxu0 0.0
    %5085 = vmatpush2.msra.mxu0 0.0
    %5086 = vmatprep.subr.mxu0 0.0
    %5087 = vmatpush2.msra.mxu0 0.0
    %5088 = vmatprep.subr.mxu0 0.0
    %5089 = vmatpush2.msra.mxu0 0.0
    %5090 = vmatprep.subr.mxu0 0.0
    %5091 = vmatpush2.msra.mxu0 0.0
    %5092 = vmatprep.subr.mxu0 0.0
    %5093 = vmatpush2.msra.mxu0 0.0
    %5094 = vmatprep.subr.mxu0 0.0
    %5095 = vmatpush2.msra.mxu0 0.0
    %5096 = vmatprep.subr.mxu0 0.0
    %5097 = vmatpush2.msra.mxu0 0.0
    %5098 = vmatprep.subr.mxu0 0.0
    %5099 = vmatpush2.msra.mxu0 0.0
    %5100 = vmatprep.subr.mxu0 0.0
    %5101 = vmatpush2.msra.mxu0 0.0
    %5102 = vmatprep.subr.mxu0 0.0
    %5103 = vmatpush2.msra.mxu0 0.0
    %5104 = vmatprep.mubr.f32.mxu0 0.0
    %5105 = vmatmul.mubr.f32.gmra.mxu0 %v4967
    %v5106 = vpop.f32.mrf.mxu0
    %v5107 = vadd.f32 0.0, %v5106
    %v5108 = vpop.f32.mrf.mxu0
    %5109 = vdwg.mxu0
    %v5111 = vsel %vm541, %v4935, 0
    %5113 = vmatprep.subr.mxu0 0.0
    %5114 = vmatpush1.msra.mxu0 0.0
    %5115 = vmatprep.subr.mxu0 0.0
    %5116 = vmatpush1.msra.mxu0 0.0
    %5117 = vmatprep.subr.mxu0 0.0
    %5118 = vmatpush1.msra.mxu0 0.0
    %5119 = vmatprep.subr.mxu0 0.0
    %5120 = vmatpush1.msra.mxu0 0.0
    %5121 = vmatprep.subr.mxu0 0.0
    %5122 = vmatpush1.msra.mxu0 0.0
    %5123 = vmatprep.subr.mxu0 0.0
    %5124 = vmatpush1.msra.mxu0 0.0
    %5125 = vmatprep.subr.mxu0 0.0
    %5126 = vmatpush1.msra.mxu0 0.0
    %5127 = vmatprep.subr.mxu0 0.0
    %5128 = vmatpush1.msra.mxu0 0.0
    %5129 = vmatprep.subr.mxu0 0.0
    %5130 = vmatpush1.msra.mxu0 0.0
    %5131 = vmatprep.subr.mxu0 0.0
    %5132 = vmatpush1.msra.mxu0 0.0
    %5133 = vmatprep.subr.mxu0 0.0
    %5134 = vmatpush1.msra.mxu0 0.0
    %5135 = vmatprep.subr.mxu0 0.0
    %5136 = vmatpush1.msra.mxu0 0.0
    %5137 = vmatprep.subr.mxu0 0.0
    %5138 = vmatpush1.msra.mxu0 0.0
    %5139 = vmatprep.subr.mxu0 0.0
    %5140 = vmatpush1.msra.mxu0 0.0
    %5141 = vmatprep.subr.mxu0 %v4933
    %5142 = vmatpush1.msra.mxu0 %v4932
    %5143 = vmatprep.subr.mxu0 %v4930
    %5144 = vmatpush1.msra.mxu0 %v4929
    %5145 = vmatprep.subr.mxu0 0.0
    %5146 = vmatpush2.msra.mxu0 0.0
    %5147 = vmatprep.subr.mxu0 0.0
    %5148 = vmatpush2.msra.mxu0 0.0
    %5149 = vmatprep.subr.mxu0 0.0
    %5150 = vmatpush2.msra.mxu0 0.0
    %5151 = vmatprep.subr.mxu0 0.0
    %5152 = vmatpush2.msra.mxu0 0.0
    %5153 = vmatprep.subr.mxu0 0.0
    %5154 = vmatpush2.msra.mxu0 0.0
    %5155 = vmatprep.subr.mxu0 0.0
    %5156 = vmatpush2.msra.mxu0 0.0
    %5157 = vmatprep.subr.mxu0 0.0
    %5158 = vmatpush2.msra.mxu0 0.0
    %5159 = vmatprep.subr.mxu0 0.0
    %5160 = vmatpush2.msra.mxu0 0.0
    %5161 = vmatprep.subr.mxu0 0.0
    %5162 = vmatpush2.msra.mxu0 0.0
    %5163 = vmatprep.subr.mxu0 0.0
    %5164 = vmatpush2.msra.mxu0 0.0
    %5165 = vmatprep.subr.mxu0 0.0
    %5166 = vmatpush2.msra.mxu0 0.0
    %5167 = vmatprep.subr.mxu0 0.0
    %5168 = vmatpush2.msra.mxu0 0.0
    %5169 = vmatprep.subr.mxu0 0.0
    %5170 = vmatpush2.msra.mxu0 0.0
    %5171 = vmatprep.subr.mxu0 0.0
    %5172 = vmatpush2.msra.mxu0 0.0
    %5173 = vmatprep.subr.mxu0 0.0
    %5174 = vmatpush2.msra.mxu0 0.0
    %5175 = vmatprep.subr.mxu0 0.0
    %5176 = vmatpush2.msra.mxu0 0.0
    %5177 = vmatprep.mubr.f32.mxu0 0.0
    %5178 = vmatmul.mubr.f32.gmra.mxu0 %v5111
    %v5179 = vpop.f32.mrf.mxu0
    %v5180 = vadd.f32 %v5036, %v5179
    %v5181 = vpop.f32.mrf.mxu0
    %v5182 = vadd.f32 %v5038, %v5181
    %5183 = vdwg.mxu0
    %5184 = vmatprep.subr.mxu0 0.0
    %5185 = vmatpush1.msra.mxu0 0.0
    %5186 = vmatprep.subr.mxu0 0.0
    %5187 = vmatpush1.msra.mxu0 0.0
    %5188 = vmatprep.subr.mxu0 0.0
    %5189 = vmatpush1.msra.mxu0 0.0
    %5190 = vmatprep.subr.mxu0 0.0
    %5191 = vmatpush1.msra.mxu0 0.0
    %5192 = vmatprep.subr.mxu0 0.0
    %5193 = vmatpush1.msra.mxu0 0.0
    %5194 = vmatprep.subr.mxu0 0.0
    %5195 = vmatpush1.msra.mxu0 0.0
    %5196 = vmatprep.subr.mxu0 0.0
    %5197 = vmatpush1.msra.mxu0 0.0
    %5198 = vmatprep.subr.mxu0 0.0
    %5199 = vmatpush1.msra.mxu0 0.0
    %5200 = vmatprep.subr.mxu0 0.0
    %5201 = vmatpush1.msra.mxu0 0.0
    %5202 = vmatprep.subr.mxu0 0.0
    %5203 = vmatpush1.msra.mxu0 0.0
    %5204 = vmatprep.subr.mxu0 0.0
    %5205 = vmatpush1.msra.mxu0 0.0
    %5206 = vmatprep.subr.mxu0 0.0
    %5207 = vmatpush1.msra.mxu0 0.0
    %5208 = vmatprep.subr.mxu0 0.0
    %5209 = vmatpush1.msra.mxu0 0.0
    %5210 = vmatprep.subr.mxu0 0.0
    %5211 = vmatpush1.msra.mxu0 0.0
    %5212 = vmatprep.subr.mxu0 0.0
    %5213 = vmatpush1.msra.mxu0 %v4934
    %5214 = vmatprep.subr.mxu0 0.0
    %5215 = vmatpush1.msra.mxu0 %v4931
    %5216 = vmatprep.subr.mxu0 0.0
    %5217 = vmatpush2.msra.mxu0 0.0
    %5218 = vmatprep.subr.mxu0 0.0
    %5219 = vmatpush2.msra.mxu0 0.0
    %5220 = vmatprep.subr.mxu0 0.0
    %5221 = vmatpush2.msra.mxu0 0.0
    %5222 = vmatprep.subr.mxu0 0.0
    %5223 = vmatpush2.msra.mxu0 0.0
    %5224 = vmatprep.subr.mxu0 0.0
    %5225 = vmatpush2.msra.mxu0 0.0
    %5226 = vmatprep.subr.mxu0 0.0
    %5227 = vmatpush2.msra.mxu0 0.0
    %5228 = vmatprep.subr.mxu0 0.0
    %5229 = vmatpush2.msra.mxu0 0.0
    %5230 = vmatprep.subr.mxu0 0.0
    %5231 = vmatpush2.msra.mxu0 0.0
    %5232 = vmatprep.subr.mxu0 0.0
    %5233 = vmatpush2.msra.mxu0 0.0
    %5234 = vmatprep.subr.mxu0 0.0
    %5235 = vmatpush2.msra.mxu0 0.0
    %5236 = vmatprep.subr.mxu0 0.0
    %5237 = vmatpush2.msra.mxu0 0.0
    %5238 = vmatprep.subr.mxu0 0.0
    %5239 = vmatpush2.msra.mxu0 0.0
    %5240 = vmatprep.subr.mxu0 0.0
    %5241 = vmatpush2.msra.mxu0 0.0
    %5242 = vmatprep.subr.mxu0 0.0
    %5243 = vmatpush2.msra.mxu0 0.0
    %5244 = vmatprep.subr.mxu0 0.0
    %5245 = vmatpush2.msra.mxu0 0.0
    %5246 = vmatprep.subr.mxu0 0.0
    %5247 = vmatpush2.msra.mxu0 0.0
    %5248 = vmatprep.mubr.f32.mxu0 0.0
    %5249 = vmatmul.mubr.f32.gmra.mxu0 %v5111
    %v5250 = vpop.f32.mrf.mxu0
    %v5251 = vadd.f32 %v5107, %v5250
    %v5252 = vpop.f32.mrf.mxu0
    %5253 = vdwg.mxu0
    %s5254 = scalar_lea.vmem %s20, 16
    %v5255 = vld [vmem:[%s5254] sm:$0x3f]
    %5256 = vrot.lane.b32.xlu0 %v4929, 126
    %v5257 = vpop.permute.xlu0 %5256
    %5258 = vrot.lane.b32.xlu0 %v4930, 126
    %v5259 = vpop.permute.xlu0 %5258
    %5260 = vrot.lane.b32.xlu0 %v4931, 126
    %v5261 = vpop.permute.xlu0 %5260
    %5262 = vrot.lane.b32.xlu0 %v4932, 126
    %v5263 = vpop.permute.xlu0 %5262
    %5264 = vrot.lane.b32.xlu0 %v4933, 126
    %v5265 = vpop.permute.xlu0 %5264
    %5266 = vrot.lane.b32.xlu0 %v4934, 126
    %v5267 = vpop.permute.xlu0 %5266
    %v5268 = vsel %vm3125, %v5257, %v5259
    %v5269 = vsel %vm3125, %v5259, %v5261
    %v5270 = vsel %vm3125, %v5263, %v5265
    %v5271 = vsel %vm3125, %v5265, %v5267
    %v5279 = vsel %vm541, %v5255, 0
    %5281 = vmatprep.subr.mxu0 0.0
    %5282 = vmatpush1.msra.mxu0 0.0
    %5283 = vmatprep.subr.mxu0 0.0
    %5284 = vmatpush1.msra.mxu0 0.0
    %5285 = vmatprep.subr.mxu0 0.0
    %5286 = vmatpush1.msra.mxu0 0.0
    %5287 = vmatprep.subr.mxu0 0.0
    %5288 = vmatpush1.msra.mxu0 0.0
    %5289 = vmatprep.subr.mxu0 0.0
    %5290 = vmatpush1.msra.mxu0 0.0
    %5291 = vmatprep.subr.mxu0 0.0
    %5292 = vmatpush1.msra.mxu0 0.0
    %5293 = vmatprep.subr.mxu0 0.0
    %5294 = vmatpush1.msra.mxu0 0.0
    %5295 = vmatprep.subr.mxu0 0.0
    %5296 = vmatpush1.msra.mxu0 0.0
    %5297 = vmatprep.subr.mxu0 0.0
    %5298 = vmatpush1.msra.mxu0 0.0
    %5299 = vmatprep.subr.mxu0 0.0
    %5300 = vmatpush1.msra.mxu0 0.0
    %5301 = vmatprep.subr.mxu0 0.0
    %5302 = vmatpush1.msra.mxu0 0.0
    %5303 = vmatprep.subr.mxu0 0.0
    %5304 = vmatpush1.msra.mxu0 0.0
    %5305 = vmatprep.subr.mxu0 0.0
    %5306 = vmatpush1.msra.mxu0 0.0
    %5307 = vmatprep.subr.mxu0 0.0
    %5308 = vmatpush1.msra.mxu0 0.0
    %5309 = vmatprep.subr.mxu0 %v5271
    %5310 = vmatpush1.msra.mxu0 %v5270
    %5311 = vmatprep.subr.mxu0 %v5269
    %5312 = vmatpush1.msra.mxu0 %v5268
    %5313 = vmatprep.subr.mxu0 0.0
    %5314 = vmatpush2.msra.mxu0 0.0
    %5315 = vmatprep.subr.mxu0 0.0
    %5316 = vmatpush2.msra.mxu0 0.0
    %5317 = vmatprep.subr.mxu0 0.0
    %5318 = vmatpush2.msra.mxu0 0.0
    %5319 = vmatprep.subr.mxu0 0.0
    %5320 = vmatpush2.msra.mxu0 0.0
    %5321 = vmatprep.subr.mxu0 0.0
    %5322 = vmatpush2.msra.mxu0 0.0
    %5323 = vmatprep.subr.mxu0 0.0
    %5324 = vmatpush2.msra.mxu0 0.0
    %5325 = vmatprep.subr.mxu0 0.0
    %5326 = vmatpush2.msra.mxu0 0.0
    %5327 = vmatprep.subr.mxu0 0.0
    %5328 = vmatpush2.msra.mxu0 0.0
    %5329 = vmatprep.subr.mxu0 0.0
    %5330 = vmatpush2.msra.mxu0 0.0
    %5331 = vmatprep.subr.mxu0 0.0
    %5332 = vmatpush2.msra.mxu0 0.0
    %5333 = vmatprep.subr.mxu0 0.0
    %5334 = vmatpush2.msra.mxu0 0.0
    %5335 = vmatprep.subr.mxu0 0.0
    %5336 = vmatpush2.msra.mxu0 0.0
    %5337 = vmatprep.subr.mxu0 0.0
    %5338 = vmatpush2.msra.mxu0 0.0
    %5339 = vmatprep.subr.mxu0 0.0
    %5340 = vmatpush2.msra.mxu0 0.0
    %5341 = vmatprep.subr.mxu0 0.0
    %5342 = vmatpush2.msra.mxu0 0.0
    %5343 = vmatprep.subr.mxu0 0.0
    %5344 = vmatpush2.msra.mxu0 0.0
    %5345 = vmatprep.mubr.f32.mxu0 0.0
    %5346 = vmatmul.mubr.f32.gmra.mxu0 %v5279
    %v5347 = vpop.f32.mrf.mxu0
    %v5348 = vadd.f32 0.0, %v5347
    %v5349 = vpop.f32.mrf.mxu0
    %v5350 = vadd.f32 0.0, %v5349
    %5351 = vdwg.mxu0
    %5352 = vmatprep.subr.mxu0 0.0
    %5353 = vmatpush1.msra.mxu0 0.0
    %5354 = vmatprep.subr.mxu0 0.0
    %5355 = vmatpush1.msra.mxu0 0.0
    %5356 = vmatprep.subr.mxu0 0.0
    %5357 = vmatpush1.msra.mxu0 0.0
    %5358 = vmatprep.subr.mxu0 0.0
    %5359 = vmatpush1.msra.mxu0 0.0
    %5360 = vmatprep.subr.mxu0 0.0
    %5361 = vmatpush1.msra.mxu0 0.0
    %5362 = vmatprep.subr.mxu0 0.0
    %5363 = vmatpush1.msra.mxu0 0.0
    %5364 = vmatprep.subr.mxu0 0.0
    %5365 = vmatpush1.msra.mxu0 0.0
    %5366 = vmatprep.subr.mxu0 0.0
    %5367 = vmatpush1.msra.mxu0 0.0
    %5368 = vmatprep.subr.mxu0 0.0
    %5369 = vmatpush1.msra.mxu0 0.0
    %5370 = vmatprep.subr.mxu0 0.0
    %5371 = vmatpush1.msra.mxu0 0.0
    %5372 = vmatprep.subr.mxu0 0.0
    %5373 = vmatpush1.msra.mxu0 0.0
    %5374 = vmatprep.subr.mxu0 0.0
    %5375 = vmatpush1.msra.mxu0 0.0
    %5376 = vmatprep.subr.mxu0 0.0
    %5377 = vmatpush1.msra.mxu0 0.0
    %5378 = vmatprep.subr.mxu0 0.0
    %5379 = vmatpush1.msra.mxu0 0.0
    %5380 = vmatprep.subr.mxu0 0.0
    %5381 = vmatpush1.msra.mxu0 %v5267
    %5382 = vmatprep.subr.mxu0 0.0
    %5383 = vmatpush1.msra.mxu0 %v5261
    %5384 = vmatprep.subr.mxu0 0.0
    %5385 = vmatpush2.msra.mxu0 0.0
    %5386 = vmatprep.subr.mxu0 0.0
    %5387 = vmatpush2.msra.mxu0 0.0
    %5388 = vmatprep.subr.mxu0 0.0
    %5389 = vmatpush2.msra.mxu0 0.0
    %5390 = vmatprep.subr.mxu0 0.0
    %5391 = vmatpush2.msra.mxu0 0.0
    %5392 = vmatprep.subr.mxu0 0.0
    %5393 = vmatpush2.msra.mxu0 0.0
    %5394 = vmatprep.subr.mxu0 0.0
    %5395 = vmatpush2.msra.mxu0 0.0
    %5396 = vmatprep.subr.mxu0 0.0
    %5397 = vmatpush2.msra.mxu0 0.0
    %5398 = vmatprep.subr.mxu0 0.0
    %5399 = vmatpush2.msra.mxu0 0.0
    %5400 = vmatprep.subr.mxu0 0.0
    %5401 = vmatpush2.msra.mxu0 0.0
    %5402 = vmatprep.subr.mxu0 0.0
    %5403 = vmatpush2.msra.mxu0 0.0
    %5404 = vmatprep.subr.mxu0 0.0
    %5405 = vmatpush2.msra.mxu0 0.0
    %5406 = vmatprep.subr.mxu0 0.0
    %5407 = vmatpush2.msra.mxu0 0.0
    %5408 = vmatprep.subr.mxu0 0.0
    %5409 = vmatpush2.msra.mxu0 0.0
    %5410 = vmatprep.subr.mxu0 0.0
    %5411 = vmatpush2.msra.mxu0 0.0
    %5412 = vmatprep.subr.mxu0 0.0
    %5413 = vmatpush2.msra.mxu0 0.0
    %5414 = vmatprep.subr.mxu0 0.0
    %5415 = vmatpush2.msra.mxu0 0.0
    %5416 = vmatprep.mubr.f32.mxu0 0.0
    %5417 = vmatmul.mubr.f32.gmra.mxu0 %v5279
    %v5418 = vpop.f32.mrf.mxu0
    %v5419 = vadd.f32 0.0, %v5418
    %v5420 = vpop.f32.mrf.mxu0
    %5421 = vdwg.mxu0
    %v5422 = vadd.f32 %v5180, %v5348
    %v5423 = vadd.f32 %v5182, %v5350
    %v5424 = vadd.f32 %v5251, %v5419
    %s5425 = scalar_lea.vmem %s20, 24
    %v5426 = vld [vmem:[%s5425] sm:$0x3f]
    %5427 = vrot.lane.b32.xlu0 %v4929, 110
    %v5428 = vpop.permute.xlu0 %5427
    %5429 = vrot.lane.b32.xlu0 %v4930, 110
    %v5430 = vpop.permute.xlu0 %5429
    %5431 = vrot.lane.b32.xlu0 %v4931, 110
    %v5432 = vpop.permute.xlu0 %5431
    %5433 = vrot.lane.b32.xlu0 %v4932, 110
    %v5434 = vpop.permute.xlu0 %5433
    %5435 = vrot.lane.b32.xlu0 %v4933, 110
    %v5436 = vpop.permute.xlu0 %5435
    %5437 = vrot.lane.b32.xlu0 %v4934, 110
    %v5438 = vpop.permute.xlu0 %5437
    %v5439 = vsel %vm3337, %v5428, %v5430
    %v5440 = vsel %vm3337, %v5430, %v5432
    %v5441 = vsel %vm3337, %v5434, %v5436
    %v5442 = vsel %vm3337, %v5436, %v5438
    %v5450 = vsel %vm541, %v5426, 0
    %5452 = vmatprep.subr.mxu0 0.0
    %5453 = vmatpush1.msra.mxu0 0.0
    %5454 = vmatprep.subr.mxu0 0.0
    %5455 = vmatpush1.msra.mxu0 0.0
    %5456 = vmatprep.subr.mxu0 0.0
    %5457 = vmatpush1.msra.mxu0 0.0
    %5458 = vmatprep.subr.mxu0 0.0
    %5459 = vmatpush1.msra.mxu0 0.0
    %5460 = vmatprep.subr.mxu0 0.0
    %5461 = vmatpush1.msra.mxu0 0.0
    %5462 = vmatprep.subr.mxu0 0.0
    %5463 = vmatpush1.msra.mxu0 0.0
    %5464 = vmatprep.subr.mxu0 0.0
    %5465 = vmatpush1.msra.mxu0 0.0
    %5466 = vmatprep.subr.mxu0 0.0
    %5467 = vmatpush1.msra.mxu0 0.0
    %5468 = vmatprep.subr.mxu0 0.0
    %5469 = vmatpush1.msra.mxu0 0.0
    %5470 = vmatprep.subr.mxu0 0.0
    %5471 = vmatpush1.msra.mxu0 0.0
    %5472 = vmatprep.subr.mxu0 0.0
    %5473 = vmatpush1.msra.mxu0 0.0
    %5474 = vmatprep.subr.mxu0 0.0
    %5475 = vmatpush1.msra.mxu0 0.0
    %5476 = vmatprep.subr.mxu0 0.0
    %5477 = vmatpush1.msra.mxu0 0.0
    %5478 = vmatprep.subr.mxu0 0.0
    %5479 = vmatpush1.msra.mxu0 0.0
    %5480 = vmatprep.subr.mxu0 %v5442
    %5481 = vmatpush1.msra.mxu0 %v5441
    %5482 = vmatprep.subr.mxu0 %v5440
    %5483 = vmatpush1.msra.mxu0 %v5439
    %5484 = vmatprep.subr.mxu0 0.0
    %5485 = vmatpush2.msra.mxu0 0.0
    %5486 = vmatprep.subr.mxu0 0.0
    %5487 = vmatpush2.msra.mxu0 0.0
    %5488 = vmatprep.subr.mxu0 0.0
    %5489 = vmatpush2.msra.mxu0 0.0
    %5490 = vmatprep.subr.mxu0 0.0
    %5491 = vmatpush2.msra.mxu0 0.0
    %5492 = vmatprep.subr.mxu0 0.0
    %5493 = vmatpush2.msra.mxu0 0.0
    %5494 = vmatprep.subr.mxu0 0.0
    %5495 = vmatpush2.msra.mxu0 0.0
    %5496 = vmatprep.subr.mxu0 0.0
    %5497 = vmatpush2.msra.mxu0 0.0
    %5498 = vmatprep.subr.mxu0 0.0
    %5499 = vmatpush2.msra.mxu0 0.0
    %5500 = vmatprep.subr.mxu0 0.0
    %5501 = vmatpush2.msra.mxu0 0.0
    %5502 = vmatprep.subr.mxu0 0.0
    %5503 = vmatpush2.msra.mxu0 0.0
    %5504 = vmatprep.subr.mxu0 0.0
    %5505 = vmatpush2.msra.mxu0 0.0
    %5506 = vmatprep.subr.mxu0 0.0
    %5507 = vmatpush2.msra.mxu0 0.0
    %5508 = vmatprep.subr.mxu0 0.0
    %5509 = vmatpush2.msra.mxu0 0.0
    %5510 = vmatprep.subr.mxu0 0.0
    %5511 = vmatpush2.msra.mxu0 0.0
    %5512 = vmatprep.subr.mxu0 0.0
    %5513 = vmatpush2.msra.mxu0 0.0
    %5514 = vmatprep.subr.mxu0 0.0
    %5515 = vmatpush2.msra.mxu0 0.0
    %5516 = vmatprep.mubr.f32.mxu0 0.0
    %5517 = vmatmul.mubr.f32.gmra.mxu0 %v5450
    %v5518 = vpop.f32.mrf.mxu0
    %v5519 = vadd.f32 0.0, %v5518
    %v5520 = vpop.f32.mrf.mxu0
    %v5521 = vadd.f32 0.0, %v5520
    %5522 = vdwg.mxu0
    %5523 = vmatprep.subr.mxu0 0.0
    %5524 = vmatpush1.msra.mxu0 0.0
    %5525 = vmatprep.subr.mxu0 0.0
    %5526 = vmatpush1.msra.mxu0 0.0
    %5527 = vmatprep.subr.mxu0 0.0
    %5528 = vmatpush1.msra.mxu0 0.0
    %5529 = vmatprep.subr.mxu0 0.0
    %5530 = vmatpush1.msra.mxu0 0.0
    %5531 = vmatprep.subr.mxu0 0.0
    %5532 = vmatpush1.msra.mxu0 0.0
    %5533 = vmatprep.subr.mxu0 0.0
    %5534 = vmatpush1.msra.mxu0 0.0
    %5535 = vmatprep.subr.mxu0 0.0
    %5536 = vmatpush1.msra.mxu0 0.0
    %5537 = vmatprep.subr.mxu0 0.0
    %5538 = vmatpush1.msra.mxu0 0.0
    %5539 = vmatprep.subr.mxu0 0.0
    %5540 = vmatpush1.msra.mxu0 0.0
    %5541 = vmatprep.subr.mxu0 0.0
    %5542 = vmatpush1.msra.mxu0 0.0
    %5543 = vmatprep.subr.mxu0 0.0
    %5544 = vmatpush1.msra.mxu0 0.0
    %5545 = vmatprep.subr.mxu0 0.0
    %5546 = vmatpush1.msra.mxu0 0.0
    %5547 = vmatprep.subr.mxu0 0.0
    %5548 = vmatpush1.msra.mxu0 0.0
    %5549 = vmatprep.subr.mxu0 0.0
    %5550 = vmatpush1.msra.mxu0 0.0
    %5551 = vmatprep.subr.mxu0 0.0
    %5552 = vmatpush1.msra.mxu0 %v5438
    %5553 = vmatprep.subr.mxu0 0.0
    %5554 = vmatpush1.msra.mxu0 %v5432
    %5555 = vmatprep.subr.mxu0 0.0
    %5556 = vmatpush2.msra.mxu0 0.0
    %5557 = vmatprep.subr.mxu0 0.0
    %5558 = vmatpush2.msra.mxu0 0.0
    %5559 = vmatprep.subr.mxu0 0.0
    %5560 = vmatpush2.msra.mxu0 0.0
    %5561 = vmatprep.subr.mxu0 0.0
    %5562 = vmatpush2.msra.mxu0 0.0
    %5563 = vmatprep.subr.mxu0 0.0
    %5564 = vmatpush2.msra.mxu0 0.0
    %5565 = vmatprep.subr.mxu0 0.0
    %5566 = vmatpush2.msra.mxu0 0.0
    %5567 = vmatprep.subr.mxu0 0.0
    %5568 = vmatpush2.msra.mxu0 0.0
    %5569 = vmatprep.subr.mxu0 0.0
    %5570 = vmatpush2.msra.mxu0 0.0
    %5571 = vmatprep.subr.mxu0 0.0
    %5572 = vmatpush2.msra.mxu0 0.0
    %5573 = vmatprep.subr.mxu0 0.0
    %5574 = vmatpush2.msra.mxu0 0.0
    %5575 = vmatprep.subr.mxu0 0.0
    %5576 = vmatpush2.msra.mxu0 0.0
    %5577 = vmatprep.subr.mxu0 0.0
    %5578 = vmatpush2.msra.mxu0 0.0
    %5579 = vmatprep.subr.mxu0 0.0
    %5580 = vmatpush2.msra.mxu0 0.0
    %5581 = vmatprep.subr.mxu0 0.0
    %5582 = vmatpush2.msra.mxu0 0.0
    %5583 = vmatprep.subr.mxu0 0.0
    %5584 = vmatpush2.msra.mxu0 0.0
    %5585 = vmatprep.subr.mxu0 0.0
    %5586 = vmatpush2.msra.mxu0 0.0
    %5587 = vmatprep.mubr.f32.mxu0 0.0
    %5588 = vmatmul.mubr.f32.gmra.mxu0 %v5450
    %v5589 = vpop.f32.mrf.mxu0
    %v5590 = vadd.f32 0.0, %v5589
    %v5591 = vpop.f32.mrf.mxu0
    %5592 = vdwg.mxu0
    %v5593 = vadd.f32 %v5422, %v5519
    %v5594 = vadd.f32 %v5423, %v5521
    %v5595 = vadd.f32 %v5424, %v5590
    %s5596 = scalar_lea.vmem %s20, 32
    %v5597 = vld [vmem:[%s5596] sm:$0x3f]
    %5598 = vrot.lane.b32.xlu0 %v4929, 109
    %v5599 = vpop.permute.xlu0 %5598
    %5600 = vrot.lane.b32.xlu0 %v4930, 109
    %v5601 = vpop.permute.xlu0 %5600
    %5602 = vrot.lane.b32.xlu0 %v4931, 109
    %v5603 = vpop.permute.xlu0 %5602
    %5604 = vrot.lane.b32.xlu0 %v4932, 109
    %v5605 = vpop.permute.xlu0 %5604
    %5606 = vrot.lane.b32.xlu0 %v4933, 109
    %v5607 = vpop.permute.xlu0 %5606
    %5608 = vrot.lane.b32.xlu0 %v4934, 109
    %v5609 = vpop.permute.xlu0 %5608
    %v5610 = vsel %vm3549, %v5599, %v5601
    %v5611 = vsel %vm3549, %v5601, %v5603
    %v5612 = vsel %vm3549, %v5605, %v5607
    %v5613 = vsel %vm3549, %v5607, %v5609
    %v5621 = vsel %vm541, %v5597, 0
    %5623 = vmatprep.subr.mxu0 0.0
    %5624 = vmatpush1.msra.mxu0 0.0
    %5625 = vmatprep.subr.mxu0 0.0
    %5626 = vmatpush1.msra.mxu0 0.0
    %5627 = vmatprep.subr.mxu0 0.0
    %5628 = vmatpush1.msra.mxu0 0.0
    %5629 = vmatprep.subr.mxu0 0.0
    %5630 = vmatpush1.msra.mxu0 0.0
    %5631 = vmatprep.subr.mxu0 0.0
    %5632 = vmatpush1.msra.mxu0 0.0
    %5633 = vmatprep.subr.mxu0 0.0
    %5634 = vmatpush1.msra.mxu0 0.0
    %5635 = vmatprep.subr.mxu0 0.0
    %5636 = vmatpush1.msra.mxu0 0.0
    %5637 = vmatprep.subr.mxu0 0.0
    %5638 = vmatpush1.msra.mxu0 0.0
    %5639 = vmatprep.subr.mxu0 0.0
    %5640 = vmatpush1.msra.mxu0 0.0
    %5641 = vmatprep.subr.mxu0 0.0
    %5642 = vmatpush1.msra.mxu0 0.0
    %5643 = vmatprep.subr.mxu0 0.0
    %5644 = vmatpush1.msra.mxu0 0.0
    %5645 = vmatprep.subr.mxu0 0.0
    %5646 = vmatpush1.msra.mxu0 0.0
    %5647 = vmatprep.subr.mxu0 0.0
    %5648 = vmatpush1.msra.mxu0 0.0
    %5649 = vmatprep.subr.mxu0 0.0
    %5650 = vmatpush1.msra.mxu0 0.0
    %5651 = vmatprep.subr.mxu0 %v5613
    %5652 = vmatpush1.msra.mxu0 %v5612
    %5653 = vmatprep.subr.mxu0 %v5611
    %5654 = vmatpush1.msra.mxu0 %v5610
    %5655 = vmatprep.subr.mxu0 0.0
    %5656 = vmatpush2.msra.mxu0 0.0
    %5657 = vmatprep.subr.mxu0 0.0
    %5658 = vmatpush2.msra.mxu0 0.0
    %5659 = vmatprep.subr.mxu0 0.0
    %5660 = vmatpush2.msra.mxu0 0.0
    %5661 = vmatprep.subr.mxu0 0.0
    %5662 = vmatpush2.msra.mxu0 0.0
    %5663 = vmatprep.subr.mxu0 0.0
    %5664 = vmatpush2.msra.mxu0 0.0
    %5665 = vmatprep.subr.mxu0 0.0
    %5666 = vmatpush2.msra.mxu0 0.0
    %5667 = vmatprep.subr.mxu0 0.0
    %5668 = vmatpush2.msra.mxu0 0.0
    %5669 = vmatprep.subr.mxu0 0.0
    %5670 = vmatpush2.msra.mxu0 0.0
    %5671 = vmatprep.subr.mxu0 0.0
    %5672 = vmatpush2.msra.mxu0 0.0
    %5673 = vmatprep.subr.mxu0 0.0
    %5674 = vmatpush2.msra.mxu0 0.0
    %5675 = vmatprep.subr.mxu0 0.0
    %5676 = vmatpush2.msra.mxu0 0.0
    %5677 = vmatprep.subr.mxu0 0.0
    %5678 = vmatpush2.msra.mxu0 0.0
    %5679 = vmatprep.subr.mxu0 0.0
    %5680 = vmatpush2.msra.mxu0 0.0
    %5681 = vmatprep.subr.mxu0 0.0
    %5682 = vmatpush2.msra.mxu0 0.0
    %5683 = vmatprep.subr.mxu0 0.0
    %5684 = vmatpush2.msra.mxu0 0.0
    %5685 = vmatprep.subr.mxu0 0.0
    %5686 = vmatpush2.msra.mxu0 0.0
    %5687 = vmatprep.mubr.f32.mxu0 0.0
    %5688 = vmatmul.mubr.f32.gmra.mxu0 %v5621
    %v5689 = vpop.f32.mrf.mxu0
    %v5690 = vadd.f32 0.0, %v5689
    %v5691 = vpop.f32.mrf.mxu0
    %v5692 = vadd.f32 0.0, %v5691
    %5693 = vdwg.mxu0
    %5694 = vmatprep.subr.mxu0 0.0
    %5695 = vmatpush1.msra.mxu0 0.0
    %5696 = vmatprep.subr.mxu0 0.0
    %5697 = vmatpush1.msra.mxu0 0.0
    %5698 = vmatprep.subr.mxu0 0.0
    %5699 = vmatpush1.msra.mxu0 0.0
    %5700 = vmatprep.subr.mxu0 0.0
    %5701 = vmatpush1.msra.mxu0 0.0
    %5702 = vmatprep.subr.mxu0 0.0
    %5703 = vmatpush1.msra.mxu0 0.0
    %5704 = vmatprep.subr.mxu0 0.0
    %5705 = vmatpush1.msra.mxu0 0.0
    %5706 = vmatprep.subr.mxu0 0.0
    %5707 = vmatpush1.msra.mxu0 0.0
    %5708 = vmatprep.subr.mxu0 0.0
    %5709 = vmatpush1.msra.mxu0 0.0
    %5710 = vmatprep.subr.mxu0 0.0
    %5711 = vmatpush1.msra.mxu0 0.0
    %5712 = vmatprep.subr.mxu0 0.0
    %5713 = vmatpush1.msra.mxu0 0.0
    %5714 = vmatprep.subr.mxu0 0.0
    %5715 = vmatpush1.msra.mxu0 0.0
    %5716 = vmatprep.subr.mxu0 0.0
    %5717 = vmatpush1.msra.mxu0 0.0
    %5718 = vmatprep.subr.mxu0 0.0
    %5719 = vmatpush1.msra.mxu0 0.0
    %5720 = vmatprep.subr.mxu0 0.0
    %5721 = vmatpush1.msra.mxu0 0.0
    %5722 = vmatprep.subr.mxu0 0.0
    %5723 = vmatpush1.msra.mxu0 %v5609
    %5724 = vmatprep.subr.mxu0 0.0
    %5725 = vmatpush1.msra.mxu0 %v5603
    %5726 = vmatprep.subr.mxu0 0.0
    %5727 = vmatpush2.msra.mxu0 0.0
    %5728 = vmatprep.subr.mxu0 0.0
    %5729 = vmatpush2.msra.mxu0 0.0
    %5730 = vmatprep.subr.mxu0 0.0
    %5731 = vmatpush2.msra.mxu0 0.0
    %5732 = vmatprep.subr.mxu0 0.0
    %5733 = vmatpush2.msra.mxu0 0.0
    %5734 = vmatprep.subr.mxu0 0.0
    %5735 = vmatpush2.msra.mxu0 0.0
    %5736 = vmatprep.subr.mxu0 0.0
    %5737 = vmatpush2.msra.mxu0 0.0
    %5738 = vmatprep.subr.mxu0 0.0
    %5739 = vmatpush2.msra.mxu0 0.0
    %5740 = vmatprep.subr.mxu0 0.0
    %5741 = vmatpush2.msra.mxu0 0.0
    %5742 = vmatprep.subr.mxu0 0.0
    %5743 = vmatpush2.msra.mxu0 0.0
    %5744 = vmatprep.subr.mxu0 0.0
    %5745 = vmatpush2.msra.mxu0 0.0
    %5746 = vmatprep.subr.mxu0 0.0
    %5747 = vmatpush2.msra.mxu0 0.0
    %5748 = vmatprep.subr.mxu0 0.0
    %5749 = vmatpush2.msra.mxu0 0.0
    %5750 = vmatprep.subr.mxu0 0.0
    %5751 = vmatpush2.msra.mxu0 0.0
    %5752 = vmatprep.subr.mxu0 0.0
    %5753 = vmatpush2.msra.mxu0 0.0
    %5754 = vmatprep.subr.mxu0 0.0
    %5755 = vmatpush2.msra.mxu0 0.0
    %5756 = vmatprep.subr.mxu0 0.0
    %5757 = vmatpush2.msra.mxu0 0.0
    %5758 = vmatprep.mubr.f32.mxu0 0.0
    %5759 = vmatmul.mubr.f32.gmra.mxu0 %v5621
    %v5760 = vpop.f32.mrf.mxu0
    %v5761 = vadd.f32 0.0, %v5760
    %v5762 = vpop.f32.mrf.mxu0
    %5763 = vdwg.mxu0
    %v5764 = vadd.f32 %v5593, %v5690
    %v5765 = vadd.f32 %v5594, %v5692
    %v5766 = vadd.f32 %v5595, %v5761
    %s5767 = scalar_lea.vmem %s20, 40
    %v5768 = vld [vmem:[%s5767] sm:$0x3f]
    %5769 = vrot.lane.b32.xlu0 %v4929, 108
    %v5770 = vpop.permute.xlu0 %5769
    %5771 = vrot.lane.b32.xlu0 %v4930, 108
    %v5772 = vpop.permute.xlu0 %5771
    %5773 = vrot.lane.b32.xlu0 %v4931, 108
    %v5774 = vpop.permute.xlu0 %5773
    %5775 = vrot.lane.b32.xlu0 %v4932, 108
    %v5776 = vpop.permute.xlu0 %5775
    %5777 = vrot.lane.b32.xlu0 %v4933, 108
    %v5778 = vpop.permute.xlu0 %5777
    %5779 = vrot.lane.b32.xlu0 %v4934, 108
    %v5780 = vpop.permute.xlu0 %5779
    %v5781 = vsel %vm3761, %v5770, %v5772
    %v5782 = vsel %vm3761, %v5772, %v5774
    %v5783 = vsel %vm3761, %v5776, %v5778
    %v5784 = vsel %vm3761, %v5778, %v5780
    %v5792 = vsel %vm541, %v5768, 0
    %5794 = vmatprep.subr.mxu0 0.0
    %5795 = vmatpush1.msra.mxu0 0.0
    %5796 = vmatprep.subr.mxu0 0.0
    %5797 = vmatpush1.msra.mxu0 0.0
    %5798 = vmatprep.subr.mxu0 0.0
    %5799 = vmatpush1.msra.mxu0 0.0
    %5800 = vmatprep.subr.mxu0 0.0
    %5801 = vmatpush1.msra.mxu0 0.0
    %5802 = vmatprep.subr.mxu0 0.0
    %5803 = vmatpush1.msra.mxu0 0.0
    %5804 = vmatprep.subr.mxu0 0.0
    %5805 = vmatpush1.msra.mxu0 0.0
    %5806 = vmatprep.subr.mxu0 0.0
    %5807 = vmatpush1.msra.mxu0 0.0
    %5808 = vmatprep.subr.mxu0 0.0
    %5809 = vmatpush1.msra.mxu0 0.0
    %5810 = vmatprep.subr.mxu0 0.0
    %5811 = vmatpush1.msra.mxu0 0.0
    %5812 = vmatprep.subr.mxu0 0.0
    %5813 = vmatpush1.msra.mxu0 0.0
    %5814 = vmatprep.subr.mxu0 0.0
    %5815 = vmatpush1.msra.mxu0 0.0
    %5816 = vmatprep.subr.mxu0 0.0
    %5817 = vmatpush1.msra.mxu0 0.0
    %5818 = vmatprep.subr.mxu0 0.0
    %5819 = vmatpush1.msra.mxu0 0.0
    %5820 = vmatprep.subr.mxu0 0.0
    %5821 = vmatpush1.msra.mxu0 0.0
    %5822 = vmatprep.subr.mxu0 %v5784
    %5823 = vmatpush1.msra.mxu0 %v5783
    %5824 = vmatprep.subr.mxu0 %v5782
    %5825 = vmatpush1.msra.mxu0 %v5781
    %5826 = vmatprep.subr.mxu0 0.0
    %5827 = vmatpush2.msra.mxu0 0.0
    %5828 = vmatprep.subr.mxu0 0.0
    %5829 = vmatpush2.msra.mxu0 0.0
    %5830 = vmatprep.subr.mxu0 0.0
    %5831 = vmatpush2.msra.mxu0 0.0
    %5832 = vmatprep.subr.mxu0 0.0
    %5833 = vmatpush2.msra.mxu0 0.0
    %5834 = vmatprep.subr.mxu0 0.0
    %5835 = vmatpush2.msra.mxu0 0.0
    %5836 = vmatprep.subr.mxu0 0.0
    %5837 = vmatpush2.msra.mxu0 0.0
    %5838 = vmatprep.subr.mxu0 0.0
    %5839 = vmatpush2.msra.mxu0 0.0
    %5840 = vmatprep.subr.mxu0 0.0
    %5841 = vmatpush2.msra.mxu0 0.0
    %5842 = vmatprep.subr.mxu0 0.0
    %5843 = vmatpush2.msra.mxu0 0.0
    %5844 = vmatprep.subr.mxu0 0.0
    %5845 = vmatpush2.msra.mxu0 0.0
    %5846 = vmatprep.subr.mxu0 0.0
    %5847 = vmatpush2.msra.mxu0 0.0
    %5848 = vmatprep.subr.mxu0 0.0
    %5849 = vmatpush2.msra.mxu0 0.0
    %5850 = vmatprep.subr.mxu0 0.0
    %5851 = vmatpush2.msra.mxu0 0.0
    %5852 = vmatprep.subr.mxu0 0.0
    %5853 = vmatpush2.msra.mxu0 0.0
    %5854 = vmatprep.subr.mxu0 0.0
    %5855 = vmatpush2.msra.mxu0 0.0
    %5856 = vmatprep.subr.mxu0 0.0
    %5857 = vmatpush2.msra.mxu0 0.0
    %5858 = vmatprep.mubr.f32.mxu0 0.0
    %5859 = vmatmul.mubr.f32.gmra.mxu0 %v5792
    %v5860 = vpop.f32.mrf.mxu0
    %v5861 = vadd.f32 0.0, %v5860
    %v5862 = vpop.f32.mrf.mxu0
    %v5863 = vadd.f32 0.0, %v5862
    %5864 = vdwg.mxu0
    %5865 = vmatprep.subr.mxu0 0.0
    %5866 = vmatpush1.msra.mxu0 0.0
    %5867 = vmatprep.subr.mxu0 0.0
    %5868 = vmatpush1.msra.mxu0 0.0
    %5869 = vmatprep.subr.mxu0 0.0
    %5870 = vmatpush1.msra.mxu0 0.0
    %5871 = vmatprep.subr.mxu0 0.0
    %5872 = vmatpush1.msra.mxu0 0.0
    %5873 = vmatprep.subr.mxu0 0.0
    %5874 = vmatpush1.msra.mxu0 0.0
    %5875 = vmatprep.subr.mxu0 0.0
    %5876 = vmatpush1.msra.mxu0 0.0
    %5877 = vmatprep.subr.mxu0 0.0
    %5878 = vmatpush1.msra.mxu0 0.0
    %5879 = vmatprep.subr.mxu0 0.0
    %5880 = vmatpush1.msra.mxu0 0.0
    %5881 = vmatprep.subr.mxu0 0.0
    %5882 = vmatpush1.msra.mxu0 0.0
    %5883 = vmatprep.subr.mxu0 0.0
    %5884 = vmatpush1.msra.mxu0 0.0
    %5885 = vmatprep.subr.mxu0 0.0
    %5886 = vmatpush1.msra.mxu0 0.0
    %5887 = vmatprep.subr.mxu0 0.0
    %5888 = vmatpush1.msra.mxu0 0.0
    %5889 = vmatprep.subr.mxu0 0.0
    %5890 = vmatpush1.msra.mxu0 0.0
    %5891 = vmatprep.subr.mxu0 0.0
    %5892 = vmatpush1.msra.mxu0 0.0
    %5893 = vmatprep.subr.mxu0 0.0
    %5894 = vmatpush1.msra.mxu0 %v5780
    %5895 = vmatprep.subr.mxu0 0.0
    %5896 = vmatpush1.msra.mxu0 %v5774
    %5897 = vmatprep.subr.mxu0 0.0
    %5898 = vmatpush2.msra.mxu0 0.0
    %5899 = vmatprep.subr.mxu0 0.0
    %5900 = vmatpush2.msra.mxu0 0.0
    %5901 = vmatprep.subr.mxu0 0.0
    %5902 = vmatpush2.msra.mxu0 0.0
    %5903 = vmatprep.subr.mxu0 0.0
    %5904 = vmatpush2.msra.mxu0 0.0
    %5905 = vmatprep.subr.mxu0 0.0
    %5906 = vmatpush2.msra.mxu0 0.0
    %5907 = vmatprep.subr.mxu0 0.0
    %5908 = vmatpush2.msra.mxu0 0.0
    %5909 = vmatprep.subr.mxu0 0.0
    %5910 = vmatpush2.msra.mxu0 0.0
    %5911 = vmatprep.subr.mxu0 0.0
    %5912 = vmatpush2.msra.mxu0 0.0
    %5913 = vmatprep.subr.mxu0 0.0
    %5914 = vmatpush2.msra.mxu0 0.0
    %5915 = vmatprep.subr.mxu0 0.0
    %5916 = vmatpush2.msra.mxu0 0.0
    %5917 = vmatprep.subr.mxu0 0.0
    %5918 = vmatpush2.msra.mxu0 0.0
    %5919 = vmatprep.subr.mxu0 0.0
    %5920 = vmatpush2.msra.mxu0 0.0
    %5921 = vmatprep.subr.mxu0 0.0
    %5922 = vmatpush2.msra.mxu0 0.0
    %5923 = vmatprep.subr.mxu0 0.0
    %5924 = vmatpush2.msra.mxu0 0.0
    %5925 = vmatprep.subr.mxu0 0.0
    %5926 = vmatpush2.msra.mxu0 0.0
    %5927 = vmatprep.subr.mxu0 0.0
    %5928 = vmatpush2.msra.mxu0 0.0
    %5929 = vmatprep.mubr.f32.mxu0 0.0
    %5930 = vmatmul.mubr.f32.gmra.mxu0 %v5792
    %v5931 = vpop.f32.mrf.mxu0
    %v5932 = vadd.f32 0.0, %v5931
    %v5933 = vpop.f32.mrf.mxu0
    %5934 = vdwg.mxu0
    %v5935 = vadd.f32 %v5764, %v5861
    %v5936 = vadd.f32 %v5765, %v5863
    %v5937 = vadd.f32 %v5766, %v5932
    %s5938 = scalar_lea.vmem %s20, 48
    %v5939 = vld [vmem:[%s5938] sm:$0x3f]
    %5940 = vrot.lane.b32.xlu0 %v4929, 92
    %v5941 = vpop.permute.xlu0 %5940
    %5942 = vrot.lane.b32.xlu0 %v4930, 92
    %v5943 = vpop.permute.xlu0 %5942
    %5944 = vrot.lane.b32.xlu0 %v4931, 92
    %v5945 = vpop.permute.xlu0 %5944
    %5946 = vrot.lane.b32.xlu0 %v4932, 92
    %v5947 = vpop.permute.xlu0 %5946
    %5948 = vrot.lane.b32.xlu0 %v4933, 92
    %v5949 = vpop.permute.xlu0 %5948
    %5950 = vrot.lane.b32.xlu0 %v4934, 92
    %v5951 = vpop.permute.xlu0 %5950
    %v5952 = vsel %vm3973, %v5941, %v5943
    %v5953 = vsel %vm3973, %v5943, %v5945
    %v5954 = vsel %vm3973, %v5947, %v5949
    %v5955 = vsel %vm3973, %v5949, %v5951
    %v5963 = vsel %vm541, %v5939, 0
    %5965 = vmatprep.subr.mxu0 0.0
    %5966 = vmatpush1.msra.mxu0 0.0
    %5967 = vmatprep.subr.mxu0 0.0
    %5968 = vmatpush1.msra.mxu0 0.0
    %5969 = vmatprep.subr.mxu0 0.0
    %5970 = vmatpush1.msra.mxu0 0.0
    %5971 = vmatprep.subr.mxu0 0.0
    %5972 = vmatpush1.msra.mxu0 0.0
    %5973 = vmatprep.subr.mxu0 0.0
    %5974 = vmatpush1.msra.mxu0 0.0
    %5975 = vmatprep.subr.mxu0 0.0
    %5976 = vmatpush1.msra.mxu0 0.0
    %5977 = vmatprep.subr.mxu0 0.0
    %5978 = vmatpush1.msra.mxu0 0.0
    %5979 = vmatprep.subr.mxu0 0.0
    %5980 = vmatpush1.msra.mxu0 0.0
    %5981 = vmatprep.subr.mxu0 0.0
    %5982 = vmatpush1.msra.mxu0 0.0
    %5983 = vmatprep.subr.mxu0 0.0
    %5984 = vmatpush1.msra.mxu0 0.0
    %5985 = vmatprep.subr.mxu0 0.0
    %5986 = vmatpush1.msra.mxu0 0.0
    %5987 = vmatprep.subr.mxu0 0.0
    %5988 = vmatpush1.msra.mxu0 0.0
    %5989 = vmatprep.subr.mxu0 0.0
    %5990 = vmatpush1.msra.mxu0 0.0
    %5991 = vmatprep.subr.mxu0 0.0
    %5992 = vmatpush1.msra.mxu0 0.0
    %5993 = vmatprep.subr.mxu0 %v5955
    %5994 = vmatpush1.msra.mxu0 %v5954
    %5995 = vmatprep.subr.mxu0 %v5953
    %5996 = vmatpush1.msra.mxu0 %v5952
    %5997 = vmatprep.subr.mxu0 0.0
    %5998 = vmatpush2.msra.mxu0 0.0
    %5999 = vmatprep.subr.mxu0 0.0
    %6000 = vmatpush2.msra.mxu0 0.0
    %6001 = vmatprep.subr.mxu0 0.0
    %6002 = vmatpush2.msra.mxu0 0.0
    %6003 = vmatprep.subr.mxu0 0.0
    %6004 = vmatpush2.msra.mxu0 0.0
    %6005 = vmatprep.subr.mxu0 0.0
    %6006 = vmatpush2.msra.mxu0 0.0
    %6007 = vmatprep.subr.mxu0 0.0
    %6008 = vmatpush2.msra.mxu0 0.0
    %6009 = vmatprep.subr.mxu0 0.0
    %6010 = vmatpush2.msra.mxu0 0.0
    %6011 = vmatprep.subr.mxu0 0.0
    %6012 = vmatpush2.msra.mxu0 0.0
    %6013 = vmatprep.subr.mxu0 0.0
    %6014 = vmatpush2.msra.mxu0 0.0
    %6015 = vmatprep.subr.mxu0 0.0
    %6016 = vmatpush2.msra.mxu0 0.0
    %6017 = vmatprep.subr.mxu0 0.0
    %6018 = vmatpush2.msra.mxu0 0.0
    %6019 = vmatprep.subr.mxu0 0.0
    %6020 = vmatpush2.msra.mxu0 0.0
    %6021 = vmatprep.subr.mxu0 0.0
    %6022 = vmatpush2.msra.mxu0 0.0
    %6023 = vmatprep.subr.mxu0 0.0
    %6024 = vmatpush2.msra.mxu0 0.0
    %6025 = vmatprep.subr.mxu0 0.0
    %6026 = vmatpush2.msra.mxu0 0.0
    %6027 = vmatprep.subr.mxu0 0.0
    %6028 = vmatpush2.msra.mxu0 0.0
    %6029 = vmatprep.mubr.f32.mxu0 0.0
    %6030 = vmatmul.mubr.f32.gmra.mxu0 %v5963
    %v6031 = vpop.f32.mrf.mxu0
    %v6032 = vadd.f32 0.0, %v6031
    %v6033 = vpop.f32.mrf.mxu0
    %v6034 = vadd.f32 0.0, %v6033
    %6035 = vdwg.mxu0
    %6036 = vmatprep.subr.mxu0 0.0
    %6037 = vmatpush1.msra.mxu0 0.0
    %6038 = vmatprep.subr.mxu0 0.0
    %6039 = vmatpush1.msra.mxu0 0.0
    %6040 = vmatprep.subr.mxu0 0.0
    %6041 = vmatpush1.msra.mxu0 0.0
    %6042 = vmatprep.subr.mxu0 0.0
    %6043 = vmatpush1.msra.mxu0 0.0
    %6044 = vmatprep.subr.mxu0 0.0
    %6045 = vmatpush1.msra.mxu0 0.0
    %6046 = vmatprep.subr.mxu0 0.0
    %6047 = vmatpush1.msra.mxu0 0.0
    %6048 = vmatprep.subr.mxu0 0.0
    %6049 = vmatpush1.msra.mxu0 0.0
    %6050 = vmatprep.subr.mxu0 0.0
    %6051 = vmatpush1.msra.mxu0 0.0
    %6052 = vmatprep.subr.mxu0 0.0
    %6053 = vmatpush1.msra.mxu0 0.0
    %6054 = vmatprep.subr.mxu0 0.0
    %6055 = vmatpush1.msra.mxu0 0.0
    %6056 = vmatprep.subr.mxu0 0.0
    %6057 = vmatpush1.msra.mxu0 0.0
    %6058 = vmatprep.subr.mxu0 0.0
    %6059 = vmatpush1.msra.mxu0 0.0
    %6060 = vmatprep.subr.mxu0 0.0
    %6061 = vmatpush1.msra.mxu0 0.0
    %6062 = vmatprep.subr.mxu0 0.0
    %6063 = vmatpush1.msra.mxu0 0.0
    %6064 = vmatprep.subr.mxu0 0.0
    %6065 = vmatpush1.msra.mxu0 %v5951
    %6066 = vmatprep.subr.mxu0 0.0
    %6067 = vmatpush1.msra.mxu0 %v5945
    %6068 = vmatprep.subr.mxu0 0.0
    %6069 = vmatpush2.msra.mxu0 0.0
    %6070 = vmatprep.subr.mxu0 0.0
    %6071 = vmatpush2.msra.mxu0 0.0
    %6072 = vmatprep.subr.mxu0 0.0
    %6073 = vmatpush2.msra.mxu0 0.0
    %6074 = vmatprep.subr.mxu0 0.0
    %6075 = vmatpush2.msra.mxu0 0.0
    %6076 = vmatprep.subr.mxu0 0.0
    %6077 = vmatpush2.msra.mxu0 0.0
    %6078 = vmatprep.subr.mxu0 0.0
    %6079 = vmatpush2.msra.mxu0 0.0
    %6080 = vmatprep.subr.mxu0 0.0
    %6081 = vmatpush2.msra.mxu0 0.0
    %6082 = vmatprep.subr.mxu0 0.0
    %6083 = vmatpush2.msra.mxu0 0.0
    %6084 = vmatprep.subr.mxu0 0.0
    %6085 = vmatpush2.msra.mxu0 0.0
    %6086 = vmatprep.subr.mxu0 0.0
    %6087 = vmatpush2.msra.mxu0 0.0
    %6088 = vmatprep.subr.mxu0 0.0
    %6089 = vmatpush2.msra.mxu0 0.0
    %6090 = vmatprep.subr.mxu0 0.0
    %6091 = vmatpush2.msra.mxu0 0.0
    %6092 = vmatprep.subr.mxu0 0.0
    %6093 = vmatpush2.msra.mxu0 0.0
    %6094 = vmatprep.subr.mxu0 0.0
    %6095 = vmatpush2.msra.mxu0 0.0
    %6096 = vmatprep.subr.mxu0 0.0
    %6097 = vmatpush2.msra.mxu0 0.0
    %6098 = vmatprep.subr.mxu0 0.0
    %6099 = vmatpush2.msra.mxu0 0.0
    %6100 = vmatprep.mubr.f32.mxu0 0.0
    %6101 = vmatmul.mubr.f32.gmra.mxu0 %v5963
    %v6102 = vpop.f32.mrf.mxu0
    %v6103 = vadd.f32 0.0, %v6102
    %v6104 = vpop.f32.mrf.mxu0
    %6105 = vdwg.mxu0
    %v6106 = vadd.f32 %v5935, %v6032
    %v6107 = vadd.f32 %v5936, %v6034
    %v6108 = vadd.f32 %v5937, %v6103
    %s6109 = scalar_lea.vmem %s20, 56
    %v6110 = vld [vmem:[%s6109] sm:$0x3f]
    %6111 = vrot.lane.b32.xlu0 %v4929, 91
    %v6112 = vpop.permute.xlu0 %6111
    %6113 = vrot.lane.b32.xlu0 %v4930, 91
    %v6114 = vpop.permute.xlu0 %6113
    %6115 = vrot.lane.b32.xlu0 %v4931, 91
    %v6116 = vpop.permute.xlu0 %6115
    %6117 = vrot.lane.b32.xlu0 %v4932, 91
    %v6118 = vpop.permute.xlu0 %6117
    %6119 = vrot.lane.b32.xlu0 %v4933, 91
    %v6120 = vpop.permute.xlu0 %6119
    %6121 = vrot.lane.b32.xlu0 %v4934, 91
    %v6122 = vpop.permute.xlu0 %6121
    %v6123 = vsel %vm4185, %v6112, %v6114
    %v6124 = vsel %vm4185, %v6114, %v6116
    %v6125 = vsel %vm4185, %v6118, %v6120
    %v6126 = vsel %vm4185, %v6120, %v6122
    %v6134 = vsel %vm541, %v6110, 0
    %6136 = vmatprep.subr.mxu0 0.0
    %6137 = vmatpush1.msra.mxu0 0.0
    %6138 = vmatprep.subr.mxu0 0.0
    %6139 = vmatpush1.msra.mxu0 0.0
    %6140 = vmatprep.subr.mxu0 0.0
    %6141 = vmatpush1.msra.mxu0 0.0
    %6142 = vmatprep.subr.mxu0 0.0
    %6143 = vmatpush1.msra.mxu0 0.0
    %6144 = vmatprep.subr.mxu0 0.0
    %6145 = vmatpush1.msra.mxu0 0.0
    %6146 = vmatprep.subr.mxu0 0.0
    %6147 = vmatpush1.msra.mxu0 0.0
    %6148 = vmatprep.subr.mxu0 0.0
    %6149 = vmatpush1.msra.mxu0 0.0
    %6150 = vmatprep.subr.mxu0 0.0
    %6151 = vmatpush1.msra.mxu0 0.0
    %6152 = vmatprep.subr.mxu0 0.0
    %6153 = vmatpush1.msra.mxu0 0.0
    %6154 = vmatprep.subr.mxu0 0.0
    %6155 = vmatpush1.msra.mxu0 0.0
    %6156 = vmatprep.subr.mxu0 0.0
    %6157 = vmatpush1.msra.mxu0 0.0
    %6158 = vmatprep.subr.mxu0 0.0
    %6159 = vmatpush1.msra.mxu0 0.0
    %6160 = vmatprep.subr.mxu0 0.0
    %6161 = vmatpush1.msra.mxu0 0.0
    %6162 = vmatprep.subr.mxu0 0.0
    %6163 = vmatpush1.msra.mxu0 0.0
    %6164 = vmatprep.subr.mxu0 %v6126
    %6165 = vmatpush1.msra.mxu0 %v6125
    %6166 = vmatprep.subr.mxu0 %v6124
    %6167 = vmatpush1.msra.mxu0 %v6123
    %6168 = vmatprep.subr.mxu0 0.0
    %6169 = vmatpush2.msra.mxu0 0.0
    %6170 = vmatprep.subr.mxu0 0.0
    %6171 = vmatpush2.msra.mxu0 0.0
    %6172 = vmatprep.subr.mxu0 0.0
    %6173 = vmatpush2.msra.mxu0 0.0
    %6174 = vmatprep.subr.mxu0 0.0
    %6175 = vmatpush2.msra.mxu0 0.0
    %6176 = vmatprep.subr.mxu0 0.0
    %6177 = vmatpush2.msra.mxu0 0.0
    %6178 = vmatprep.subr.mxu0 0.0
    %6179 = vmatpush2.msra.mxu0 0.0
    %6180 = vmatprep.subr.mxu0 0.0
    %6181 = vmatpush2.msra.mxu0 0.0
    %6182 = vmatprep.subr.mxu0 0.0
    %6183 = vmatpush2.msra.mxu0 0.0
    %6184 = vmatprep.subr.mxu0 0.0
    %6185 = vmatpush2.msra.mxu0 0.0
    %6186 = vmatprep.subr.mxu0 0.0
    %6187 = vmatpush2.msra.mxu0 0.0
    %6188 = vmatprep.subr.mxu0 0.0
    %6189 = vmatpush2.msra.mxu0 0.0
    %6190 = vmatprep.subr.mxu0 0.0
    %6191 = vmatpush2.msra.mxu0 0.0
    %6192 = vmatprep.subr.mxu0 0.0
    %6193 = vmatpush2.msra.mxu0 0.0
    %6194 = vmatprep.subr.mxu0 0.0
    %6195 = vmatpush2.msra.mxu0 0.0
    %6196 = vmatprep.subr.mxu0 0.0
    %6197 = vmatpush2.msra.mxu0 0.0
    %6198 = vmatprep.subr.mxu0 0.0
    %6199 = vmatpush2.msra.mxu0 0.0
    %6200 = vmatprep.mubr.f32.mxu0 0.0
    %6201 = vmatmul.mubr.f32.gmra.mxu0 %v6134
    %v6202 = vpop.f32.mrf.mxu0
    %v6203 = vadd.f32 0.0, %v6202
    %v6204 = vpop.f32.mrf.mxu0
    %v6205 = vadd.f32 0.0, %v6204
    %6206 = vdwg.mxu0
    %6207 = vmatprep.subr.mxu0 0.0
    %6208 = vmatpush1.msra.mxu0 0.0
    %6209 = vmatprep.subr.mxu0 0.0
    %6210 = vmatpush1.msra.mxu0 0.0
    %6211 = vmatprep.subr.mxu0 0.0
    %6212 = vmatpush1.msra.mxu0 0.0
    %6213 = vmatprep.subr.mxu0 0.0
    %6214 = vmatpush1.msra.mxu0 0.0
    %6215 = vmatprep.subr.mxu0 0.0
    %6216 = vmatpush1.msra.mxu0 0.0
    %6217 = vmatprep.subr.mxu0 0.0
    %6218 = vmatpush1.msra.mxu0 0.0
    %6219 = vmatprep.subr.mxu0 0.0
    %6220 = vmatpush1.msra.mxu0 0.0
    %6221 = vmatprep.subr.mxu0 0.0
    %6222 = vmatpush1.msra.mxu0 0.0
    %6223 = vmatprep.subr.mxu0 0.0
    %6224 = vmatpush1.msra.mxu0 0.0
    %6225 = vmatprep.subr.mxu0 0.0
    %6226 = vmatpush1.msra.mxu0 0.0
    %6227 = vmatprep.subr.mxu0 0.0
    %6228 = vmatpush1.msra.mxu0 0.0
    %6229 = vmatprep.subr.mxu0 0.0
    %6230 = vmatpush1.msra.mxu0 0.0
    %6231 = vmatprep.subr.mxu0 0.0
    %6232 = vmatpush1.msra.mxu0 0.0
    %6233 = vmatprep.subr.mxu0 0.0
    %6234 = vmatpush1.msra.mxu0 0.0
    %6235 = vmatprep.subr.mxu0 0.0
    %6236 = vmatpush1.msra.mxu0 %v6122
    %6237 = vmatprep.subr.mxu0 0.0
    %6238 = vmatpush1.msra.mxu0 %v6116
    %6239 = vmatprep.subr.mxu0 0.0
    %6240 = vmatpush2.msra.mxu0 0.0
    %6241 = vmatprep.subr.mxu0 0.0
    %6242 = vmatpush2.msra.mxu0 0.0
    %6243 = vmatprep.subr.mxu0 0.0
    %6244 = vmatpush2.msra.mxu0 0.0
    %6245 = vmatprep.subr.mxu0 0.0
    %6246 = vmatpush2.msra.mxu0 0.0
    %6247 = vmatprep.subr.mxu0 0.0
    %6248 = vmatpush2.msra.mxu0 0.0
    %6249 = vmatprep.subr.mxu0 0.0
    %6250 = vmatpush2.msra.mxu0 0.0
    %6251 = vmatprep.subr.mxu0 0.0
    %6252 = vmatpush2.msra.mxu0 0.0
    %6253 = vmatprep.subr.mxu0 0.0
    %6254 = vmatpush2.msra.mxu0 0.0
    %6255 = vmatprep.subr.mxu0 0.0
    %6256 = vmatpush2.msra.mxu0 0.0
    %6257 = vmatprep.subr.mxu0 0.0
    %6258 = vmatpush2.msra.mxu0 0.0
    %6259 = vmatprep.subr.mxu0 0.0
    %6260 = vmatpush2.msra.mxu0 0.0
    %6261 = vmatprep.subr.mxu0 0.0
    %6262 = vmatpush2.msra.mxu0 0.0
    %6263 = vmatprep.subr.mxu0 0.0
    %6264 = vmatpush2.msra.mxu0 0.0
    %6265 = vmatprep.subr.mxu0 0.0
    %6266 = vmatpush2.msra.mxu0 0.0
    %6267 = vmatprep.subr.mxu0 0.0
    %6268 = vmatpush2.msra.mxu0 0.0
    %6269 = vmatprep.subr.mxu0 0.0
    %6270 = vmatpush2.msra.mxu0 0.0
    %6271 = vmatprep.mubr.f32.mxu0 0.0
    %6272 = vmatmul.mubr.f32.gmra.mxu0 %v6134
    %v6273 = vpop.f32.mrf.mxu0
    %v6274 = vadd.f32 0.0, %v6273
    %v6275 = vpop.f32.mrf.mxu0
    %6276 = vdwg.mxu0
    %v6277 = vadd.f32 %v6106, %v6203
    %v6278 = vadd.f32 %v6107, %v6205
    %v6279 = vadd.f32 %v6108, %v6274
    %s6280 = scalar_lea.vmem %s20, 64
    %v6281 = vld [vmem:[%s6280] sm:$0x3f]
    %6282 = vrot.lane.b32.xlu0 %v4929, 90
    %v6283 = vpop.permute.xlu0 %6282
    %6284 = vrot.lane.b32.xlu0 %v4930, 90
    %v6285 = vpop.permute.xlu0 %6284
    %6286 = vrot.lane.b32.xlu0 %v4931, 90
    %v6287 = vpop.permute.xlu0 %6286
    %6288 = vrot.lane.b32.xlu0 %v4932, 90
    %v6289 = vpop.permute.xlu0 %6288
    %6290 = vrot.lane.b32.xlu0 %v4933, 90
    %v6291 = vpop.permute.xlu0 %6290
    %6292 = vrot.lane.b32.xlu0 %v4934, 90
    %v6293 = vpop.permute.xlu0 %6292
    %v6294 = vsel %vm4397, %v6283, %v6285
    %v6295 = vsel %vm4397, %v6285, %v6287
    %v6296 = vsel %vm4397, %v6289, %v6291
    %v6297 = vsel %vm4397, %v6291, %v6293
    %v6305 = vsel %vm541, %v6281, 0
    %6307 = vmatprep.subr.mxu0 0.0
    %6308 = vmatpush1.msra.mxu0 0.0
    %6309 = vmatprep.subr.mxu0 0.0
    %6310 = vmatpush1.msra.mxu0 0.0
    %6311 = vmatprep.subr.mxu0 0.0
    %6312 = vmatpush1.msra.mxu0 0.0
    %6313 = vmatprep.subr.mxu0 0.0
    %6314 = vmatpush1.msra.mxu0 0.0
    %6315 = vmatprep.subr.mxu0 0.0
    %6316 = vmatpush1.msra.mxu0 0.0
    %6317 = vmatprep.subr.mxu0 0.0
    %6318 = vmatpush1.msra.mxu0 0.0
    %6319 = vmatprep.subr.mxu0 0.0
    %6320 = vmatpush1.msra.mxu0 0.0
    %6321 = vmatprep.subr.mxu0 0.0
    %6322 = vmatpush1.msra.mxu0 0.0
    %6323 = vmatprep.subr.mxu0 0.0
    %6324 = vmatpush1.msra.mxu0 0.0
    %6325 = vmatprep.subr.mxu0 0.0
    %6326 = vmatpush1.msra.mxu0 0.0
    %6327 = vmatprep.subr.mxu0 0.0
    %6328 = vmatpush1.msra.mxu0 0.0
    %6329 = vmatprep.subr.mxu0 0.0
    %6330 = vmatpush1.msra.mxu0 0.0
    %6331 = vmatprep.subr.mxu0 0.0
    %6332 = vmatpush1.msra.mxu0 0.0
    %6333 = vmatprep.subr.mxu0 0.0
    %6334 = vmatpush1.msra.mxu0 0.0
    %6335 = vmatprep.subr.mxu0 %v6297
    %6336 = vmatpush1.msra.mxu0 %v6296
    %6337 = vmatprep.subr.mxu0 %v6295
    %6338 = vmatpush1.msra.mxu0 %v6294
    %6339 = vmatprep.subr.mxu0 0.0
    %6340 = vmatpush2.msra.mxu0 0.0
    %6341 = vmatprep.subr.mxu0 0.0
    %6342 = vmatpush2.msra.mxu0 0.0
    %6343 = vmatprep.subr.mxu0 0.0
    %6344 = vmatpush2.msra.mxu0 0.0
    %6345 = vmatprep.subr.mxu0 0.0
    %6346 = vmatpush2.msra.mxu0 0.0
    %6347 = vmatprep.subr.mxu0 0.0
    %6348 = vmatpush2.msra.mxu0 0.0
    %6349 = vmatprep.subr.mxu0 0.0
    %6350 = vmatpush2.msra.mxu0 0.0
    %6351 = vmatprep.subr.mxu0 0.0
    %6352 = vmatpush2.msra.mxu0 0.0
    %6353 = vmatprep.subr.mxu0 0.0
    %6354 = vmatpush2.msra.mxu0 0.0
    %6355 = vmatprep.subr.mxu0 0.0
    %6356 = vmatpush2.msra.mxu0 0.0
    %6357 = vmatprep.subr.mxu0 0.0
    %6358 = vmatpush2.msra.mxu0 0.0
    %6359 = vmatprep.subr.mxu0 0.0
    %6360 = vmatpush2.msra.mxu0 0.0
    %6361 = vmatprep.subr.mxu0 0.0
    %6362 = vmatpush2.msra.mxu0 0.0
    %6363 = vmatprep.subr.mxu0 0.0
    %6364 = vmatpush2.msra.mxu0 0.0
    %6365 = vmatprep.subr.mxu0 0.0
    %6366 = vmatpush2.msra.mxu0 0.0
    %6367 = vmatprep.subr.mxu0 0.0
    %6368 = vmatpush2.msra.mxu0 0.0
    %6369 = vmatprep.subr.mxu0 0.0
    %6370 = vmatpush2.msra.mxu0 0.0
    %6371 = vmatprep.mubr.f32.mxu0 0.0
    %6372 = vmatmul.mubr.f32.gmra.mxu0 %v6305
    %v6373 = vpop.f32.mrf.mxu0
    %v6374 = vadd.f32 0.0, %v6373
    %v6375 = vpop.f32.mrf.mxu0
    %v6376 = vadd.f32 0.0, %v6375
    %6377 = vdwg.mxu0
    %6378 = vmatprep.subr.mxu0 0.0
    %6379 = vmatpush1.msra.mxu0 0.0
    %6380 = vmatprep.subr.mxu0 0.0
    %6381 = vmatpush1.msra.mxu0 0.0
    %6382 = vmatprep.subr.mxu0 0.0
    %6383 = vmatpush1.msra.mxu0 0.0
    %6384 = vmatprep.subr.mxu0 0.0
    %6385 = vmatpush1.msra.mxu0 0.0
    %6386 = vmatprep.subr.mxu0 0.0
    %6387 = vmatpush1.msra.mxu0 0.0
    %6388 = vmatprep.subr.mxu0 0.0
    %6389 = vmatpush1.msra.mxu0 0.0
    %6390 = vmatprep.subr.mxu0 0.0
    %6391 = vmatpush1.msra.mxu0 0.0
    %6392 = vmatprep.subr.mxu0 0.0
    %6393 = vmatpush1.msra.mxu0 0.0
    %6394 = vmatprep.subr.mxu0 0.0
    %6395 = vmatpush1.msra.mxu0 0.0
    %6396 = vmatprep.subr.mxu0 0.0
    %6397 = vmatpush1.msra.mxu0 0.0
    %6398 = vmatprep.subr.mxu0 0.0
    %6399 = vmatpush1.msra.mxu0 0.0
    %6400 = vmatprep.subr.mxu0 0.0
    %6401 = vmatpush1.msra.mxu0 0.0
    %6402 = vmatprep.subr.mxu0 0.0
    %6403 = vmatpush1.msra.mxu0 0.0
    %6404 = vmatprep.subr.mxu0 0.0
    %6405 = vmatpush1.msra.mxu0 0.0
    %6406 = vmatprep.subr.mxu0 0.0
    %6407 = vmatpush1.msra.mxu0 %v6293
    %6408 = vmatprep.subr.mxu0 0.0
    %6409 = vmatpush1.msra.mxu0 %v6287
    %6410 = vmatprep.subr.mxu0 0.0
    %6411 = vmatpush2.msra.mxu0 0.0
    %6412 = vmatprep.subr.mxu0 0.0
    %6413 = vmatpush2.msra.mxu0 0.0
    %6414 = vmatprep.subr.mxu0 0.0
    %6415 = vmatpush2.msra.mxu0 0.0
    %6416 = vmatprep.subr.mxu0 0.0
    %6417 = vmatpush2.msra.mxu0 0.0
    %6418 = vmatprep.subr.mxu0 0.0
    %6419 = vmatpush2.msra.mxu0 0.0
    %6420 = vmatprep.subr.mxu0 0.0
    %6421 = vmatpush2.msra.mxu0 0.0
    %6422 = vmatprep.subr.mxu0 0.0
    %6423 = vmatpush2.msra.mxu0 0.0
    %6424 = vmatprep.subr.mxu0 0.0
    %6425 = vmatpush2.msra.mxu0 0.0
    %6426 = vmatprep.subr.mxu0 0.0
    %6427 = vmatpush2.msra.mxu0 0.0
    %6428 = vmatprep.subr.mxu0 0.0
    %6429 = vmatpush2.msra.mxu0 0.0
    %6430 = vmatprep.subr.mxu0 0.0
    %6431 = vmatpush2.msra.mxu0 0.0
    %6432 = vmatprep.subr.mxu0 0.0
    %6433 = vmatpush2.msra.mxu0 0.0
    %6434 = vmatprep.subr.mxu0 0.0
    %6435 = vmatpush2.msra.mxu0 0.0
    %6436 = vmatprep.subr.mxu0 0.0
    %6437 = vmatpush2.msra.mxu0 0.0
    %6438 = vmatprep.subr.mxu0 0.0
    %6439 = vmatpush2.msra.mxu0 0.0
    %6440 = vmatprep.subr.mxu0 0.0
    %6441 = vmatpush2.msra.mxu0 0.0
    %6442 = vmatprep.mubr.f32.mxu0 0.0
    %6443 = vmatmul.mubr.f32.gmra.mxu0 %v6305
    %v6444 = vpop.f32.mrf.mxu0
    %v6445 = vadd.f32 0.0, %v6444
    %v6446 = vpop.f32.mrf.mxu0
    %6447 = vdwg.mxu0
    %v6448 = vadd.f32 %v6277, %v6374
    %v6449 = vadd.f32 %v6278, %v6376
    %v6450 = vadd.f32 %v6279, %v6445
    %v6451 = vld [vmem:[%s21] sm:$0x3f]
    %6453 = vset.pattern.permute.xlu0 0
    %6454 = vperm.xlu0 %6453, %v6451
    %v6455 = vpop.permute.xlu0 %6454
    %v6457 = vadd.f32 %v6448, %v6455
    %v6458 = vadd.f32 %v6449, %v6455
    %v6459 = vadd.f32 %v6450, %v6455
    %v6460 = vsel %vm4601, %v6457, 0.0
    %v6461 = vsel %vm4602, %v6458, 0.0
    %v6462 = vsel %vm4603, %v6459, 0.0
    %v6463 = vxor.u32 %v6460, 2147483648
    %v6464 = vxor.u32 %v6461, 2147483648
    %v6465 = vxor.u32 %v6462, 2147483648
    %v6466 = vmul.f32 %v6463, 1.442695
    %v6467 = vpow.pop %v6466
    %v6468 = vmul.f32 %v6464, 1.442695
    %v6469 = vpow.pop %v6468
    %v6470 = vmul.f32 %v6465, 1.442695
    %v6471 = vpow.pop %v6470
    %v6472 = vadd.f32 %v6467, 1.0
    %v6473 = vadd.f32 %v6469, 1.0
    %v6474 = vadd.f32 %v6471, 1.0
    %v6475 = vrcp.pop %v6472
    %v6476 = vmul.f32 1.0, %v6475
    %v6477 = vrcp.pop %v6473
    %v6478 = vmul.f32 1.0, %v6477
    %v6479 = vrcp.pop %v6474
    %v6480 = vmul.f32 1.0, %v6479
    %6481 = vst [vmem:[%s22] sm:$0x3f] %v6476
    %6482 = vst [vmem:[%s22 + $0x8] sm:$0x3f] %v6478
    %vm6483 = vcmask 553984
    %6484 = vst.msk [vmem:[%s22 + $0x10] sm:$0x3f] %vm6483, %v6480
    // Predicated region
    $region126: #{generator_forward.1} parent=1 // pred_check
      _
    $region127: #{generator_forward.1} parent=1 // pred_check_branch
      %6486 = sbr.rel (0) target = $region129
    $region128: #{generator_forward.1} parent=1 // pred_region
      _
    $region129: #{generator_forward.1} parent=1 // pred_fallthru
      _
    // Predicated region
    $region130: #{generator_forward.1} parent=1 // pred_check
      _
    $region131: #{generator_forward.1} parent=1 // pred_check_branch
      %6488 = sbr.rel (0) target = $region133
    $region132: #{generator_forward.1} parent=1 // pred_region
      _
    $region133: #{generator_forward.1} parent=1 // pred_fallthru
      _
    %6489 = vsyncpa [#allocation6], 1
    %6490 = vsyncpa [#allocation8], 1
    %6491 = vsyncpa [#allocation11], 1
    %6492 = vsyncpa [#allocation14], 1
    %6493 = vsyncpa [#allocation17], 1

</llo_original>
